<compile_context>
chip_gen: v7x
topology: tpu7x:2x2x1
jax: 0.10.0
libtpu: 0.0.40
codegen_flags: <defaults>
</compile_context>

<pallas_src>
import functools

import jax
import jax.numpy as jnp
from jax import lax
from jax.experimental import pallas as pl
from jax.experimental.pallas import tpu as pltpu


PARAM_ORDER = [
    "w_gh", "b_gh",          # temporal decay (hidden):  Linear(D -> H)
    "w_gx", "b_gx",          # temporal decay (input, diagonal): D -> D (elementwise)
    "w_hist", "b_hist",      # history regression:       Linear(H -> D)
    "w_feat", "b_feat",      # feature regression:       Linear(D -> D), zero diagonal
    "w_comb_x", "w_comb_m", "b_comb",   # weighted combine:  Linear([gamma_x ; m] -> D)
    "w_lstm_x", "w_lstm_m", "w_lstm_h", "b_lstm",  # LSTMCell gates on [c_c ; m], h
    "w_out", "b_out",        # classification head:      Linear(H -> n_class)
]


def _brits_kernel(
    # shared inputs, full arrays resident in VMEM
    x_ref, m_ref,                                   # (S, B, D) each
    # per-direction weights (leading direction axis squeezed away by BlockSpec)
    w_gh_ref, b_gh_ref, w_gx_ref, b_gx_ref,
    w_hist_ref, b_hist_ref, w_feat_ref, b_feat_ref,
    w_comb_x_ref, w_comb_m_ref, b_comb_ref,
    w_lstm_x_ref, w_lstm_m_ref, w_lstm_h_ref, b_lstm_ref,
    w_out_ref, b_out_ref,
    # outputs (one block per direction)
    imput_ref,                                      # (S, B, D)
    logits_ref,                                     # (B, n_class)
):
    S, B, D = x_ref.shape
    H = w_gh_ref.shape[1]
    f32 = jnp.float32
    direction = pl.program_id(0)   # 0 = forward in time, 1 = backward

    # Hoist all weight loads out of the time loop.
    w_gh = w_gh_ref[...]
    b_gh = b_gh_ref[...]
    w_gx = w_gx_ref[...]
    b_gx = b_gx_ref[...]
    w_hist = w_hist_ref[...]
    b_hist = b_hist_ref[...]
    w_feat = w_feat_ref[...]
    b_feat = b_feat_ref[...]
    w_comb_x = w_comb_x_ref[...]
    w_comb_m = w_comb_m_ref[...]
    b_comb = b_comb_ref[...]
    w_lstm_x = w_lstm_x_ref[...]
    w_lstm_m = w_lstm_m_ref[...]
    w_lstm_h = w_lstm_h_ref[...]
    b_lstm = b_lstm_ref[...]

    def step(i, carry):
        h, c, delta = carry
        # processing order i -> time index t (reversed for the backward direction)
        t = jnp.where(direction == 0, i, S - 1 - i)
        x = x_ref[t]           # (B, D)
        m = m_ref[t]           # (B, D)

        # temporal decays: gamma = exp(-relu(W d + b))
        gamma_h = jnp.exp(-jnp.maximum(
            jnp.dot(delta, w_gh, preferred_element_type=f32) + b_gh, 0.0))
        gamma_x = jnp.exp(-jnp.maximum(delta * w_gx + b_gx, 0.0))

        h_d = h * gamma_h

        # history regression + masked fill
        x_h = jnp.dot(h_d, w_hist, preferred_element_type=f32) + b_hist
        x_c = m * x + (1.0 - m) * x_h

        # feature regression (zero-diagonal weight applied at init time)
        z_h = jnp.dot(x_c, w_feat, preferred_element_type=f32) + b_feat

        # weighted combination: alpha = sigmoid(W [gamma_x, m] + b)
        alpha = jax.nn.sigmoid(
            jnp.dot(gamma_x, w_comb_x, preferred_element_type=f32)
            + jnp.dot(m, w_comb_m, preferred_element_type=f32) + b_comb)
        c_h = alpha * z_h + (1.0 - alpha) * x_h
        c_c = m * x + (1.0 - m) * c_h

        # LSTM cell on input [c_c, m] with state (h_d, c)
        gates = (jnp.dot(c_c, w_lstm_x, preferred_element_type=f32)
                 + jnp.dot(m, w_lstm_m, preferred_element_type=f32)
                 + jnp.dot(h_d, w_lstm_h, preferred_element_type=f32)
                 + b_lstm)                                            # (B, 4H)
        i_g = jax.nn.sigmoid(gates[:, 0 * H:1 * H])
        f_g = jax.nn.sigmoid(gates[:, 1 * H:2 * H])
        g_g = jnp.tanh(gates[:, 2 * H:3 * H])
        o_g = jax.nn.sigmoid(gates[:, 3 * H:4 * H])
        c_new = f_g * c + i_g * g_g
        h_new = o_g * jnp.tanh(c_new)

        # per-step imputation, written directly into the (time-ordered) output block
        imput_ref[t] = c_c

        # BRITS time-gap delta recursion (in this direction's processing order)
        delta_new = 1.0 + (1.0 - m) * delta
        return (h_new, c_new, delta_new)

    init = (jnp.zeros((B, H), f32),   # h
            jnp.zeros((B, H), f32),   # c
            jnp.zeros((B, D), f32))   # delta
    h_final, _, _ = lax.fori_loop(0, S, step, init, unroll=True)

    # classification head: only on the final hidden state (gated out of the loop)
    logits_ref[...] = (jnp.dot(h_final, w_out_ref[...], preferred_element_type=f32)
                       + b_out_ref[...])


def run_brits(x_sbd, m_sbd, params):
    """Both BRITS directions in one pallas_call. x/m: (S, B, D) float32.

    Returns (imputations (2, S, B, D), logits (2, B, n_class)); index 0 is the
    forward direction, index 1 is the backward (time-reversed) direction.  Both
    imputation slabs are already stored in natural time order.
    """
    S, B, D = x_sbd.shape
    n_class = params["w_out"].shape[2]
    weights = [params[k] for k in PARAM_ORDER]

    # whole series resident in VMEM, shared by both directions
    data_spec = pl.BlockSpec((S, B, D), lambda d: (0, 0, 0))

    def dir_spec(w):
        # select the per-direction weight slab; leading axis squeezed out of the ref
        nd = w.ndim
        return pl.BlockSpec((None,) + w.shape[1:],
                            lambda d, nd=nd: (d,) + (0,) * (nd - 1))

    out_shapes = (
        jax.ShapeDtypeStruct((2, S, B, D), jnp.float32),      # per-direction imputations
        jax.ShapeDtypeStruct((2, B, n_class), jnp.float32),   # per-direction class logits
    )
    out_specs = (
        pl.BlockSpec((None, S, B, D), lambda d: (d, 0, 0, 0)),
        pl.BlockSpec((None, B, n_class), lambda d: (d, 0, 0)),
    )

    return pl.pallas_call(
        _brits_kernel,
        out_shape=out_shapes,
        grid=(2,),
        in_specs=[data_spec, data_spec] + [dir_spec(w) for w in weights],
        out_specs=out_specs,
        compiler_params=pltpu.CompilerParams(
            dimension_semantics=("parallel",)),   # v7x: one direction per TensorCore
    )(x_sbd, m_sbd, *weights)


def init_rits_params(key, D, H, n_class):
    keys = jax.random.split(key, 19)
    s = 0.1

    def n(i, shape):
        return jax.random.normal(keys[i], shape, jnp.float32) * s

    return {
        "w_gh": n(0, (D, H)), "b_gh": n(1, (1, H)),
        "w_gx": n(2, (1, D)), "b_gx": n(3, (1, D)),
        "w_hist": n(4, (H, D)), "b_hist": n(5, (1, D)),
        "w_feat": n(6, (D, D)) * (1.0 - jnp.eye(D, dtype=jnp.float32)),
        "b_feat": n(7, (1, D)),
        # combine: alpha = sigmoid(gamma_x @ w_comb_x + m @ w_comb_m + b_comb)
        "w_comb_x": n(8, (D, D)), "w_comb_m": n(9, (D, D)), "b_comb": n(10, (1, D)),
        # LSTM gates (i,f,g,o stacked along the 4H column axis)
        "w_lstm_x": n(11, (D, 4 * H)), "w_lstm_m": n(12, (D, 4 * H)),
        "w_lstm_h": n(13, (H, 4 * H)), "b_lstm": n(14, (1, 4 * H)),
        "w_out": n(15, (H, n_class)), "b_out": n(16, (1, n_class)),
    }


class BritsClassifierPallas:
    """JAX/Pallas equivalent of BRITSCLASSIFIER (eval mode)."""

    def __init__(self, d_in, ff_dropout, d_dim, d_hidden=64, n_class=2,
                 key=jax.random.PRNGKey(0)):
        del ff_dropout  # inference: dropout is a no-op
        self.d_in = d_in
        self.d_dim = d_dim
        self.d_hidden = d_hidden
        kf, kb = jax.random.split(key)
        pf = init_rits_params(kf, d_in, d_hidden, n_class)
        pb = init_rits_params(kb, d_in, d_hidden, n_class)
        # stack forward/backward weights along a leading direction axis (size 2)
        self.params = {k: jnp.stack([pf[k], pb[k]], axis=0) for k in PARAM_ORDER}

    @functools.partial(jax.jit, static_argnums=0)
    def __call__(self, x, mask=None):
        # x: (B, S, N, C)  ->  'b s n c -> b c s n' -> slice nodes -> squeeze (C == 1)
        x = jnp.transpose(x, (0, 3, 1, 2))[:, :, :, :self.d_dim]
        x = jnp.squeeze(x, axis=1).astype(jnp.float32)           # (B, S, D)
        if mask is None:
            m = jnp.ones_like(x)
        else:
            m = jnp.transpose(mask, (0, 3, 1, 2))[:, :, :, :self.d_dim]
            m = jnp.squeeze(m, axis=1).astype(jnp.float32)       # (B, S, D)

        # kernel layout: (S, B, D) so the in-kernel time loop indexes the leading axis
        x_sbd = jnp.transpose(x, (1, 0, 2))
        m_sbd = jnp.transpose(m, (1, 0, 2))

        imps, logits = run_brits(x_sbd, m_sbd, self.params)

        predictions = 0.5 * (logits[0] + logits[1])                   # (B, n_class)
        output = jnp.transpose(0.5 * (imps[0] + imps[1]), (1, 0, 2))  # (B, S, D)
        return predictions, output                                    # eval-mode return


if __name__ == "__main__":
    B, S, N, C = 8, 8, 40, 1
    D_DIM, D_HIDDEN, N_CLASS = 36, 32, 2

    key = jax.random.PRNGKey(0)
    kx, km, kp = jax.random.split(key, 3)
    x = jax.random.normal(kx, (B, S, N, C), jnp.float32)
    mask = (jax.random.uniform(km, (B, S, N, C)) > 0.3).astype(jnp.float32)

    model = BritsClassifierPallas(d_in=D_DIM, ff_dropout=0.0, d_dim=D_DIM,
                                  d_hidden=D_HIDDEN, n_class=N_CLASS, key=kp)

    predictions, output = model(x, mask)
    jax.block_until_ready((predictions, output))

    assert predictions.shape == (B, N_CLASS)
    assert output.shape == (B, S, D_DIM)
    assert bool(jnp.isfinite(predictions).all()) and bool(jnp.isfinite(output).all())
    print("KERNEL_OK")
</pallas_src>

<mosaic_0001>
module attributes {stable_mosaic.version = 11 : i64} {
  func.func @_brits_kernel(%arg0: i32, %arg1: memref<8x8x36xf32, #tpu.memory_space<vmem>>, %arg2: memref<8x8x36xf32, #tpu.memory_space<vmem>>, %arg3: memref<1x36x32xf32, #tpu.memory_space<vmem>>, %arg4: memref<1x1x32xf32, #tpu.memory_space<vmem>>, %arg5: memref<1x1x36xf32, #tpu.memory_space<vmem>>, %arg6: memref<1x1x36xf32, #tpu.memory_space<vmem>>, %arg7: memref<1x32x36xf32, #tpu.memory_space<vmem>>, %arg8: memref<1x1x36xf32, #tpu.memory_space<vmem>>, %arg9: memref<1x36x36xf32, #tpu.memory_space<vmem>>, %arg10: memref<1x1x36xf32, #tpu.memory_space<vmem>>, %arg11: memref<1x36x36xf32, #tpu.memory_space<vmem>>, %arg12: memref<1x36x36xf32, #tpu.memory_space<vmem>>, %arg13: memref<1x1x36xf32, #tpu.memory_space<vmem>>, %arg14: memref<1x36x128xf32, #tpu.memory_space<vmem>>, %arg15: memref<1x36x128xf32, #tpu.memory_space<vmem>>, %arg16: memref<1x32x128xf32, #tpu.memory_space<vmem>>, %arg17: memref<1x1x128xf32, #tpu.memory_space<vmem>>, %arg18: memref<1x32x2xf32, #tpu.memory_space<vmem>>, %arg19: memref<1x1x2xf32, #tpu.memory_space<vmem>>, %arg20: memref<1x8x8x36xf32, #tpu.memory_space<vmem>>, %arg21: memref<1x8x2xf32, #tpu.memory_space<vmem>>) attributes {dimension_semantics = [#tpu.dimension_semantics<parallel>], iteration_bounds = array<i64: 2>, scalar_prefetch = 0 : i64, scratch_operands = 0 : i64, tpu.core_type = #tpu.core_type<tc>, window_params = [{pipeline_mode = #tpu.pipeline_mode<synchronous>, transform_indices = @transform_0, window_bounds = array<i64: 8, 8, 36>}, {pipeline_mode = #tpu.pipeline_mode<synchronous>, transform_indices = @transform_1, window_bounds = array<i64: 8, 8, 36>}, {transform_indices = @transform_2, window_bounds = array<i64: 1, 36, 32>}, {transform_indices = @transform_3, window_bounds = array<i64: 1, 1, 32>}, {transform_indices = @transform_4, window_bounds = array<i64: 1, 1, 36>}, {transform_indices = @transform_5, window_bounds = array<i64: 1, 1, 36>}, {transform_indices = @transform_6, window_bounds = array<i64: 1, 32, 36>}, {transform_indices = @transform_7, window_bounds = array<i64: 1, 1, 36>}, {transform_indices = @transform_8, window_bounds = array<i64: 1, 36, 36>}, {transform_indices = @transform_9, window_bounds = array<i64: 1, 1, 36>}, {transform_indices = @transform_10, window_bounds = array<i64: 1, 36, 36>}, {transform_indices = @transform_11, window_bounds = array<i64: 1, 36, 36>}, {transform_indices = @transform_12, window_bounds = array<i64: 1, 1, 36>}, {transform_indices = @transform_13, window_bounds = array<i64: 1, 36, 128>}, {transform_indices = @transform_14, window_bounds = array<i64: 1, 36, 128>}, {transform_indices = @transform_15, window_bounds = array<i64: 1, 32, 128>}, {transform_indices = @transform_16, window_bounds = array<i64: 1, 1, 128>}, {transform_indices = @transform_17, window_bounds = array<i64: 1, 32, 2>}, {transform_indices = @transform_18, window_bounds = array<i64: 1, 1, 2>}, {transform_indices = @transform_19, window_bounds = array<i64: 1, 8, 8, 36>}, {transform_indices = @transform_20, window_bounds = array<i64: 1, 8, 2>}]} {
    %c0 = arith.constant 0 : index
    %c0_0 = arith.constant 0 : index
    %c0_1 = arith.constant 0 : index
    %0 = vector.load %arg3[%c0, %c0_0, %c0_1] : memref<1x36x32xf32, #tpu.memory_space<vmem>>, vector<1x36x32xf32>
    %1 = vector.shape_cast %0 : vector<1x36x32xf32> to vector<36x32xf32>
    %c0_2 = arith.constant 0 : index
    %c0_3 = arith.constant 0 : index
    %c0_4 = arith.constant 0 : index
    %2 = vector.load %arg4[%c0_2, %c0_3, %c0_4] : memref<1x1x32xf32, #tpu.memory_space<vmem>>, vector<1x1x32xf32>
    %3 = vector.shape_cast %2 : vector<1x1x32xf32> to vector<1x32xf32>
    %c0_5 = arith.constant 0 : index
    %c0_6 = arith.constant 0 : index
    %c0_7 = arith.constant 0 : index
    %4 = vector.load %arg5[%c0_5, %c0_6, %c0_7] : memref<1x1x36xf32, #tpu.memory_space<vmem>>, vector<1x1x36xf32>
    %5 = vector.shape_cast %4 : vector<1x1x36xf32> to vector<1x36xf32>
    %c0_8 = arith.constant 0 : index
    %c0_9 = arith.constant 0 : index
    %c0_10 = arith.constant 0 : index
    %6 = vector.load %arg6[%c0_8, %c0_9, %c0_10] : memref<1x1x36xf32, #tpu.memory_space<vmem>>, vector<1x1x36xf32>
    %7 = vector.shape_cast %6 : vector<1x1x36xf32> to vector<1x36xf32>
    %c0_11 = arith.constant 0 : index
    %c0_12 = arith.constant 0 : index
    %c0_13 = arith.constant 0 : index
    %8 = vector.load %arg7[%c0_11, %c0_12, %c0_13] : memref<1x32x36xf32, #tpu.memory_space<vmem>>, vector<1x32x36xf32>
    %9 = vector.shape_cast %8 : vector<1x32x36xf32> to vector<32x36xf32>
    %c0_14 = arith.constant 0 : index
    %c0_15 = arith.constant 0 : index
    %c0_16 = arith.constant 0 : index
    %10 = vector.load %arg8[%c0_14, %c0_15, %c0_16] : memref<1x1x36xf32, #tpu.memory_space<vmem>>, vector<1x1x36xf32>
    %11 = vector.shape_cast %10 : vector<1x1x36xf32> to vector<1x36xf32>
    %c0_17 = arith.constant 0 : index
    %c0_18 = arith.constant 0 : index
    %c0_19 = arith.constant 0 : index
    %12 = vector.load %arg9[%c0_17, %c0_18, %c0_19] : memref<1x36x36xf32, #tpu.memory_space<vmem>>, vector<1x36x36xf32>
    %13 = vector.shape_cast %12 : vector<1x36x36xf32> to vector<36x36xf32>
    %c0_20 = arith.constant 0 : index
    %c0_21 = arith.constant 0 : index
    %c0_22 = arith.constant 0 : index
    %14 = vector.load %arg10[%c0_20, %c0_21, %c0_22] : memref<1x1x36xf32, #tpu.memory_space<vmem>>, vector<1x1x36xf32>
    %15 = vector.shape_cast %14 : vector<1x1x36xf32> to vector<1x36xf32>
    %c0_23 = arith.constant 0 : index
    %c0_24 = arith.constant 0 : index
    %c0_25 = arith.constant 0 : index
    %16 = vector.load %arg11[%c0_23, %c0_24, %c0_25] : memref<1x36x36xf32, #tpu.memory_space<vmem>>, vector<1x36x36xf32>
    %17 = vector.shape_cast %16 : vector<1x36x36xf32> to vector<36x36xf32>
    %c0_26 = arith.constant 0 : index
    %c0_27 = arith.constant 0 : index
    %c0_28 = arith.constant 0 : index
    %18 = vector.load %arg12[%c0_26, %c0_27, %c0_28] : memref<1x36x36xf32, #tpu.memory_space<vmem>>, vector<1x36x36xf32>
    %19 = vector.shape_cast %18 : vector<1x36x36xf32> to vector<36x36xf32>
    %c0_29 = arith.constant 0 : index
    %c0_30 = arith.constant 0 : index
    %c0_31 = arith.constant 0 : index
    %20 = vector.load %arg13[%c0_29, %c0_30, %c0_31] : memref<1x1x36xf32, #tpu.memory_space<vmem>>, vector<1x1x36xf32>
    %21 = vector.shape_cast %20 : vector<1x1x36xf32> to vector<1x36xf32>
    %c0_32 = arith.constant 0 : index
    %c0_33 = arith.constant 0 : index
    %c0_34 = arith.constant 0 : index
    %22 = vector.load %arg14[%c0_32, %c0_33, %c0_34] : memref<1x36x128xf32, #tpu.memory_space<vmem>>, vector<1x36x128xf32>
    %23 = vector.shape_cast %22 : vector<1x36x128xf32> to vector<36x128xf32>
    %c0_35 = arith.constant 0 : index
    %c0_36 = arith.constant 0 : index
    %c0_37 = arith.constant 0 : index
    %24 = vector.load %arg15[%c0_35, %c0_36, %c0_37] : memref<1x36x128xf32, #tpu.memory_space<vmem>>, vector<1x36x128xf32>
    %25 = vector.shape_cast %24 : vector<1x36x128xf32> to vector<36x128xf32>
    %c0_38 = arith.constant 0 : index
    %c0_39 = arith.constant 0 : index
    %c0_40 = arith.constant 0 : index
    %26 = vector.load %arg16[%c0_38, %c0_39, %c0_40] : memref<1x32x128xf32, #tpu.memory_space<vmem>>, vector<1x32x128xf32>
    %27 = vector.shape_cast %26 : vector<1x32x128xf32> to vector<32x128xf32>
    %c0_41 = arith.constant 0 : index
    %c0_42 = arith.constant 0 : index
    %c0_43 = arith.constant 0 : index
    %28 = vector.load %arg17[%c0_41, %c0_42, %c0_43] : memref<1x1x128xf32, #tpu.memory_space<vmem>>, vector<1x1x128xf32>
    %29 = vector.shape_cast %28 : vector<1x1x128xf32> to vector<1x128xf32>
    %cst = arith.constant 0.000000e+00 : f32
    %30 = vector.broadcast %cst : f32 to vector<8x32xf32>
    %cst_44 = arith.constant 0.000000e+00 : f32
    %31 = vector.broadcast %cst_44 : f32 to vector<8x32xf32>
    %cst_45 = arith.constant 0.000000e+00 : f32
    %32 = vector.broadcast %cst_45 : f32 to vector<8x36xf32>
    %c0_i32 = arith.constant 0 : i32
    %c0_i32_46 = arith.constant 0 : i32
    %33 = arith.cmpi eq, %arg0, %c0_i32_46 : i32
    %c7_i32 = arith.constant 7 : i32
    %34 = arith.subi %c7_i32, %c0_i32 : i32
    %35 = arith.select %33, %c0_i32, %34 : i32
    %36 = arith.index_cast %35 : i32 to index
    %c0_47 = arith.constant 0 : index
    %c0_48 = arith.constant 0 : index
    %37 = vector.load %arg1[%36, %c0_47, %c0_48] : memref<8x8x36xf32, #tpu.memory_space<vmem>>, vector<1x8x36xf32>
    %38 = vector.shape_cast %37 : vector<1x8x36xf32> to vector<8x36xf32>
    %39 = arith.index_cast %35 : i32 to index
    %c0_49 = arith.constant 0 : index
    %c0_50 = arith.constant 0 : index
    %40 = vector.load %arg2[%39, %c0_49, %c0_50] : memref<8x8x36xf32, #tpu.memory_space<vmem>>, vector<1x8x36xf32>
    %41 = vector.shape_cast %40 : vector<1x8x36xf32> to vector<8x36xf32>
    %cst_51 = arith.constant dense<0.000000e+00> : vector<8x32xf32>
    %42 = tpu.matmul %32, %1, %cst_51 {dimension_numbers = #tpu.dot_dimension_numbers<[1], [0], [0], [1], [0, 0, 1, 1], [], []>} : vector<8x36xf32>, vector<36x32xf32>, vector<8x32xf32> -> vector<8x32xf32>
    %43 = vector.broadcast %3 : vector<1x32xf32> to vector<8x32xf32>
    %44 = arith.addf %42, %43 : vector<8x32xf32>
    %cst_52 = arith.constant 0.000000e+00 : f32
    %45 = vector.broadcast %cst_52 : f32 to vector<8x32xf32>
    %46 = arith.maximumf %44, %45 : vector<8x32xf32>
    %cst_53 = arith.constant 0.000000e+00 : f32
    %47 = vector.broadcast %cst_53 : f32 to vector<8x32xf32>
    %48 = arith.subf %47, %46 : vector<8x32xf32>
    %49 = math.exp %48 : vector<8x32xf32>
    %50 = vector.broadcast %5 : vector<1x36xf32> to vector<8x36xf32>
    %51 = arith.mulf %32, %50 : vector<8x36xf32>
    %52 = vector.broadcast %7 : vector<1x36xf32> to vector<8x36xf32>
    %53 = arith.addf %51, %52 : vector<8x36xf32>
    %cst_54 = arith.constant 0.000000e+00 : f32
    %54 = vector.broadcast %cst_54 : f32 to vector<8x36xf32>
    %55 = arith.maximumf %53, %54 : vector<8x36xf32>
    %cst_55 = arith.constant 0.000000e+00 : f32
    %56 = vector.broadcast %cst_55 : f32 to vector<8x36xf32>
    %57 = arith.subf %56, %55 : vector<8x36xf32>
    %58 = math.exp %57 : vector<8x36xf32>
    %59 = arith.mulf %30, %49 : vector<8x32xf32>
    %cst_56 = arith.constant dense<0.000000e+00> : vector<8x36xf32>
    %60 = tpu.matmul %59, %9, %cst_56 {dimension_numbers = #tpu.dot_dimension_numbers<[1], [0], [0], [1], [0, 0, 1, 1], [], []>} : vector<8x32xf32>, vector<32x36xf32>, vector<8x36xf32> -> vector<8x36xf32>
    %61 = vector.broadcast %11 : vector<1x36xf32> to vector<8x36xf32>
    %62 = arith.addf %60, %61 : vector<8x36xf32>
    %63 = arith.mulf %41, %38 : vector<8x36xf32>
    %cst_57 = arith.constant 1.000000e+00 : f32
    %64 = vector.broadcast %cst_57 : f32 to vector<8x36xf32>
    %65 = arith.subf %64, %41 : vector<8x36xf32>
    %66 = arith.mulf %65, %62 : vector<8x36xf32>
    %67 = arith.addf %63, %66 : vector<8x36xf32>
    %cst_58 = arith.constant dense<0.000000e+00> : vector<8x36xf32>
    %68 = tpu.matmul %67, %13, %cst_58 {dimension_numbers = #tpu.dot_dimension_numbers<[1], [0], [0], [1], [0, 0, 1, 1], [], []>} : vector<8x36xf32>, vector<36x36xf32>, vector<8x36xf32> -> vector<8x36xf32>
    %69 = vector.broadcast %15 : vector<1x36xf32> to vector<8x36xf32>
    %70 = arith.addf %68, %69 : vector<8x36xf32>
    %cst_59 = arith.constant dense<0.000000e+00> : vector<8x36xf32>
    %71 = tpu.matmul %58, %17, %cst_59 {dimension_numbers = #tpu.dot_dimension_numbers<[1], [0], [0], [1], [0, 0, 1, 1], [], []>} : vector<8x36xf32>, vector<36x36xf32>, vector<8x36xf32> -> vector<8x36xf32>
    %cst_60 = arith.constant dense<0.000000e+00> : vector<8x36xf32>
    %72 = tpu.matmul %41, %19, %cst_60 {dimension_numbers = #tpu.dot_dimension_numbers<[1], [0], [0], [1], [0, 0, 1, 1], [], []>} : vector<8x36xf32>, vector<36x36xf32>, vector<8x36xf32> -> vector<8x36xf32>
    %73 = arith.addf %71, %72 : vector<8x36xf32>
    %74 = vector.broadcast %21 : vector<1x36xf32> to vector<8x36xf32>
    %75 = arith.addf %73, %74 : vector<8x36xf32>
    %76 = arith.negf %75 : vector<8x36xf32>
    %77 = math.exp %76 : vector<8x36xf32>
    %cst_61 = arith.constant 1.000000e+00 : f32
    %78 = vector.broadcast %cst_61 : f32 to vector<8x36xf32>
    %79 = arith.addf %78, %77 : vector<8x36xf32>
    %80 = arith.divf %78, %79 : vector<8x36xf32>
    %81 = arith.mulf %80, %70 : vector<8x36xf32>
    %cst_62 = arith.constant 1.000000e+00 : f32
    %82 = vector.broadcast %cst_62 : f32 to vector<8x36xf32>
    %83 = arith.subf %82, %80 : vector<8x36xf32>
    %84 = arith.mulf %83, %62 : vector<8x36xf32>
    %85 = arith.addf %81, %84 : vector<8x36xf32>
    %86 = arith.mulf %41, %38 : vector<8x36xf32>
    %cst_63 = arith.constant 1.000000e+00 : f32
    %87 = vector.broadcast %cst_63 : f32 to vector<8x36xf32>
    %88 = arith.subf %87, %41 : vector<8x36xf32>
    %89 = arith.mulf %88, %85 : vector<8x36xf32>
    %90 = arith.addf %86, %89 : vector<8x36xf32>
    %cst_64 = arith.constant dense<0.000000e+00> : vector<8x128xf32>
    %91 = tpu.matmul %90, %23, %cst_64 {dimension_numbers = #tpu.dot_dimension_numbers<[1], [0], [0], [1], [0, 0, 1, 1], [], []>} : vector<8x36xf32>, vector<36x128xf32>, vector<8x128xf32> -> vector<8x128xf32>
    %cst_65 = arith.constant dense<0.000000e+00> : vector<8x128xf32>
    %92 = tpu.matmul %41, %25, %cst_65 {dimension_numbers = #tpu.dot_dimension_numbers<[1], [0], [0], [1], [0, 0, 1, 1], [], []>} : vector<8x36xf32>, vector<36x128xf32>, vector<8x128xf32> -> vector<8x128xf32>
    %93 = arith.addf %91, %92 : vector<8x128xf32>
    %cst_66 = arith.constant dense<0.000000e+00> : vector<8x128xf32>
    %94 = tpu.matmul %59, %27, %cst_66 {dimension_numbers = #tpu.dot_dimension_numbers<[1], [0], [0], [1], [0, 0, 1, 1], [], []>} : vector<8x32xf32>, vector<32x128xf32>, vector<8x128xf32> -> vector<8x128xf32>
    %95 = arith.addf %93, %94 : vector<8x128xf32>
    %96 = vector.broadcast %29 : vector<1x128xf32> to vector<8x128xf32>
    %97 = arith.addf %95, %96 : vector<8x128xf32>
    %98 = vector.extract_strided_slice %97 {offsets = [0, 0], sizes = [8, 32], strides = [1, 1]} : vector<8x128xf32> to vector<8x32xf32>
    %99 = arith.negf %98 : vector<8x32xf32>
    %100 = math.exp %99 : vector<8x32xf32>
    %cst_67 = arith.constant 1.000000e+00 : f32
    %101 = vector.broadcast %cst_67 : f32 to vector<8x32xf32>
    %102 = arith.addf %101, %100 : vector<8x32xf32>
    %103 = arith.divf %101, %102 : vector<8x32xf32>
    %104 = vector.extract_strided_slice %97 {offsets = [0, 32], sizes = [8, 32], strides = [1, 1]} : vector<8x128xf32> to vector<8x32xf32>
    %105 = arith.negf %104 : vector<8x32xf32>
    %106 = math.exp %105 : vector<8x32xf32>
    %cst_68 = arith.constant 1.000000e+00 : f32
    %107 = vector.broadcast %cst_68 : f32 to vector<8x32xf32>
    %108 = arith.addf %107, %106 : vector<8x32xf32>
    %109 = arith.divf %107, %108 : vector<8x32xf32>
    %110 = vector.extract_strided_slice %97 {offsets = [0, 64], sizes = [8, 32], strides = [1, 1]} : vector<8x128xf32> to vector<8x32xf32>
    %111 = math.tanh %110 : vector<8x32xf32>
    %112 = vector.extract_strided_slice %97 {offsets = [0, 96], sizes = [8, 32], strides = [1, 1]} : vector<8x128xf32> to vector<8x32xf32>
    %113 = arith.negf %112 : vector<8x32xf32>
    %114 = math.exp %113 : vector<8x32xf32>
    %cst_69 = arith.constant 1.000000e+00 : f32
    %115 = vector.broadcast %cst_69 : f32 to vector<8x32xf32>
    %116 = arith.addf %115, %114 : vector<8x32xf32>
    %117 = arith.divf %115, %116 : vector<8x32xf32>
    %118 = arith.mulf %109, %31 : vector<8x32xf32>
    %119 = arith.mulf %103, %111 : vector<8x32xf32>
    %120 = arith.addf %118, %119 : vector<8x32xf32>
    %121 = math.tanh %120 : vector<8x32xf32>
    %122 = arith.mulf %117, %121 : vector<8x32xf32>
    %c0_70 = arith.constant 0 : index
    %123 = arith.index_cast %35 : i32 to index
    %c0_71 = arith.constant 0 : index
    %c0_72 = arith.constant 0 : index
    %124 = vector.load %arg20[%c0_70, %123, %c0_71, %c0_72] : memref<1x8x8x36xf32, #tpu.memory_space<vmem>>, vector<1x1x8x36xf32>
    %125 = vector.shape_cast %124 : vector<1x1x8x36xf32> to vector<8x36xf32>
    %126 = vector.shape_cast %90 : vector<8x36xf32> to vector<1x1x8x36xf32>
    tpu.vector_store %arg20[%c0_70, %123, %c0_71, %c0_72], %126 {strides = array<i32>} : memref<1x8x8x36xf32, #tpu.memory_space<vmem>>, vector<1x1x8x36xf32>,
    %cst_73 = arith.constant 1.000000e+00 : f32
    %127 = vector.broadcast %cst_73 : f32 to vector<8x36xf32>
    %128 = arith.subf %127, %41 : vector<8x36xf32>
    %129 = arith.mulf %128, %32 : vector<8x36xf32>
    %cst_74 = arith.constant 1.000000e+00 : f32
    %130 = vector.broadcast %cst_74 : f32 to vector<8x36xf32>
    %131 = arith.addf %130, %129 : vector<8x36xf32>
    %c1_i32 = arith.constant 1 : i32
    %c0_i32_75 = arith.constant 0 : i32
    %132 = arith.cmpi eq, %arg0, %c0_i32_75 : i32
    %c7_i32_76 = arith.constant 7 : i32
    %133 = arith.subi %c7_i32_76, %c1_i32 : i32
    %134 = arith.select %132, %c1_i32, %133 : i32
    %135 = arith.index_cast %134 : i32 to index
    %c0_77 = arith.constant 0 : index
    %c0_78 = arith.constant 0 : index
    %136 = vector.load %arg1[%135, %c0_77, %c0_78] : memref<8x8x36xf32, #tpu.memory_space<vmem>>, vector<1x8x36xf32>
    %137 = vector.shape_cast %136 : vector<1x8x36xf32> to vector<8x36xf32>
    %138 = arith.index_cast %134 : i32 to index
    %c0_79 = arith.constant 0 : index
    %c0_80 = arith.constant 0 : index
    %139 = vector.load %arg2[%138, %c0_79, %c0_80] : memref<8x8x36xf32, #tpu.memory_space<vmem>>, vector<1x8x36xf32>
    %140 = vector.shape_cast %139 : vector<1x8x36xf32> to vector<8x36xf32>
    %cst_81 = arith.constant dense<0.000000e+00> : vector<8x32xf32>
    %141 = tpu.matmul %131, %1, %cst_81 {dimension_numbers = #tpu.dot_dimension_numbers<[1], [0], [0], [1], [0, 0, 1, 1], [], []>} : vector<8x36xf32>, vector<36x32xf32>, vector<8x32xf32> -> vector<8x32xf32>
    %142 = vector.broadcast %3 : vector<1x32xf32> to vector<8x32xf32>
    %143 = arith.addf %141, %142 : vector<8x32xf32>
    %cst_82 = arith.constant 0.000000e+00 : f32
    %144 = vector.broadcast %cst_82 : f32 to vector<8x32xf32>
    %145 = arith.maximumf %143, %144 : vector<8x32xf32>
    %cst_83 = arith.constant 0.000000e+00 : f32
    %146 = vector.broadcast %cst_83 : f32 to vector<8x32xf32>
    %147 = arith.subf %146, %145 : vector<8x32xf32>
    %148 = math.exp %147 : vector<8x32xf32>
    %149 = vector.broadcast %5 : vector<1x36xf32> to vector<8x36xf32>
    %150 = arith.mulf %131, %149 : vector<8x36xf32>
    %151 = vector.broadcast %7 : vector<1x36xf32> to vector<8x36xf32>
    %152 = arith.addf %150, %151 : vector<8x36xf32>
    %cst_84 = arith.constant 0.000000e+00 : f32
    %153 = vector.broadcast %cst_84 : f32 to vector<8x36xf32>
    %154 = arith.maximumf %152, %153 : vector<8x36xf32>
    %cst_85 = arith.constant 0.000000e+00 : f32
    %155 = vector.broadcast %cst_85 : f32 to vector<8x36xf32>
    %156 = arith.subf %155, %154 : vector<8x36xf32>
    %157 = math.exp %156 : vector<8x36xf32>
    %158 = arith.mulf %122, %148 : vector<8x32xf32>
    %cst_86 = arith.constant dense<0.000000e+00> : vector<8x36xf32>
    %159 = tpu.matmul %158, %9, %cst_86 {dimension_numbers = #tpu.dot_dimension_numbers<[1], [0], [0], [1], [0, 0, 1, 1], [], []>} : vector<8x32xf32>, vector<32x36xf32>, vector<8x36xf32> -> vector<8x36xf32>
    %160 = vector.broadcast %11 : vector<1x36xf32> to vector<8x36xf32>
    %161 = arith.addf %159, %160 : vector<8x36xf32>
    %162 = arith.mulf %140, %137 : vector<8x36xf32>
    %cst_87 = arith.constant 1.000000e+00 : f32
    %163 = vector.broadcast %cst_87 : f32 to vector<8x36xf32>
    %164 = arith.subf %163, %140 : vector<8x36xf32>
    %165 = arith.mulf %164, %161 : vector<8x36xf32>
    %166 = arith.addf %162, %165 : vector<8x36xf32>
    %cst_88 = arith.constant dense<0.000000e+00> : vector<8x36xf32>
    %167 = tpu.matmul %166, %13, %cst_88 {dimension_numbers = #tpu.dot_dimension_numbers<[1], [0], [0], [1], [0, 0, 1, 1], [], []>} : vector<8x36xf32>, vector<36x36xf32>, vector<8x36xf32> -> vector<8x36xf32>
    %168 = vector.broadcast %15 : vector<1x36xf32> to vector<8x36xf32>
    %169 = arith.addf %167, %168 : vector<8x36xf32>
    %cst_89 = arith.constant dense<0.000000e+00> : vector<8x36xf32>
    %170 = tpu.matmul %157, %17, %cst_89 {dimension_numbers = #tpu.dot_dimension_numbers<[1], [0], [0], [1], [0, 0, 1, 1], [], []>} : vector<8x36xf32>, vector<36x36xf32>, vector<8x36xf32> -> vector<8x36xf32>
    %cst_90 = arith.constant dense<0.000000e+00> : vector<8x36xf32>
    %171 = tpu.matmul %140, %19, %cst_90 {dimension_numbers = #tpu.dot_dimension_numbers<[1], [0], [0], [1], [0, 0, 1, 1], [], []>} : vector<8x36xf32>, vector<36x36xf32>, vector<8x36xf32> -> vector<8x36xf32>
    %172 = arith.addf %170, %171 : vector<8x36xf32>
    %173 = vector.broadcast %21 : vector<1x36xf32> to vector<8x36xf32>
    %174 = arith.addf %172, %173 : vector<8x36xf32>
    %175 = arith.negf %174 : vector<8x36xf32>
    %176 = math.exp %175 : vector<8x36xf32>
    %cst_91 = arith.constant 1.000000e+00 : f32
    %177 = vector.broadcast %cst_91 : f32 to vector<8x36xf32>
    %178 = arith.addf %177, %176 : vector<8x36xf32>
    %179 = arith.divf %177, %178 : vector<8x36xf32>
    %180 = arith.mulf %179, %169 : vector<8x36xf32>
    %cst_92 = arith.constant 1.000000e+00 : f32
    %181 = vector.broadcast %cst_92 : f32 to vector<8x36xf32>
    %182 = arith.subf %181, %179 : vector<8x36xf32>
    %183 = arith.mulf %182, %161 : vector<8x36xf32>
    %184 = arith.addf %180, %183 : vector<8x36xf32>
    %185 = arith.mulf %140, %137 : vector<8x36xf32>
    %cst_93 = arith.constant 1.000000e+00 : f32
    %186 = vector.broadcast %cst_93 : f32 to vector<8x36xf32>
    %187 = arith.subf %186, %140 : vector<8x36xf32>
    %188 = arith.mulf %187, %184 : vector<8x36xf32>
    %189 = arith.addf %185, %188 : vector<8x36xf32>
    %cst_94 = arith.constant dense<0.000000e+00> : vector<8x128xf32>
    %190 = tpu.matmul %189, %23, %cst_94 {dimension_numbers = #tpu.dot_dimension_numbers<[1], [0], [0], [1], [0, 0, 1, 1], [], []>} : vector<8x36xf32>, vector<36x128xf32>, vector<8x128xf32> -> vector<8x128xf32>
    %cst_95 = arith.constant dense<0.000000e+00> : vector<8x128xf32>
    %191 = tpu.matmul %140, %25, %cst_95 {dimension_numbers = #tpu.dot_dimension_numbers<[1], [0], [0], [1], [0, 0, 1, 1], [], []>} : vector<8x36xf32>, vector<36x128xf32>, vector<8x128xf32> -> vector<8x128xf32>
    %192 = arith.addf %190, %191 : vector<8x128xf32>
    %cst_96 = arith.constant dense<0.000000e+00> : vector<8x128xf32>
    %193 = tpu.matmul %158, %27, %cst_96 {dimension_numbers = #tpu.dot_dimension_numbers<[1], [0], [0], [1], [0, 0, 1, 1], [], []>} : vector<8x32xf32>, vector<32x128xf32>, vector<8x128xf32> -> vector<8x128xf32>
    %194 = arith.addf %192, %193 : vector<8x128xf32>
    %195 = vector.broadcast %29 : vector<1x128xf32> to vector<8x128xf32>
    %196 = arith.addf %194, %195 : vector<8x128xf32>
    %197 = vector.extract_strided_slice %196 {offsets = [0, 0], sizes = [8, 32], strides = [1, 1]} : vector<8x128xf32> to vector<8x32xf32>
    %198 = arith.negf %197 : vector<8x32xf32>
    %199 = math.exp %198 : vector<8x32xf32>
    %cst_97 = arith.constant 1.000000e+00 : f32
    %200 = vector.broadcast %cst_97 : f32 to vector<8x32xf32>
    %201 = arith.addf %200, %199 : vector<8x32xf32>
    %202 = arith.divf %200, %201 : vector<8x32xf32>
    %203 = vector.extract_strided_slice %196 {offsets = [0, 32], sizes = [8, 32], strides = [1, 1]} : vector<8x128xf32> to vector<8x32xf32>
    %204 = arith.negf %203 : vector<8x32xf32>
    %205 = math.exp %204 : vector<8x32xf32>
    %cst_98 = arith.constant 1.000000e+00 : f32
    %206 = vector.broadcast %cst_98 : f32 to vector<8x32xf32>
    %207 = arith.addf %206, %205 : vector<8x32xf32>
    %208 = arith.divf %206, %207 : vector<8x32xf32>
    %209 = vector.extract_strided_slice %196 {offsets = [0, 64], sizes = [8, 32], strides = [1, 1]} : vector<8x128xf32> to vector<8x32xf32>
    %210 = math.tanh %209 : vector<8x32xf32>
    %211 = vector.extract_strided_slice %196 {offsets = [0, 96], sizes = [8, 32], strides = [1, 1]} : vector<8x128xf32> to vector<8x32xf32>
    %212 = arith.negf %211 : vector<8x32xf32>
    %213 = math.exp %212 : vector<8x32xf32>
    %cst_99 = arith.constant 1.000000e+00 : f32
    %214 = vector.broadcast %cst_99 : f32 to vector<8x32xf32>
    %215 = arith.addf %214, %213 : vector<8x32xf32>
    %216 = arith.divf %214, %215 : vector<8x32xf32>
    %217 = arith.mulf %208, %120 : vector<8x32xf32>
    %218 = arith.mulf %202, %210 : vector<8x32xf32>
    %219 = arith.addf %217, %218 : vector<8x32xf32>
    %220 = math.tanh %219 : vector<8x32xf32>
    %221 = arith.mulf %216, %220 : vector<8x32xf32>
    %c0_100 = arith.constant 0 : index
    %222 = arith.index_cast %134 : i32 to index
    %c0_101 = arith.constant 0 : index
    %c0_102 = arith.constant 0 : index
    %223 = vector.load %arg20[%c0_100, %222, %c0_101, %c0_102] : memref<1x8x8x36xf32, #tpu.memory_space<vmem>>, vector<1x1x8x36xf32>
    %224 = vector.shape_cast %223 : vector<1x1x8x36xf32> to vector<8x36xf32>
    %225 = vector.shape_cast %189 : vector<8x36xf32> to vector<1x1x8x36xf32>
    tpu.vector_store %arg20[%c0_100, %222, %c0_101, %c0_102], %225 {strides = array<i32>} : memref<1x8x8x36xf32, #tpu.memory_space<vmem>>, vector<1x1x8x36xf32>,
    %cst_103 = arith.constant 1.000000e+00 : f32
    %226 = vector.broadcast %cst_103 : f32 to vector<8x36xf32>
    %227 = arith.subf %226, %140 : vector<8x36xf32>
    %228 = arith.mulf %227, %131 : vector<8x36xf32>
    %cst_104 = arith.constant 1.000000e+00 : f32
    %229 = vector.broadcast %cst_104 : f32 to vector<8x36xf32>
    %230 = arith.addf %229, %228 : vector<8x36xf32>
    %c2_i32 = arith.constant 2 : i32
    %c0_i32_105 = arith.constant 0 : i32
    %231 = arith.cmpi eq, %arg0, %c0_i32_105 : i32
    %c7_i32_106 = arith.constant 7 : i32
    %232 = arith.subi %c7_i32_106, %c2_i32 : i32
    %233 = arith.select %231, %c2_i32, %232 : i32
    %234 = arith.index_cast %233 : i32 to index
    %c0_107 = arith.constant 0 : index
    %c0_108 = arith.constant 0 : index
    %235 = vector.load %arg1[%234, %c0_107, %c0_108] : memref<8x8x36xf32, #tpu.memory_space<vmem>>, vector<1x8x36xf32>
    %236 = vector.shape_cast %235 : vector<1x8x36xf32> to vector<8x36xf32>
    %237 = arith.index_cast %233 : i32 to index
    %c0_109 = arith.constant 0 : index
    %c0_110 = arith.constant 0 : index
    %238 = vector.load %arg2[%237, %c0_109, %c0_110] : memref<8x8x36xf32, #tpu.memory_space<vmem>>, vector<1x8x36xf32>
    %239 = vector.shape_cast %238 : vector<1x8x36xf32> to vector<8x36xf32>
    %cst_111 = arith.constant dense<0.000000e+00> : vector<8x32xf32>
    %240 = tpu.matmul %230, %1, %cst_111 {dimension_numbers = #tpu.dot_dimension_numbers<[1], [0], [0], [1], [0, 0, 1, 1], [], []>} : vector<8x36xf32>, vector<36x32xf32>, vector<8x32xf32> -> vector<8x32xf32>
    %241 = vector.broadcast %3 : vector<1x32xf32> to vector<8x32xf32>
    %242 = arith.addf %240, %241 : vector<8x32xf32>
    %cst_112 = arith.constant 0.000000e+00 : f32
    %243 = vector.broadcast %cst_112 : f32 to vector<8x32xf32>
    %244 = arith.maximumf %242, %243 : vector<8x32xf32>
    %cst_113 = arith.constant 0.000000e+00 : f32
    %245 = vector.broadcast %cst_113 : f32 to vector<8x32xf32>
    %246 = arith.subf %245, %244 : vector<8x32xf32>
    %247 = math.exp %246 : vector<8x32xf32>
    %248 = vector.broadcast %5 : vector<1x36xf32> to vector<8x36xf32>
    %249 = arith.mulf %230, %248 : vector<8x36xf32>
    %250 = vector.broadcast %7 : vector<1x36xf32> to vector<8x36xf32>
    %251 = arith.addf %249, %250 : vector<8x36xf32>
    %cst_114 = arith.constant 0.000000e+00 : f32
    %252 = vector.broadcast %cst_114 : f32 to vector<8x36xf32>
    %253 = arith.maximumf %251, %252 : vector<8x36xf32>
    %cst_115 = arith.constant 0.000000e+00 : f32
    %254 = vector.broadcast %cst_115 : f32 to vector<8x36xf32>
    %255 = arith.subf %254, %253 : vector<8x36xf32>
    %256 = math.exp %255 : vector<8x36xf32>
    %257 = arith.mulf %221, %247 : vector<8x32xf32>
    %cst_116 = arith.constant dense<0.000000e+00> : vector<8x36xf32>
    %258 = tpu.matmul %257, %9, %cst_116 {dimension_numbers = #tpu.dot_dimension_numbers<[1], [0], [0], [1], [0, 0, 1, 1], [], []>} : vector<8x32xf32>, vector<32x36xf32>, vector<8x36xf32> -> vector<8x36xf32>
    %259 = vector.broadcast %11 : vector<1x36xf32> to vector<8x36xf32>
    %260 = arith.addf %258, %259 : vector<8x36xf32>
    %261 = arith.mulf %239, %236 : vector<8x36xf32>
    %cst_117 = arith.constant 1.000000e+00 : f32
    %262 = vector.broadcast %cst_117 : f32 to vector<8x36xf32>
    %263 = arith.subf %262, %239 : vector<8x36xf32>
    %264 = arith.mulf %263, %260 : vector<8x36xf32>
    %265 = arith.addf %261, %264 : vector<8x36xf32>
    %cst_118 = arith.constant dense<0.000000e+00> : vector<8x36xf32>
    %266 = tpu.matmul %265, %13, %cst_118 {dimension_numbers = #tpu.dot_dimension_numbers<[1], [0], [0], [1], [0, 0, 1, 1], [], []>} : vector<8x36xf32>, vector<36x36xf32>, vector<8x36xf32> -> vector<8x36xf32>
    %267 = vector.broadcast %15 : vector<1x36xf32> to vector<8x36xf32>
    %268 = arith.addf %266, %267 : vector<8x36xf32>
    %cst_119 = arith.constant dense<0.000000e+00> : vector<8x36xf32>
    %269 = tpu.matmul %256, %17, %cst_119 {dimension_numbers = #tpu.dot_dimension_numbers<[1], [0], [0], [1], [0, 0, 1, 1], [], []>} : vector<8x36xf32>, vector<36x36xf32>, vector<8x36xf32> -> vector<8x36xf32>
    %cst_120 = arith.constant dense<0.000000e+00> : vector<8x36xf32>
    %270 = tpu.matmul %239, %19, %cst_120 {dimension_numbers = #tpu.dot_dimension_numbers<[1], [0], [0], [1], [0, 0, 1, 1], [], []>} : vector<8x36xf32>, vector<36x36xf32>, vector<8x36xf32> -> vector<8x36xf32>
    %271 = arith.addf %269, %270 : vector<8x36xf32>
    %272 = vector.broadcast %21 : vector<1x36xf32> to vector<8x36xf32>
    %273 = arith.addf %271, %272 : vector<8x36xf32>
    %274 = arith.negf %273 : vector<8x36xf32>
    %275 = math.exp %274 : vector<8x36xf32>
    %cst_121 = arith.constant 1.000000e+00 : f32
    %276 = vector.broadcast %cst_121 : f32 to vector<8x36xf32>
    %277 = arith.addf %276, %275 : vector<8x36xf32>
    %278 = arith.divf %276, %277 : vector<8x36xf32>
    %279 = arith.mulf %278, %268 : vector<8x36xf32>
    %cst_122 = arith.constant 1.000000e+00 : f32
    %280 = vector.broadcast %cst_122 : f32 to vector<8x36xf32>
    %281 = arith.subf %280, %278 : vector<8x36xf32>
    %282 = arith.mulf %281, %260 : vector<8x36xf32>
    %283 = arith.addf %279, %282 : vector<8x36xf32>
    %284 = arith.mulf %239, %236 : vector<8x36xf32>
    %cst_123 = arith.constant 1.000000e+00 : f32
    %285 = vector.broadcast %cst_123 : f32 to vector<8x36xf32>
    %286 = arith.subf %285, %239 : vector<8x36xf32>
    %287 = arith.mulf %286, %283 : vector<8x36xf32>
    %288 = arith.addf %284, %287 : vector<8x36xf32>
    %cst_124 = arith.constant dense<0.000000e+00> : vector<8x128xf32>
    %289 = tpu.matmul %288, %23, %cst_124 {dimension_numbers = #tpu.dot_dimension_numbers<[1], [0], [0], [1], [0, 0, 1, 1], [], []>} : vector<8x36xf32>, vector<36x128xf32>, vector<8x128xf32> -> vector<8x128xf32>
    %cst_125 = arith.constant dense<0.000000e+00> : vector<8x128xf32>
    %290 = tpu.matmul %239, %25, %cst_125 {dimension_numbers = #tpu.dot_dimension_numbers<[1], [0], [0], [1], [0, 0, 1, 1], [], []>} : vector<8x36xf32>, vector<36x128xf32>, vector<8x128xf32> -> vector<8x128xf32>
    %291 = arith.addf %289, %290 : vector<8x128xf32>
    %cst_126 = arith.constant dense<0.000000e+00> : vector<8x128xf32>
    %292 = tpu.matmul %257, %27, %cst_126 {dimension_numbers = #tpu.dot_dimension_numbers<[1], [0], [0], [1], [0, 0, 1, 1], [], []>} : vector<8x32xf32>, vector<32x128xf32>, vector<8x128xf32> -> vector<8x128xf32>
    %293 = arith.addf %291, %292 : vector<8x128xf32>
    %294 = vector.broadcast %29 : vector<1x128xf32> to vector<8x128xf32>
    %295 = arith.addf %293, %294 : vector<8x128xf32>
    %296 = vector.extract_strided_slice %295 {offsets = [0, 0], sizes = [8, 32], strides = [1, 1]} : vector<8x128xf32> to vector<8x32xf32>
    %297 = arith.negf %296 : vector<8x32xf32>
    %298 = math.exp %297 : vector<8x32xf32>
    %cst_127 = arith.constant 1.000000e+00 : f32
    %299 = vector.broadcast %cst_127 : f32 to vector<8x32xf32>
    %300 = arith.addf %299, %298 : vector<8x32xf32>
    %301 = arith.divf %299, %300 : vector<8x32xf32>
    %302 = vector.extract_strided_slice %295 {offsets = [0, 32], sizes = [8, 32], strides = [1, 1]} : vector<8x128xf32> to vector<8x32xf32>
    %303 = arith.negf %302 : vector<8x32xf32>
    %304 = math.exp %303 : vector<8x32xf32>
    %cst_128 = arith.constant 1.000000e+00 : f32
    %305 = vector.broadcast %cst_128 : f32 to vector<8x32xf32>
    %306 = arith.addf %305, %304 : vector<8x32xf32>
    %307 = arith.divf %305, %306 : vector<8x32xf32>
    %308 = vector.extract_strided_slice %295 {offsets = [0, 64], sizes = [8, 32], strides = [1, 1]} : vector<8x128xf32> to vector<8x32xf32>
    %309 = math.tanh %308 : vector<8x32xf32>
    %310 = vector.extract_strided_slice %295 {offsets = [0, 96], sizes = [8, 32], strides = [1, 1]} : vector<8x128xf32> to vector<8x32xf32>
    %311 = arith.negf %310 : vector<8x32xf32>
    %312 = math.exp %311 : vector<8x32xf32>
    %cst_129 = arith.constant 1.000000e+00 : f32
    %313 = vector.broadcast %cst_129 : f32 to vector<8x32xf32>
    %314 = arith.addf %313, %312 : vector<8x32xf32>
    %315 = arith.divf %313, %314 : vector<8x32xf32>
    %316 = arith.mulf %307, %219 : vector<8x32xf32>
    %317 = arith.mulf %301, %309 : vector<8x32xf32>
    %318 = arith.addf %316, %317 : vector<8x32xf32>
    %319 = math.tanh %318 : vector<8x32xf32>
    %320 = arith.mulf %315, %319 : vector<8x32xf32>
    %c0_130 = arith.constant 0 : index
    %321 = arith.index_cast %233 : i32 to index
    %c0_131 = arith.constant 0 : index
    %c0_132 = arith.constant 0 : index
    %322 = vector.load %arg20[%c0_130, %321, %c0_131, %c0_132] : memref<1x8x8x36xf32, #tpu.memory_space<vmem>>, vector<1x1x8x36xf32>
    %323 = vector.shape_cast %322 : vector<1x1x8x36xf32> to vector<8x36xf32>
    %324 = vector.shape_cast %288 : vector<8x36xf32> to vector<1x1x8x36xf32>
    tpu.vector_store %arg20[%c0_130, %321, %c0_131, %c0_132], %324 {strides = array<i32>} : memref<1x8x8x36xf32, #tpu.memory_space<vmem>>, vector<1x1x8x36xf32>,
    %cst_133 = arith.constant 1.000000e+00 : f32
    %325 = vector.broadcast %cst_133 : f32 to vector<8x36xf32>
    %326 = arith.subf %325, %239 : vector<8x36xf32>
    %327 = arith.mulf %326, %230 : vector<8x36xf32>
    %cst_134 = arith.constant 1.000000e+00 : f32
    %328 = vector.broadcast %cst_134 : f32 to vector<8x36xf32>
    %329 = arith.addf %328, %327 : vector<8x36xf32>
    %c3_i32 = arith.constant 3 : i32
    %c0_i32_135 = arith.constant 0 : i32
    %330 = arith.cmpi eq, %arg0, %c0_i32_135 : i32
    %c7_i32_136 = arith.constant 7 : i32
    %331 = arith.subi %c7_i32_136, %c3_i32 : i32
    %332 = arith.select %330, %c3_i32, %331 : i32
    %333 = arith.index_cast %332 : i32 to index
    %c0_137 = arith.constant 0 : index
    %c0_138 = arith.constant 0 : index
    %334 = vector.load %arg1[%333, %c0_137, %c0_138] : memref<8x8x36xf32, #tpu.memory_space<vmem>>, vector<1x8x36xf32>
    %335 = vector.shape_cast %334 : vector<1x8x36xf32> to vector<8x36xf32>
    %336 = arith.index_cast %332 : i32 to index
    %c0_139 = arith.constant 0 : index
    %c0_140 = arith.constant 0 : index
    %337 = vector.load %arg2[%336, %c0_139, %c0_140] : memref<8x8x36xf32, #tpu.memory_space<vmem>>, vector<1x8x36xf32>
    %338 = vector.shape_cast %337 : vector<1x8x36xf32> to vector<8x36xf32>
    %cst_141 = arith.constant dense<0.000000e+00> : vector<8x32xf32>
    %339 = tpu.matmul %329, %1, %cst_141 {dimension_numbers = #tpu.dot_dimension_numbers<[1], [0], [0], [1], [0, 0, 1, 1], [], []>} : vector<8x36xf32>, vector<36x32xf32>, vector<8x32xf32> -> vector<8x32xf32>
    %340 = vector.broadcast %3 : vector<1x32xf32> to vector<8x32xf32>
    %341 = arith.addf %339, %340 : vector<8x32xf32>
    %cst_142 = arith.constant 0.000000e+00 : f32
    %342 = vector.broadcast %cst_142 : f32 to vector<8x32xf32>
    %343 = arith.maximumf %341, %342 : vector<8x32xf32>
    %cst_143 = arith.constant 0.000000e+00 : f32
    %344 = vector.broadcast %cst_143 : f32 to vector<8x32xf32>
    %345 = arith.subf %344, %343 : vector<8x32xf32>
    %346 = math.exp %345 : vector<8x32xf32>
    %347 = vector.broadcast %5 : vector<1x36xf32> to vector<8x36xf32>
    %348 = arith.mulf %329, %347 : vector<8x36xf32>
    %349 = vector.broadcast %7 : vector<1x36xf32> to vector<8x36xf32>
    %350 = arith.addf %348, %349 : vector<8x36xf32>
    %cst_144 = arith.constant 0.000000e+00 : f32
    %351 = vector.broadcast %cst_144 : f32 to vector<8x36xf32>
    %352 = arith.maximumf %350, %351 : vector<8x36xf32>
    %cst_145 = arith.constant 0.000000e+00 : f32
    %353 = vector.broadcast %cst_145 : f32 to vector<8x36xf32>
    %354 = arith.subf %353, %352 : vector<8x36xf32>
    %355 = math.exp %354 : vector<8x36xf32>
    %356 = arith.mulf %320, %346 : vector<8x32xf32>
    %cst_146 = arith.constant dense<0.000000e+00> : vector<8x36xf32>
    %357 = tpu.matmul %356, %9, %cst_146 {dimension_numbers = #tpu.dot_dimension_numbers<[1], [0], [0], [1], [0, 0, 1, 1], [], []>} : vector<8x32xf32>, vector<32x36xf32>, vector<8x36xf32> -> vector<8x36xf32>
    %358 = vector.broadcast %11 : vector<1x36xf32> to vector<8x36xf32>
    %359 = arith.addf %357, %358 : vector<8x36xf32>
    %360 = arith.mulf %338, %335 : vector<8x36xf32>
    %cst_147 = arith.constant 1.000000e+00 : f32
    %361 = vector.broadcast %cst_147 : f32 to vector<8x36xf32>
    %362 = arith.subf %361, %338 : vector<8x36xf32>
    %363 = arith.mulf %362, %359 : vector<8x36xf32>
    %364 = arith.addf %360, %363 : vector<8x36xf32>
    %cst_148 = arith.constant dense<0.000000e+00> : vector<8x36xf32>
    %365 = tpu.matmul %364, %13, %cst_148 {dimension_numbers = #tpu.dot_dimension_numbers<[1], [0], [0], [1], [0, 0, 1, 1], [], []>} : vector<8x36xf32>, vector<36x36xf32>, vector<8x36xf32> -> vector<8x36xf32>
    %366 = vector.broadcast %15 : vector<1x36xf32> to vector<8x36xf32>
    %367 = arith.addf %365, %366 : vector<8x36xf32>
    %cst_149 = arith.constant dense<0.000000e+00> : vector<8x36xf32>
    %368 = tpu.matmul %355, %17, %cst_149 {dimension_numbers = #tpu.dot_dimension_numbers<[1], [0], [0], [1], [0, 0, 1, 1], [], []>} : vector<8x36xf32>, vector<36x36xf32>, vector<8x36xf32> -> vector<8x36xf32>
    %cst_150 = arith.constant dense<0.000000e+00> : vector<8x36xf32>
    %369 = tpu.matmul %338, %19, %cst_150 {dimension_numbers = #tpu.dot_dimension_numbers<[1], [0], [0], [1], [0, 0, 1, 1], [], []>} : vector<8x36xf32>, vector<36x36xf32>, vector<8x36xf32> -> vector<8x36xf32>
    %370 = arith.addf %368, %369 : vector<8x36xf32>
    %371 = vector.broadcast %21 : vector<1x36xf32> to vector<8x36xf32>
    %372 = arith.addf %370, %371 : vector<8x36xf32>
    %373 = arith.negf %372 : vector<8x36xf32>
    %374 = math.exp %373 : vector<8x36xf32>
    %cst_151 = arith.constant 1.000000e+00 : f32
    %375 = vector.broadcast %cst_151 : f32 to vector<8x36xf32>
    %376 = arith.addf %375, %374 : vector<8x36xf32>
    %377 = arith.divf %375, %376 : vector<8x36xf32>
    %378 = arith.mulf %377, %367 : vector<8x36xf32>
    %cst_152 = arith.constant 1.000000e+00 : f32
    %379 = vector.broadcast %cst_152 : f32 to vector<8x36xf32>
    %380 = arith.subf %379, %377 : vector<8x36xf32>
    %381 = arith.mulf %380, %359 : vector<8x36xf32>
    %382 = arith.addf %378, %381 : vector<8x36xf32>
    %383 = arith.mulf %338, %335 : vector<8x36xf32>
    %cst_153 = arith.constant 1.000000e+00 : f32
    %384 = vector.broadcast %cst_153 : f32 to vector<8x36xf32>
    %385 = arith.subf %384, %338 : vector<8x36xf32>
    %386 = arith.mulf %385, %382 : vector<8x36xf32>
    %387 = arith.addf %383, %386 : vector<8x36xf32>
    %cst_154 = arith.constant dense<0.000000e+00> : vector<8x128xf32>
    %388 = tpu.matmul %387, %23, %cst_154 {dimension_numbers = #tpu.dot_dimension_numbers<[1], [0], [0], [1], [0, 0, 1, 1], [], []>} : vector<8x36xf32>, vector<36x128xf32>, vector<8x128xf32> -> vector<8x128xf32>
    %cst_155 = arith.constant dense<0.000000e+00> : vector<8x128xf32>
    %389 = tpu.matmul %338, %25, %cst_155 {dimension_numbers = #tpu.dot_dimension_numbers<[1], [0], [0], [1], [0, 0, 1, 1], [], []>} : vector<8x36xf32>, vector<36x128xf32>, vector<8x128xf32> -> vector<8x128xf32>
    %390 = arith.addf %388, %389 : vector<8x128xf32>
    %cst_156 = arith.constant dense<0.000000e+00> : vector<8x128xf32>
    %391 = tpu.matmul %356, %27, %cst_156 {dimension_numbers = #tpu.dot_dimension_numbers<[1], [0], [0], [1], [0, 0, 1, 1], [], []>} : vector<8x32xf32>, vector<32x128xf32>, vector<8x128xf32> -> vector<8x128xf32>
    %392 = arith.addf %390, %391 : vector<8x128xf32>
    %393 = vector.broadcast %29 : vector<1x128xf32> to vector<8x128xf32>
    %394 = arith.addf %392, %393 : vector<8x128xf32>
    %395 = vector.extract_strided_slice %394 {offsets = [0, 0], sizes = [8, 32], strides = [1, 1]} : vector<8x128xf32> to vector<8x32xf32>
    %396 = arith.negf %395 : vector<8x32xf32>
    %397 = math.exp %396 : vector<8x32xf32>
    %cst_157 = arith.constant 1.000000e+00 : f32
    %398 = vector.broadcast %cst_157 : f32 to vector<8x32xf32>
    %399 = arith.addf %398, %397 : vector<8x32xf32>
    %400 = arith.divf %398, %399 : vector<8x32xf32>
    %401 = vector.extract_strided_slice %394 {offsets = [0, 32], sizes = [8, 32], strides = [1, 1]} : vector<8x128xf32> to vector<8x32xf32>
    %402 = arith.negf %401 : vector<8x32xf32>
    %403 = math.exp %402 : vector<8x32xf32>
    %cst_158 = arith.constant 1.000000e+00 : f32
    %404 = vector.broadcast %cst_158 : f32 to vector<8x32xf32>
    %405 = arith.addf %404, %403 : vector<8x32xf32>
    %406 = arith.divf %404, %405 : vector<8x32xf32>
    %407 = vector.extract_strided_slice %394 {offsets = [0, 64], sizes = [8, 32], strides = [1, 1]} : vector<8x128xf32> to vector<8x32xf32>
    %408 = math.tanh %407 : vector<8x32xf32>
    %409 = vector.extract_strided_slice %394 {offsets = [0, 96], sizes = [8, 32], strides = [1, 1]} : vector<8x128xf32> to vector<8x32xf32>
    %410 = arith.negf %409 : vector<8x32xf32>
    %411 = math.exp %410 : vector<8x32xf32>
    %cst_159 = arith.constant 1.000000e+00 : f32
    %412 = vector.broadcast %cst_159 : f32 to vector<8x32xf32>
    %413 = arith.addf %412, %411 : vector<8x32xf32>
    %414 = arith.divf %412, %413 : vector<8x32xf32>
    %415 = arith.mulf %406, %318 : vector<8x32xf32>
    %416 = arith.mulf %400, %408 : vector<8x32xf32>
    %417 = arith.addf %415, %416 : vector<8x32xf32>
    %418 = math.tanh %417 : vector<8x32xf32>
    %419 = arith.mulf %414, %418 : vector<8x32xf32>
    %c0_160 = arith.constant 0 : index
    %420 = arith.index_cast %332 : i32 to index
    %c0_161 = arith.constant 0 : index
    %c0_162 = arith.constant 0 : index
    %421 = vector.load %arg20[%c0_160, %420, %c0_161, %c0_162] : memref<1x8x8x36xf32, #tpu.memory_space<vmem>>, vector<1x1x8x36xf32>
    %422 = vector.shape_cast %421 : vector<1x1x8x36xf32> to vector<8x36xf32>
    %423 = vector.shape_cast %387 : vector<8x36xf32> to vector<1x1x8x36xf32>
    tpu.vector_store %arg20[%c0_160, %420, %c0_161, %c0_162], %423 {strides = array<i32>} : memref<1x8x8x36xf32, #tpu.memory_space<vmem>>, vector<1x1x8x36xf32>,
    %cst_163 = arith.constant 1.000000e+00 : f32
    %424 = vector.broadcast %cst_163 : f32 to vector<8x36xf32>
    %425 = arith.subf %424, %338 : vector<8x36xf32>
    %426 = arith.mulf %425, %329 : vector<8x36xf32>
    %cst_164 = arith.constant 1.000000e+00 : f32
    %427 = vector.broadcast %cst_164 : f32 to vector<8x36xf32>
    %428 = arith.addf %427, %426 : vector<8x36xf32>
    %c4_i32 = arith.constant 4 : i32
    %c0_i32_165 = arith.constant 0 : i32
    %429 = arith.cmpi eq, %arg0, %c0_i32_165 : i32
    %c7_i32_166 = arith.constant 7 : i32
    %430 = arith.subi %c7_i32_166, %c4_i32 : i32
    %431 = arith.select %429, %c4_i32, %430 : i32
    %432 = arith.index_cast %431 : i32 to index
    %c0_167 = arith.constant 0 : index
    %c0_168 = arith.constant 0 : index
    %433 = vector.load %arg1[%432, %c0_167, %c0_168] : memref<8x8x36xf32, #tpu.memory_space<vmem>>, vector<1x8x36xf32>
    %434 = vector.shape_cast %433 : vector<1x8x36xf32> to vector<8x36xf32>
    %435 = arith.index_cast %431 : i32 to index
    %c0_169 = arith.constant 0 : index
    %c0_170 = arith.constant 0 : index
    %436 = vector.load %arg2[%435, %c0_169, %c0_170] : memref<8x8x36xf32, #tpu.memory_space<vmem>>, vector<1x8x36xf32>
    %437 = vector.shape_cast %436 : vector<1x8x36xf32> to vector<8x36xf32>
    %cst_171 = arith.constant dense<0.000000e+00> : vector<8x32xf32>
    %438 = tpu.matmul %428, %1, %cst_171 {dimension_numbers = #tpu.dot_dimension_numbers<[1], [0], [0], [1], [0, 0, 1, 1], [], []>} : vector<8x36xf32>, vector<36x32xf32>, vector<8x32xf32> -> vector<8x32xf32>
    %439 = vector.broadcast %3 : vector<1x32xf32> to vector<8x32xf32>
    %440 = arith.addf %438, %439 : vector<8x32xf32>
    %cst_172 = arith.constant 0.000000e+00 : f32
    %441 = vector.broadcast %cst_172 : f32 to vector<8x32xf32>
    %442 = arith.maximumf %440, %441 : vector<8x32xf32>
    %cst_173 = arith.constant 0.000000e+00 : f32
    %443 = vector.broadcast %cst_173 : f32 to vector<8x32xf32>
    %444 = arith.subf %443, %442 : vector<8x32xf32>
    %445 = math.exp %444 : vector<8x32xf32>
    %446 = vector.broadcast %5 : vector<1x36xf32> to vector<8x36xf32>
    %447 = arith.mulf %428, %446 : vector<8x36xf32>
    %448 = vector.broadcast %7 : vector<1x36xf32> to vector<8x36xf32>
    %449 = arith.addf %447, %448 : vector<8x36xf32>
    %cst_174 = arith.constant 0.000000e+00 : f32
    %450 = vector.broadcast %cst_174 : f32 to vector<8x36xf32>
    %451 = arith.maximumf %449, %450 : vector<8x36xf32>
    %cst_175 = arith.constant 0.000000e+00 : f32
    %452 = vector.broadcast %cst_175 : f32 to vector<8x36xf32>
    %453 = arith.subf %452, %451 : vector<8x36xf32>
    %454 = math.exp %453 : vector<8x36xf32>
    %455 = arith.mulf %419, %445 : vector<8x32xf32>
    %cst_176 = arith.constant dense<0.000000e+00> : vector<8x36xf32>
    %456 = tpu.matmul %455, %9, %cst_176 {dimension_numbers = #tpu.dot_dimension_numbers<[1], [0], [0], [1], [0, 0, 1, 1], [], []>} : vector<8x32xf32>, vector<32x36xf32>, vector<8x36xf32> -> vector<8x36xf32>
    %457 = vector.broadcast %11 : vector<1x36xf32> to vector<8x36xf32>
    %458 = arith.addf %456, %457 : vector<8x36xf32>
    %459 = arith.mulf %437, %434 : vector<8x36xf32>
    %cst_177 = arith.constant 1.000000e+00 : f32
    %460 = vector.broadcast %cst_177 : f32 to vector<8x36xf32>
    %461 = arith.subf %460, %437 : vector<8x36xf32>
    %462 = arith.mulf %461, %458 : vector<8x36xf32>
    %463 = arith.addf %459, %462 : vector<8x36xf32>
    %cst_178 = arith.constant dense<0.000000e+00> : vector<8x36xf32>
    %464 = tpu.matmul %463, %13, %cst_178 {dimension_numbers = #tpu.dot_dimension_numbers<[1], [0], [0], [1], [0, 0, 1, 1], [], []>} : vector<8x36xf32>, vector<36x36xf32>, vector<8x36xf32> -> vector<8x36xf32>
    %465 = vector.broadcast %15 : vector<1x36xf32> to vector<8x36xf32>
    %466 = arith.addf %464, %465 : vector<8x36xf32>
    %cst_179 = arith.constant dense<0.000000e+00> : vector<8x36xf32>
    %467 = tpu.matmul %454, %17, %cst_179 {dimension_numbers = #tpu.dot_dimension_numbers<[1], [0], [0], [1], [0, 0, 1, 1], [], []>} : vector<8x36xf32>, vector<36x36xf32>, vector<8x36xf32> -> vector<8x36xf32>
    %cst_180 = arith.constant dense<0.000000e+00> : vector<8x36xf32>
    %468 = tpu.matmul %437, %19, %cst_180 {dimension_numbers = #tpu.dot_dimension_numbers<[1], [0], [0], [1], [0, 0, 1, 1], [], []>} : vector<8x36xf32>, vector<36x36xf32>, vector<8x36xf32> -> vector<8x36xf32>
    %469 = arith.addf %467, %468 : vector<8x36xf32>
    %470 = vector.broadcast %21 : vector<1x36xf32> to vector<8x36xf32>
    %471 = arith.addf %469, %470 : vector<8x36xf32>
    %472 = arith.negf %471 : vector<8x36xf32>
    %473 = math.exp %472 : vector<8x36xf32>
    %cst_181 = arith.constant 1.000000e+00 : f32
    %474 = vector.broadcast %cst_181 : f32 to vector<8x36xf32>
    %475 = arith.addf %474, %473 : vector<8x36xf32>
    %476 = arith.divf %474, %475 : vector<8x36xf32>
    %477 = arith.mulf %476, %466 : vector<8x36xf32>
    %cst_182 = arith.constant 1.000000e+00 : f32
    %478 = vector.broadcast %cst_182 : f32 to vector<8x36xf32>
    %479 = arith.subf %478, %476 : vector<8x36xf32>
    %480 = arith.mulf %479, %458 : vector<8x36xf32>
    %481 = arith.addf %477, %480 : vector<8x36xf32>
    %482 = arith.mulf %437, %434 : vector<8x36xf32>
    %cst_183 = arith.constant 1.000000e+00 : f32
    %483 = vector.broadcast %cst_183 : f32 to vector<8x36xf32>
    %484 = arith.subf %483, %437 : vector<8x36xf32>
    %485 = arith.mulf %484, %481 : vector<8x36xf32>
    %486 = arith.addf %482, %485 : vector<8x36xf32>
    %cst_184 = arith.constant dense<0.000000e+00> : vector<8x128xf32>
    %487 = tpu.matmul %486, %23, %cst_184 {dimension_numbers = #tpu.dot_dimension_numbers<[1], [0], [0], [1], [0, 0, 1, 1], [], []>} : vector<8x36xf32>, vector<36x128xf32>, vector<8x128xf32> -> vector<8x128xf32>
    %cst_185 = arith.constant dense<0.000000e+00> : vector<8x128xf32>
    %488 = tpu.matmul %437, %25, %cst_185 {dimension_numbers = #tpu.dot_dimension_numbers<[1], [0], [0], [1], [0, 0, 1, 1], [], []>} : vector<8x36xf32>, vector<36x128xf32>, vector<8x128xf32> -> vector<8x128xf32>
    %489 = arith.addf %487, %488 : vector<8x128xf32>
    %cst_186 = arith.constant dense<0.000000e+00> : vector<8x128xf32>
    %490 = tpu.matmul %455, %27, %cst_186 {dimension_numbers = #tpu.dot_dimension_numbers<[1], [0], [0], [1], [0, 0, 1, 1], [], []>} : vector<8x32xf32>, vector<32x128xf32>, vector<8x128xf32> -> vector<8x128xf32>
    %491 = arith.addf %489, %490 : vector<8x128xf32>
    %492 = vector.broadcast %29 : vector<1x128xf32> to vector<8x128xf32>
    %493 = arith.addf %491, %492 : vector<8x128xf32>
    %494 = vector.extract_strided_slice %493 {offsets = [0, 0], sizes = [8, 32], strides = [1, 1]} : vector<8x128xf32> to vector<8x32xf32>
    %495 = arith.negf %494 : vector<8x32xf32>
    %496 = math.exp %495 : vector<8x32xf32>
    %cst_187 = arith.constant 1.000000e+00 : f32
    %497 = vector.broadcast %cst_187 : f32 to vector<8x32xf32>
    %498 = arith.addf %497, %496 : vector<8x32xf32>
    %499 = arith.divf %497, %498 : vector<8x32xf32>
    %500 = vector.extract_strided_slice %493 {offsets = [0, 32], sizes = [8, 32], strides = [1, 1]} : vector<8x128xf32> to vector<8x32xf32>
    %501 = arith.negf %500 : vector<8x32xf32>
    %502 = math.exp %501 : vector<8x32xf32>
    %cst_188 = arith.constant 1.000000e+00 : f32
    %503 = vector.broadcast %cst_188 : f32 to vector<8x32xf32>
    %504 = arith.addf %503, %502 : vector<8x32xf32>
    %505 = arith.divf %503, %504 : vector<8x32xf32>
    %506 = vector.extract_strided_slice %493 {offsets = [0, 64], sizes = [8, 32], strides = [1, 1]} : vector<8x128xf32> to vector<8x32xf32>
    %507 = math.tanh %506 : vector<8x32xf32>
    %508 = vector.extract_strided_slice %493 {offsets = [0, 96], sizes = [8, 32], strides = [1, 1]} : vector<8x128xf32> to vector<8x32xf32>
    %509 = arith.negf %508 : vector<8x32xf32>
    %510 = math.exp %509 : vector<8x32xf32>
    %cst_189 = arith.constant 1.000000e+00 : f32
    %511 = vector.broadcast %cst_189 : f32 to vector<8x32xf32>
    %512 = arith.addf %511, %510 : vector<8x32xf32>
    %513 = arith.divf %511, %512 : vector<8x32xf32>
    %514 = arith.mulf %505, %417 : vector<8x32xf32>
    %515 = arith.mulf %499, %507 : vector<8x32xf32>
    %516 = arith.addf %514, %515 : vector<8x32xf32>
    %517 = math.tanh %516 : vector<8x32xf32>
    %518 = arith.mulf %513, %517 : vector<8x32xf32>
    %c0_190 = arith.constant 0 : index
    %519 = arith.index_cast %431 : i32 to index
    %c0_191 = arith.constant 0 : index
    %c0_192 = arith.constant 0 : index
    %520 = vector.load %arg20[%c0_190, %519, %c0_191, %c0_192] : memref<1x8x8x36xf32, #tpu.memory_space<vmem>>, vector<1x1x8x36xf32>
    %521 = vector.shape_cast %520 : vector<1x1x8x36xf32> to vector<8x36xf32>
    %522 = vector.shape_cast %486 : vector<8x36xf32> to vector<1x1x8x36xf32>
    tpu.vector_store %arg20[%c0_190, %519, %c0_191, %c0_192], %522 {strides = array<i32>} : memref<1x8x8x36xf32, #tpu.memory_space<vmem>>, vector<1x1x8x36xf32>,
    %cst_193 = arith.constant 1.000000e+00 : f32
    %523 = vector.broadcast %cst_193 : f32 to vector<8x36xf32>
    %524 = arith.subf %523, %437 : vector<8x36xf32>
    %525 = arith.mulf %524, %428 : vector<8x36xf32>
    %cst_194 = arith.constant 1.000000e+00 : f32
    %526 = vector.broadcast %cst_194 : f32 to vector<8x36xf32>
    %527 = arith.addf %526, %525 : vector<8x36xf32>
    %c5_i32 = arith.constant 5 : i32
    %c0_i32_195 = arith.constant 0 : i32
    %528 = arith.cmpi eq, %arg0, %c0_i32_195 : i32
    %c7_i32_196 = arith.constant 7 : i32
    %529 = arith.subi %c7_i32_196, %c5_i32 : i32
    %530 = arith.select %528, %c5_i32, %529 : i32
    %531 = arith.index_cast %530 : i32 to index
    %c0_197 = arith.constant 0 : index
    %c0_198 = arith.constant 0 : index
    %532 = vector.load %arg1[%531, %c0_197, %c0_198] : memref<8x8x36xf32, #tpu.memory_space<vmem>>, vector<1x8x36xf32>
    %533 = vector.shape_cast %532 : vector<1x8x36xf32> to vector<8x36xf32>
    %534 = arith.index_cast %530 : i32 to index
    %c0_199 = arith.constant 0 : index
    %c0_200 = arith.constant 0 : index
    %535 = vector.load %arg2[%534, %c0_199, %c0_200] : memref<8x8x36xf32, #tpu.memory_space<vmem>>, vector<1x8x36xf32>
    %536 = vector.shape_cast %535 : vector<1x8x36xf32> to vector<8x36xf32>
    %cst_201 = arith.constant dense<0.000000e+00> : vector<8x32xf32>
    %537 = tpu.matmul %527, %1, %cst_201 {dimension_numbers = #tpu.dot_dimension_numbers<[1], [0], [0], [1], [0, 0, 1, 1], [], []>} : vector<8x36xf32>, vector<36x32xf32>, vector<8x32xf32> -> vector<8x32xf32>
    %538 = vector.broadcast %3 : vector<1x32xf32> to vector<8x32xf32>
    %539 = arith.addf %537, %538 : vector<8x32xf32>
    %cst_202 = arith.constant 0.000000e+00 : f32
    %540 = vector.broadcast %cst_202 : f32 to vector<8x32xf32>
    %541 = arith.maximumf %539, %540 : vector<8x32xf32>
    %cst_203 = arith.constant 0.000000e+00 : f32
    %542 = vector.broadcast %cst_203 : f32 to vector<8x32xf32>
    %543 = arith.subf %542, %541 : vector<8x32xf32>
    %544 = math.exp %543 : vector<8x32xf32>
    %545 = vector.broadcast %5 : vector<1x36xf32> to vector<8x36xf32>
    %546 = arith.mulf %527, %545 : vector<8x36xf32>
    %547 = vector.broadcast %7 : vector<1x36xf32> to vector<8x36xf32>
    %548 = arith.addf %546, %547 : vector<8x36xf32>
    %cst_204 = arith.constant 0.000000e+00 : f32
    %549 = vector.broadcast %cst_204 : f32 to vector<8x36xf32>
    %550 = arith.maximumf %548, %549 : vector<8x36xf32>
    %cst_205 = arith.constant 0.000000e+00 : f32
    %551 = vector.broadcast %cst_205 : f32 to vector<8x36xf32>
    %552 = arith.subf %551, %550 : vector<8x36xf32>
    %553 = math.exp %552 : vector<8x36xf32>
    %554 = arith.mulf %518, %544 : vector<8x32xf32>
    %cst_206 = arith.constant dense<0.000000e+00> : vector<8x36xf32>
    %555 = tpu.matmul %554, %9, %cst_206 {dimension_numbers = #tpu.dot_dimension_numbers<[1], [0], [0], [1], [0, 0, 1, 1], [], []>} : vector<8x32xf32>, vector<32x36xf32>, vector<8x36xf32> -> vector<8x36xf32>
    %556 = vector.broadcast %11 : vector<1x36xf32> to vector<8x36xf32>
    %557 = arith.addf %555, %556 : vector<8x36xf32>
    %558 = arith.mulf %536, %533 : vector<8x36xf32>
    %cst_207 = arith.constant 1.000000e+00 : f32
    %559 = vector.broadcast %cst_207 : f32 to vector<8x36xf32>
    %560 = arith.subf %559, %536 : vector<8x36xf32>
    %561 = arith.mulf %560, %557 : vector<8x36xf32>
    %562 = arith.addf %558, %561 : vector<8x36xf32>
    %cst_208 = arith.constant dense<0.000000e+00> : vector<8x36xf32>
    %563 = tpu.matmul %562, %13, %cst_208 {dimension_numbers = #tpu.dot_dimension_numbers<[1], [0], [0], [1], [0, 0, 1, 1], [], []>} : vector<8x36xf32>, vector<36x36xf32>, vector<8x36xf32> -> vector<8x36xf32>
    %564 = vector.broadcast %15 : vector<1x36xf32> to vector<8x36xf32>
    %565 = arith.addf %563, %564 : vector<8x36xf32>
    %cst_209 = arith.constant dense<0.000000e+00> : vector<8x36xf32>
    %566 = tpu.matmul %553, %17, %cst_209 {dimension_numbers = #tpu.dot_dimension_numbers<[1], [0], [0], [1], [0, 0, 1, 1], [], []>} : vector<8x36xf32>, vector<36x36xf32>, vector<8x36xf32> -> vector<8x36xf32>
    %cst_210 = arith.constant dense<0.000000e+00> : vector<8x36xf32>
    %567 = tpu.matmul %536, %19, %cst_210 {dimension_numbers = #tpu.dot_dimension_numbers<[1], [0], [0], [1], [0, 0, 1, 1], [], []>} : vector<8x36xf32>, vector<36x36xf32>, vector<8x36xf32> -> vector<8x36xf32>
    %568 = arith.addf %566, %567 : vector<8x36xf32>
    %569 = vector.broadcast %21 : vector<1x36xf32> to vector<8x36xf32>
    %570 = arith.addf %568, %569 : vector<8x36xf32>
    %571 = arith.negf %570 : vector<8x36xf32>
    %572 = math.exp %571 : vector<8x36xf32>
    %cst_211 = arith.constant 1.000000e+00 : f32
    %573 = vector.broadcast %cst_211 : f32 to vector<8x36xf32>
    %574 = arith.addf %573, %572 : vector<8x36xf32>
    %575 = arith.divf %573, %574 : vector<8x36xf32>
    %576 = arith.mulf %575, %565 : vector<8x36xf32>
    %cst_212 = arith.constant 1.000000e+00 : f32
    %577 = vector.broadcast %cst_212 : f32 to vector<8x36xf32>
    %578 = arith.subf %577, %575 : vector<8x36xf32>
    %579 = arith.mulf %578, %557 : vector<8x36xf32>
    %580 = arith.addf %576, %579 : vector<8x36xf32>
    %581 = arith.mulf %536, %533 : vector<8x36xf32>
    %cst_213 = arith.constant 1.000000e+00 : f32
    %582 = vector.broadcast %cst_213 : f32 to vector<8x36xf32>
    %583 = arith.subf %582, %536 : vector<8x36xf32>
    %584 = arith.mulf %583, %580 : vector<8x36xf32>
    %585 = arith.addf %581, %584 : vector<8x36xf32>
    %cst_214 = arith.constant dense<0.000000e+00> : vector<8x128xf32>
    %586 = tpu.matmul %585, %23, %cst_214 {dimension_numbers = #tpu.dot_dimension_numbers<[1], [0], [0], [1], [0, 0, 1, 1], [], []>} : vector<8x36xf32>, vector<36x128xf32>, vector<8x128xf32> -> vector<8x128xf32>
    %cst_215 = arith.constant dense<0.000000e+00> : vector<8x128xf32>
    %587 = tpu.matmul %536, %25, %cst_215 {dimension_numbers = #tpu.dot_dimension_numbers<[1], [0], [0], [1], [0, 0, 1, 1], [], []>} : vector<8x36xf32>, vector<36x128xf32>, vector<8x128xf32> -> vector<8x128xf32>
    %588 = arith.addf %586, %587 : vector<8x128xf32>
    %cst_216 = arith.constant dense<0.000000e+00> : vector<8x128xf32>
    %589 = tpu.matmul %554, %27, %cst_216 {dimension_numbers = #tpu.dot_dimension_numbers<[1], [0], [0], [1], [0, 0, 1, 1], [], []>} : vector<8x32xf32>, vector<32x128xf32>, vector<8x128xf32> -> vector<8x128xf32>
    %590 = arith.addf %588, %589 : vector<8x128xf32>
    %591 = vector.broadcast %29 : vector<1x128xf32> to vector<8x128xf32>
    %592 = arith.addf %590, %591 : vector<8x128xf32>
    %593 = vector.extract_strided_slice %592 {offsets = [0, 0], sizes = [8, 32], strides = [1, 1]} : vector<8x128xf32> to vector<8x32xf32>
    %594 = arith.negf %593 : vector<8x32xf32>
    %595 = math.exp %594 : vector<8x32xf32>
    %cst_217 = arith.constant 1.000000e+00 : f32
    %596 = vector.broadcast %cst_217 : f32 to vector<8x32xf32>
    %597 = arith.addf %596, %595 : vector<8x32xf32>
    %598 = arith.divf %596, %597 : vector<8x32xf32>
    %599 = vector.extract_strided_slice %592 {offsets = [0, 32], sizes = [8, 32], strides = [1, 1]} : vector<8x128xf32> to vector<8x32xf32>
    %600 = arith.negf %599 : vector<8x32xf32>
    %601 = math.exp %600 : vector<8x32xf32>
    %cst_218 = arith.constant 1.000000e+00 : f32
    %602 = vector.broadcast %cst_218 : f32 to vector<8x32xf32>
    %603 = arith.addf %602, %601 : vector<8x32xf32>
    %604 = arith.divf %602, %603 : vector<8x32xf32>
    %605 = vector.extract_strided_slice %592 {offsets = [0, 64], sizes = [8, 32], strides = [1, 1]} : vector<8x128xf32> to vector<8x32xf32>
    %606 = math.tanh %605 : vector<8x32xf32>
    %607 = vector.extract_strided_slice %592 {offsets = [0, 96], sizes = [8, 32], strides = [1, 1]} : vector<8x128xf32> to vector<8x32xf32>
    %608 = arith.negf %607 : vector<8x32xf32>
    %609 = math.exp %608 : vector<8x32xf32>
    %cst_219 = arith.constant 1.000000e+00 : f32
    %610 = vector.broadcast %cst_219 : f32 to vector<8x32xf32>
    %611 = arith.addf %610, %609 : vector<8x32xf32>
    %612 = arith.divf %610, %611 : vector<8x32xf32>
    %613 = arith.mulf %604, %516 : vector<8x32xf32>
    %614 = arith.mulf %598, %606 : vector<8x32xf32>
    %615 = arith.addf %613, %614 : vector<8x32xf32>
    %616 = math.tanh %615 : vector<8x32xf32>
    %617 = arith.mulf %612, %616 : vector<8x32xf32>
    %c0_220 = arith.constant 0 : index
    %618 = arith.index_cast %530 : i32 to index
    %c0_221 = arith.constant 0 : index
    %c0_222 = arith.constant 0 : index
    %619 = vector.load %arg20[%c0_220, %618, %c0_221, %c0_222] : memref<1x8x8x36xf32, #tpu.memory_space<vmem>>, vector<1x1x8x36xf32>
    %620 = vector.shape_cast %619 : vector<1x1x8x36xf32> to vector<8x36xf32>
    %621 = vector.shape_cast %585 : vector<8x36xf32> to vector<1x1x8x36xf32>
    tpu.vector_store %arg20[%c0_220, %618, %c0_221, %c0_222], %621 {strides = array<i32>} : memref<1x8x8x36xf32, #tpu.memory_space<vmem>>, vector<1x1x8x36xf32>,
    %cst_223 = arith.constant 1.000000e+00 : f32
    %622 = vector.broadcast %cst_223 : f32 to vector<8x36xf32>
    %623 = arith.subf %622, %536 : vector<8x36xf32>
    %624 = arith.mulf %623, %527 : vector<8x36xf32>
    %cst_224 = arith.constant 1.000000e+00 : f32
    %625 = vector.broadcast %cst_224 : f32 to vector<8x36xf32>
    %626 = arith.addf %625, %624 : vector<8x36xf32>
    %c6_i32 = arith.constant 6 : i32
    %c0_i32_225 = arith.constant 0 : i32
    %627 = arith.cmpi eq, %arg0, %c0_i32_225 : i32
    %c7_i32_226 = arith.constant 7 : i32
    %628 = arith.subi %c7_i32_226, %c6_i32 : i32
    %629 = arith.select %627, %c6_i32, %628 : i32
    %630 = arith.index_cast %629 : i32 to index
    %c0_227 = arith.constant 0 : index
    %c0_228 = arith.constant 0 : index
    %631 = vector.load %arg1[%630, %c0_227, %c0_228] : memref<8x8x36xf32, #tpu.memory_space<vmem>>, vector<1x8x36xf32>
    %632 = vector.shape_cast %631 : vector<1x8x36xf32> to vector<8x36xf32>
    %633 = arith.index_cast %629 : i32 to index
    %c0_229 = arith.constant 0 : index
    %c0_230 = arith.constant 0 : index
    %634 = vector.load %arg2[%633, %c0_229, %c0_230] : memref<8x8x36xf32, #tpu.memory_space<vmem>>, vector<1x8x36xf32>
    %635 = vector.shape_cast %634 : vector<1x8x36xf32> to vector<8x36xf32>
    %cst_231 = arith.constant dense<0.000000e+00> : vector<8x32xf32>
    %636 = tpu.matmul %626, %1, %cst_231 {dimension_numbers = #tpu.dot_dimension_numbers<[1], [0], [0], [1], [0, 0, 1, 1], [], []>} : vector<8x36xf32>, vector<36x32xf32>, vector<8x32xf32> -> vector<8x32xf32>
    %637 = vector.broadcast %3 : vector<1x32xf32> to vector<8x32xf32>
    %638 = arith.addf %636, %637 : vector<8x32xf32>
    %cst_232 = arith.constant 0.000000e+00 : f32
    %639 = vector.broadcast %cst_232 : f32 to vector<8x32xf32>
    %640 = arith.maximumf %638, %639 : vector<8x32xf32>
    %cst_233 = arith.constant 0.000000e+00 : f32
    %641 = vector.broadcast %cst_233 : f32 to vector<8x32xf32>
    %642 = arith.subf %641, %640 : vector<8x32xf32>
    %643 = math.exp %642 : vector<8x32xf32>
    %644 = vector.broadcast %5 : vector<1x36xf32> to vector<8x36xf32>
    %645 = arith.mulf %626, %644 : vector<8x36xf32>
    %646 = vector.broadcast %7 : vector<1x36xf32> to vector<8x36xf32>
    %647 = arith.addf %645, %646 : vector<8x36xf32>
    %cst_234 = arith.constant 0.000000e+00 : f32
    %648 = vector.broadcast %cst_234 : f32 to vector<8x36xf32>
    %649 = arith.maximumf %647, %648 : vector<8x36xf32>
    %cst_235 = arith.constant 0.000000e+00 : f32
    %650 = vector.broadcast %cst_235 : f32 to vector<8x36xf32>
    %651 = arith.subf %650, %649 : vector<8x36xf32>
    %652 = math.exp %651 : vector<8x36xf32>
    %653 = arith.mulf %617, %643 : vector<8x32xf32>
    %cst_236 = arith.constant dense<0.000000e+00> : vector<8x36xf32>
    %654 = tpu.matmul %653, %9, %cst_236 {dimension_numbers = #tpu.dot_dimension_numbers<[1], [0], [0], [1], [0, 0, 1, 1], [], []>} : vector<8x32xf32>, vector<32x36xf32>, vector<8x36xf32> -> vector<8x36xf32>
    %655 = vector.broadcast %11 : vector<1x36xf32> to vector<8x36xf32>
    %656 = arith.addf %654, %655 : vector<8x36xf32>
    %657 = arith.mulf %635, %632 : vector<8x36xf32>
    %cst_237 = arith.constant 1.000000e+00 : f32
    %658 = vector.broadcast %cst_237 : f32 to vector<8x36xf32>
    %659 = arith.subf %658, %635 : vector<8x36xf32>
    %660 = arith.mulf %659, %656 : vector<8x36xf32>
    %661 = arith.addf %657, %660 : vector<8x36xf32>
    %cst_238 = arith.constant dense<0.000000e+00> : vector<8x36xf32>
    %662 = tpu.matmul %661, %13, %cst_238 {dimension_numbers = #tpu.dot_dimension_numbers<[1], [0], [0], [1], [0, 0, 1, 1], [], []>} : vector<8x36xf32>, vector<36x36xf32>, vector<8x36xf32> -> vector<8x36xf32>
    %663 = vector.broadcast %15 : vector<1x36xf32> to vector<8x36xf32>
    %664 = arith.addf %662, %663 : vector<8x36xf32>
    %cst_239 = arith.constant dense<0.000000e+00> : vector<8x36xf32>
    %665 = tpu.matmul %652, %17, %cst_239 {dimension_numbers = #tpu.dot_dimension_numbers<[1], [0], [0], [1], [0, 0, 1, 1], [], []>} : vector<8x36xf32>, vector<36x36xf32>, vector<8x36xf32> -> vector<8x36xf32>
    %cst_240 = arith.constant dense<0.000000e+00> : vector<8x36xf32>
    %666 = tpu.matmul %635, %19, %cst_240 {dimension_numbers = #tpu.dot_dimension_numbers<[1], [0], [0], [1], [0, 0, 1, 1], [], []>} : vector<8x36xf32>, vector<36x36xf32>, vector<8x36xf32> -> vector<8x36xf32>
    %667 = arith.addf %665, %666 : vector<8x36xf32>
    %668 = vector.broadcast %21 : vector<1x36xf32> to vector<8x36xf32>
    %669 = arith.addf %667, %668 : vector<8x36xf32>
    %670 = arith.negf %669 : vector<8x36xf32>
    %671 = math.exp %670 : vector<8x36xf32>
    %cst_241 = arith.constant 1.000000e+00 : f32
    %672 = vector.broadcast %cst_241 : f32 to vector<8x36xf32>
    %673 = arith.addf %672, %671 : vector<8x36xf32>
    %674 = arith.divf %672, %673 : vector<8x36xf32>
    %675 = arith.mulf %674, %664 : vector<8x36xf32>
    %cst_242 = arith.constant 1.000000e+00 : f32
    %676 = vector.broadcast %cst_242 : f32 to vector<8x36xf32>
    %677 = arith.subf %676, %674 : vector<8x36xf32>
    %678 = arith.mulf %677, %656 : vector<8x36xf32>
    %679 = arith.addf %675, %678 : vector<8x36xf32>
    %680 = arith.mulf %635, %632 : vector<8x36xf32>
    %cst_243 = arith.constant 1.000000e+00 : f32
    %681 = vector.broadcast %cst_243 : f32 to vector<8x36xf32>
    %682 = arith.subf %681, %635 : vector<8x36xf32>
    %683 = arith.mulf %682, %679 : vector<8x36xf32>
    %684 = arith.addf %680, %683 : vector<8x36xf32>
    %cst_244 = arith.constant dense<0.000000e+00> : vector<8x128xf32>
    %685 = tpu.matmul %684, %23, %cst_244 {dimension_numbers = #tpu.dot_dimension_numbers<[1], [0], [0], [1], [0, 0, 1, 1], [], []>} : vector<8x36xf32>, vector<36x128xf32>, vector<8x128xf32> -> vector<8x128xf32>
    %cst_245 = arith.constant dense<0.000000e+00> : vector<8x128xf32>
    %686 = tpu.matmul %635, %25, %cst_245 {dimension_numbers = #tpu.dot_dimension_numbers<[1], [0], [0], [1], [0, 0, 1, 1], [], []>} : vector<8x36xf32>, vector<36x128xf32>, vector<8x128xf32> -> vector<8x128xf32>
    %687 = arith.addf %685, %686 : vector<8x128xf32>
    %cst_246 = arith.constant dense<0.000000e+00> : vector<8x128xf32>
    %688 = tpu.matmul %653, %27, %cst_246 {dimension_numbers = #tpu.dot_dimension_numbers<[1], [0], [0], [1], [0, 0, 1, 1], [], []>} : vector<8x32xf32>, vector<32x128xf32>, vector<8x128xf32> -> vector<8x128xf32>
    %689 = arith.addf %687, %688 : vector<8x128xf32>
    %690 = vector.broadcast %29 : vector<1x128xf32> to vector<8x128xf32>
    %691 = arith.addf %689, %690 : vector<8x128xf32>
    %692 = vector.extract_strided_slice %691 {offsets = [0, 0], sizes = [8, 32], strides = [1, 1]} : vector<8x128xf32> to vector<8x32xf32>
    %693 = arith.negf %692 : vector<8x32xf32>
    %694 = math.exp %693 : vector<8x32xf32>
    %cst_247 = arith.constant 1.000000e+00 : f32
    %695 = vector.broadcast %cst_247 : f32 to vector<8x32xf32>
    %696 = arith.addf %695, %694 : vector<8x32xf32>
    %697 = arith.divf %695, %696 : vector<8x32xf32>
    %698 = vector.extract_strided_slice %691 {offsets = [0, 32], sizes = [8, 32], strides = [1, 1]} : vector<8x128xf32> to vector<8x32xf32>
    %699 = arith.negf %698 : vector<8x32xf32>
    %700 = math.exp %699 : vector<8x32xf32>
    %cst_248 = arith.constant 1.000000e+00 : f32
    %701 = vector.broadcast %cst_248 : f32 to vector<8x32xf32>
    %702 = arith.addf %701, %700 : vector<8x32xf32>
    %703 = arith.divf %701, %702 : vector<8x32xf32>
    %704 = vector.extract_strided_slice %691 {offsets = [0, 64], sizes = [8, 32], strides = [1, 1]} : vector<8x128xf32> to vector<8x32xf32>
    %705 = math.tanh %704 : vector<8x32xf32>
    %706 = vector.extract_strided_slice %691 {offsets = [0, 96], sizes = [8, 32], strides = [1, 1]} : vector<8x128xf32> to vector<8x32xf32>
    %707 = arith.negf %706 : vector<8x32xf32>
    %708 = math.exp %707 : vector<8x32xf32>
    %cst_249 = arith.constant 1.000000e+00 : f32
    %709 = vector.broadcast %cst_249 : f32 to vector<8x32xf32>
    %710 = arith.addf %709, %708 : vector<8x32xf32>
    %711 = arith.divf %709, %710 : vector<8x32xf32>
    %712 = arith.mulf %703, %615 : vector<8x32xf32>
    %713 = arith.mulf %697, %705 : vector<8x32xf32>
    %714 = arith.addf %712, %713 : vector<8x32xf32>
    %715 = math.tanh %714 : vector<8x32xf32>
    %716 = arith.mulf %711, %715 : vector<8x32xf32>
    %c0_250 = arith.constant 0 : index
    %717 = arith.index_cast %629 : i32 to index
    %c0_251 = arith.constant 0 : index
    %c0_252 = arith.constant 0 : index
    %718 = vector.load %arg20[%c0_250, %717, %c0_251, %c0_252] : memref<1x8x8x36xf32, #tpu.memory_space<vmem>>, vector<1x1x8x36xf32>
    %719 = vector.shape_cast %718 : vector<1x1x8x36xf32> to vector<8x36xf32>
    %720 = vector.shape_cast %684 : vector<8x36xf32> to vector<1x1x8x36xf32>
    tpu.vector_store %arg20[%c0_250, %717, %c0_251, %c0_252], %720 {strides = array<i32>} : memref<1x8x8x36xf32, #tpu.memory_space<vmem>>, vector<1x1x8x36xf32>,
    %cst_253 = arith.constant 1.000000e+00 : f32
    %721 = vector.broadcast %cst_253 : f32 to vector<8x36xf32>
    %722 = arith.subf %721, %635 : vector<8x36xf32>
    %723 = arith.mulf %722, %626 : vector<8x36xf32>
    %cst_254 = arith.constant 1.000000e+00 : f32
    %724 = vector.broadcast %cst_254 : f32 to vector<8x36xf32>
    %725 = arith.addf %724, %723 : vector<8x36xf32>
    %c7_i32_255 = arith.constant 7 : i32
    %c0_i32_256 = arith.constant 0 : i32
    %726 = arith.cmpi eq, %arg0, %c0_i32_256 : i32
    %c7_i32_257 = arith.constant 7 : i32
    %727 = arith.subi %c7_i32_257, %c7_i32_255 : i32
    %728 = arith.select %726, %c7_i32_255, %727 : i32
    %729 = arith.index_cast %728 : i32 to index
    %c0_258 = arith.constant 0 : index
    %c0_259 = arith.constant 0 : index
    %730 = vector.load %arg1[%729, %c0_258, %c0_259] : memref<8x8x36xf32, #tpu.memory_space<vmem>>, vector<1x8x36xf32>
    %731 = vector.shape_cast %730 : vector<1x8x36xf32> to vector<8x36xf32>
    %732 = arith.index_cast %728 : i32 to index
    %c0_260 = arith.constant 0 : index
    %c0_261 = arith.constant 0 : index
    %733 = vector.load %arg2[%732, %c0_260, %c0_261] : memref<8x8x36xf32, #tpu.memory_space<vmem>>, vector<1x8x36xf32>
    %734 = vector.shape_cast %733 : vector<1x8x36xf32> to vector<8x36xf32>
    %cst_262 = arith.constant dense<0.000000e+00> : vector<8x32xf32>
    %735 = tpu.matmul %725, %1, %cst_262 {dimension_numbers = #tpu.dot_dimension_numbers<[1], [0], [0], [1], [0, 0, 1, 1], [], []>} : vector<8x36xf32>, vector<36x32xf32>, vector<8x32xf32> -> vector<8x32xf32>
    %736 = vector.broadcast %3 : vector<1x32xf32> to vector<8x32xf32>
    %737 = arith.addf %735, %736 : vector<8x32xf32>
    %cst_263 = arith.constant 0.000000e+00 : f32
    %738 = vector.broadcast %cst_263 : f32 to vector<8x32xf32>
    %739 = arith.maximumf %737, %738 : vector<8x32xf32>
    %cst_264 = arith.constant 0.000000e+00 : f32
    %740 = vector.broadcast %cst_264 : f32 to vector<8x32xf32>
    %741 = arith.subf %740, %739 : vector<8x32xf32>
    %742 = math.exp %741 : vector<8x32xf32>
    %743 = vector.broadcast %5 : vector<1x36xf32> to vector<8x36xf32>
    %744 = arith.mulf %725, %743 : vector<8x36xf32>
    %745 = vector.broadcast %7 : vector<1x36xf32> to vector<8x36xf32>
    %746 = arith.addf %744, %745 : vector<8x36xf32>
    %cst_265 = arith.constant 0.000000e+00 : f32
    %747 = vector.broadcast %cst_265 : f32 to vector<8x36xf32>
    %748 = arith.maximumf %746, %747 : vector<8x36xf32>
    %cst_266 = arith.constant 0.000000e+00 : f32
    %749 = vector.broadcast %cst_266 : f32 to vector<8x36xf32>
    %750 = arith.subf %749, %748 : vector<8x36xf32>
    %751 = math.exp %750 : vector<8x36xf32>
    %752 = arith.mulf %716, %742 : vector<8x32xf32>
    %cst_267 = arith.constant dense<0.000000e+00> : vector<8x36xf32>
    %753 = tpu.matmul %752, %9, %cst_267 {dimension_numbers = #tpu.dot_dimension_numbers<[1], [0], [0], [1], [0, 0, 1, 1], [], []>} : vector<8x32xf32>, vector<32x36xf32>, vector<8x36xf32> -> vector<8x36xf32>
    %754 = vector.broadcast %11 : vector<1x36xf32> to vector<8x36xf32>
    %755 = arith.addf %753, %754 : vector<8x36xf32>
    %756 = arith.mulf %734, %731 : vector<8x36xf32>
    %cst_268 = arith.constant 1.000000e+00 : f32
    %757 = vector.broadcast %cst_268 : f32 to vector<8x36xf32>
    %758 = arith.subf %757, %734 : vector<8x36xf32>
    %759 = arith.mulf %758, %755 : vector<8x36xf32>
    %760 = arith.addf %756, %759 : vector<8x36xf32>
    %cst_269 = arith.constant dense<0.000000e+00> : vector<8x36xf32>
    %761 = tpu.matmul %760, %13, %cst_269 {dimension_numbers = #tpu.dot_dimension_numbers<[1], [0], [0], [1], [0, 0, 1, 1], [], []>} : vector<8x36xf32>, vector<36x36xf32>, vector<8x36xf32> -> vector<8x36xf32>
    %762 = vector.broadcast %15 : vector<1x36xf32> to vector<8x36xf32>
    %763 = arith.addf %761, %762 : vector<8x36xf32>
    %cst_270 = arith.constant dense<0.000000e+00> : vector<8x36xf32>
    %764 = tpu.matmul %751, %17, %cst_270 {dimension_numbers = #tpu.dot_dimension_numbers<[1], [0], [0], [1], [0, 0, 1, 1], [], []>} : vector<8x36xf32>, vector<36x36xf32>, vector<8x36xf32> -> vector<8x36xf32>
    %cst_271 = arith.constant dense<0.000000e+00> : vector<8x36xf32>
    %765 = tpu.matmul %734, %19, %cst_271 {dimension_numbers = #tpu.dot_dimension_numbers<[1], [0], [0], [1], [0, 0, 1, 1], [], []>} : vector<8x36xf32>, vector<36x36xf32>, vector<8x36xf32> -> vector<8x36xf32>
    %766 = arith.addf %764, %765 : vector<8x36xf32>
    %767 = vector.broadcast %21 : vector<1x36xf32> to vector<8x36xf32>
    %768 = arith.addf %766, %767 : vector<8x36xf32>
    %769 = arith.negf %768 : vector<8x36xf32>
    %770 = math.exp %769 : vector<8x36xf32>
    %cst_272 = arith.constant 1.000000e+00 : f32
    %771 = vector.broadcast %cst_272 : f32 to vector<8x36xf32>
    %772 = arith.addf %771, %770 : vector<8x36xf32>
    %773 = arith.divf %771, %772 : vector<8x36xf32>
    %774 = arith.mulf %773, %763 : vector<8x36xf32>
    %cst_273 = arith.constant 1.000000e+00 : f32
    %775 = vector.broadcast %cst_273 : f32 to vector<8x36xf32>
    %776 = arith.subf %775, %773 : vector<8x36xf32>
    %777 = arith.mulf %776, %755 : vector<8x36xf32>
    %778 = arith.addf %774, %777 : vector<8x36xf32>
    %779 = arith.mulf %734, %731 : vector<8x36xf32>
    %cst_274 = arith.constant 1.000000e+00 : f32
    %780 = vector.broadcast %cst_274 : f32 to vector<8x36xf32>
    %781 = arith.subf %780, %734 : vector<8x36xf32>
    %782 = arith.mulf %781, %778 : vector<8x36xf32>
    %783 = arith.addf %779, %782 : vector<8x36xf32>
    %cst_275 = arith.constant dense<0.000000e+00> : vector<8x128xf32>
    %784 = tpu.matmul %783, %23, %cst_275 {dimension_numbers = #tpu.dot_dimension_numbers<[1], [0], [0], [1], [0, 0, 1, 1], [], []>} : vector<8x36xf32>, vector<36x128xf32>, vector<8x128xf32> -> vector<8x128xf32>
    %cst_276 = arith.constant dense<0.000000e+00> : vector<8x128xf32>
    %785 = tpu.matmul %734, %25, %cst_276 {dimension_numbers = #tpu.dot_dimension_numbers<[1], [0], [0], [1], [0, 0, 1, 1], [], []>} : vector<8x36xf32>, vector<36x128xf32>, vector<8x128xf32> -> vector<8x128xf32>
    %786 = arith.addf %784, %785 : vector<8x128xf32>
    %cst_277 = arith.constant dense<0.000000e+00> : vector<8x128xf32>
    %787 = tpu.matmul %752, %27, %cst_277 {dimension_numbers = #tpu.dot_dimension_numbers<[1], [0], [0], [1], [0, 0, 1, 1], [], []>} : vector<8x32xf32>, vector<32x128xf32>, vector<8x128xf32> -> vector<8x128xf32>
    %788 = arith.addf %786, %787 : vector<8x128xf32>
    %789 = vector.broadcast %29 : vector<1x128xf32> to vector<8x128xf32>
    %790 = arith.addf %788, %789 : vector<8x128xf32>
    %791 = vector.extract_strided_slice %790 {offsets = [0, 0], sizes = [8, 32], strides = [1, 1]} : vector<8x128xf32> to vector<8x32xf32>
    %792 = arith.negf %791 : vector<8x32xf32>
    %793 = math.exp %792 : vector<8x32xf32>
    %cst_278 = arith.constant 1.000000e+00 : f32
    %794 = vector.broadcast %cst_278 : f32 to vector<8x32xf32>
    %795 = arith.addf %794, %793 : vector<8x32xf32>
    %796 = arith.divf %794, %795 : vector<8x32xf32>
    %797 = vector.extract_strided_slice %790 {offsets = [0, 32], sizes = [8, 32], strides = [1, 1]} : vector<8x128xf32> to vector<8x32xf32>
    %798 = arith.negf %797 : vector<8x32xf32>
    %799 = math.exp %798 : vector<8x32xf32>
    %cst_279 = arith.constant 1.000000e+00 : f32
    %800 = vector.broadcast %cst_279 : f32 to vector<8x32xf32>
    %801 = arith.addf %800, %799 : vector<8x32xf32>
    %802 = arith.divf %800, %801 : vector<8x32xf32>
    %803 = vector.extract_strided_slice %790 {offsets = [0, 64], sizes = [8, 32], strides = [1, 1]} : vector<8x128xf32> to vector<8x32xf32>
    %804 = math.tanh %803 : vector<8x32xf32>
    %805 = vector.extract_strided_slice %790 {offsets = [0, 96], sizes = [8, 32], strides = [1, 1]} : vector<8x128xf32> to vector<8x32xf32>
    %806 = arith.negf %805 : vector<8x32xf32>
    %807 = math.exp %806 : vector<8x32xf32>
    %cst_280 = arith.constant 1.000000e+00 : f32
    %808 = vector.broadcast %cst_280 : f32 to vector<8x32xf32>
    %809 = arith.addf %808, %807 : vector<8x32xf32>
    %810 = arith.divf %808, %809 : vector<8x32xf32>
    %811 = arith.mulf %802, %714 : vector<8x32xf32>
    %812 = arith.mulf %796, %804 : vector<8x32xf32>
    %813 = arith.addf %811, %812 : vector<8x32xf32>
    %814 = math.tanh %813 : vector<8x32xf32>
    %815 = arith.mulf %810, %814 : vector<8x32xf32>
    %c0_281 = arith.constant 0 : index
    %816 = arith.index_cast %728 : i32 to index
    %c0_282 = arith.constant 0 : index
    %c0_283 = arith.constant 0 : index
    %817 = vector.load %arg20[%c0_281, %816, %c0_282, %c0_283] : memref<1x8x8x36xf32, #tpu.memory_space<vmem>>, vector<1x1x8x36xf32>
    %818 = vector.shape_cast %817 : vector<1x1x8x36xf32> to vector<8x36xf32>
    %819 = vector.shape_cast %783 : vector<8x36xf32> to vector<1x1x8x36xf32>
    tpu.vector_store %arg20[%c0_281, %816, %c0_282, %c0_283], %819 {strides = array<i32>} : memref<1x8x8x36xf32, #tpu.memory_space<vmem>>, vector<1x1x8x36xf32>,
    %cst_284 = arith.constant 1.000000e+00 : f32
    %820 = vector.broadcast %cst_284 : f32 to vector<8x36xf32>
    %821 = arith.subf %820, %734 : vector<8x36xf32>
    %822 = arith.mulf %821, %725 : vector<8x36xf32>
    %cst_285 = arith.constant 1.000000e+00 : f32
    %823 = vector.broadcast %cst_285 : f32 to vector<8x36xf32>
    %824 = arith.addf %823, %822 : vector<8x36xf32>
    %c8_i32 = arith.constant 8 : i32
    %c0_286 = arith.constant 0 : index
    %c0_287 = arith.constant 0 : index
    %c0_288 = arith.constant 0 : index
    %825 = vector.load %arg18[%c0_286, %c0_287, %c0_288] : memref<1x32x2xf32, #tpu.memory_space<vmem>>, vector<1x32x2xf32>
    %826 = vector.shape_cast %825 : vector<1x32x2xf32> to vector<32x2xf32>
    %cst_289 = arith.constant dense<0.000000e+00> : vector<8x2xf32>
    %827 = tpu.matmul %815, %826, %cst_289 {dimension_numbers = #tpu.dot_dimension_numbers<[1], [0], [0], [1], [0, 0, 1, 1], [], []>} : vector<8x32xf32>, vector<32x2xf32>, vector<8x2xf32> -> vector<8x2xf32>
    %c0_290 = arith.constant 0 : index
    %c0_291 = arith.constant 0 : index
    %c0_292 = arith.constant 0 : index
    %828 = vector.load %arg19[%c0_290, %c0_291, %c0_292] : memref<1x1x2xf32, #tpu.memory_space<vmem>>, vector<1x1x2xf32>
    %829 = vector.shape_cast %828 : vector<1x1x2xf32> to vector<1x2xf32>
    %830 = vector.broadcast %829 : vector<1x2xf32> to vector<8x2xf32>
    %831 = arith.addf %827, %830 : vector<8x2xf32>
    %c0_293 = arith.constant 0 : index
    %c0_294 = arith.constant 0 : index
    %c0_295 = arith.constant 0 : index
    %832 = vector.load %arg21[%c0_293, %c0_294, %c0_295] : memref<1x8x2xf32, #tpu.memory_space<vmem>>, vector<1x8x2xf32>
    %833 = vector.shape_cast %832 : vector<1x8x2xf32> to vector<8x2xf32>
    %834 = vector.shape_cast %831 : vector<8x2xf32> to vector<1x8x2xf32>
    tpu.vector_store %arg21[%c0_293, %c0_294, %c0_295], %834 {strides = array<i32>} : memref<1x8x2xf32, #tpu.memory_space<vmem>>, vector<1x8x2xf32>,
    return
  }
  func.func @transform_0(%arg0: i32) -> (i32, i32, i32) {
    %c0_i32 = arith.constant 0 : i32
    %c0_i32_0 = arith.constant 0 : i32
    %c0_i32_1 = arith.constant 0 : i32
    %c0_i32_2 = arith.constant 0 : i32
    return %c0_i32, %c0_i32_0, %c0_i32_1 : i32, i32, i32
  }
  func.func @transform_1(%arg0: i32) -> (i32, i32, i32) {
    %c0_i32 = arith.constant 0 : i32
    %c0_i32_0 = arith.constant 0 : i32
    %c0_i32_1 = arith.constant 0 : i32
    %c0_i32_2 = arith.constant 0 : i32
    return %c0_i32, %c0_i32_0, %c0_i32_1 : i32, i32, i32
  }
  func.func @transform_2(%arg0: i32) -> (i32, i32, i32) {
    %c0_i32 = arith.constant 0 : i32
    %c0_i32_0 = arith.constant 0 : i32
    %c0_i32_1 = arith.constant 0 : i32
    return %arg0, %c0_i32, %c0_i32_0 : i32, i32, i32
  }
  func.func @transform_3(%arg0: i32) -> (i32, i32, i32) {
    %c0_i32 = arith.constant 0 : i32
    %c0_i32_0 = arith.constant 0 : i32
    %c0_i32_1 = arith.constant 0 : i32
    return %arg0, %c0_i32, %c0_i32_0 : i32, i32, i32
  }
  func.func @transform_4(%arg0: i32) -> (i32, i32, i32) {
    %c0_i32 = arith.constant 0 : i32
    %c0_i32_0 = arith.constant 0 : i32
    %c0_i32_1 = arith.constant 0 : i32
    return %arg0, %c0_i32, %c0_i32_0 : i32, i32, i32
  }
  func.func @transform_5(%arg0: i32) -> (i32, i32, i32) {
    %c0_i32 = arith.constant 0 : i32
    %c0_i32_0 = arith.constant 0 : i32
    %c0_i32_1 = arith.constant 0 : i32
    return %arg0, %c0_i32, %c0_i32_0 : i32, i32, i32
  }
  func.func @transform_6(%arg0: i32) -> (i32, i32, i32) {
    %c0_i32 = arith.constant 0 : i32
    %c0_i32_0 = arith.constant 0 : i32
    %c0_i32_1 = arith.constant 0 : i32
    return %arg0, %c0_i32, %c0_i32_0 : i32, i32, i32
  }
  func.func @transform_7(%arg0: i32) -> (i32, i32, i32) {
    %c0_i32 = arith.constant 0 : i32
    %c0_i32_0 = arith.constant 0 : i32
    %c0_i32_1 = arith.constant 0 : i32
    return %arg0, %c0_i32, %c0_i32_0 : i32, i32, i32
  }
  func.func @transform_8(%arg0: i32) -> (i32, i32, i32) {
    %c0_i32 = arith.constant 0 : i32
    %c0_i32_0 = arith.constant 0 : i32
    %c0_i32_1 = arith.constant 0 : i32
    return %arg0, %c0_i32, %c0_i32_0 : i32, i32, i32
  }
  func.func @transform_9(%arg0: i32) -> (i32, i32, i32) {
    %c0_i32 = arith.constant 0 : i32
    %c0_i32_0 = arith.constant 0 : i32
    %c0_i32_1 = arith.constant 0 : i32
    return %arg0, %c0_i32, %c0_i32_0 : i32, i32, i32
  }
  func.func @transform_10(%arg0: i32) -> (i32, i32, i32) {
    %c0_i32 = arith.constant 0 : i32
    %c0_i32_0 = arith.constant 0 : i32
    %c0_i32_1 = arith.constant 0 : i32
    return %arg0, %c0_i32, %c0_i32_0 : i32, i32, i32
  }
  func.func @transform_11(%arg0: i32) -> (i32, i32, i32) {
    %c0_i32 = arith.constant 0 : i32
    %c0_i32_0 = arith.constant 0 : i32
    %c0_i32_1 = arith.constant 0 : i32
    return %arg0, %c0_i32, %c0_i32_0 : i32, i32, i32
  }
  func.func @transform_12(%arg0: i32) -> (i32, i32, i32) {
    %c0_i32 = arith.constant 0 : i32
    %c0_i32_0 = arith.constant 0 : i32
    %c0_i32_1 = arith.constant 0 : i32
    return %arg0, %c0_i32, %c0_i32_0 : i32, i32, i32
  }
  func.func @transform_13(%arg0: i32) -> (i32, i32, i32) {
    %c0_i32 = arith.constant 0 : i32
    %c0_i32_0 = arith.constant 0 : i32
    %c0_i32_1 = arith.constant 0 : i32
    return %arg0, %c0_i32, %c0_i32_0 : i32, i32, i32
  }
  func.func @transform_14(%arg0: i32) -> (i32, i32, i32) {
    %c0_i32 = arith.constant 0 : i32
    %c0_i32_0 = arith.constant 0 : i32
    %c0_i32_1 = arith.constant 0 : i32
    return %arg0, %c0_i32, %c0_i32_0 : i32, i32, i32
  }
  func.func @transform_15(%arg0: i32) -> (i32, i32, i32) {
    %c0_i32 = arith.constant 0 : i32
    %c0_i32_0 = arith.constant 0 : i32
    %c0_i32_1 = arith.constant 0 : i32
    return %arg0, %c0_i32, %c0_i32_0 : i32, i32, i32
  }
  func.func @transform_16(%arg0: i32) -> (i32, i32, i32) {
    %c0_i32 = arith.constant 0 : i32
    %c0_i32_0 = arith.constant 0 : i32
    %c0_i32_1 = arith.constant 0 : i32
    return %arg0, %c0_i32, %c0_i32_0 : i32, i32, i32
  }
  func.func @transform_17(%arg0: i32) -> (i32, i32, i32) {
    %c0_i32 = arith.constant 0 : i32
    %c0_i32_0 = arith.constant 0 : i32
    %c0_i32_1 = arith.constant 0 : i32
    return %arg0, %c0_i32, %c0_i32_0 : i32, i32, i32
  }
  func.func @transform_18(%arg0: i32) -> (i32, i32, i32) {
    %c0_i32 = arith.constant 0 : i32
    %c0_i32_0 = arith.constant 0 : i32
    %c0_i32_1 = arith.constant 0 : i32
    return %arg0, %c0_i32, %c0_i32_0 : i32, i32, i32
  }
  func.func @transform_19(%arg0: i32) -> (i32, i32, i32, i32) {
    %c0_i32 = arith.constant 0 : i32
    %c0_i32_0 = arith.constant 0 : i32
    %c0_i32_1 = arith.constant 0 : i32
    %c0_i32_2 = arith.constant 0 : i32
    return %arg0, %c0_i32, %c0_i32_0, %c0_i32_1 : i32, i32, i32, i32
  }
  func.func @transform_20(%arg0: i32) -> (i32, i32, i32) {
    %c0_i32 = arith.constant 0 : i32
    %c0_i32_0 = arith.constant 0 : i32
    %c0_i32_1 = arith.constant 0 : i32
    return %arg0, %c0_i32, %c0_i32_0 : i32, i32, i32
  }
}

</mosaic_0001>

<llo_original>
// kernel: a_call__.1
$region0: #{a_call__.1}
  #allocation0 [shape = 'u32[]', space=smem, size = 0x4, offset = 0x4, fixed_abs, tag = 'smem constant byte address 0x4 - core index']
  #allocation1 [shape = 'u32[144,128]{1,0:T(1,128)}', space=vmem, size = 0x12000, scoped, tag = 'internal scratch']
  %s0 = inlined_call_operand.vmem [shape: f32[8,8,36], index: 0, kind: input, shape index: {}]
  %s1 = inlined_call_operand.vmem [shape: f32[8,8,36], index: 1, kind: input, shape index: {}]
  %s2 = inlined_call_operand.vmem [shape: f32[2,36,32], index: 2, kind: input, shape index: {}]
  %s3 = inlined_call_operand.hbm [shape: f32[2,1,32], index: 3, kind: input, shape index: {}]
  %s4 = inlined_call_operand.hbm [shape: f32[2,1,36], index: 4, kind: input, shape index: {}]
  %s5 = inlined_call_operand.hbm [shape: f32[2,1,36], index: 5, kind: input, shape index: {}]
  %s6 = inlined_call_operand.hbm [shape: f32[2,32,36], index: 6, kind: input, shape index: {}]
  %s7 = inlined_call_operand.hbm [shape: f32[2,1,36], index: 7, kind: input, shape index: {}]
  %s8 = inlined_call_operand.vmem [shape: f32[2,36,36], index: 8, kind: input, shape index: {}]
  %s9 = inlined_call_operand.hbm [shape: f32[2,1,36], index: 9, kind: input, shape index: {}]
  %s10 = inlined_call_operand.vmem [shape: f32[2,36,36], index: 10, kind: input, shape index: {}]
  %s11 = inlined_call_operand.vmem [shape: f32[2,36,36], index: 11, kind: input, shape index: {}]
  %s12 = inlined_call_operand.vmem [shape: f32[2,1,36], index: 12, kind: input, shape index: {}]
  %s13 = inlined_call_operand.vmem [shape: f32[2,36,128], index: 13, kind: input, shape index: {}]
  %s14 = inlined_call_operand.vmem [shape: f32[2,36,128], index: 14, kind: input, shape index: {}]
  %s15 = inlined_call_operand.hbm [shape: f32[2,32,128], index: 15, kind: input, shape index: {}]
  %s16 = inlined_call_operand.vmem [shape: f32[2,1,128], index: 16, kind: input, shape index: {}]
  %s17 = inlined_call_operand.vmem [shape: f32[2,32,2], index: 17, kind: input, shape index: {}]
  %s18 = inlined_call_operand.vmem [shape: f32[2,1,2], index: 18, kind: input, shape index: {}]
  %s19 = inlined_call_operand.vmem [shape: f32[2,8,8,36], index: 19, kind: output, shape index: {0}]
  %s20 = inlined_call_operand.vmem [shape: f32[2,8,2], index: 20, kind: output, shape index: {1}]
  %21 = xla_tuple %s19, %s20
  %s22 = sld [smem:[#allocation0]]
  $region145: #{a_call__.1} parent=0
    _
  %s24 = ssub.s32 1, %s22
  %s25 = scalar_select 0, %s24, %s22
  $region1: #{a_call__.1} parent=0
    #allocation2 [shape = 'u8[1024]{0}', space=vmem, size = 0x400, scoped, tag = 'input window, operand 3']
    #allocation3 [shape = 's32[2]{0}', space=sflag, size = 0x8, scoped, tag = 'scoped memory for a_call__.1']
    #allocation4 [shape = 'u8[1024]{0}', space=vmem, size = 0x400, scoped, tag = 'input window, operand 4']
    #allocation5 [shape = 's32[2]{0}', space=sflag, size = 0x8, scoped, tag = 'scoped memory for a_call__.1']
    #allocation6 [shape = 'u8[1024]{0}', space=vmem, size = 0x400, scoped, tag = 'input window, operand 5']
    #allocation7 [shape = 'u8[32768]{0}', space=vmem, size = 0x8000, scoped, tag = 'input window, operand 6']
    #allocation8 [shape = 's32[2]{0}', space=sflag, size = 0x8, scoped, tag = 'scoped memory for a_call__.1']
    #allocation9 [shape = 'u8[1024]{0}', space=vmem, size = 0x400, scoped, tag = 'input window, operand 7']
    #allocation10 [shape = 'u8[1024]{0}', space=vmem, size = 0x400, scoped, tag = 'input window, operand 9']
    #allocation11 [shape = 's32[2]{0}', space=sflag, size = 0x8, scoped, tag = 'scoped memory for a_call__.1']
    #allocation12 [shape = 'u8[32768]{0}', space=vmem, size = 0x8000, scoped, tag = 'input window, operand 15']
    %26 = vsyncpa [#allocation3], 0
    %s27 = scalar_lea.sflag [#allocation3], 1
    %28 = vsyncpa %s27, 0
    %29 = vsyncpa [#allocation5], 0
    %s30 = scalar_lea.sflag [#allocation5], 1
    %31 = vsyncpa %s30, 0
    %32 = vsyncpa [#allocation8], 0
    %s33 = scalar_lea.sflag [#allocation8], 1
    %34 = vsyncpa %s33, 0
    %35 = vsyncpa [#allocation11], 0
    %s36 = scalar_lea.sflag [#allocation11], 1
    %37 = vsyncpa %s36, 0
    loop: start=0, step=1, limit=4
    $region2: #{a_call__.1} parent=1 // loop_pre_header
      _
    $region3: #{a_call__.1} parent=1 // loop_header
      %s39 = sphi 0, %s43
      %p40 = scmp.ge.s32.totalorder %s39, 4
      %s47 = sphi 0, %s47
      %s49 = sphi 0, %s47
      %s50 = sphi 0, %s49
      %s64 = sphi 0, %s50
      %s68 = sphi 0, %s68
      %s70 = sphi 0, %s68
      %s71 = sphi 0, %s70
      %s85 = sphi 0, %s71
      %s91 = sphi 0, %s93
      %s94 = sphi 0, %s91
      %s95 = sphi 0, %s94
      %s111 = sphi 0, %s95
      %s117 = sphi 0, %s119
      %s120 = sphi 0, %s117
      %s121 = sphi 0, %s120
      %s137 = sphi 0, %s121
      %s143 = sphi 0, %s145
      %s146 = sphi 0, %s143
      %s147 = sphi 0, %s146
      %s163 = sphi 0, %s147
      %s169 = sphi 0, %s171
      %s172 = sphi 0, %s169
      %s173 = sphi 0, %s172
      %s189 = sphi 0, %s173
      %s195 = sphi 0, %s197
      %s198 = sphi 0, %s195
      %s199 = sphi 0, %s198
      %s215 = sphi 0, %s199
      %s221 = sphi 0, %s223
      %s224 = sphi 0, %s221
      %s225 = sphi 0, %s224
      %s241 = sphi 0, %s225
      %s247 = sphi 0, %s249
      %s250 = sphi 0, %s247
      %s251 = sphi 0, %s250
      %s267 = sphi 0, %s251
      %s273 = sphi 0, %s275
      %s276 = sphi 0, %s273
      %s277 = sphi 0, %s276
      %s293 = sphi 0, %s277
      %s299 = sphi 0, %s301
      %s302 = sphi 0, %s299
      %s303 = sphi 0, %s302
      %s319 = sphi 0, %s303
      %s325 = sphi 0, %s327
      %s328 = sphi 0, %s325
      %s329 = sphi 0, %s328
      %s345 = sphi 0, %s329
      %s351 = sphi 0, %s353
      %s354 = sphi 0, %s351
      %s355 = sphi 0, %s354
      %s371 = sphi 0, %s355
      %s377 = sphi 0, %s379
      %s380 = sphi 0, %s377
      %s381 = sphi 0, %s380
      %s397 = sphi 0, %s381
      %s403 = sphi 0, %s405
      %s406 = sphi 0, %s403
      %s407 = sphi 0, %s406
      %s423 = sphi 0, %s407
      %s429 = sphi 0, %s431
      %s432 = sphi 0, %s429
      %s433 = sphi 0, %s432
      %s449 = sphi 0, %s433
      %s455 = sphi 0, %s457
      %s458 = sphi 0, %s455
      %s459 = sphi 0, %s458
      %s475 = sphi 0, %s459
      %s481 = sphi 0, %s483
      %s484 = sphi 0, %s481
      %s485 = sphi 0, %s484
      %s501 = sphi 0, %s485
      %s507 = sphi 0, %s509
      %s510 = sphi 0, %s507
      %s511 = sphi 0, %s510
      %s527 = sphi 0, %s511
      %s533 = sphi 0, %s535
      %s536 = sphi 0, %s533
      %s537 = sphi 0, %s536
      %s553 = sphi 0, %s537
      %s559 = sphi 0, %s561
      %s562 = sphi 0, %s559
      %s563 = sphi 0, %s562
      %s579 = sphi 0, %s563
    $region4: #{a_call__.1} parent=1 // loop_header_branch
      %42 = sbr.rel (%p40) target = $region8
    $region5: #{a_call__.1} parent=1 // loop_body
      %s44 = ssub.s32 %s39, 1
      %s45 = ssub.s32 %s39, 2
      %s46 = sadd.s32 %s39, 1
      %s48 = sadd.s32 %s47, 1
      %p51 = scmp.eq.s32.totalorder %s39, 1
      %p52 = scmp.ne.s32.totalorder %s47, %s49
      %p53 = scmp.eq.s32.totalorder %s39, 0
      %p54 = por %p52, %p53
      %p55 = scmp.ne.s32.totalorder %s47, %s49
      %p56 = scmp.eq.s32.totalorder %s44, 1
      %p57 = por %p55, %p56
      %p58 = scmp.ne.s32.totalorder %s49, %s50
      %p59 = scmp.eq.s32.totalorder %s44, 0
      %p60 = por %p58, %p59
      %p61 = scmp.ne.s32.totalorder %s49, %s50
      %p62 = scmp.eq.s32.totalorder %s45, 1
      %p63 = por %p61, %p62
      %p65 = scmp.ne.s32.totalorder %s50, %s64
      %p66 = scmp.eq.s32.totalorder %s45, 0
      %p67 = por %p65, %p66
      %s69 = sadd.s32 %s68, 1
      %p72 = scmp.eq.s32.totalorder %s39, 1
      %p73 = scmp.ne.s32.totalorder %s68, %s70
      %p74 = scmp.eq.s32.totalorder %s39, 0
      %p75 = por %p73, %p74
      %p76 = scmp.ne.s32.totalorder %s68, %s70
      %p77 = scmp.eq.s32.totalorder %s44, 1
      %p78 = por %p76, %p77
      %p79 = scmp.ne.s32.totalorder %s70, %s71
      %p80 = scmp.eq.s32.totalorder %s44, 0
      %p81 = por %p79, %p80
      %p82 = scmp.ne.s32.totalorder %s70, %s71
      %p83 = scmp.eq.s32.totalorder %s45, 1
      %p84 = por %p82, %p83
      %p86 = scmp.ne.s32.totalorder %s71, %s85
      %p87 = scmp.eq.s32.totalorder %s45, 0
      %p88 = por %p86, %p87
      %s89 = ssub.s32 %s39, %s46
      %p90 = scmp.eq.s32.totalorder %s89, 0
      %s92 = sadd.s32 %s91, 1
      %s93 = scalar_select %p90, %s91, %s92
      %p96 = pneg %p90
      %p97 = scmp.eq.s32.totalorder %s39, 1
      %p98 = por %p96, %p97
      %p99 = scmp.ne.s32.totalorder %s91, %s94
      %p100 = scmp.eq.s32.totalorder %s39, 0
      %p101 = por %p99, %p100
      %p102 = scmp.ne.s32.totalorder %s91, %s94
      %p103 = scmp.eq.s32.totalorder %s44, 1
      %p104 = por %p102, %p103
      %p105 = scmp.ne.s32.totalorder %s94, %s95
      %p106 = scmp.eq.s32.totalorder %s44, 0
      %p107 = por %p105, %p106
      %p108 = scmp.ne.s32.totalorder %s94, %s95
      %p109 = scmp.eq.s32.totalorder %s45, 1
      %p110 = por %p108, %p109
      %p112 = scmp.ne.s32.totalorder %s95, %s111
      %p113 = scmp.eq.s32.totalorder %s45, 0
      %p114 = por %p112, %p113
      %s115 = ssub.s32 %s39, %s46
      %p116 = scmp.eq.s32.totalorder %s115, 0
      %s118 = sadd.s32 %s117, 1
      %s119 = scalar_select %p116, %s117, %s118
      %p122 = pneg %p116
      %p123 = scmp.eq.s32.totalorder %s39, 1
      %p124 = por %p122, %p123
      %p125 = scmp.ne.s32.totalorder %s117, %s120
      %p126 = scmp.eq.s32.totalorder %s39, 0
      %p127 = por %p125, %p126
      %p128 = scmp.ne.s32.totalorder %s117, %s120
      %p129 = scmp.eq.s32.totalorder %s44, 1
      %p130 = por %p128, %p129
      %p131 = scmp.ne.s32.totalorder %s120, %s121
      %p132 = scmp.eq.s32.totalorder %s44, 0
      %p133 = por %p131, %p132
      %p134 = scmp.ne.s32.totalorder %s120, %s121
      %p135 = scmp.eq.s32.totalorder %s45, 1
      %p136 = por %p134, %p135
      %p138 = scmp.ne.s32.totalorder %s121, %s137
      %p139 = scmp.eq.s32.totalorder %s45, 0
      %p140 = por %p138, %p139
      %s141 = ssub.s32 %s39, %s46
      %p142 = scmp.eq.s32.totalorder %s141, 0
      %s144 = sadd.s32 %s143, 1
      %s145 = scalar_select %p142, %s143, %s144
      %p148 = pneg %p142
      %p149 = scmp.eq.s32.totalorder %s39, 1
      %p150 = por %p148, %p149
      %p151 = scmp.ne.s32.totalorder %s143, %s146
      %p152 = scmp.eq.s32.totalorder %s39, 0
      %p153 = por %p151, %p152
      %p154 = scmp.ne.s32.totalorder %s143, %s146
      %p155 = scmp.eq.s32.totalorder %s44, 1
      %p156 = por %p154, %p155
      %p157 = scmp.ne.s32.totalorder %s146, %s147
      %p158 = scmp.eq.s32.totalorder %s44, 0
      %p159 = por %p157, %p158
      %p160 = scmp.ne.s32.totalorder %s146, %s147
      %p161 = scmp.eq.s32.totalorder %s45, 1
      %p162 = por %p160, %p161
      %p164 = scmp.ne.s32.totalorder %s147, %s163
      %p165 = scmp.eq.s32.totalorder %s45, 0
      %p166 = por %p164, %p165
      %s167 = ssub.s32 %s39, %s46
      %p168 = scmp.eq.s32.totalorder %s167, 0
      %s170 = sadd.s32 %s169, 1
      %s171 = scalar_select %p168, %s169, %s170
      %p174 = pneg %p168
      %p175 = scmp.eq.s32.totalorder %s39, 1
      %p176 = por %p174, %p175
      %p177 = scmp.ne.s32.totalorder %s169, %s172
      %p178 = scmp.eq.s32.totalorder %s39, 0
      %p179 = por %p177, %p178
      %p180 = scmp.ne.s32.totalorder %s169, %s172
      %p181 = scmp.eq.s32.totalorder %s44, 1
      %p182 = por %p180, %p181
      %p183 = scmp.ne.s32.totalorder %s172, %s173
      %p184 = scmp.eq.s32.totalorder %s44, 0
      %p185 = por %p183, %p184
      %p186 = scmp.ne.s32.totalorder %s172, %s173
      %p187 = scmp.eq.s32.totalorder %s45, 1
      %p188 = por %p186, %p187
      %p190 = scmp.ne.s32.totalorder %s173, %s189
      %p191 = scmp.eq.s32.totalorder %s45, 0
      %p192 = por %p190, %p191
      %s193 = ssub.s32 %s39, %s46
      %p194 = scmp.eq.s32.totalorder %s193, 0
      %s196 = sadd.s32 %s195, 1
      %s197 = scalar_select %p194, %s195, %s196
      %p200 = pneg %p194
      %p201 = scmp.eq.s32.totalorder %s39, 1
      %p202 = por %p200, %p201
      %p203 = scmp.ne.s32.totalorder %s195, %s198
      %p204 = scmp.eq.s32.totalorder %s39, 0
      %p205 = por %p203, %p204
      %p206 = scmp.ne.s32.totalorder %s195, %s198
      %p207 = scmp.eq.s32.totalorder %s44, 1
      %p208 = por %p206, %p207
      %p209 = scmp.ne.s32.totalorder %s198, %s199
      %p210 = scmp.eq.s32.totalorder %s44, 0
      %p211 = por %p209, %p210
      %p212 = scmp.ne.s32.totalorder %s198, %s199
      %p213 = scmp.eq.s32.totalorder %s45, 1
      %p214 = por %p212, %p213
      %p216 = scmp.ne.s32.totalorder %s199, %s215
      %p217 = scmp.eq.s32.totalorder %s45, 0
      %p218 = por %p216, %p217
      %s219 = ssub.s32 %s39, %s46
      %p220 = scmp.eq.s32.totalorder %s219, 0
      %s222 = sadd.s32 %s221, 1
      %s223 = scalar_select %p220, %s221, %s222
      %p226 = pneg %p220
      %p227 = scmp.eq.s32.totalorder %s39, 1
      %p228 = por %p226, %p227
      %p229 = scmp.ne.s32.totalorder %s221, %s224
      %p230 = scmp.eq.s32.totalorder %s39, 0
      %p231 = por %p229, %p230
      %p232 = scmp.ne.s32.totalorder %s221, %s224
      %p233 = scmp.eq.s32.totalorder %s44, 1
      %p234 = por %p232, %p233
      %p235 = scmp.ne.s32.totalorder %s224, %s225
      %p236 = scmp.eq.s32.totalorder %s44, 0
      %p237 = por %p235, %p236
      %p238 = scmp.ne.s32.totalorder %s224, %s225
      %p239 = scmp.eq.s32.totalorder %s45, 1
      %p240 = por %p238, %p239
      %p242 = scmp.ne.s32.totalorder %s225, %s241
      %p243 = scmp.eq.s32.totalorder %s45, 0
      %p244 = por %p242, %p243
      %s245 = ssub.s32 %s39, %s46
      %p246 = scmp.eq.s32.totalorder %s245, 0
      %s248 = sadd.s32 %s247, 1
      %s249 = scalar_select %p246, %s247, %s248
      %p252 = pneg %p246
      %p253 = scmp.eq.s32.totalorder %s39, 1
      %p254 = por %p252, %p253
      %p255 = scmp.ne.s32.totalorder %s247, %s250
      %p256 = scmp.eq.s32.totalorder %s39, 0
      %p257 = por %p255, %p256
      %p258 = scmp.ne.s32.totalorder %s247, %s250
      %p259 = scmp.eq.s32.totalorder %s44, 1
      %p260 = por %p258, %p259
      %p261 = scmp.ne.s32.totalorder %s250, %s251
      %p262 = scmp.eq.s32.totalorder %s44, 0
      %p263 = por %p261, %p262
      %p264 = scmp.ne.s32.totalorder %s250, %s251
      %p265 = scmp.eq.s32.totalorder %s45, 1
      %p266 = por %p264, %p265
      %p268 = scmp.ne.s32.totalorder %s251, %s267
      %p269 = scmp.eq.s32.totalorder %s45, 0
      %p270 = por %p268, %p269
      %s271 = ssub.s32 %s39, %s46
      %p272 = scmp.eq.s32.totalorder %s271, 0
      %s274 = sadd.s32 %s273, 1
      %s275 = scalar_select %p272, %s273, %s274
      %p278 = pneg %p272
      %p279 = scmp.eq.s32.totalorder %s39, 1
      %p280 = por %p278, %p279
      %p281 = scmp.ne.s32.totalorder %s273, %s276
      %p282 = scmp.eq.s32.totalorder %s39, 0
      %p283 = por %p281, %p282
      %p284 = scmp.ne.s32.totalorder %s273, %s276
      %p285 = scmp.eq.s32.totalorder %s44, 1
      %p286 = por %p284, %p285
      %p287 = scmp.ne.s32.totalorder %s276, %s277
      %p288 = scmp.eq.s32.totalorder %s44, 0
      %p289 = por %p287, %p288
      %p290 = scmp.ne.s32.totalorder %s276, %s277
      %p291 = scmp.eq.s32.totalorder %s45, 1
      %p292 = por %p290, %p291
      %p294 = scmp.ne.s32.totalorder %s277, %s293
      %p295 = scmp.eq.s32.totalorder %s45, 0
      %p296 = por %p294, %p295
      %s297 = ssub.s32 %s39, %s46
      %p298 = scmp.eq.s32.totalorder %s297, 0
      %s300 = sadd.s32 %s299, 1
      %s301 = scalar_select %p298, %s299, %s300
      %p304 = pneg %p298
      %p305 = scmp.eq.s32.totalorder %s39, 1
      %p306 = por %p304, %p305
      %p307 = scmp.ne.s32.totalorder %s299, %s302
      %p308 = scmp.eq.s32.totalorder %s39, 0
      %p309 = por %p307, %p308
      %p310 = scmp.ne.s32.totalorder %s299, %s302
      %p311 = scmp.eq.s32.totalorder %s44, 1
      %p312 = por %p310, %p311
      %p313 = scmp.ne.s32.totalorder %s302, %s303
      %p314 = scmp.eq.s32.totalorder %s44, 0
      %p315 = por %p313, %p314
      %p316 = scmp.ne.s32.totalorder %s302, %s303
      %p317 = scmp.eq.s32.totalorder %s45, 1
      %p318 = por %p316, %p317
      %p320 = scmp.ne.s32.totalorder %s303, %s319
      %p321 = scmp.eq.s32.totalorder %s45, 0
      %p322 = por %p320, %p321
      %s323 = ssub.s32 %s39, %s46
      %p324 = scmp.eq.s32.totalorder %s323, 0
      %s326 = sadd.s32 %s325, 1
      %s327 = scalar_select %p324, %s325, %s326
      %p330 = pneg %p324
      %p331 = scmp.eq.s32.totalorder %s39, 1
      %p332 = por %p330, %p331
      %p333 = scmp.ne.s32.totalorder %s325, %s328
      %p334 = scmp.eq.s32.totalorder %s39, 0
      %p335 = por %p333, %p334
      %p336 = scmp.ne.s32.totalorder %s325, %s328
      %p337 = scmp.eq.s32.totalorder %s44, 1
      %p338 = por %p336, %p337
      %p339 = scmp.ne.s32.totalorder %s328, %s329
      %p340 = scmp.eq.s32.totalorder %s44, 0
      %p341 = por %p339, %p340
      %p342 = scmp.ne.s32.totalorder %s328, %s329
      %p343 = scmp.eq.s32.totalorder %s45, 1
      %p344 = por %p342, %p343
      %p346 = scmp.ne.s32.totalorder %s329, %s345
      %p347 = scmp.eq.s32.totalorder %s45, 0
      %p348 = por %p346, %p347
      %s349 = ssub.s32 %s39, %s46
      %p350 = scmp.eq.s32.totalorder %s349, 0
      %s352 = sadd.s32 %s351, 1
      %s353 = scalar_select %p350, %s351, %s352
      %p356 = pneg %p350
      %p357 = scmp.eq.s32.totalorder %s39, 1
      %p358 = por %p356, %p357
      %p359 = scmp.ne.s32.totalorder %s351, %s354
      %p360 = scmp.eq.s32.totalorder %s39, 0
      %p361 = por %p359, %p360
      %p362 = scmp.ne.s32.totalorder %s351, %s354
      %p363 = scmp.eq.s32.totalorder %s44, 1
      %p364 = por %p362, %p363
      %p365 = scmp.ne.s32.totalorder %s354, %s355
      %p366 = scmp.eq.s32.totalorder %s44, 0
      %p367 = por %p365, %p366
      %p368 = scmp.ne.s32.totalorder %s354, %s355
      %p369 = scmp.eq.s32.totalorder %s45, 1
      %p370 = por %p368, %p369
      %p372 = scmp.ne.s32.totalorder %s355, %s371
      %p373 = scmp.eq.s32.totalorder %s45, 0
      %p374 = por %p372, %p373
      %s375 = ssub.s32 %s39, %s46
      %p376 = scmp.eq.s32.totalorder %s375, 0
      %s378 = sadd.s32 %s377, 1
      %s379 = scalar_select %p376, %s377, %s378
      %p382 = pneg %p376
      %p383 = scmp.eq.s32.totalorder %s39, 1
      %p384 = por %p382, %p383
      %p385 = scmp.ne.s32.totalorder %s377, %s380
      %p386 = scmp.eq.s32.totalorder %s39, 0
      %p387 = por %p385, %p386
      %p388 = scmp.ne.s32.totalorder %s377, %s380
      %p389 = scmp.eq.s32.totalorder %s44, 1
      %p390 = por %p388, %p389
      %p391 = scmp.ne.s32.totalorder %s380, %s381
      %p392 = scmp.eq.s32.totalorder %s44, 0
      %p393 = por %p391, %p392
      %p394 = scmp.ne.s32.totalorder %s380, %s381
      %p395 = scmp.eq.s32.totalorder %s45, 1
      %p396 = por %p394, %p395
      %p398 = scmp.ne.s32.totalorder %s381, %s397
      %p399 = scmp.eq.s32.totalorder %s45, 0
      %p400 = por %p398, %p399
      %s401 = ssub.s32 %s39, %s46
      %p402 = scmp.eq.s32.totalorder %s401, 0
      %s404 = sadd.s32 %s403, 1
      %s405 = scalar_select %p402, %s403, %s404
      %p408 = pneg %p402
      %p409 = scmp.eq.s32.totalorder %s39, 1
      %p410 = por %p408, %p409
      %p411 = scmp.ne.s32.totalorder %s403, %s406
      %p412 = scmp.eq.s32.totalorder %s39, 0
      %p413 = por %p411, %p412
      %p414 = scmp.ne.s32.totalorder %s403, %s406
      %p415 = scmp.eq.s32.totalorder %s44, 1
      %p416 = por %p414, %p415
      %p417 = scmp.ne.s32.totalorder %s406, %s407
      %p418 = scmp.eq.s32.totalorder %s44, 0
      %p419 = por %p417, %p418
      %p420 = scmp.ne.s32.totalorder %s406, %s407
      %p421 = scmp.eq.s32.totalorder %s45, 1
      %p422 = por %p420, %p421
      %p424 = scmp.ne.s32.totalorder %s407, %s423
      %p425 = scmp.eq.s32.totalorder %s45, 0
      %p426 = por %p424, %p425
      %s427 = ssub.s32 %s39, %s46
      %p428 = scmp.eq.s32.totalorder %s427, 0
      %s430 = sadd.s32 %s429, 1
      %s431 = scalar_select %p428, %s429, %s430
      %p434 = pneg %p428
      %p435 = scmp.eq.s32.totalorder %s39, 1
      %p436 = por %p434, %p435
      %p437 = scmp.ne.s32.totalorder %s429, %s432
      %p438 = scmp.eq.s32.totalorder %s39, 0
      %p439 = por %p437, %p438
      %p440 = scmp.ne.s32.totalorder %s429, %s432
      %p441 = scmp.eq.s32.totalorder %s44, 1
      %p442 = por %p440, %p441
      %p443 = scmp.ne.s32.totalorder %s432, %s433
      %p444 = scmp.eq.s32.totalorder %s44, 0
      %p445 = por %p443, %p444
      %p446 = scmp.ne.s32.totalorder %s432, %s433
      %p447 = scmp.eq.s32.totalorder %s45, 1
      %p448 = por %p446, %p447
      %p450 = scmp.ne.s32.totalorder %s433, %s449
      %p451 = scmp.eq.s32.totalorder %s45, 0
      %p452 = por %p450, %p451
      %s453 = ssub.s32 %s39, %s46
      %p454 = scmp.eq.s32.totalorder %s453, 0
      %s456 = sadd.s32 %s455, 1
      %s457 = scalar_select %p454, %s455, %s456
      %p460 = pneg %p454
      %p461 = scmp.eq.s32.totalorder %s39, 1
      %p462 = por %p460, %p461
      %p463 = scmp.ne.s32.totalorder %s455, %s458
      %p464 = scmp.eq.s32.totalorder %s39, 0
      %p465 = por %p463, %p464
      %p466 = scmp.ne.s32.totalorder %s455, %s458
      %p467 = scmp.eq.s32.totalorder %s44, 1
      %p468 = por %p466, %p467
      %p469 = scmp.ne.s32.totalorder %s458, %s459
      %p470 = scmp.eq.s32.totalorder %s44, 0
      %p471 = por %p469, %p470
      %p472 = scmp.ne.s32.totalorder %s458, %s459
      %p473 = scmp.eq.s32.totalorder %s45, 1
      %p474 = por %p472, %p473
      %p476 = scmp.ne.s32.totalorder %s459, %s475
      %p477 = scmp.eq.s32.totalorder %s45, 0
      %p478 = por %p476, %p477
      %s479 = ssub.s32 %s39, %s46
      %p480 = scmp.eq.s32.totalorder %s479, 0
      %s482 = sadd.s32 %s481, 1
      %s483 = scalar_select %p480, %s481, %s482
      %p486 = pneg %p480
      %p487 = scmp.eq.s32.totalorder %s39, 1
      %p488 = por %p486, %p487
      %p489 = scmp.ne.s32.totalorder %s481, %s484
      %p490 = scmp.eq.s32.totalorder %s39, 0
      %p491 = por %p489, %p490
      %p492 = scmp.ne.s32.totalorder %s481, %s484
      %p493 = scmp.eq.s32.totalorder %s44, 1
      %p494 = por %p492, %p493
      %p495 = scmp.ne.s32.totalorder %s484, %s485
      %p496 = scmp.eq.s32.totalorder %s44, 0
      %p497 = por %p495, %p496
      %p498 = scmp.ne.s32.totalorder %s484, %s485
      %p499 = scmp.eq.s32.totalorder %s45, 1
      %p500 = por %p498, %p499
      %p502 = scmp.ne.s32.totalorder %s485, %s501
      %p503 = scmp.eq.s32.totalorder %s45, 0
      %p504 = por %p502, %p503
      %s505 = ssub.s32 %s39, %s46
      %p506 = scmp.eq.s32.totalorder %s505, 0
      %s508 = sadd.s32 %s507, 1
      %s509 = scalar_select %p506, %s507, %s508
      %p512 = pneg %p506
      %p513 = scmp.eq.s32.totalorder %s39, 1
      %p514 = por %p512, %p513
      %p515 = scmp.ne.s32.totalorder %s507, %s510
      %p516 = scmp.eq.s32.totalorder %s39, 0
      %p517 = por %p515, %p516
      %p518 = scmp.ne.s32.totalorder %s507, %s510
      %p519 = scmp.eq.s32.totalorder %s44, 1
      %p520 = por %p518, %p519
      %p521 = scmp.ne.s32.totalorder %s510, %s511
      %p522 = scmp.eq.s32.totalorder %s44, 0
      %p523 = por %p521, %p522
      %p524 = scmp.ne.s32.totalorder %s510, %s511
      %p525 = scmp.eq.s32.totalorder %s45, 1
      %p526 = por %p524, %p525
      %p528 = scmp.ne.s32.totalorder %s511, %s527
      %p529 = scmp.eq.s32.totalorder %s45, 0
      %p530 = por %p528, %p529
      %s531 = ssub.s32 %s39, %s46
      %p532 = scmp.eq.s32.totalorder %s531, 0
      %s534 = sadd.s32 %s533, 1
      %s535 = scalar_select %p532, %s533, %s534
      %p538 = pneg %p532
      %p539 = scmp.eq.s32.totalorder %s39, 1
      %p540 = por %p538, %p539
      %p541 = scmp.ne.s32.totalorder %s533, %s536
      %p542 = scmp.eq.s32.totalorder %s39, 0
      %p543 = por %p541, %p542
      %p544 = scmp.ne.s32.totalorder %s533, %s536
      %p545 = scmp.eq.s32.totalorder %s44, 1
      %p546 = por %p544, %p545
      %p547 = scmp.ne.s32.totalorder %s536, %s537
      %p548 = scmp.eq.s32.totalorder %s44, 0
      %p549 = por %p547, %p548
      %p550 = scmp.ne.s32.totalorder %s536, %s537
      %p551 = scmp.eq.s32.totalorder %s45, 1
      %p552 = por %p550, %p551
      %p554 = scmp.ne.s32.totalorder %s537, %s553
      %p555 = scmp.eq.s32.totalorder %s45, 0
      %p556 = por %p554, %p555
      %s557 = ssub.s32 %s39, %s46
      %p558 = scmp.eq.s32.totalorder %s557, 0
      %s560 = sadd.s32 %s559, 1
      %s561 = scalar_select %p558, %s559, %s560
      %p564 = pneg %p558
      %p565 = scmp.eq.s32.totalorder %s39, 1
      %p566 = por %p564, %p565
      %p567 = scmp.ne.s32.totalorder %s559, %s562
      %p568 = scmp.eq.s32.totalorder %s39, 0
      %p569 = por %p567, %p568
      %p570 = scmp.ne.s32.totalorder %s559, %s562
      %p571 = scmp.eq.s32.totalorder %s44, 1
      %p572 = por %p570, %p571
      %p573 = scmp.ne.s32.totalorder %s562, %s563
      %p574 = scmp.eq.s32.totalorder %s44, 0
      %p575 = por %p573, %p574
      %p576 = scmp.ne.s32.totalorder %s562, %s563
      %p577 = scmp.eq.s32.totalorder %s45, 1
      %p578 = por %p576, %p577
      %p580 = scmp.ne.s32.totalorder %s563, %s579
      %p581 = scmp.eq.s32.totalorder %s45, 0
      %p582 = por %p580, %p581
      %p583 = scmp.le.s32.totalorder 1, %s39
      %p584 = scmp.lt.s32.totalorder %s39, 3
      %p585 = pnand %p583, %p584
      %p586 = pneg %p585
      // Predicated region
      $region9: #{a_call__.1} parent=5 // pred_check
        _
      $region10: #{a_call__.1} parent=5 // pred_check_branch
        %588 = sbr.rel (%p585) target = $region12
      $region11: #{a_call__.1} parent=5 // pred_region
        %s589 = ssub.s32 %s39, 1
        // Predicated region
        $region13: #{a_call__.1} parent=11 // pred_check
          %p590 = pneg %p60
        $region14: #{a_call__.1} parent=11 // pred_check_branch
          %592 = sbr.rel (%p590) target = $region16
        $region15: #{a_call__.1} parent=11 // pred_region
          _
        $region16: #{a_call__.1} parent=11 // pred_fallthru
          _
        // Predicated region
        $region17: #{a_call__.1} parent=11 // pred_check
          %p593 = pneg %p81
        $region18: #{a_call__.1} parent=11 // pred_check_branch
          %595 = sbr.rel (%p593) target = $region20
        $region19: #{a_call__.1} parent=11 // pred_region
          _
        $region20: #{a_call__.1} parent=11 // pred_fallthru
          _
      $region12: #{a_call__.1} parent=5 // pred_fallthru
        _
      %p596 = scmp.lt.s32.totalorder %s39, 2
      // Predicated region
      $region21: #{a_call__.1} parent=5 // pred_check
        %p597 = pneg %p596
      $region22: #{a_call__.1} parent=5 // pred_check_branch
        %599 = sbr.rel (%p597) target = $region24
      $region23: #{a_call__.1} parent=5 // pred_region
        // Predicated region
        $region25: #{a_call__.1} parent=23 // pred_check
          %p600 = pneg %p101
        $region26: #{a_call__.1} parent=23 // pred_check_branch
          %602 = sbr.rel (%p600) target = $region28
        $region27: #{a_call__.1} parent=23 // pred_region
          %p603 = scmp.lt.s32.totalorder %s39, 1
          %s604 = scalar_select %p603, %s39, 1
          %s605 = smul.addr %s604, 5
          %s606 = smul.addr %s605, 8
          %s607 = scalar_lea.vmem %s2, %s606
        $region28: #{a_call__.1} parent=23 // pred_fallthru
          _
        // Predicated region
        $region29: #{a_call__.1} parent=23 // pred_check
          %p608 = pneg %p127
        $region30: #{a_call__.1} parent=23 // pred_check_branch
          %610 = sbr.rel (%p608) target = $region32
        $region31: #{a_call__.1} parent=23 // pred_region
          %s611 = sand.u32 %s117, 1
          %s612 = scalar_lea.sflag [#allocation3], %s611
          %s613 = sand.u32 %s117, 1
          %s614 = scalar_lea.vmem [#allocation2], %s613
          %s616 = ssub.s32 16, 16
          %617 = vsyncadd %s612, %s616
          %s618 = smul.addr %s39, 16
          %s619 = scalar_lea.hbm %s3, %s618
          %s621 = sshll.u32 %s614, 4
          %s622 = int_to_ptr.vmem [resolvable:$true] %s621
          %624 = dma.hbm_to_vmem [thread:$0]  %s619, 16, %s622, %s612
        $region32: #{a_call__.1} parent=23 // pred_fallthru
          _
        // Predicated region
        $region33: #{a_call__.1} parent=23 // pred_check
          %p625 = pneg %p153
        $region34: #{a_call__.1} parent=23 // pred_check_branch
          %627 = sbr.rel (%p625) target = $region36
        $region35: #{a_call__.1} parent=23 // pred_region
          %s628 = sand.u32 %s39, 1
          %s629 = scalar_lea.sflag [#allocation5], %s628
          %s630 = sand.u32 %s143, 1
          %s631 = scalar_lea.vmem [#allocation4], %s630
          %s633 = ssub.s32 16, 16
          %634 = vsyncadd %s629, %s633
          %s635 = smul.addr %s39, 16
          %s636 = scalar_lea.hbm %s4, %s635
          %s638 = sshll.u32 %s631, 4
          %s639 = int_to_ptr.vmem [resolvable:$true] %s638
          %641 = dma.hbm_to_vmem [thread:$0]  %s636, 16, %s639, %s629
        $region36: #{a_call__.1} parent=23 // pred_fallthru
          _
        // Predicated region
        $region37: #{a_call__.1} parent=23 // pred_check
          %p642 = pneg %p179
        $region38: #{a_call__.1} parent=23 // pred_check_branch
          %644 = sbr.rel (%p642) target = $region40
        $region39: #{a_call__.1} parent=23 // pred_region
          %s645 = sand.u32 %s39, 1
          %s646 = scalar_lea.sflag [#allocation5], %s645
          %s647 = sand.u32 %s169, 1
          %s648 = scalar_lea.vmem [#allocation6], %s647
          %s650 = ssub.s32 16, 16
          %651 = vsyncadd %s646, %s650
          %s652 = smul.addr %s39, 16
          %s653 = scalar_lea.hbm %s5, %s652
          %s655 = sshll.u32 %s648, 4
          %s656 = int_to_ptr.vmem [resolvable:$true] %s655
          %658 = dma.hbm_to_vmem [thread:$0]  %s653, 16, %s656, %s646
        $region40: #{a_call__.1} parent=23 // pred_fallthru
          _
        // Predicated region
        $region41: #{a_call__.1} parent=23 // pred_check
          %p659 = pneg %p205
        $region42: #{a_call__.1} parent=23 // pred_check_branch
          %661 = sbr.rel (%p659) target = $region44
        $region43: #{a_call__.1} parent=23 // pred_region
          %s662 = sand.u32 %s39, 1
          %s663 = scalar_lea.sflag [#allocation8], %s662
          %s664 = sand.u32 %s195, 1
          %s665 = smul.addr %s664, 32
          %s666 = scalar_lea.vmem [#allocation7], %s665
          %s668 = ssub.s32 512, 512
          %669 = vsyncadd %s663, %s668
          %s670 = smul.addr %s39, 4
          %s671 = smul.addr %s670, 128
          %s672 = scalar_lea.hbm %s6, %s671
          %s673 = sshll.u32 %s666, 4
          %s674 = int_to_ptr.vmem [resolvable:$true] %s673
          %679 = dma.hbm_to_vmem [thread:$0]  %s672, 512, %s674, %s663, 128, 128, 8
        $region44: #{a_call__.1} parent=23 // pred_fallthru
          _
        // Predicated region
        $region45: #{a_call__.1} parent=23 // pred_check
          %p680 = pneg %p231
        $region46: #{a_call__.1} parent=23 // pred_check_branch
          %682 = sbr.rel (%p680) target = $region48
        $region47: #{a_call__.1} parent=23 // pred_region
          %s683 = sand.u32 %s39, 1
          %s684 = scalar_lea.sflag [#allocation8], %s683
          %s685 = sand.u32 %s221, 1
          %s686 = scalar_lea.vmem [#allocation9], %s685
          %s688 = ssub.s32 16, 16
          %689 = vsyncadd %s684, %s688
          %s690 = smul.addr %s39, 16
          %s691 = scalar_lea.hbm %s7, %s690
          %s693 = sshll.u32 %s686, 4
          %s694 = int_to_ptr.vmem [resolvable:$true] %s693
          %696 = dma.hbm_to_vmem [thread:$0]  %s691, 16, %s694, %s684
        $region48: #{a_call__.1} parent=23 // pred_fallthru
          _
        // Predicated region
        $region49: #{a_call__.1} parent=23 // pred_check
          %p697 = pneg %p257
        $region50: #{a_call__.1} parent=23 // pred_check_branch
          %699 = sbr.rel (%p697) target = $region52
        $region51: #{a_call__.1} parent=23 // pred_region
          %p700 = scmp.lt.s32.totalorder %s39, 1
          %s701 = scalar_select %p700, %s39, 1
          %s702 = smul.addr %s701, 5
          %s703 = smul.addr %s702, 8
          %s704 = scalar_lea.vmem %s8, %s703
        $region52: #{a_call__.1} parent=23 // pred_fallthru
          _
        // Predicated region
        $region53: #{a_call__.1} parent=23 // pred_check
          %p705 = pneg %p283
        $region54: #{a_call__.1} parent=23 // pred_check_branch
          %707 = sbr.rel (%p705) target = $region56
        $region55: #{a_call__.1} parent=23 // pred_region
          %s708 = sand.u32 %s39, 1
          %s709 = scalar_lea.sflag [#allocation11], %s708
          %s710 = sand.u32 %s273, 1
          %s711 = scalar_lea.vmem [#allocation10], %s710
          %s713 = ssub.s32 16, 16
          %714 = vsyncadd %s709, %s713
          %s715 = smul.addr %s39, 16
          %s716 = scalar_lea.hbm %s9, %s715
          %s718 = sshll.u32 %s711, 4
          %s719 = int_to_ptr.vmem [resolvable:$true] %s718
          %721 = dma.hbm_to_vmem [thread:$0]  %s716, 16, %s719, %s709
        $region56: #{a_call__.1} parent=23 // pred_fallthru
          _
        // Predicated region
        $region57: #{a_call__.1} parent=23 // pred_check
          %p722 = pneg %p309
        $region58: #{a_call__.1} parent=23 // pred_check_branch
          %724 = sbr.rel (%p722) target = $region60
        $region59: #{a_call__.1} parent=23 // pred_region
          %p725 = scmp.lt.s32.totalorder %s39, 1
          %s726 = scalar_select %p725, %s39, 1
          %s727 = smul.addr %s726, 5
          %s728 = smul.addr %s727, 8
          %s729 = scalar_lea.vmem %s10, %s728
        $region60: #{a_call__.1} parent=23 // pred_fallthru
          _
        // Predicated region
        $region61: #{a_call__.1} parent=23 // pred_check
          %p730 = pneg %p335
        $region62: #{a_call__.1} parent=23 // pred_check_branch
          %732 = sbr.rel (%p730) target = $region64
        $region63: #{a_call__.1} parent=23 // pred_region
          %p733 = scmp.lt.s32.totalorder %s39, 1
          %s734 = scalar_select %p733, %s39, 1
          %s735 = smul.addr %s734, 5
          %s736 = smul.addr %s735, 8
          %s737 = scalar_lea.vmem %s11, %s736
        $region64: #{a_call__.1} parent=23 // pred_fallthru
          _
        // Predicated region
        $region65: #{a_call__.1} parent=23 // pred_check
          %p738 = pneg %p361
        $region66: #{a_call__.1} parent=23 // pred_check_branch
          %740 = sbr.rel (%p738) target = $region68
        $region67: #{a_call__.1} parent=23 // pred_region
          %p741 = scmp.lt.s32.totalorder %s39, 1
          %s742 = scalar_select %p741, %s39, 1
          %s743 = scalar_lea.vmem %s12, %s742
        $region68: #{a_call__.1} parent=23 // pred_fallthru
          _
        // Predicated region
        $region69: #{a_call__.1} parent=23 // pred_check
          %p744 = pneg %p387
        $region70: #{a_call__.1} parent=23 // pred_check_branch
          %746 = sbr.rel (%p744) target = $region72
        $region71: #{a_call__.1} parent=23 // pred_region
          %p747 = scmp.lt.s32.totalorder %s39, 1
          %s748 = scalar_select %p747, %s39, 1
          %s749 = smul.addr %s748, 5
          %s750 = smul.addr %s749, 8
          %s751 = scalar_lea.vmem %s13, %s750
        $region72: #{a_call__.1} parent=23 // pred_fallthru
          _
        // Predicated region
        $region73: #{a_call__.1} parent=23 // pred_check
          %p752 = pneg %p413
        $region74: #{a_call__.1} parent=23 // pred_check_branch
          %754 = sbr.rel (%p752) target = $region76
        $region75: #{a_call__.1} parent=23 // pred_region
          %p755 = scmp.lt.s32.totalorder %s39, 1
          %s756 = scalar_select %p755, %s39, 1
          %s757 = smul.addr %s756, 5
          %s758 = smul.addr %s757, 8
          %s759 = scalar_lea.vmem %s14, %s758
        $region76: #{a_call__.1} parent=23 // pred_fallthru
          _
        // Predicated region
        $region77: #{a_call__.1} parent=23 // pred_check
          %p760 = pneg %p439
        $region78: #{a_call__.1} parent=23 // pred_check_branch
          %762 = sbr.rel (%p760) target = $region80
        $region79: #{a_call__.1} parent=23 // pred_region
          %s763 = sand.u32 %s39, 1
          %s764 = scalar_lea.sflag [#allocation11], %s763
          %s765 = sand.u32 %s429, 1
          %s766 = smul.addr %s765, 32
          %s767 = scalar_lea.vmem [#allocation12], %s766
          %s769 = ssub.s32 512, 512
          %770 = vsyncadd %s764, %s769
          %s771 = smul.addr %s39, 4
          %s772 = smul.addr %s771, 128
          %s773 = scalar_lea.hbm %s15, %s772
          %s774 = sshll.u32 %s767, 4
          %s775 = int_to_ptr.vmem [resolvable:$true] %s774
          %780 = dma.hbm_to_vmem [thread:$0]  %s773, 512, %s775, %s764, 128, 128, 8
        $region80: #{a_call__.1} parent=23 // pred_fallthru
          _
        // Predicated region
        $region81: #{a_call__.1} parent=23 // pred_check
          %p781 = pneg %p465
        $region82: #{a_call__.1} parent=23 // pred_check_branch
          %783 = sbr.rel (%p781) target = $region84
        $region83: #{a_call__.1} parent=23 // pred_region
          %p784 = scmp.lt.s32.totalorder %s39, 1
          %s785 = scalar_select %p784, %s39, 1
          %s786 = scalar_lea.vmem %s16, %s785
        $region84: #{a_call__.1} parent=23 // pred_fallthru
          _
        // Predicated region
        $region85: #{a_call__.1} parent=23 // pred_check
          %p787 = pneg %p491
        $region86: #{a_call__.1} parent=23 // pred_check_branch
          %789 = sbr.rel (%p787) target = $region88
        $region87: #{a_call__.1} parent=23 // pred_region
          %p790 = scmp.lt.s32.totalorder %s39, 1
          %s791 = scalar_select %p790, %s39, 1
          %s792 = smul.addr %s791, 4
          %s793 = smul.addr %s792, 8
          %s794 = scalar_lea.vmem %s17, %s793
        $region88: #{a_call__.1} parent=23 // pred_fallthru
          _
        // Predicated region
        $region89: #{a_call__.1} parent=23 // pred_check
          %p795 = pneg %p517
        $region90: #{a_call__.1} parent=23 // pred_check_branch
          %797 = sbr.rel (%p795) target = $region92
        $region91: #{a_call__.1} parent=23 // pred_region
          %p798 = scmp.lt.s32.totalorder %s39, 1
          %s799 = scalar_select %p798, %s39, 1
          %s800 = scalar_lea.vmem %s18, %s799
        $region92: #{a_call__.1} parent=23 // pred_fallthru
          _
      $region24: #{a_call__.1} parent=5 // pred_fallthru
        _
      %p801 = scmp.le.s32.totalorder 1, %s39
      %p802 = scmp.lt.s32.totalorder %s39, 3
      %p803 = pnand %p801, %p802
      %p804 = pneg %p803
      // Predicated region
      $region93: #{a_call__.1} parent=5 // pred_check
        _
      $region94: #{a_call__.1} parent=5 // pred_check_branch
        %806 = sbr.rel (%p803) target = $region96
      $region95: #{a_call__.1} parent=5 // pred_region
        %s807 = ssub.s32 %s39, 1
        %s808 = sand.u32 %s120, 1
        %s809 = scalar_lea.sflag [#allocation3], %s808
        %s810 = sand.u32 %s120, 1
        %s811 = scalar_lea.vmem [#allocation2], %s810
        // Predicated region
        $region97: #{a_call__.1} parent=95 // pred_check
          %p812 = pneg %p133
        $region98: #{a_call__.1} parent=95 // pred_check_branch
          %814 = sbr.rel (%p812) target = $region100
        $region99: #{a_call__.1} parent=95 // pred_region
          %815 = dma.done %s809, 16
        $region100: #{a_call__.1} parent=95 // pred_fallthru
          _
        %s816 = sand.u32 %s44, 1
        %s817 = scalar_lea.sflag [#allocation5], %s816
        %s818 = sand.u32 %s146, 1
        %s819 = scalar_lea.vmem [#allocation4], %s818
        // Predicated region
        $region101: #{a_call__.1} parent=95 // pred_check
          %p820 = pneg %p159
        $region102: #{a_call__.1} parent=95 // pred_check_branch
          %822 = sbr.rel (%p820) target = $region104
        $region103: #{a_call__.1} parent=95 // pred_region
          %823 = dma.done %s817, 16
        $region104: #{a_call__.1} parent=95 // pred_fallthru
          _
        %s824 = sand.u32 %s44, 1
        %s825 = scalar_lea.sflag [#allocation5], %s824
        %s826 = sand.u32 %s172, 1
        %s827 = scalar_lea.vmem [#allocation6], %s826
        // Predicated region
        $region105: #{a_call__.1} parent=95 // pred_check
          %p828 = pneg %p185
        $region106: #{a_call__.1} parent=95 // pred_check_branch
          %830 = sbr.rel (%p828) target = $region108
        $region107: #{a_call__.1} parent=95 // pred_region
          %831 = dma.done %s825, 16
        $region108: #{a_call__.1} parent=95 // pred_fallthru
          _
        %s832 = sand.u32 %s44, 1
        %s833 = scalar_lea.sflag [#allocation8], %s832
        %s834 = sand.u32 %s198, 1
        %s835 = smul.addr %s834, 32
        %s836 = scalar_lea.vmem [#allocation7], %s835
        // Predicated region
        $region109: #{a_call__.1} parent=95 // pred_check
          %p837 = pneg %p211
        $region110: #{a_call__.1} parent=95 // pred_check_branch
          %839 = sbr.rel (%p837) target = $region112
        $region111: #{a_call__.1} parent=95 // pred_region
          %840 = dma.done %s833, 512
        $region112: #{a_call__.1} parent=95 // pred_fallthru
          _
        %s841 = sand.u32 %s44, 1
        %s842 = scalar_lea.sflag [#allocation8], %s841
        %s843 = sand.u32 %s224, 1
        %s844 = scalar_lea.vmem [#allocation9], %s843
        // Predicated region
        $region113: #{a_call__.1} parent=95 // pred_check
          %p845 = pneg %p237
        $region114: #{a_call__.1} parent=95 // pred_check_branch
          %847 = sbr.rel (%p845) target = $region116
        $region115: #{a_call__.1} parent=95 // pred_region
          %848 = dma.done %s842, 16
        $region116: #{a_call__.1} parent=95 // pred_fallthru
          _
        %s849 = sand.u32 %s44, 1
        %s850 = scalar_lea.sflag [#allocation11], %s849
        %s851 = sand.u32 %s276, 1
        %s852 = scalar_lea.vmem [#allocation10], %s851
        // Predicated region
        $region117: #{a_call__.1} parent=95 // pred_check
          %p853 = pneg %p289
        $region118: #{a_call__.1} parent=95 // pred_check_branch
          %855 = sbr.rel (%p853) target = $region120
        $region119: #{a_call__.1} parent=95 // pred_region
          %856 = dma.done %s850, 16
        $region120: #{a_call__.1} parent=95 // pred_fallthru
          _
        %s857 = sand.u32 %s44, 1
        %s858 = scalar_lea.sflag [#allocation11], %s857
        %s859 = sand.u32 %s432, 1
        %s860 = smul.addr %s859, 32
        %s861 = scalar_lea.vmem [#allocation12], %s860
        // Predicated region
        $region121: #{a_call__.1} parent=95 // pred_check
          %p862 = pneg %p445
        $region122: #{a_call__.1} parent=95 // pred_check_branch
          %864 = sbr.rel (%p862) target = $region124
        $region123: #{a_call__.1} parent=95 // pred_region
          %865 = dma.done %s858, 512
        $region124: #{a_call__.1} parent=95 // pred_fallthru
          _
        %p866 = pneg %p60
        %p867 = pneg %p57
        %p868 = pneg %p81
        %p869 = pneg %p78
        %p870 = scmp.lt.s32.totalorder %s44, 1
        %s871 = scalar_select %p870, %s44, 1
        %s872 = smul.addr %s871, 5
        %s873 = smul.addr %s872, 8
        %s874 = scalar_lea.vmem %s2, %s873
        %p875 = pneg %p107
        %p876 = pneg %p104
        %s877 = sand.u32 %s120, 1
        %s878 = scalar_lea.sflag [#allocation3], %s877
        %s879 = sand.u32 %s120, 1
        %s880 = scalar_lea.vmem [#allocation2], %s879
        %p881 = pneg %p133
        %p882 = pneg %p130
        %s883 = sand.u32 %s44, 1
        %s884 = scalar_lea.sflag [#allocation5], %s883
        %s885 = sand.u32 %s146, 1
        %s886 = scalar_lea.vmem [#allocation4], %s885
        %p887 = pneg %p159
        %p888 = pneg %p156
        %s889 = sand.u32 %s44, 1
        %s890 = scalar_lea.sflag [#allocation5], %s889
        %s891 = sand.u32 %s172, 1
        %s892 = scalar_lea.vmem [#allocation6], %s891
        %p893 = pneg %p185
        %p894 = pneg %p182
        %s895 = sand.u32 %s44, 1
        %s896 = scalar_lea.sflag [#allocation8], %s895
        %s897 = sand.u32 %s198, 1
        %s898 = smul.addr %s897, 32
        %s899 = scalar_lea.vmem [#allocation7], %s898
        %p900 = pneg %p211
        %p901 = pneg %p208
        %s902 = sand.u32 %s44, 1
        %s903 = scalar_lea.sflag [#allocation8], %s902
        %s904 = sand.u32 %s224, 1
        %s905 = scalar_lea.vmem [#allocation9], %s904
        %p906 = pneg %p237
        %p907 = pneg %p234
        %p908 = scmp.lt.s32.totalorder %s44, 1
        %s909 = scalar_select %p908, %s44, 1
        %s910 = smul.addr %s909, 5
        %s911 = smul.addr %s910, 8
        %s912 = scalar_lea.vmem %s8, %s911
        %p913 = pneg %p263
        %p914 = pneg %p260
        %s915 = sand.u32 %s44, 1
        %s916 = scalar_lea.sflag [#allocation11], %s915
        %s917 = sand.u32 %s276, 1
        %s918 = scalar_lea.vmem [#allocation10], %s917
        %p919 = pneg %p289
        %p920 = pneg %p286
        %p921 = scmp.lt.s32.totalorder %s44, 1
        %s922 = scalar_select %p921, %s44, 1
        %s923 = smul.addr %s922, 5
        %s924 = smul.addr %s923, 8
        %s925 = scalar_lea.vmem %s10, %s924
        %p926 = pneg %p315
        %p927 = pneg %p312
        %p928 = scmp.lt.s32.totalorder %s44, 1
        %s929 = scalar_select %p928, %s44, 1
        %s930 = smul.addr %s929, 5
        %s931 = smul.addr %s930, 8
        %s932 = scalar_lea.vmem %s11, %s931
        %p933 = pneg %p341
        %p934 = pneg %p338
        %p935 = scmp.lt.s32.totalorder %s44, 1
        %s936 = scalar_select %p935, %s44, 1
        %s937 = scalar_lea.vmem %s12, %s936
        %p938 = pneg %p367
        %p939 = pneg %p364
        %p940 = scmp.lt.s32.totalorder %s44, 1
        %s941 = scalar_select %p940, %s44, 1
        %s942 = smul.addr %s941, 5
        %s943 = smul.addr %s942, 8
        %s944 = scalar_lea.vmem %s13, %s943
        %p945 = pneg %p393
        %p946 = pneg %p390
        %p947 = scmp.lt.s32.totalorder %s44, 1
        %s948 = scalar_select %p947, %s44, 1
        %s949 = smul.addr %s948, 5
        %s950 = smul.addr %s949, 8
        %s951 = scalar_lea.vmem %s14, %s950
        %p952 = pneg %p419
        %p953 = pneg %p416
        %s954 = sand.u32 %s44, 1
        %s955 = scalar_lea.sflag [#allocation11], %s954
        %s956 = sand.u32 %s432, 1
        %s957 = smul.addr %s956, 32
        %s958 = scalar_lea.vmem [#allocation12], %s957
        %p959 = pneg %p445
        %p960 = pneg %p442
        %p961 = scmp.lt.s32.totalorder %s44, 1
        %s962 = scalar_select %p961, %s44, 1
        %s963 = scalar_lea.vmem %s16, %s962
        %p964 = pneg %p471
        %p965 = pneg %p468
        %p966 = scmp.lt.s32.totalorder %s44, 1
        %s967 = scalar_select %p966, %s44, 1
        %s968 = smul.addr %s967, 4
        %s969 = smul.addr %s968, 8
        %s970 = scalar_lea.vmem %s17, %s969
        %p971 = pneg %p497
        %p972 = pneg %p494
        %p973 = scmp.lt.s32.totalorder %s44, 1
        %s974 = scalar_select %p973, %s44, 1
        %s975 = scalar_lea.vmem %s18, %s974
        %p976 = pneg %p523
        %p977 = pneg %p520
        %p978 = pneg %p549
        %p979 = pneg %p546
        %p980 = scmp.lt.s32.totalorder %s44, 1
        %s981 = scalar_select %p980, %s44, 1
        %s982 = smul.addr %s981, 8
        %s983 = smul.addr %s982, 8
        %s984 = scalar_lea.vmem %s19, %s983
        %p985 = pneg %p575
        %p986 = pneg %p572
        %p987 = scmp.lt.s32.totalorder %s44, 1
        %s988 = scalar_select %p987, %s44, 1
        %s989 = smul.addr %s988, 8
        %s990 = scalar_lea.vmem %s20, %s989
        %p991 = scmp.lt.s32.totalorder %s44, 1
        %s992 = scalar_select %p991, %s44, 1
        %s993 = smul.addr %s992, 5
        %s994 = smul.addr %s993, 8
        %s995 = scalar_lea.vmem %s2, %s994
        %p996 = scmp.lt.s32.totalorder %s44, 1
        %s997 = scalar_select %p996, %s44, 1
        %s998 = smul.addr %s997, 5
        %s999 = smul.addr %s998, 8
        %s1000 = scalar_lea.vmem %s8, %s999
        %p1001 = scmp.lt.s32.totalorder %s44, 1
        %s1002 = scalar_select %p1001, %s44, 1
        %s1003 = smul.addr %s1002, 5
        %s1004 = smul.addr %s1003, 8
        %s1005 = scalar_lea.vmem %s10, %s1004
        %p1006 = scmp.lt.s32.totalorder %s44, 1
        %s1007 = scalar_select %p1006, %s44, 1
        %s1008 = smul.addr %s1007, 5
        %s1009 = smul.addr %s1008, 8
        %s1010 = scalar_lea.vmem %s11, %s1009
        %p1011 = scmp.lt.s32.totalorder %s44, 1
        %s1012 = scalar_select %p1011, %s44, 1
        %s1013 = scalar_lea.vmem %s12, %s1012
        %p1014 = scmp.lt.s32.totalorder %s44, 1
        %s1015 = scalar_select %p1014, %s44, 1
        %s1016 = smul.addr %s1015, 5
        %s1017 = smul.addr %s1016, 8
        %s1018 = scalar_lea.vmem %s13, %s1017
        %p1019 = scmp.lt.s32.totalorder %s44, 1
        %s1020 = scalar_select %p1019, %s44, 1
        %s1021 = smul.addr %s1020, 5
        %s1022 = smul.addr %s1021, 8
        %s1023 = scalar_lea.vmem %s14, %s1022
        %p1024 = scmp.lt.s32.totalorder %s44, 1
        %s1025 = scalar_select %p1024, %s44, 1
        %s1026 = scalar_lea.vmem %s16, %s1025
        %p1027 = scmp.lt.s32.totalorder %s44, 1
        %s1028 = scalar_select %p1027, %s44, 1
        %s1029 = smul.addr %s1028, 4
        %s1030 = smul.addr %s1029, 8
        %s1031 = scalar_lea.vmem %s17, %s1030
        %p1032 = scmp.lt.s32.totalorder %s44, 1
        %s1033 = scalar_select %p1032, %s44, 1
        %s1034 = scalar_lea.vmem %s18, %s1033
        %p1035 = scmp.lt.s32.totalorder %s44, 1
        %s1036 = scalar_select %p1035, %s44, 1
        %s1037 = smul.addr %s1036, 8
        %s1038 = smul.addr %s1037, 8
        %s1039 = scalar_lea.vmem %s19, %s1038
        %p1040 = scmp.lt.s32.totalorder %s44, 1
        %s1041 = scalar_select %p1040, %s44, 1
        %s1042 = smul.addr %s1041, 8
        %s1043 = scalar_lea.vmem %s20, %s1042
        %v1044 = vld [vmem:[%s995] sm:$0xff]
        %v1045 = vld [vmem:[%s995 + $0x8] sm:$0xff]
        %v1046 = vld [vmem:[%s995 + $0x10] sm:$0xff]
        %v1047 = vld [vmem:[%s995 + $0x18] sm:$0xff]
        %v1048 = vld [vmem:[%s995 + $0x20] sm:$0xf]
        %v1049 = vld [vmem:[%s811] sm:$0x1]
        %v1050 = vld [vmem:[%s819] sm:$0x1]
        %v1051 = vld [vmem:[%s827] sm:$0x1]
        %v1052 = vld [vmem:[%s836] sm:$0xff]
        %v1053 = vld [vmem:[%s836 + $0x8] sm:$0xff]
        %v1054 = vld [vmem:[%s836 + $0x10] sm:$0xff]
        %v1055 = vld [vmem:[%s836 + $0x18] sm:$0xff]
        %v1056 = vld [vmem:[%s844] sm:$0x1]
        %v1057 = vld [vmem:[%s1000] sm:$0xff]
        %v1058 = vld [vmem:[%s1000 + $0x8] sm:$0xff]
        %v1059 = vld [vmem:[%s1000 + $0x10] sm:$0xff]
        %v1060 = vld [vmem:[%s1000 + $0x18] sm:$0xff]
        %v1061 = vld [vmem:[%s1000 + $0x20] sm:$0xf]
        %v1062 = vld [vmem:[%s852] sm:$0x1]
        %v1063 = vld [vmem:[%s1005] sm:$0xff]
        %v1064 = vld [vmem:[%s1005 + $0x8] sm:$0xff]
        %v1065 = vld [vmem:[%s1005 + $0x10] sm:$0xff]
        %v1066 = vld [vmem:[%s1005 + $0x18] sm:$0xff]
        %v1067 = vld [vmem:[%s1005 + $0x20] sm:$0xf]
        %v1068 = vld [vmem:[%s1010] sm:$0xff]
        %v1069 = vld [vmem:[%s1010 + $0x8] sm:$0xff]
        %v1070 = vld [vmem:[%s1010 + $0x10] sm:$0xff]
        %v1071 = vld [vmem:[%s1010 + $0x18] sm:$0xff]
        %v1072 = vld [vmem:[%s1010 + $0x20] sm:$0xf]
        %v1073 = vld [vmem:[%s1013] sm:$0x1]
        %v1074 = vld [vmem:[%s1018] sm:$0xff]
        %v1075 = vld [vmem:[%s1018 + $0x8] sm:$0xff]
        %v1076 = vld [vmem:[%s1018 + $0x10] sm:$0xff]
        %v1077 = vld [vmem:[%s1018 + $0x18] sm:$0xff]
        %v1078 = vld [vmem:[%s1018 + $0x20] sm:$0xf]
        %v1079 = vld [vmem:[%s1023] sm:$0xff]
        %v1080 = vld [vmem:[%s1023 + $0x8] sm:$0xff]
        %v1081 = vld [vmem:[%s1023 + $0x10] sm:$0xff]
        %v1082 = vld [vmem:[%s1023 + $0x18] sm:$0xff]
        %v1083 = vld [vmem:[%s1023 + $0x20] sm:$0xf]
        %v1084 = vld [vmem:[%s861] sm:$0xff]
        %v1085 = vld [vmem:[%s861 + $0x8] sm:$0xff]
        %v1086 = vld [vmem:[%s861 + $0x10] sm:$0xff]
        %v1087 = vld [vmem:[%s861 + $0x18] sm:$0xff]
        %v1088 = vld [vmem:[%s1026] sm:$0x1]
        %p1089 = scmp.eq.s32.totalorder %s44, 0
        %s1090 = scalar_select %p1089, 0, 7
        %s1091 = smul.u32 %s1090, 8
        %s1092 = scalar_lea.vmem %s0, %s1091
        %v1093 = vld [vmem:[%s1092] sm:$0xff]
        %s1094 = scalar_lea.vmem %s1, %s1091
        %v1095 = vld [vmem:[%s1094] sm:$0xff]
        %v1097 = vlaneseq
        %v1098 = vshrl.u32 %v1097, 7
        %v1099 = vsub.s32 0, %v1098
        %v1100 = vrot.slane %v1049, %v1099
        %vm1102 = vcmask 293888
        %v1104 = vsel %vm1102, 0.0, 0
        %vm1106 = vcmask 1043456
        %v1108 = vsel %vm1106, %v1048, 0
        %1110 = vmatprep.subr.mxu0 0.0
        %1111 = vmatpush1.msra.mxu0 %v1044
        %1112 = vmatprep.subr.mxu0 0.0
        %1113 = vmatpush1.msra.mxu0 %v1045
        %1114 = vmatprep.subr.mxu0 0.0
        %1115 = vmatpush1.msra.mxu0 %v1046
        %1116 = vmatprep.subr.mxu0 0.0
        %1117 = vmatpush1.msra.mxu0 %v1047
        %1118 = vmatprep.subr.mxu0 0.0
        %1119 = vmatpush1.msra.mxu0 %v1108
        %1120 = vmatprep.subr.mxu0 0.0
        %1121 = vmatpush1.msra.mxu0 0.0
        %1122 = vmatprep.subr.mxu0 0.0
        %1123 = vmatpush1.msra.mxu0 0.0
        %1124 = vmatprep.subr.mxu0 0.0
        %1125 = vmatpush1.msra.mxu0 0.0
        %1126 = vmatprep.subr.mxu0 0.0
        %1127 = vmatpush1.msra.mxu0 0.0
        %1128 = vmatprep.subr.mxu0 0.0
        %1129 = vmatpush1.msra.mxu0 0.0
        %1130 = vmatprep.subr.mxu0 0.0
        %1131 = vmatpush1.msra.mxu0 0.0
        %1132 = vmatprep.subr.mxu0 0.0
        %1133 = vmatpush1.msra.mxu0 0.0
        %1134 = vmatprep.subr.mxu0 0.0
        %1135 = vmatpush1.msra.mxu0 0.0
        %1136 = vmatprep.subr.mxu0 0.0
        %1137 = vmatpush1.msra.mxu0 0.0
        %1138 = vmatprep.subr.mxu0 0.0
        %1139 = vmatpush1.msra.mxu0 0.0
        %1140 = vmatprep.subr.mxu0 0.0
        %1141 = vmatpush1.msra.mxu0 0.0
        %1142 = vmatprep.subr.mxu0 0.0
        %1143 = vmatpush1.msra.mxu0 0.0
        %1144 = vmatprep.subr.mxu0 0.0
        %1145 = vmatpush1.msra.mxu0 0.0
        %1146 = vmatprep.subr.mxu0 0.0
        %1147 = vmatpush1.msra.mxu0 0.0
        %1148 = vmatprep.subr.mxu0 0.0
        %1149 = vmatpush1.msra.mxu0 0.0
        %1150 = vmatprep.subr.mxu0 0.0
        %1151 = vmatpush1.msra.mxu0 0.0
        %1152 = vmatprep.subr.mxu0 0.0
        %1153 = vmatpush1.msra.mxu0 0.0
        %1154 = vmatprep.subr.mxu0 0.0
        %1155 = vmatpush1.msra.mxu0 0.0
        %1156 = vmatprep.subr.mxu0 0.0
        %1157 = vmatpush1.msra.mxu0 0.0
        %1158 = vmatprep.subr.mxu0 0.0
        %1159 = vmatpush1.msra.mxu0 0.0
        %1160 = vmatprep.subr.mxu0 0.0
        %1161 = vmatpush1.msra.mxu0 0.0
        %1162 = vmatprep.subr.mxu0 0.0
        %1163 = vmatpush1.msra.mxu0 0.0
        %1164 = vmatprep.subr.mxu0 0.0
        %1165 = vmatpush1.msra.mxu0 0.0
        %1166 = vmatprep.subr.mxu0 0.0
        %1167 = vmatpush1.msra.mxu0 0.0
        %1168 = vmatprep.subr.mxu0 0.0
        %1169 = vmatpush1.msra.mxu0 0.0
        %1170 = vmatprep.subr.mxu0 0.0
        %1171 = vmatpush1.msra.mxu0 0.0
        %1172 = vmatprep.subr.mxu0 0.0
        %1173 = vmatpush1.msra.mxu0 0.0
        %1174 = vmatprep.mubr.f32.mxu0 0.0
        %1175 = vmatmul.mubr.f32.gmra.mrb[0].mxu0 %v1104
        %v1176 = vpop.f32.mrb[0].mxu0
        %v1177 = vadd.f32 %v1100, %v1176
        %v1178 = vpop.f32.mrb[0].mxu0
        %1179 = vdwg.mxu0
        %v1180 = vmax.f32 %v1177, 0.0
        %v1181 = vsub.f32 0.0, %v1180
        %v1182 = vmul.f32 %v1181, 1.442695
        %v1183 = vpow.pop %v1182
        %v1185 = vlaneseq
        %v1186 = vshrl.u32 %v1185, 7
        %v1187 = vsub.s32 0, %v1186
        %v1188 = vrot.slane %v1050, %v1187
        %v1190 = vmul.f32 %v1188, 0.0
        %v1192 = vlaneseq
        %v1193 = vshrl.u32 %v1192, 7
        %v1194 = vsub.s32 0, %v1193
        %v1195 = vrot.slane %v1051, %v1194
        %v1197 = vadd.f32 %v1190, %v1195
        %v1198 = vmax.f32 %v1197, 0.0
        %v1199 = vsub.f32 0.0, %v1198
        %v1200 = vmul.f32 %v1199, 1.442695
        %v1201 = vpow.pop %v1200
        %v1202 = vmul.f32 %v1183, 0.0
        %v1204 = vlaneseq
        %v1205 = vshrl.u32 %v1204, 7
        %v1206 = vsub.s32 0, %v1205
        %v1207 = vrot.slane %v1056, %v1206
        %vm1209 = vcmask 261120
        %v1211 = vsel %vm1209, %v1202, 0
        %1213 = vmatprep.subr.mxu0 0.0
        %1214 = vmatpush1.msra.mxu0 %v1052
        %1215 = vmatprep.subr.mxu0 0.0
        %1216 = vmatpush1.msra.mxu0 %v1053
        %1217 = vmatprep.subr.mxu0 0.0
        %1218 = vmatpush1.msra.mxu0 %v1054
        %1219 = vmatprep.subr.mxu0 0.0
        %1220 = vmatpush1.msra.mxu0 %v1055
        %1221 = vmatprep.subr.mxu0 0.0
        %1222 = vmatpush1.msra.mxu0 0.0
        %1223 = vmatprep.subr.mxu0 0.0
        %1224 = vmatpush1.msra.mxu0 0.0
        %1225 = vmatprep.subr.mxu0 0.0
        %1226 = vmatpush1.msra.mxu0 0.0
        %1227 = vmatprep.subr.mxu0 0.0
        %1228 = vmatpush1.msra.mxu0 0.0
        %1229 = vmatprep.subr.mxu0 0.0
        %1230 = vmatpush1.msra.mxu0 0.0
        %1231 = vmatprep.subr.mxu0 0.0
        %1232 = vmatpush1.msra.mxu0 0.0
        %1233 = vmatprep.subr.mxu0 0.0
        %1234 = vmatpush1.msra.mxu0 0.0
        %1235 = vmatprep.subr.mxu0 0.0
        %1236 = vmatpush1.msra.mxu0 0.0
        %1237 = vmatprep.subr.mxu0 0.0
        %1238 = vmatpush1.msra.mxu0 0.0
        %1239 = vmatprep.subr.mxu0 0.0
        %1240 = vmatpush1.msra.mxu0 0.0
        %1241 = vmatprep.subr.mxu0 0.0
        %1242 = vmatpush1.msra.mxu0 0.0
        %1243 = vmatprep.subr.mxu0 0.0
        %1244 = vmatpush1.msra.mxu0 0.0
        %1245 = vmatprep.subr.mxu0 0.0
        %1246 = vmatpush1.msra.mxu0 0.0
        %1247 = vmatprep.subr.mxu0 0.0
        %1248 = vmatpush1.msra.mxu0 0.0
        %1249 = vmatprep.subr.mxu0 0.0
        %1250 = vmatpush1.msra.mxu0 0.0
        %1251 = vmatprep.subr.mxu0 0.0
        %1252 = vmatpush1.msra.mxu0 0.0
        %1253 = vmatprep.subr.mxu0 0.0
        %1254 = vmatpush1.msra.mxu0 0.0
        %1255 = vmatprep.subr.mxu0 0.0
        %1256 = vmatpush1.msra.mxu0 0.0
        %1257 = vmatprep.subr.mxu0 0.0
        %1258 = vmatpush1.msra.mxu0 0.0
        %1259 = vmatprep.subr.mxu0 0.0
        %1260 = vmatpush1.msra.mxu0 0.0
        %1261 = vmatprep.subr.mxu0 0.0
        %1262 = vmatpush1.msra.mxu0 0.0
        %1263 = vmatprep.subr.mxu0 0.0
        %1264 = vmatpush1.msra.mxu0 0.0
        %1265 = vmatprep.subr.mxu0 0.0
        %1266 = vmatpush1.msra.mxu0 0.0
        %1267 = vmatprep.subr.mxu0 0.0
        %1268 = vmatpush1.msra.mxu0 0.0
        %1269 = vmatprep.subr.mxu0 0.0
        %1270 = vmatpush1.msra.mxu0 0.0
        %1271 = vmatprep.subr.mxu0 0.0
        %1272 = vmatpush1.msra.mxu0 0.0
        %1273 = vmatprep.subr.mxu0 0.0
        %1274 = vmatpush1.msra.mxu0 0.0
        %1275 = vmatprep.subr.mxu0 0.0
        %1276 = vmatpush1.msra.mxu0 0.0
        %1277 = vmatprep.mubr.f32.mxu0 0.0
        %1278 = vmatmul.mubr.f32.gmra.mrb[0].mxu0 %v1211
        %v1279 = vpop.f32.mrb[0].mxu0
        %v1280 = vadd.f32 %v1207, %v1279
        %v1281 = vpop.f32.mrb[0].mxu0
        %1282 = vdwg.mxu0
        %v1283 = vmul.f32 %v1095, %v1093
        %v1284 = vsub.f32 1.0, %v1095
        %v1285 = vmul.f32 %v1284, %v1280
        %v1286 = vadd.f32 %v1283, %v1285
        %v1288 = vlaneseq
        %v1289 = vshrl.u32 %v1288, 7
        %v1290 = vsub.s32 0, %v1289
        %v1291 = vrot.slane %v1062, %v1290
        %v1294 = vsel %vm1102, %v1286, 0
        %v1297 = vsel %vm1106, %v1061, 0
        %1299 = vmatprep.subr.mxu0 0.0
        %1300 = vmatpush1.msra.mxu0 %v1057
        %1301 = vmatprep.subr.mxu0 0.0
        %1302 = vmatpush1.msra.mxu0 %v1058
        %1303 = vmatprep.subr.mxu0 0.0
        %1304 = vmatpush1.msra.mxu0 %v1059
        %1305 = vmatprep.subr.mxu0 0.0
        %1306 = vmatpush1.msra.mxu0 %v1060
        %1307 = vmatprep.subr.mxu0 0.0
        %1308 = vmatpush1.msra.mxu0 %v1297
        %1309 = vmatprep.subr.mxu0 0.0
        %1310 = vmatpush1.msra.mxu0 0.0
        %1311 = vmatprep.subr.mxu0 0.0
        %1312 = vmatpush1.msra.mxu0 0.0
        %1313 = vmatprep.subr.mxu0 0.0
        %1314 = vmatpush1.msra.mxu0 0.0
        %1315 = vmatprep.subr.mxu0 0.0
        %1316 = vmatpush1.msra.mxu0 0.0
        %1317 = vmatprep.subr.mxu0 0.0
        %1318 = vmatpush1.msra.mxu0 0.0
        %1319 = vmatprep.subr.mxu0 0.0
        %1320 = vmatpush1.msra.mxu0 0.0
        %1321 = vmatprep.subr.mxu0 0.0
        %1322 = vmatpush1.msra.mxu0 0.0
        %1323 = vmatprep.subr.mxu0 0.0
        %1324 = vmatpush1.msra.mxu0 0.0
        %1325 = vmatprep.subr.mxu0 0.0
        %1326 = vmatpush1.msra.mxu0 0.0
        %1327 = vmatprep.subr.mxu0 0.0
        %1328 = vmatpush1.msra.mxu0 0.0
        %1329 = vmatprep.subr.mxu0 0.0
        %1330 = vmatpush1.msra.mxu0 0.0
        %1331 = vmatprep.subr.mxu0 0.0
        %1332 = vmatpush1.msra.mxu0 0.0
        %1333 = vmatprep.subr.mxu0 0.0
        %1334 = vmatpush1.msra.mxu0 0.0
        %1335 = vmatprep.subr.mxu0 0.0
        %1336 = vmatpush1.msra.mxu0 0.0
        %1337 = vmatprep.subr.mxu0 0.0
        %1338 = vmatpush1.msra.mxu0 0.0
        %1339 = vmatprep.subr.mxu0 0.0
        %1340 = vmatpush1.msra.mxu0 0.0
        %1341 = vmatprep.subr.mxu0 0.0
        %1342 = vmatpush1.msra.mxu0 0.0
        %1343 = vmatprep.subr.mxu0 0.0
        %1344 = vmatpush1.msra.mxu0 0.0
        %1345 = vmatprep.subr.mxu0 0.0
        %1346 = vmatpush1.msra.mxu0 0.0
        %1347 = vmatprep.subr.mxu0 0.0
        %1348 = vmatpush1.msra.mxu0 0.0
        %1349 = vmatprep.subr.mxu0 0.0
        %1350 = vmatpush1.msra.mxu0 0.0
        %1351 = vmatprep.subr.mxu0 0.0
        %1352 = vmatpush1.msra.mxu0 0.0
        %1353 = vmatprep.subr.mxu0 0.0
        %1354 = vmatpush1.msra.mxu0 0.0
        %1355 = vmatprep.subr.mxu0 0.0
        %1356 = vmatpush1.msra.mxu0 0.0
        %1357 = vmatprep.subr.mxu0 0.0
        %1358 = vmatpush1.msra.mxu0 0.0
        %1359 = vmatprep.subr.mxu0 0.0
        %1360 = vmatpush1.msra.mxu0 0.0
        %1361 = vmatprep.subr.mxu0 0.0
        %1362 = vmatpush1.msra.mxu0 0.0
        %1363 = vmatprep.mubr.f32.mxu0 0.0
        %1364 = vmatmul.mubr.f32.gmra.mrb[0].mxu0 %v1294
        %v1365 = vpop.f32.mrb[0].mxu0
        %v1366 = vadd.f32 %v1291, %v1365
        %v1367 = vpop.f32.mrb[0].mxu0
        %1368 = vdwg.mxu0
        %v1370 = vsel %vm1102, %v1095, 0
        %v1373 = vsel %vm1106, %v1072, 0
        %1375 = vmatprep.subr.mxu0 0.0
        %1376 = vmatpush1.msra.mxu0 %v1068
        %1377 = vmatprep.subr.mxu0 0.0
        %1378 = vmatpush1.msra.mxu0 %v1069
        %1379 = vmatprep.subr.mxu0 0.0
        %1380 = vmatpush1.msra.mxu0 %v1070
        %1381 = vmatprep.subr.mxu0 0.0
        %1382 = vmatpush1.msra.mxu0 %v1071
        %1383 = vmatprep.subr.mxu0 0.0
        %1384 = vmatpush1.msra.mxu0 %v1373
        %1385 = vmatprep.subr.mxu0 0.0
        %1386 = vmatpush1.msra.mxu0 0.0
        %1387 = vmatprep.subr.mxu0 0.0
        %1388 = vmatpush1.msra.mxu0 0.0
        %1389 = vmatprep.subr.mxu0 0.0
        %1390 = vmatpush1.msra.mxu0 0.0
        %1391 = vmatprep.subr.mxu0 0.0
        %1392 = vmatpush1.msra.mxu0 0.0
        %1393 = vmatprep.subr.mxu0 0.0
        %1394 = vmatpush1.msra.mxu0 0.0
        %1395 = vmatprep.subr.mxu0 0.0
        %1396 = vmatpush1.msra.mxu0 0.0
        %1397 = vmatprep.subr.mxu0 0.0
        %1398 = vmatpush1.msra.mxu0 0.0
        %1399 = vmatprep.subr.mxu0 0.0
        %1400 = vmatpush1.msra.mxu0 0.0
        %1401 = vmatprep.subr.mxu0 0.0
        %1402 = vmatpush1.msra.mxu0 0.0
        %1403 = vmatprep.subr.mxu0 0.0
        %1404 = vmatpush1.msra.mxu0 0.0
        %1405 = vmatprep.subr.mxu0 0.0
        %1406 = vmatpush1.msra.mxu0 0.0
        %1407 = vmatprep.subr.mxu0 0.0
        %1408 = vmatpush1.msra.mxu0 0.0
        %1409 = vmatprep.subr.mxu0 0.0
        %1410 = vmatpush1.msra.mxu0 0.0
        %1411 = vmatprep.subr.mxu0 0.0
        %1412 = vmatpush1.msra.mxu0 0.0
        %1413 = vmatprep.subr.mxu0 0.0
        %1414 = vmatpush1.msra.mxu0 0.0
        %1415 = vmatprep.subr.mxu0 0.0
        %1416 = vmatpush1.msra.mxu0 0.0
        %1417 = vmatprep.subr.mxu0 0.0
        %1418 = vmatpush1.msra.mxu0 0.0
        %1419 = vmatprep.subr.mxu0 0.0
        %1420 = vmatpush1.msra.mxu0 0.0
        %1421 = vmatprep.subr.mxu0 0.0
        %1422 = vmatpush1.msra.mxu0 0.0
        %1423 = vmatprep.subr.mxu0 0.0
        %1424 = vmatpush1.msra.mxu0 0.0
        %1425 = vmatprep.subr.mxu0 0.0
        %1426 = vmatpush1.msra.mxu0 0.0
        %1427 = vmatprep.subr.mxu0 0.0
        %1428 = vmatpush1.msra.mxu0 0.0
        %1429 = vmatprep.subr.mxu0 0.0
        %1430 = vmatpush1.msra.mxu0 0.0
        %1431 = vmatprep.subr.mxu0 0.0
        %1432 = vmatpush1.msra.mxu0 0.0
        %1433 = vmatprep.subr.mxu0 0.0
        %1434 = vmatpush1.msra.mxu0 0.0
        %1435 = vmatprep.subr.mxu0 0.0
        %1436 = vmatpush1.msra.mxu0 0.0
        %1437 = vmatprep.subr.mxu0 0.0
        %1438 = vmatpush1.msra.mxu0 0.0
        %1439 = vmatprep.mubr.f32.mxu0 0.0
        %1440 = vmatmul.mubr.f32.gmra.mrb[0].mxu0 %v1370
        %v1441 = vpop.f32.mrb[0].mxu0
        %v1442 = vadd.f32 0.0, %v1441
        %v1443 = vpop.f32.mrb[0].mxu0
        %1444 = vdwg.mxu0
        %v1446 = vsel %vm1102, %v1201, 0
        %v1449 = vsel %vm1106, %v1067, 0
        %1451 = vmatprep.subr.mxu0 0.0
        %1452 = vmatpush1.msra.mxu0 %v1063
        %1453 = vmatprep.subr.mxu0 0.0
        %1454 = vmatpush1.msra.mxu0 %v1064
        %1455 = vmatprep.subr.mxu0 0.0
        %1456 = vmatpush1.msra.mxu0 %v1065
        %1457 = vmatprep.subr.mxu0 0.0
        %1458 = vmatpush1.msra.mxu0 %v1066
        %1459 = vmatprep.subr.mxu0 0.0
        %1460 = vmatpush1.msra.mxu0 %v1449
        %1461 = vmatprep.subr.mxu0 0.0
        %1462 = vmatpush1.msra.mxu0 0.0
        %1463 = vmatprep.subr.mxu0 0.0
        %1464 = vmatpush1.msra.mxu0 0.0
        %1465 = vmatprep.subr.mxu0 0.0
        %1466 = vmatpush1.msra.mxu0 0.0
        %1467 = vmatprep.subr.mxu0 0.0
        %1468 = vmatpush1.msra.mxu0 0.0
        %1469 = vmatprep.subr.mxu0 0.0
        %1470 = vmatpush1.msra.mxu0 0.0
        %1471 = vmatprep.subr.mxu0 0.0
        %1472 = vmatpush1.msra.mxu0 0.0
        %1473 = vmatprep.subr.mxu0 0.0
        %1474 = vmatpush1.msra.mxu0 0.0
        %1475 = vmatprep.subr.mxu0 0.0
        %1476 = vmatpush1.msra.mxu0 0.0
        %1477 = vmatprep.subr.mxu0 0.0
        %1478 = vmatpush1.msra.mxu0 0.0
        %1479 = vmatprep.subr.mxu0 0.0
        %1480 = vmatpush1.msra.mxu0 0.0
        %1481 = vmatprep.subr.mxu0 0.0
        %1482 = vmatpush1.msra.mxu0 0.0
        %1483 = vmatprep.subr.mxu0 0.0
        %1484 = vmatpush1.msra.mxu0 0.0
        %1485 = vmatprep.subr.mxu0 0.0
        %1486 = vmatpush1.msra.mxu0 0.0
        %1487 = vmatprep.subr.mxu0 0.0
        %1488 = vmatpush1.msra.mxu0 0.0
        %1489 = vmatprep.subr.mxu0 0.0
        %1490 = vmatpush1.msra.mxu0 0.0
        %1491 = vmatprep.subr.mxu0 0.0
        %1492 = vmatpush1.msra.mxu0 0.0
        %1493 = vmatprep.subr.mxu0 0.0
        %1494 = vmatpush1.msra.mxu0 0.0
        %1495 = vmatprep.subr.mxu0 0.0
        %1496 = vmatpush1.msra.mxu0 0.0
        %1497 = vmatprep.subr.mxu0 0.0
        %1498 = vmatpush1.msra.mxu0 0.0
        %1499 = vmatprep.subr.mxu0 0.0
        %1500 = vmatpush1.msra.mxu0 0.0
        %1501 = vmatprep.subr.mxu0 0.0
        %1502 = vmatpush1.msra.mxu0 0.0
        %1503 = vmatprep.subr.mxu0 0.0
        %1504 = vmatpush1.msra.mxu0 0.0
        %1505 = vmatprep.subr.mxu0 0.0
        %1506 = vmatpush1.msra.mxu0 0.0
        %1507 = vmatprep.subr.mxu0 0.0
        %1508 = vmatpush1.msra.mxu0 0.0
        %1509 = vmatprep.subr.mxu0 0.0
        %1510 = vmatpush1.msra.mxu0 0.0
        %1511 = vmatprep.subr.mxu0 0.0
        %1512 = vmatpush1.msra.mxu0 0.0
        %1513 = vmatprep.subr.mxu0 0.0
        %1514 = vmatpush1.msra.mxu0 0.0
        %1515 = vmatprep.mubr.f32.mxu0 0.0
        %1516 = vmatmul.mubr.f32.gmra.mrb[0].mxu0 %v1446
        %v1517 = vpop.f32.mrb[0].mxu0
        %v1518 = vadd.f32 %v1442, %v1517
        %v1519 = vpop.f32.mrb[0].mxu0
        %1520 = vdwg.mxu0
        %v1522 = vlaneseq
        %v1523 = vshrl.u32 %v1522, 7
        %v1524 = vsub.s32 0, %v1523
        %v1525 = vrot.slane %v1073, %v1524
        %v1527 = vadd.f32 %v1518, %v1525
        %v1528 = vxor.u32 %v1527, 2147483648
        %v1529 = vmul.f32 %v1528, 1.442695
        %v1530 = vpow.pop %v1529
        %v1531 = vadd.f32 %v1530, 1.0
        %v1532 = vrcp.pop %v1531
        %v1533 = vmul.f32 1.0, %v1532
        %v1534 = vmul.f32 %v1533, %v1366
        %v1535 = vsub.f32 1.0, %v1533
        %v1536 = vmul.f32 %v1535, %v1280
        %v1537 = vadd.f32 %v1534, %v1536
        %v1538 = vmul.f32 %v1284, %v1537
        %v1539 = vadd.f32 %v1283, %v1538
        %v1541 = vsel %vm1106, %v1083, 0
        %1543 = vmatprep.subr.mxu0 0.0
        %1544 = vmatpush1.msra.mxu0 %v1079
        %1545 = vmatprep.subr.mxu0 0.0
        %1546 = vmatpush1.msra.mxu0 %v1080
        %1547 = vmatprep.subr.mxu0 0.0
        %1548 = vmatpush1.msra.mxu0 %v1081
        %1549 = vmatprep.subr.mxu0 0.0
        %1550 = vmatpush1.msra.mxu0 %v1082
        %1551 = vmatprep.subr.mxu0 0.0
        %1552 = vmatpush1.msra.mxu0 %v1541
        %1553 = vmatprep.subr.mxu0 0.0
        %1554 = vmatpush1.msra.mxu0 0.0
        %1555 = vmatprep.subr.mxu0 0.0
        %1556 = vmatpush1.msra.mxu0 0.0
        %1557 = vmatprep.subr.mxu0 0.0
        %1558 = vmatpush1.msra.mxu0 0.0
        %1559 = vmatprep.subr.mxu0 0.0
        %1560 = vmatpush1.msra.mxu0 0.0
        %1561 = vmatprep.subr.mxu0 0.0
        %1562 = vmatpush1.msra.mxu0 0.0
        %1563 = vmatprep.subr.mxu0 0.0
        %1564 = vmatpush1.msra.mxu0 0.0
        %1565 = vmatprep.subr.mxu0 0.0
        %1566 = vmatpush1.msra.mxu0 0.0
        %1567 = vmatprep.subr.mxu0 0.0
        %1568 = vmatpush1.msra.mxu0 0.0
        %1569 = vmatprep.subr.mxu0 0.0
        %1570 = vmatpush1.msra.mxu0 0.0
        %1571 = vmatprep.subr.mxu0 0.0
        %1572 = vmatpush1.msra.mxu0 0.0
        %1573 = vmatprep.subr.mxu0 0.0
        %1574 = vmatpush1.msra.mxu0 0.0
        %1575 = vmatprep.subr.mxu0 0.0
        %1576 = vmatpush1.msra.mxu0 0.0
        %1577 = vmatprep.subr.mxu0 0.0
        %1578 = vmatpush1.msra.mxu0 0.0
        %1579 = vmatprep.subr.mxu0 0.0
        %1580 = vmatpush1.msra.mxu0 0.0
        %1581 = vmatprep.subr.mxu0 0.0
        %1582 = vmatpush1.msra.mxu0 0.0
        %1583 = vmatprep.subr.mxu0 0.0
        %1584 = vmatpush1.msra.mxu0 0.0
        %1585 = vmatprep.subr.mxu0 0.0
        %1586 = vmatpush1.msra.mxu0 0.0
        %1587 = vmatprep.subr.mxu0 0.0
        %1588 = vmatpush1.msra.mxu0 0.0
        %1589 = vmatprep.subr.mxu0 0.0
        %1590 = vmatpush1.msra.mxu0 0.0
        %1591 = vmatprep.subr.mxu0 0.0
        %1592 = vmatpush1.msra.mxu0 0.0
        %1593 = vmatprep.subr.mxu0 0.0
        %1594 = vmatpush1.msra.mxu0 0.0
        %1595 = vmatprep.subr.mxu0 0.0
        %1596 = vmatpush1.msra.mxu0 0.0
        %1597 = vmatprep.subr.mxu0 0.0
        %1598 = vmatpush1.msra.mxu0 0.0
        %1599 = vmatprep.subr.mxu0 0.0
        %1600 = vmatpush1.msra.mxu0 0.0
        %1601 = vmatprep.subr.mxu0 0.0
        %1602 = vmatpush1.msra.mxu0 0.0
        %1603 = vmatprep.subr.mxu0 0.0
        %1604 = vmatpush1.msra.mxu0 0.0
        %1605 = vmatprep.subr.mxu0 0.0
        %1606 = vmatpush1.msra.mxu0 0.0
        %1607 = vmatprep.mubr.f32.mxu0 0.0
        %1608 = vmatmul.mubr.f32.gmra.mrb[0].mxu0 %v1370
        %v1609 = vpop.f32.mrb[0].mxu0
        %v1610 = vadd.f32 0.0, %v1609
        %v1611 = vpop.f32.mrb[0].mxu0
        %1612 = vdwg.mxu0
        %v1614 = vsel %vm1102, %v1539, 0
        %v1617 = vsel %vm1106, %v1078, 0
        %1619 = vmatprep.subr.mxu0 0.0
        %1620 = vmatpush1.msra.mxu0 %v1074
        %1621 = vmatprep.subr.mxu0 0.0
        %1622 = vmatpush1.msra.mxu0 %v1075
        %1623 = vmatprep.subr.mxu0 0.0
        %1624 = vmatpush1.msra.mxu0 %v1076
        %1625 = vmatprep.subr.mxu0 0.0
        %1626 = vmatpush1.msra.mxu0 %v1077
        %1627 = vmatprep.subr.mxu0 0.0
        %1628 = vmatpush1.msra.mxu0 %v1617
        %1629 = vmatprep.subr.mxu0 0.0
        %1630 = vmatpush1.msra.mxu0 0.0
        %1631 = vmatprep.subr.mxu0 0.0
        %1632 = vmatpush1.msra.mxu0 0.0
        %1633 = vmatprep.subr.mxu0 0.0
        %1634 = vmatpush1.msra.mxu0 0.0
        %1635 = vmatprep.subr.mxu0 0.0
        %1636 = vmatpush1.msra.mxu0 0.0
        %1637 = vmatprep.subr.mxu0 0.0
        %1638 = vmatpush1.msra.mxu0 0.0
        %1639 = vmatprep.subr.mxu0 0.0
        %1640 = vmatpush1.msra.mxu0 0.0
        %1641 = vmatprep.subr.mxu0 0.0
        %1642 = vmatpush1.msra.mxu0 0.0
        %1643 = vmatprep.subr.mxu0 0.0
        %1644 = vmatpush1.msra.mxu0 0.0
        %1645 = vmatprep.subr.mxu0 0.0
        %1646 = vmatpush1.msra.mxu0 0.0
        %1647 = vmatprep.subr.mxu0 0.0
        %1648 = vmatpush1.msra.mxu0 0.0
        %1649 = vmatprep.subr.mxu0 0.0
        %1650 = vmatpush1.msra.mxu0 0.0
        %1651 = vmatprep.subr.mxu0 0.0
        %1652 = vmatpush1.msra.mxu0 0.0
        %1653 = vmatprep.subr.mxu0 0.0
        %1654 = vmatpush1.msra.mxu0 0.0
        %1655 = vmatprep.subr.mxu0 0.0
        %1656 = vmatpush1.msra.mxu0 0.0
        %1657 = vmatprep.subr.mxu0 0.0
        %1658 = vmatpush1.msra.mxu0 0.0
        %1659 = vmatprep.subr.mxu0 0.0
        %1660 = vmatpush1.msra.mxu0 0.0
        %1661 = vmatprep.subr.mxu0 0.0
        %1662 = vmatpush1.msra.mxu0 0.0
        %1663 = vmatprep.subr.mxu0 0.0
        %1664 = vmatpush1.msra.mxu0 0.0
        %1665 = vmatprep.subr.mxu0 0.0
        %1666 = vmatpush1.msra.mxu0 0.0
        %1667 = vmatprep.subr.mxu0 0.0
        %1668 = vmatpush1.msra.mxu0 0.0
        %1669 = vmatprep.subr.mxu0 0.0
        %1670 = vmatpush1.msra.mxu0 0.0
        %1671 = vmatprep.subr.mxu0 0.0
        %1672 = vmatpush1.msra.mxu0 0.0
        %1673 = vmatprep.subr.mxu0 0.0
        %1674 = vmatpush1.msra.mxu0 0.0
        %1675 = vmatprep.subr.mxu0 0.0
        %1676 = vmatpush1.msra.mxu0 0.0
        %1677 = vmatprep.subr.mxu0 0.0
        %1678 = vmatpush1.msra.mxu0 0.0
        %1679 = vmatprep.subr.mxu0 0.0
        %1680 = vmatpush1.msra.mxu0 0.0
        %1681 = vmatprep.subr.mxu0 0.0
        %1682 = vmatpush1.msra.mxu0 0.0
        %1683 = vmatprep.mubr.f32.mxu0 0.0
        %1684 = vmatmul.mubr.f32.gmra.mrb[0].mxu0 %v1614
        %v1685 = vpop.f32.mrb[0].mxu0
        %v1686 = vadd.f32 %v1610, %v1685
        %v1687 = vpop.f32.mrb[0].mxu0
        %1688 = vdwg.mxu0
        %1689 = vmatprep.subr.mxu0 0.0
        %1690 = vmatpush1.msra.mxu0 %v1084
        %1691 = vmatprep.subr.mxu0 0.0
        %1692 = vmatpush1.msra.mxu0 %v1085
        %1693 = vmatprep.subr.mxu0 0.0
        %1694 = vmatpush1.msra.mxu0 %v1086
        %1695 = vmatprep.subr.mxu0 0.0
        %1696 = vmatpush1.msra.mxu0 %v1087
        %1697 = vmatprep.subr.mxu0 0.0
        %1698 = vmatpush1.msra.mxu0 0.0
        %1699 = vmatprep.subr.mxu0 0.0
        %1700 = vmatpush1.msra.mxu0 0.0
        %1701 = vmatprep.subr.mxu0 0.0
        %1702 = vmatpush1.msra.mxu0 0.0
        %1703 = vmatprep.subr.mxu0 0.0
        %1704 = vmatpush1.msra.mxu0 0.0
        %1705 = vmatprep.subr.mxu0 0.0
        %1706 = vmatpush1.msra.mxu0 0.0
        %1707 = vmatprep.subr.mxu0 0.0
        %1708 = vmatpush1.msra.mxu0 0.0
        %1709 = vmatprep.subr.mxu0 0.0
        %1710 = vmatpush1.msra.mxu0 0.0
        %1711 = vmatprep.subr.mxu0 0.0
        %1712 = vmatpush1.msra.mxu0 0.0
        %1713 = vmatprep.subr.mxu0 0.0
        %1714 = vmatpush1.msra.mxu0 0.0
        %1715 = vmatprep.subr.mxu0 0.0
        %1716 = vmatpush1.msra.mxu0 0.0
        %1717 = vmatprep.subr.mxu0 0.0
        %1718 = vmatpush1.msra.mxu0 0.0
        %1719 = vmatprep.subr.mxu0 0.0
        %1720 = vmatpush1.msra.mxu0 0.0
        %1721 = vmatprep.subr.mxu0 0.0
        %1722 = vmatpush1.msra.mxu0 0.0
        %1723 = vmatprep.subr.mxu0 0.0
        %1724 = vmatpush1.msra.mxu0 0.0
        %1725 = vmatprep.subr.mxu0 0.0
        %1726 = vmatpush1.msra.mxu0 0.0
        %1727 = vmatprep.subr.mxu0 0.0
        %1728 = vmatpush1.msra.mxu0 0.0
        %1729 = vmatprep.subr.mxu0 0.0
        %1730 = vmatpush1.msra.mxu0 0.0
        %1731 = vmatprep.subr.mxu0 0.0
        %1732 = vmatpush1.msra.mxu0 0.0
        %1733 = vmatprep.subr.mxu0 0.0
        %1734 = vmatpush1.msra.mxu0 0.0
        %1735 = vmatprep.subr.mxu0 0.0
        %1736 = vmatpush1.msra.mxu0 0.0
        %1737 = vmatprep.subr.mxu0 0.0
        %1738 = vmatpush1.msra.mxu0 0.0
        %1739 = vmatprep.subr.mxu0 0.0
        %1740 = vmatpush1.msra.mxu0 0.0
        %1741 = vmatprep.subr.mxu0 0.0
        %1742 = vmatpush1.msra.mxu0 0.0
        %1743 = vmatprep.subr.mxu0 0.0
        %1744 = vmatpush1.msra.mxu0 0.0
        %1745 = vmatprep.subr.mxu0 0.0
        %1746 = vmatpush1.msra.mxu0 0.0
        %1747 = vmatprep.subr.mxu0 0.0
        %1748 = vmatpush1.msra.mxu0 0.0
        %1749 = vmatprep.subr.mxu0 0.0
        %1750 = vmatpush1.msra.mxu0 0.0
        %1751 = vmatprep.subr.mxu0 0.0
        %1752 = vmatpush1.msra.mxu0 0.0
        %1753 = vmatprep.mubr.f32.mxu0 0.0
        %1754 = vmatmul.mubr.f32.gmra.mrb[0].mxu0 %v1211
        %v1755 = vpop.f32.mrb[0].mxu0
        %v1756 = vadd.f32 0.0, %v1755
        %v1757 = vpop.f32.mrb[0].mxu0
        %1758 = vdwg.mxu0
        %v1759 = vadd.f32 %v1686, %v1756
        %v1761 = vlaneseq
        %v1762 = vshrl.u32 %v1761, 7
        %v1763 = vsub.s32 0, %v1762
        %v1764 = vrot.slane %v1088, %v1763
        %v1766 = vadd.f32 %v1759, %v1764
        %v1767 = vxor.u32 %v1766, 2147483648
        %v1768 = vmul.f32 %v1767, 1.442695
        %v1769 = vpow.pop %v1768
        %v1770 = vadd.f32 %v1769, 1.0
        %v1771 = vrcp.pop %v1770
        %v1772 = vmul.f32 1.0, %v1771
        %v1773 = vtanh.pop %v1766
        %v1774 = vmul.f32 %v1772, 0.0
        %1776 = vrot.lane.b32.xlu0 %v1773, 64
        %v1777 = vpop.permute.xlu0 %1776
        %v1779 = vmul.f32 %v1772, %v1777
        %1781 = vrot.lane.b32.xlu0 %v1779, 32
        %v1782 = vpop.permute.xlu0 %1781
        %v1784 = vadd.f32 %v1774, %v1782
        %v1785 = vtanh.pop %v1784
        %1787 = vrot.lane.b32.xlu0 %v1785, 64
        %v1788 = vpop.permute.xlu0 %1787
        %v1790 = vmul.f32 %v1772, %v1788
        %s1791 = scalar_lea.vmem %s1039, %s1091
        %1792 = vst.msk [vmem:[%s1791] sm:$0xff] %vm1102, %v1539
        %v1793 = vmul.f32 %v1284, 0.0
        %v1794 = vadd.f32 %v1793, 1.0
        %s1795 = scalar_select %p1089, 1, 6
        %s1796 = smul.u32 %s1795, 8
        %s1797 = scalar_lea.vmem %s0, %s1796
        %v1798 = vld [vmem:[%s1797] sm:$0xff]
        %s1799 = scalar_lea.vmem %s1, %s1796
        %v1800 = vld [vmem:[%s1799] sm:$0xff]
        %v1802 = vsel %vm1102, %v1794, 0
        %1804 = vmatprep.subr.mxu0 0.0
        %1805 = vmatpush1.msra.mxu0 %v1044
        %1806 = vmatprep.subr.mxu0 0.0
        %1807 = vmatpush1.msra.mxu0 %v1045
        %1808 = vmatprep.subr.mxu0 0.0
        %1809 = vmatpush1.msra.mxu0 %v1046
        %1810 = vmatprep.subr.mxu0 0.0
        %1811 = vmatpush1.msra.mxu0 %v1047
        %1812 = vmatprep.subr.mxu0 0.0
        %1813 = vmatpush1.msra.mxu0 %v1108
        %1814 = vmatprep.subr.mxu0 0.0
        %1815 = vmatpush1.msra.mxu0 0.0
        %1816 = vmatprep.subr.mxu0 0.0
        %1817 = vmatpush1.msra.mxu0 0.0
        %1818 = vmatprep.subr.mxu0 0.0
        %1819 = vmatpush1.msra.mxu0 0.0
        %1820 = vmatprep.subr.mxu0 0.0
        %1821 = vmatpush1.msra.mxu0 0.0
        %1822 = vmatprep.subr.mxu0 0.0
        %1823 = vmatpush1.msra.mxu0 0.0
        %1824 = vmatprep.subr.mxu0 0.0
        %1825 = vmatpush1.msra.mxu0 0.0
        %1826 = vmatprep.subr.mxu0 0.0
        %1827 = vmatpush1.msra.mxu0 0.0
        %1828 = vmatprep.subr.mxu0 0.0
        %1829 = vmatpush1.msra.mxu0 0.0
        %1830 = vmatprep.subr.mxu0 0.0
        %1831 = vmatpush1.msra.mxu0 0.0
        %1832 = vmatprep.subr.mxu0 0.0
        %1833 = vmatpush1.msra.mxu0 0.0
        %1834 = vmatprep.subr.mxu0 0.0
        %1835 = vmatpush1.msra.mxu0 0.0
        %1836 = vmatprep.subr.mxu0 0.0
        %1837 = vmatpush1.msra.mxu0 0.0
        %1838 = vmatprep.subr.mxu0 0.0
        %1839 = vmatpush1.msra.mxu0 0.0
        %1840 = vmatprep.subr.mxu0 0.0
        %1841 = vmatpush1.msra.mxu0 0.0
        %1842 = vmatprep.subr.mxu0 0.0
        %1843 = vmatpush1.msra.mxu0 0.0
        %1844 = vmatprep.subr.mxu0 0.0
        %1845 = vmatpush1.msra.mxu0 0.0
        %1846 = vmatprep.subr.mxu0 0.0
        %1847 = vmatpush1.msra.mxu0 0.0
        %1848 = vmatprep.subr.mxu0 0.0
        %1849 = vmatpush1.msra.mxu0 0.0
        %1850 = vmatprep.subr.mxu0 0.0
        %1851 = vmatpush1.msra.mxu0 0.0
        %1852 = vmatprep.subr.mxu0 0.0
        %1853 = vmatpush1.msra.mxu0 0.0
        %1854 = vmatprep.subr.mxu0 0.0
        %1855 = vmatpush1.msra.mxu0 0.0
        %1856 = vmatprep.subr.mxu0 0.0
        %1857 = vmatpush1.msra.mxu0 0.0
        %1858 = vmatprep.subr.mxu0 0.0
        %1859 = vmatpush1.msra.mxu0 0.0
        %1860 = vmatprep.subr.mxu0 0.0
        %1861 = vmatpush1.msra.mxu0 0.0
        %1862 = vmatprep.subr.mxu0 0.0
        %1863 = vmatpush1.msra.mxu0 0.0
        %1864 = vmatprep.subr.mxu0 0.0
        %1865 = vmatpush1.msra.mxu0 0.0
        %1866 = vmatprep.subr.mxu0 0.0
        %1867 = vmatpush1.msra.mxu0 0.0
        %1868 = vmatprep.mubr.f32.mxu0 0.0
        %1869 = vmatmul.mubr.f32.gmra.mrb[0].mxu0 %v1802
        %v1870 = vpop.f32.mrb[0].mxu0
        %v1871 = vadd.f32 %v1100, %v1870
        %v1872 = vpop.f32.mrb[0].mxu0
        %1873 = vdwg.mxu0
        %v1874 = vmax.f32 %v1871, 0.0
        %v1875 = vsub.f32 0.0, %v1874
        %v1876 = vmul.f32 %v1875, 1.442695
        %v1877 = vpow.pop %v1876
        %v1878 = vmul.f32 %v1794, %v1188
        %v1879 = vadd.f32 %v1878, %v1195
        %v1880 = vmax.f32 %v1879, 0.0
        %v1881 = vsub.f32 0.0, %v1880
        %v1882 = vmul.f32 %v1881, 1.442695
        %v1883 = vpow.pop %v1882
        %1885 = vrot.lane.b32.xlu0 %v1877, 96
        %v1886 = vpop.permute.xlu0 %1885
        %v1888 = vmul.f32 %v1790, %v1886
        %1890 = vrot.lane.b32.xlu0 %v1888, 32
        %v1891 = vpop.permute.xlu0 %1890
        %v1892 = vsel %vm1209, %v1891, 0
        %1894 = vmatprep.subr.mxu0 0.0
        %1895 = vmatpush1.msra.mxu0 %v1052
        %1896 = vmatprep.subr.mxu0 0.0
        %1897 = vmatpush1.msra.mxu0 %v1053
        %1898 = vmatprep.subr.mxu0 0.0
        %1899 = vmatpush1.msra.mxu0 %v1054
        %1900 = vmatprep.subr.mxu0 0.0
        %1901 = vmatpush1.msra.mxu0 %v1055
        %1902 = vmatprep.subr.mxu0 0.0
        %1903 = vmatpush1.msra.mxu0 0.0
        %1904 = vmatprep.subr.mxu0 0.0
        %1905 = vmatpush1.msra.mxu0 0.0
        %1906 = vmatprep.subr.mxu0 0.0
        %1907 = vmatpush1.msra.mxu0 0.0
        %1908 = vmatprep.subr.mxu0 0.0
        %1909 = vmatpush1.msra.mxu0 0.0
        %1910 = vmatprep.subr.mxu0 0.0
        %1911 = vmatpush1.msra.mxu0 0.0
        %1912 = vmatprep.subr.mxu0 0.0
        %1913 = vmatpush1.msra.mxu0 0.0
        %1914 = vmatprep.subr.mxu0 0.0
        %1915 = vmatpush1.msra.mxu0 0.0
        %1916 = vmatprep.subr.mxu0 0.0
        %1917 = vmatpush1.msra.mxu0 0.0
        %1918 = vmatprep.subr.mxu0 0.0
        %1919 = vmatpush1.msra.mxu0 0.0
        %1920 = vmatprep.subr.mxu0 0.0
        %1921 = vmatpush1.msra.mxu0 0.0
        %1922 = vmatprep.subr.mxu0 0.0
        %1923 = vmatpush1.msra.mxu0 0.0
        %1924 = vmatprep.subr.mxu0 0.0
        %1925 = vmatpush1.msra.mxu0 0.0
        %1926 = vmatprep.subr.mxu0 0.0
        %1927 = vmatpush1.msra.mxu0 0.0
        %1928 = vmatprep.subr.mxu0 0.0
        %1929 = vmatpush1.msra.mxu0 0.0
        %1930 = vmatprep.subr.mxu0 0.0
        %1931 = vmatpush1.msra.mxu0 0.0
        %1932 = vmatprep.subr.mxu0 0.0
        %1933 = vmatpush1.msra.mxu0 0.0
        %1934 = vmatprep.subr.mxu0 0.0
        %1935 = vmatpush1.msra.mxu0 0.0
        %1936 = vmatprep.subr.mxu0 0.0
        %1937 = vmatpush1.msra.mxu0 0.0
        %1938 = vmatprep.subr.mxu0 0.0
        %1939 = vmatpush1.msra.mxu0 0.0
        %1940 = vmatprep.subr.mxu0 0.0
        %1941 = vmatpush1.msra.mxu0 0.0
        %1942 = vmatprep.subr.mxu0 0.0
        %1943 = vmatpush1.msra.mxu0 0.0
        %1944 = vmatprep.subr.mxu0 0.0
        %1945 = vmatpush1.msra.mxu0 0.0
        %1946 = vmatprep.subr.mxu0 0.0
        %1947 = vmatpush1.msra.mxu0 0.0
        %1948 = vmatprep.subr.mxu0 0.0
        %1949 = vmatpush1.msra.mxu0 0.0
        %1950 = vmatprep.subr.mxu0 0.0
        %1951 = vmatpush1.msra.mxu0 0.0
        %1952 = vmatprep.subr.mxu0 0.0
        %1953 = vmatpush1.msra.mxu0 0.0
        %1954 = vmatprep.subr.mxu0 0.0
        %1955 = vmatpush1.msra.mxu0 0.0
        %1956 = vmatprep.subr.mxu0 0.0
        %1957 = vmatpush1.msra.mxu0 0.0
        %1958 = vmatprep.mubr.f32.mxu0 0.0
        %1959 = vmatmul.mubr.f32.gmra.mrb[0].mxu0 %v1892
        %v1960 = vpop.f32.mrb[0].mxu0
        %v1961 = vadd.f32 %v1207, %v1960
        %v1962 = vpop.f32.mrb[0].mxu0
        %1963 = vdwg.mxu0
        %v1964 = vmul.f32 %v1800, %v1798
        %v1965 = vsub.f32 1.0, %v1800
        %v1966 = vmul.f32 %v1965, %v1961
        %v1967 = vadd.f32 %v1964, %v1966
        %v1969 = vsel %vm1102, %v1967, 0
        %1971 = vmatprep.subr.mxu0 0.0
        %1972 = vmatpush1.msra.mxu0 %v1057
        %1973 = vmatprep.subr.mxu0 0.0
        %1974 = vmatpush1.msra.mxu0 %v1058
        %1975 = vmatprep.subr.mxu0 0.0
        %1976 = vmatpush1.msra.mxu0 %v1059
        %1977 = vmatprep.subr.mxu0 0.0
        %1978 = vmatpush1.msra.mxu0 %v1060
        %1979 = vmatprep.subr.mxu0 0.0
        %1980 = vmatpush1.msra.mxu0 %v1297
        %1981 = vmatprep.subr.mxu0 0.0
        %1982 = vmatpush1.msra.mxu0 0.0
        %1983 = vmatprep.subr.mxu0 0.0
        %1984 = vmatpush1.msra.mxu0 0.0
        %1985 = vmatprep.subr.mxu0 0.0
        %1986 = vmatpush1.msra.mxu0 0.0
        %1987 = vmatprep.subr.mxu0 0.0
        %1988 = vmatpush1.msra.mxu0 0.0
        %1989 = vmatprep.subr.mxu0 0.0
        %1990 = vmatpush1.msra.mxu0 0.0
        %1991 = vmatprep.subr.mxu0 0.0
        %1992 = vmatpush1.msra.mxu0 0.0
        %1993 = vmatprep.subr.mxu0 0.0
        %1994 = vmatpush1.msra.mxu0 0.0
        %1995 = vmatprep.subr.mxu0 0.0
        %1996 = vmatpush1.msra.mxu0 0.0
        %1997 = vmatprep.subr.mxu0 0.0
        %1998 = vmatpush1.msra.mxu0 0.0
        %1999 = vmatprep.subr.mxu0 0.0
        %2000 = vmatpush1.msra.mxu0 0.0
        %2001 = vmatprep.subr.mxu0 0.0
        %2002 = vmatpush1.msra.mxu0 0.0
        %2003 = vmatprep.subr.mxu0 0.0
        %2004 = vmatpush1.msra.mxu0 0.0
        %2005 = vmatprep.subr.mxu0 0.0
        %2006 = vmatpush1.msra.mxu0 0.0
        %2007 = vmatprep.subr.mxu0 0.0
        %2008 = vmatpush1.msra.mxu0 0.0
        %2009 = vmatprep.subr.mxu0 0.0
        %2010 = vmatpush1.msra.mxu0 0.0
        %2011 = vmatprep.subr.mxu0 0.0
        %2012 = vmatpush1.msra.mxu0 0.0
        %2013 = vmatprep.subr.mxu0 0.0
        %2014 = vmatpush1.msra.mxu0 0.0
        %2015 = vmatprep.subr.mxu0 0.0
        %2016 = vmatpush1.msra.mxu0 0.0
        %2017 = vmatprep.subr.mxu0 0.0
        %2018 = vmatpush1.msra.mxu0 0.0
        %2019 = vmatprep.subr.mxu0 0.0
        %2020 = vmatpush1.msra.mxu0 0.0
        %2021 = vmatprep.subr.mxu0 0.0
        %2022 = vmatpush1.msra.mxu0 0.0
        %2023 = vmatprep.subr.mxu0 0.0
        %2024 = vmatpush1.msra.mxu0 0.0
        %2025 = vmatprep.subr.mxu0 0.0
        %2026 = vmatpush1.msra.mxu0 0.0
        %2027 = vmatprep.subr.mxu0 0.0
        %2028 = vmatpush1.msra.mxu0 0.0
        %2029 = vmatprep.subr.mxu0 0.0
        %2030 = vmatpush1.msra.mxu0 0.0
        %2031 = vmatprep.subr.mxu0 0.0
        %2032 = vmatpush1.msra.mxu0 0.0
        %2033 = vmatprep.subr.mxu0 0.0
        %2034 = vmatpush1.msra.mxu0 0.0
        %2035 = vmatprep.mubr.f32.mxu0 0.0
        %2036 = vmatmul.mubr.f32.gmra.mrb[0].mxu0 %v1969
        %v2037 = vpop.f32.mrb[0].mxu0
        %v2038 = vadd.f32 %v1291, %v2037
        %v2039 = vpop.f32.mrb[0].mxu0
        %2040 = vdwg.mxu0
        %v2042 = vsel %vm1102, %v1800, 0
        %2044 = vmatprep.subr.mxu0 0.0
        %2045 = vmatpush1.msra.mxu0 %v1068
        %2046 = vmatprep.subr.mxu0 0.0
        %2047 = vmatpush1.msra.mxu0 %v1069
        %2048 = vmatprep.subr.mxu0 0.0
        %2049 = vmatpush1.msra.mxu0 %v1070
        %2050 = vmatprep.subr.mxu0 0.0
        %2051 = vmatpush1.msra.mxu0 %v1071
        %2052 = vmatprep.subr.mxu0 0.0
        %2053 = vmatpush1.msra.mxu0 %v1373
        %2054 = vmatprep.subr.mxu0 0.0
        %2055 = vmatpush1.msra.mxu0 0.0
        %2056 = vmatprep.subr.mxu0 0.0
        %2057 = vmatpush1.msra.mxu0 0.0
        %2058 = vmatprep.subr.mxu0 0.0
        %2059 = vmatpush1.msra.mxu0 0.0
        %2060 = vmatprep.subr.mxu0 0.0
        %2061 = vmatpush1.msra.mxu0 0.0
        %2062 = vmatprep.subr.mxu0 0.0
        %2063 = vmatpush1.msra.mxu0 0.0
        %2064 = vmatprep.subr.mxu0 0.0
        %2065 = vmatpush1.msra.mxu0 0.0
        %2066 = vmatprep.subr.mxu0 0.0
        %2067 = vmatpush1.msra.mxu0 0.0
        %2068 = vmatprep.subr.mxu0 0.0
        %2069 = vmatpush1.msra.mxu0 0.0
        %2070 = vmatprep.subr.mxu0 0.0
        %2071 = vmatpush1.msra.mxu0 0.0
        %2072 = vmatprep.subr.mxu0 0.0
        %2073 = vmatpush1.msra.mxu0 0.0
        %2074 = vmatprep.subr.mxu0 0.0
        %2075 = vmatpush1.msra.mxu0 0.0
        %2076 = vmatprep.subr.mxu0 0.0
        %2077 = vmatpush1.msra.mxu0 0.0
        %2078 = vmatprep.subr.mxu0 0.0
        %2079 = vmatpush1.msra.mxu0 0.0
        %2080 = vmatprep.subr.mxu0 0.0
        %2081 = vmatpush1.msra.mxu0 0.0
        %2082 = vmatprep.subr.mxu0 0.0
        %2083 = vmatpush1.msra.mxu0 0.0
        %2084 = vmatprep.subr.mxu0 0.0
        %2085 = vmatpush1.msra.mxu0 0.0
        %2086 = vmatprep.subr.mxu0 0.0
        %2087 = vmatpush1.msra.mxu0 0.0
        %2088 = vmatprep.subr.mxu0 0.0
        %2089 = vmatpush1.msra.mxu0 0.0
        %2090 = vmatprep.subr.mxu0 0.0
        %2091 = vmatpush1.msra.mxu0 0.0
        %2092 = vmatprep.subr.mxu0 0.0
        %2093 = vmatpush1.msra.mxu0 0.0
        %2094 = vmatprep.subr.mxu0 0.0
        %2095 = vmatpush1.msra.mxu0 0.0
        %2096 = vmatprep.subr.mxu0 0.0
        %2097 = vmatpush1.msra.mxu0 0.0
        %2098 = vmatprep.subr.mxu0 0.0
        %2099 = vmatpush1.msra.mxu0 0.0
        %2100 = vmatprep.subr.mxu0 0.0
        %2101 = vmatpush1.msra.mxu0 0.0
        %2102 = vmatprep.subr.mxu0 0.0
        %2103 = vmatpush1.msra.mxu0 0.0
        %2104 = vmatprep.subr.mxu0 0.0
        %2105 = vmatpush1.msra.mxu0 0.0
        %2106 = vmatprep.subr.mxu0 0.0
        %2107 = vmatpush1.msra.mxu0 0.0
        %2108 = vmatprep.mubr.f32.mxu0 0.0
        %2109 = vmatmul.mubr.f32.gmra.mrb[0].mxu0 %v2042
        %v2110 = vpop.f32.mrb[0].mxu0
        %v2111 = vadd.f32 0.0, %v2110
        %v2112 = vpop.f32.mrb[0].mxu0
        %2113 = vdwg.mxu0
        %v2115 = vsel %vm1102, %v1883, 0
        %2117 = vmatprep.subr.mxu0 0.0
        %2118 = vmatpush1.msra.mxu0 %v1063
        %2119 = vmatprep.subr.mxu0 0.0
        %2120 = vmatpush1.msra.mxu0 %v1064
        %2121 = vmatprep.subr.mxu0 0.0
        %2122 = vmatpush1.msra.mxu0 %v1065
        %2123 = vmatprep.subr.mxu0 0.0
        %2124 = vmatpush1.msra.mxu0 %v1066
        %2125 = vmatprep.subr.mxu0 0.0
        %2126 = vmatpush1.msra.mxu0 %v1449
        %2127 = vmatprep.subr.mxu0 0.0
        %2128 = vmatpush1.msra.mxu0 0.0
        %2129 = vmatprep.subr.mxu0 0.0
        %2130 = vmatpush1.msra.mxu0 0.0
        %2131 = vmatprep.subr.mxu0 0.0
        %2132 = vmatpush1.msra.mxu0 0.0
        %2133 = vmatprep.subr.mxu0 0.0
        %2134 = vmatpush1.msra.mxu0 0.0
        %2135 = vmatprep.subr.mxu0 0.0
        %2136 = vmatpush1.msra.mxu0 0.0
        %2137 = vmatprep.subr.mxu0 0.0
        %2138 = vmatpush1.msra.mxu0 0.0
        %2139 = vmatprep.subr.mxu0 0.0
        %2140 = vmatpush1.msra.mxu0 0.0
        %2141 = vmatprep.subr.mxu0 0.0
        %2142 = vmatpush1.msra.mxu0 0.0
        %2143 = vmatprep.subr.mxu0 0.0
        %2144 = vmatpush1.msra.mxu0 0.0
        %2145 = vmatprep.subr.mxu0 0.0
        %2146 = vmatpush1.msra.mxu0 0.0
        %2147 = vmatprep.subr.mxu0 0.0
        %2148 = vmatpush1.msra.mxu0 0.0
        %2149 = vmatprep.subr.mxu0 0.0
        %2150 = vmatpush1.msra.mxu0 0.0
        %2151 = vmatprep.subr.mxu0 0.0
        %2152 = vmatpush1.msra.mxu0 0.0
        %2153 = vmatprep.subr.mxu0 0.0
        %2154 = vmatpush1.msra.mxu0 0.0
        %2155 = vmatprep.subr.mxu0 0.0
        %2156 = vmatpush1.msra.mxu0 0.0
        %2157 = vmatprep.subr.mxu0 0.0
        %2158 = vmatpush1.msra.mxu0 0.0
        %2159 = vmatprep.subr.mxu0 0.0
        %2160 = vmatpush1.msra.mxu0 0.0
        %2161 = vmatprep.subr.mxu0 0.0
        %2162 = vmatpush1.msra.mxu0 0.0
        %2163 = vmatprep.subr.mxu0 0.0
        %2164 = vmatpush1.msra.mxu0 0.0
        %2165 = vmatprep.subr.mxu0 0.0
        %2166 = vmatpush1.msra.mxu0 0.0
        %2167 = vmatprep.subr.mxu0 0.0
        %2168 = vmatpush1.msra.mxu0 0.0
        %2169 = vmatprep.subr.mxu0 0.0
        %2170 = vmatpush1.msra.mxu0 0.0
        %2171 = vmatprep.subr.mxu0 0.0
        %2172 = vmatpush1.msra.mxu0 0.0
        %2173 = vmatprep.subr.mxu0 0.0
        %2174 = vmatpush1.msra.mxu0 0.0
        %2175 = vmatprep.subr.mxu0 0.0
        %2176 = vmatpush1.msra.mxu0 0.0
        %2177 = vmatprep.subr.mxu0 0.0
        %2178 = vmatpush1.msra.mxu0 0.0
        %2179 = vmatprep.subr.mxu0 0.0
        %2180 = vmatpush1.msra.mxu0 0.0
        %2181 = vmatprep.mubr.f32.mxu0 0.0
        %2182 = vmatmul.mubr.f32.gmra.mrb[0].mxu0 %v2115
        %v2183 = vpop.f32.mrb[0].mxu0
        %v2184 = vadd.f32 %v2111, %v2183
        %v2185 = vpop.f32.mrb[0].mxu0
        %2186 = vdwg.mxu0
        %v2187 = vadd.f32 %v2184, %v1525
        %v2188 = vxor.u32 %v2187, 2147483648
        %v2189 = vmul.f32 %v2188, 1.442695
        %v2190 = vpow.pop %v2189
        %v2191 = vadd.f32 %v2190, 1.0
        %v2192 = vrcp.pop %v2191
        %v2193 = vmul.f32 1.0, %v2192
        %v2194 = vmul.f32 %v2193, %v2038
        %v2195 = vsub.f32 1.0, %v2193
        %v2196 = vmul.f32 %v2195, %v1961
        %v2197 = vadd.f32 %v2194, %v2196
        %v2198 = vmul.f32 %v1965, %v2197
        %v2199 = vadd.f32 %v1964, %v2198
        %2200 = vmatprep.subr.mxu0 0.0
        %2201 = vmatpush1.msra.mxu0 %v1079
        %2202 = vmatprep.subr.mxu0 0.0
        %2203 = vmatpush1.msra.mxu0 %v1080
        %2204 = vmatprep.subr.mxu0 0.0
        %2205 = vmatpush1.msra.mxu0 %v1081
        %2206 = vmatprep.subr.mxu0 0.0
        %2207 = vmatpush1.msra.mxu0 %v1082
        %2208 = vmatprep.subr.mxu0 0.0
        %2209 = vmatpush1.msra.mxu0 %v1541
        %2210 = vmatprep.subr.mxu0 0.0
        %2211 = vmatpush1.msra.mxu0 0.0
        %2212 = vmatprep.subr.mxu0 0.0
        %2213 = vmatpush1.msra.mxu0 0.0
        %2214 = vmatprep.subr.mxu0 0.0
        %2215 = vmatpush1.msra.mxu0 0.0
        %2216 = vmatprep.subr.mxu0 0.0
        %2217 = vmatpush1.msra.mxu0 0.0
        %2218 = vmatprep.subr.mxu0 0.0
        %2219 = vmatpush1.msra.mxu0 0.0
        %2220 = vmatprep.subr.mxu0 0.0
        %2221 = vmatpush1.msra.mxu0 0.0
        %2222 = vmatprep.subr.mxu0 0.0
        %2223 = vmatpush1.msra.mxu0 0.0
        %2224 = vmatprep.subr.mxu0 0.0
        %2225 = vmatpush1.msra.mxu0 0.0
        %2226 = vmatprep.subr.mxu0 0.0
        %2227 = vmatpush1.msra.mxu0 0.0
        %2228 = vmatprep.subr.mxu0 0.0
        %2229 = vmatpush1.msra.mxu0 0.0
        %2230 = vmatprep.subr.mxu0 0.0
        %2231 = vmatpush1.msra.mxu0 0.0
        %2232 = vmatprep.subr.mxu0 0.0
        %2233 = vmatpush1.msra.mxu0 0.0
        %2234 = vmatprep.subr.mxu0 0.0
        %2235 = vmatpush1.msra.mxu0 0.0
        %2236 = vmatprep.subr.mxu0 0.0
        %2237 = vmatpush1.msra.mxu0 0.0
        %2238 = vmatprep.subr.mxu0 0.0
        %2239 = vmatpush1.msra.mxu0 0.0
        %2240 = vmatprep.subr.mxu0 0.0
        %2241 = vmatpush1.msra.mxu0 0.0
        %2242 = vmatprep.subr.mxu0 0.0
        %2243 = vmatpush1.msra.mxu0 0.0
        %2244 = vmatprep.subr.mxu0 0.0
        %2245 = vmatpush1.msra.mxu0 0.0
        %2246 = vmatprep.subr.mxu0 0.0
        %2247 = vmatpush1.msra.mxu0 0.0
        %2248 = vmatprep.subr.mxu0 0.0
        %2249 = vmatpush1.msra.mxu0 0.0
        %2250 = vmatprep.subr.mxu0 0.0
        %2251 = vmatpush1.msra.mxu0 0.0
        %2252 = vmatprep.subr.mxu0 0.0
        %2253 = vmatpush1.msra.mxu0 0.0
        %2254 = vmatprep.subr.mxu0 0.0
        %2255 = vmatpush1.msra.mxu0 0.0
        %2256 = vmatprep.subr.mxu0 0.0
        %2257 = vmatpush1.msra.mxu0 0.0
        %2258 = vmatprep.subr.mxu0 0.0
        %2259 = vmatpush1.msra.mxu0 0.0
        %2260 = vmatprep.subr.mxu0 0.0
        %2261 = vmatpush1.msra.mxu0 0.0
        %2262 = vmatprep.subr.mxu0 0.0
        %2263 = vmatpush1.msra.mxu0 0.0
        %2264 = vmatprep.mubr.f32.mxu0 0.0
        %2265 = vmatmul.mubr.f32.gmra.mrb[0].mxu0 %v2042
        %v2266 = vpop.f32.mrb[0].mxu0
        %v2267 = vadd.f32 0.0, %v2266
        %v2268 = vpop.f32.mrb[0].mxu0
        %2269 = vdwg.mxu0
        %v2271 = vsel %vm1102, %v2199, 0
        %2273 = vmatprep.subr.mxu0 0.0
        %2274 = vmatpush1.msra.mxu0 %v1074
        %2275 = vmatprep.subr.mxu0 0.0
        %2276 = vmatpush1.msra.mxu0 %v1075
        %2277 = vmatprep.subr.mxu0 0.0
        %2278 = vmatpush1.msra.mxu0 %v1076
        %2279 = vmatprep.subr.mxu0 0.0
        %2280 = vmatpush1.msra.mxu0 %v1077
        %2281 = vmatprep.subr.mxu0 0.0
        %2282 = vmatpush1.msra.mxu0 %v1617
        %2283 = vmatprep.subr.mxu0 0.0
        %2284 = vmatpush1.msra.mxu0 0.0
        %2285 = vmatprep.subr.mxu0 0.0
        %2286 = vmatpush1.msra.mxu0 0.0
        %2287 = vmatprep.subr.mxu0 0.0
        %2288 = vmatpush1.msra.mxu0 0.0
        %2289 = vmatprep.subr.mxu0 0.0
        %2290 = vmatpush1.msra.mxu0 0.0
        %2291 = vmatprep.subr.mxu0 0.0
        %2292 = vmatpush1.msra.mxu0 0.0
        %2293 = vmatprep.subr.mxu0 0.0
        %2294 = vmatpush1.msra.mxu0 0.0
        %2295 = vmatprep.subr.mxu0 0.0
        %2296 = vmatpush1.msra.mxu0 0.0
        %2297 = vmatprep.subr.mxu0 0.0
        %2298 = vmatpush1.msra.mxu0 0.0
        %2299 = vmatprep.subr.mxu0 0.0
        %2300 = vmatpush1.msra.mxu0 0.0
        %2301 = vmatprep.subr.mxu0 0.0
        %2302 = vmatpush1.msra.mxu0 0.0
        %2303 = vmatprep.subr.mxu0 0.0
        %2304 = vmatpush1.msra.mxu0 0.0
        %2305 = vmatprep.subr.mxu0 0.0
        %2306 = vmatpush1.msra.mxu0 0.0
        %2307 = vmatprep.subr.mxu0 0.0
        %2308 = vmatpush1.msra.mxu0 0.0
        %2309 = vmatprep.subr.mxu0 0.0
        %2310 = vmatpush1.msra.mxu0 0.0
        %2311 = vmatprep.subr.mxu0 0.0
        %2312 = vmatpush1.msra.mxu0 0.0
        %2313 = vmatprep.subr.mxu0 0.0
        %2314 = vmatpush1.msra.mxu0 0.0
        %2315 = vmatprep.subr.mxu0 0.0
        %2316 = vmatpush1.msra.mxu0 0.0
        %2317 = vmatprep.subr.mxu0 0.0
        %2318 = vmatpush1.msra.mxu0 0.0
        %2319 = vmatprep.subr.mxu0 0.0
        %2320 = vmatpush1.msra.mxu0 0.0
        %2321 = vmatprep.subr.mxu0 0.0
        %2322 = vmatpush1.msra.mxu0 0.0
        %2323 = vmatprep.subr.mxu0 0.0
        %2324 = vmatpush1.msra.mxu0 0.0
        %2325 = vmatprep.subr.mxu0 0.0
        %2326 = vmatpush1.msra.mxu0 0.0
        %2327 = vmatprep.subr.mxu0 0.0
        %2328 = vmatpush1.msra.mxu0 0.0
        %2329 = vmatprep.subr.mxu0 0.0
        %2330 = vmatpush1.msra.mxu0 0.0
        %2331 = vmatprep.subr.mxu0 0.0
        %2332 = vmatpush1.msra.mxu0 0.0
        %2333 = vmatprep.subr.mxu0 0.0
        %2334 = vmatpush1.msra.mxu0 0.0
        %2335 = vmatprep.subr.mxu0 0.0
        %2336 = vmatpush1.msra.mxu0 0.0
        %2337 = vmatprep.mubr.f32.mxu0 0.0
        %2338 = vmatmul.mubr.f32.gmra.mrb[0].mxu0 %v2271
        %v2339 = vpop.f32.mrb[0].mxu0
        %v2340 = vadd.f32 %v2267, %v2339
        %v2341 = vpop.f32.mrb[0].mxu0
        %2342 = vdwg.mxu0
        %2343 = vmatprep.subr.mxu0 0.0
        %2344 = vmatpush1.msra.mxu0 %v1084
        %2345 = vmatprep.subr.mxu0 0.0
        %2346 = vmatpush1.msra.mxu0 %v1085
        %2347 = vmatprep.subr.mxu0 0.0
        %2348 = vmatpush1.msra.mxu0 %v1086
        %2349 = vmatprep.subr.mxu0 0.0
        %2350 = vmatpush1.msra.mxu0 %v1087
        %2351 = vmatprep.subr.mxu0 0.0
        %2352 = vmatpush1.msra.mxu0 0.0
        %2353 = vmatprep.subr.mxu0 0.0
        %2354 = vmatpush1.msra.mxu0 0.0
        %2355 = vmatprep.subr.mxu0 0.0
        %2356 = vmatpush1.msra.mxu0 0.0
        %2357 = vmatprep.subr.mxu0 0.0
        %2358 = vmatpush1.msra.mxu0 0.0
        %2359 = vmatprep.subr.mxu0 0.0
        %2360 = vmatpush1.msra.mxu0 0.0
        %2361 = vmatprep.subr.mxu0 0.0
        %2362 = vmatpush1.msra.mxu0 0.0
        %2363 = vmatprep.subr.mxu0 0.0
        %2364 = vmatpush1.msra.mxu0 0.0
        %2365 = vmatprep.subr.mxu0 0.0
        %2366 = vmatpush1.msra.mxu0 0.0
        %2367 = vmatprep.subr.mxu0 0.0
        %2368 = vmatpush1.msra.mxu0 0.0
        %2369 = vmatprep.subr.mxu0 0.0
        %2370 = vmatpush1.msra.mxu0 0.0
        %2371 = vmatprep.subr.mxu0 0.0
        %2372 = vmatpush1.msra.mxu0 0.0
        %2373 = vmatprep.subr.mxu0 0.0
        %2374 = vmatpush1.msra.mxu0 0.0
        %2375 = vmatprep.subr.mxu0 0.0
        %2376 = vmatpush1.msra.mxu0 0.0
        %2377 = vmatprep.subr.mxu0 0.0
        %2378 = vmatpush1.msra.mxu0 0.0
        %2379 = vmatprep.subr.mxu0 0.0
        %2380 = vmatpush1.msra.mxu0 0.0
        %2381 = vmatprep.subr.mxu0 0.0
        %2382 = vmatpush1.msra.mxu0 0.0
        %2383 = vmatprep.subr.mxu0 0.0
        %2384 = vmatpush1.msra.mxu0 0.0
        %2385 = vmatprep.subr.mxu0 0.0
        %2386 = vmatpush1.msra.mxu0 0.0
        %2387 = vmatprep.subr.mxu0 0.0
        %2388 = vmatpush1.msra.mxu0 0.0
        %2389 = vmatprep.subr.mxu0 0.0
        %2390 = vmatpush1.msra.mxu0 0.0
        %2391 = vmatprep.subr.mxu0 0.0
        %2392 = vmatpush1.msra.mxu0 0.0
        %2393 = vmatprep.subr.mxu0 0.0
        %2394 = vmatpush1.msra.mxu0 0.0
        %2395 = vmatprep.subr.mxu0 0.0
        %2396 = vmatpush1.msra.mxu0 0.0
        %2397 = vmatprep.subr.mxu0 0.0
        %2398 = vmatpush1.msra.mxu0 0.0
        %2399 = vmatprep.subr.mxu0 0.0
        %2400 = vmatpush1.msra.mxu0 0.0
        %2401 = vmatprep.subr.mxu0 0.0
        %2402 = vmatpush1.msra.mxu0 0.0
        %2403 = vmatprep.subr.mxu0 0.0
        %2404 = vmatpush1.msra.mxu0 0.0
        %2405 = vmatprep.subr.mxu0 0.0
        %2406 = vmatpush1.msra.mxu0 0.0
        %2407 = vmatprep.mubr.f32.mxu0 0.0
        %2408 = vmatmul.mubr.f32.gmra.mrb[0].mxu0 %v1892
        %v2409 = vpop.f32.mrb[0].mxu0
        %v2410 = vadd.f32 0.0, %v2409
        %v2411 = vpop.f32.mrb[0].mxu0
        %2412 = vdwg.mxu0
        %v2413 = vadd.f32 %v2340, %v2410
        %v2414 = vadd.f32 %v2413, %v1764
        %v2415 = vxor.u32 %v2414, 2147483648
        %v2416 = vmul.f32 %v2415, 1.442695
        %v2417 = vpow.pop %v2416
        %v2418 = vadd.f32 %v2417, 1.0
        %v2419 = vrcp.pop %v2418
        %v2420 = vmul.f32 1.0, %v2419
        %v2421 = vtanh.pop %v2414
        %v2422 = vmul.f32 %v2420, %v1784
        %2424 = vrot.lane.b32.xlu0 %v2421, 64
        %v2425 = vpop.permute.xlu0 %2424
        %v2427 = vmul.f32 %v2420, %v2425
        %2429 = vrot.lane.b32.xlu0 %v2427, 32
        %v2430 = vpop.permute.xlu0 %2429
        %v2432 = vadd.f32 %v2422, %v2430
        %v2433 = vtanh.pop %v2432
        %2435 = vrot.lane.b32.xlu0 %v2433, 64
        %v2436 = vpop.permute.xlu0 %2435
        %v2438 = vmul.f32 %v2420, %v2436
        %s2439 = scalar_lea.vmem %s1039, %s1796
        %2440 = vst.msk [vmem:[%s2439] sm:$0xff] %vm1102, %v2199
        %v2441 = vmul.f32 %v1965, %v1794
        %v2442 = vadd.f32 %v2441, 1.0
        %s2443 = scalar_select %p1089, 2, 5
        %s2444 = smul.u32 %s2443, 8
        %s2445 = scalar_lea.vmem %s0, %s2444
        %v2446 = vld [vmem:[%s2445] sm:$0xff]
        %s2447 = scalar_lea.vmem %s1, %s2444
        %v2448 = vld [vmem:[%s2447] sm:$0xff]
        %v2450 = vsel %vm1102, %v2442, 0
        %2452 = vmatprep.subr.mxu0 0.0
        %2453 = vmatpush1.msra.mxu0 %v1044
        %2454 = vmatprep.subr.mxu0 0.0
        %2455 = vmatpush1.msra.mxu0 %v1045
        %2456 = vmatprep.subr.mxu0 0.0
        %2457 = vmatpush1.msra.mxu0 %v1046
        %2458 = vmatprep.subr.mxu0 0.0
        %2459 = vmatpush1.msra.mxu0 %v1047
        %2460 = vmatprep.subr.mxu0 0.0
        %2461 = vmatpush1.msra.mxu0 %v1108
        %2462 = vmatprep.subr.mxu0 0.0
        %2463 = vmatpush1.msra.mxu0 0.0
        %2464 = vmatprep.subr.mxu0 0.0
        %2465 = vmatpush1.msra.mxu0 0.0
        %2466 = vmatprep.subr.mxu0 0.0
        %2467 = vmatpush1.msra.mxu0 0.0
        %2468 = vmatprep.subr.mxu0 0.0
        %2469 = vmatpush1.msra.mxu0 0.0
        %2470 = vmatprep.subr.mxu0 0.0
        %2471 = vmatpush1.msra.mxu0 0.0
        %2472 = vmatprep.subr.mxu0 0.0
        %2473 = vmatpush1.msra.mxu0 0.0
        %2474 = vmatprep.subr.mxu0 0.0
        %2475 = vmatpush1.msra.mxu0 0.0
        %2476 = vmatprep.subr.mxu0 0.0
        %2477 = vmatpush1.msra.mxu0 0.0
        %2478 = vmatprep.subr.mxu0 0.0
        %2479 = vmatpush1.msra.mxu0 0.0
        %2480 = vmatprep.subr.mxu0 0.0
        %2481 = vmatpush1.msra.mxu0 0.0
        %2482 = vmatprep.subr.mxu0 0.0
        %2483 = vmatpush1.msra.mxu0 0.0
        %2484 = vmatprep.subr.mxu0 0.0
        %2485 = vmatpush1.msra.mxu0 0.0
        %2486 = vmatprep.subr.mxu0 0.0
        %2487 = vmatpush1.msra.mxu0 0.0
        %2488 = vmatprep.subr.mxu0 0.0
        %2489 = vmatpush1.msra.mxu0 0.0
        %2490 = vmatprep.subr.mxu0 0.0
        %2491 = vmatpush1.msra.mxu0 0.0
        %2492 = vmatprep.subr.mxu0 0.0
        %2493 = vmatpush1.msra.mxu0 0.0
        %2494 = vmatprep.subr.mxu0 0.0
        %2495 = vmatpush1.msra.mxu0 0.0
        %2496 = vmatprep.subr.mxu0 0.0
        %2497 = vmatpush1.msra.mxu0 0.0
        %2498 = vmatprep.subr.mxu0 0.0
        %2499 = vmatpush1.msra.mxu0 0.0
        %2500 = vmatprep.subr.mxu0 0.0
        %2501 = vmatpush1.msra.mxu0 0.0
        %2502 = vmatprep.subr.mxu0 0.0
        %2503 = vmatpush1.msra.mxu0 0.0
        %2504 = vmatprep.subr.mxu0 0.0
        %2505 = vmatpush1.msra.mxu0 0.0
        %2506 = vmatprep.subr.mxu0 0.0
        %2507 = vmatpush1.msra.mxu0 0.0
        %2508 = vmatprep.subr.mxu0 0.0
        %2509 = vmatpush1.msra.mxu0 0.0
        %2510 = vmatprep.subr.mxu0 0.0
        %2511 = vmatpush1.msra.mxu0 0.0
        %2512 = vmatprep.subr.mxu0 0.0
        %2513 = vmatpush1.msra.mxu0 0.0
        %2514 = vmatprep.subr.mxu0 0.0
        %2515 = vmatpush1.msra.mxu0 0.0
        %2516 = vmatprep.mubr.f32.mxu0 0.0
        %2517 = vmatmul.mubr.f32.gmra.mrb[0].mxu0 %v2450
        %v2518 = vpop.f32.mrb[0].mxu0
        %v2519 = vadd.f32 %v1100, %v2518
        %v2520 = vpop.f32.mrb[0].mxu0
        %2521 = vdwg.mxu0
        %v2522 = vmax.f32 %v2519, 0.0
        %v2523 = vsub.f32 0.0, %v2522
        %v2524 = vmul.f32 %v2523, 1.442695
        %v2525 = vpow.pop %v2524
        %v2526 = vmul.f32 %v2442, %v1188
        %v2527 = vadd.f32 %v2526, %v1195
        %v2528 = vmax.f32 %v2527, 0.0
        %v2529 = vsub.f32 0.0, %v2528
        %v2530 = vmul.f32 %v2529, 1.442695
        %v2531 = vpow.pop %v2530
        %2533 = vrot.lane.b32.xlu0 %v2525, 96
        %v2534 = vpop.permute.xlu0 %2533
        %v2536 = vmul.f32 %v2438, %v2534
        %2538 = vrot.lane.b32.xlu0 %v2536, 32
        %v2539 = vpop.permute.xlu0 %2538
        %v2540 = vsel %vm1209, %v2539, 0
        %2542 = vmatprep.subr.mxu0 0.0
        %2543 = vmatpush1.msra.mxu0 %v1052
        %2544 = vmatprep.subr.mxu0 0.0
        %2545 = vmatpush1.msra.mxu0 %v1053
        %2546 = vmatprep.subr.mxu0 0.0
        %2547 = vmatpush1.msra.mxu0 %v1054
        %2548 = vmatprep.subr.mxu0 0.0
        %2549 = vmatpush1.msra.mxu0 %v1055
        %2550 = vmatprep.subr.mxu0 0.0
        %2551 = vmatpush1.msra.mxu0 0.0
        %2552 = vmatprep.subr.mxu0 0.0
        %2553 = vmatpush1.msra.mxu0 0.0
        %2554 = vmatprep.subr.mxu0 0.0
        %2555 = vmatpush1.msra.mxu0 0.0
        %2556 = vmatprep.subr.mxu0 0.0
        %2557 = vmatpush1.msra.mxu0 0.0
        %2558 = vmatprep.subr.mxu0 0.0
        %2559 = vmatpush1.msra.mxu0 0.0
        %2560 = vmatprep.subr.mxu0 0.0
        %2561 = vmatpush1.msra.mxu0 0.0
        %2562 = vmatprep.subr.mxu0 0.0
        %2563 = vmatpush1.msra.mxu0 0.0
        %2564 = vmatprep.subr.mxu0 0.0
        %2565 = vmatpush1.msra.mxu0 0.0
        %2566 = vmatprep.subr.mxu0 0.0
        %2567 = vmatpush1.msra.mxu0 0.0
        %2568 = vmatprep.subr.mxu0 0.0
        %2569 = vmatpush1.msra.mxu0 0.0
        %2570 = vmatprep.subr.mxu0 0.0
        %2571 = vmatpush1.msra.mxu0 0.0
        %2572 = vmatprep.subr.mxu0 0.0
        %2573 = vmatpush1.msra.mxu0 0.0
        %2574 = vmatprep.subr.mxu0 0.0
        %2575 = vmatpush1.msra.mxu0 0.0
        %2576 = vmatprep.subr.mxu0 0.0
        %2577 = vmatpush1.msra.mxu0 0.0
        %2578 = vmatprep.subr.mxu0 0.0
        %2579 = vmatpush1.msra.mxu0 0.0
        %2580 = vmatprep.subr.mxu0 0.0
        %2581 = vmatpush1.msra.mxu0 0.0
        %2582 = vmatprep.subr.mxu0 0.0
        %2583 = vmatpush1.msra.mxu0 0.0
        %2584 = vmatprep.subr.mxu0 0.0
        %2585 = vmatpush1.msra.mxu0 0.0
        %2586 = vmatprep.subr.mxu0 0.0
        %2587 = vmatpush1.msra.mxu0 0.0
        %2588 = vmatprep.subr.mxu0 0.0
        %2589 = vmatpush1.msra.mxu0 0.0
        %2590 = vmatprep.subr.mxu0 0.0
        %2591 = vmatpush1.msra.mxu0 0.0
        %2592 = vmatprep.subr.mxu0 0.0
        %2593 = vmatpush1.msra.mxu0 0.0
        %2594 = vmatprep.subr.mxu0 0.0
        %2595 = vmatpush1.msra.mxu0 0.0
        %2596 = vmatprep.subr.mxu0 0.0
        %2597 = vmatpush1.msra.mxu0 0.0
        %2598 = vmatprep.subr.mxu0 0.0
        %2599 = vmatpush1.msra.mxu0 0.0
        %2600 = vmatprep.subr.mxu0 0.0
        %2601 = vmatpush1.msra.mxu0 0.0
        %2602 = vmatprep.subr.mxu0 0.0
        %2603 = vmatpush1.msra.mxu0 0.0
        %2604 = vmatprep.subr.mxu0 0.0
        %2605 = vmatpush1.msra.mxu0 0.0
        %2606 = vmatprep.mubr.f32.mxu0 0.0
        %2607 = vmatmul.mubr.f32.gmra.mrb[0].mxu0 %v2540
        %v2608 = vpop.f32.mrb[0].mxu0
        %v2609 = vadd.f32 %v1207, %v2608
        %v2610 = vpop.f32.mrb[0].mxu0
        %2611 = vdwg.mxu0
        %v2612 = vmul.f32 %v2448, %v2446
        %v2613 = vsub.f32 1.0, %v2448
        %v2614 = vmul.f32 %v2613, %v2609
        %v2615 = vadd.f32 %v2612, %v2614
        %v2617 = vsel %vm1102, %v2615, 0
        %2619 = vmatprep.subr.mxu0 0.0
        %2620 = vmatpush1.msra.mxu0 %v1057
        %2621 = vmatprep.subr.mxu0 0.0
        %2622 = vmatpush1.msra.mxu0 %v1058
        %2623 = vmatprep.subr.mxu0 0.0
        %2624 = vmatpush1.msra.mxu0 %v1059
        %2625 = vmatprep.subr.mxu0 0.0
        %2626 = vmatpush1.msra.mxu0 %v1060
        %2627 = vmatprep.subr.mxu0 0.0
        %2628 = vmatpush1.msra.mxu0 %v1297
        %2629 = vmatprep.subr.mxu0 0.0
        %2630 = vmatpush1.msra.mxu0 0.0
        %2631 = vmatprep.subr.mxu0 0.0
        %2632 = vmatpush1.msra.mxu0 0.0
        %2633 = vmatprep.subr.mxu0 0.0
        %2634 = vmatpush1.msra.mxu0 0.0
        %2635 = vmatprep.subr.mxu0 0.0
        %2636 = vmatpush1.msra.mxu0 0.0
        %2637 = vmatprep.subr.mxu0 0.0
        %2638 = vmatpush1.msra.mxu0 0.0
        %2639 = vmatprep.subr.mxu0 0.0
        %2640 = vmatpush1.msra.mxu0 0.0
        %2641 = vmatprep.subr.mxu0 0.0
        %2642 = vmatpush1.msra.mxu0 0.0
        %2643 = vmatprep.subr.mxu0 0.0
        %2644 = vmatpush1.msra.mxu0 0.0
        %2645 = vmatprep.subr.mxu0 0.0
        %2646 = vmatpush1.msra.mxu0 0.0
        %2647 = vmatprep.subr.mxu0 0.0
        %2648 = vmatpush1.msra.mxu0 0.0
        %2649 = vmatprep.subr.mxu0 0.0
        %2650 = vmatpush1.msra.mxu0 0.0
        %2651 = vmatprep.subr.mxu0 0.0
        %2652 = vmatpush1.msra.mxu0 0.0
        %2653 = vmatprep.subr.mxu0 0.0
        %2654 = vmatpush1.msra.mxu0 0.0
        %2655 = vmatprep.subr.mxu0 0.0
        %2656 = vmatpush1.msra.mxu0 0.0
        %2657 = vmatprep.subr.mxu0 0.0
        %2658 = vmatpush1.msra.mxu0 0.0
        %2659 = vmatprep.subr.mxu0 0.0
        %2660 = vmatpush1.msra.mxu0 0.0
        %2661 = vmatprep.subr.mxu0 0.0
        %2662 = vmatpush1.msra.mxu0 0.0
        %2663 = vmatprep.subr.mxu0 0.0
        %2664 = vmatpush1.msra.mxu0 0.0
        %2665 = vmatprep.subr.mxu0 0.0
        %2666 = vmatpush1.msra.mxu0 0.0
        %2667 = vmatprep.subr.mxu0 0.0
        %2668 = vmatpush1.msra.mxu0 0.0
        %2669 = vmatprep.subr.mxu0 0.0
        %2670 = vmatpush1.msra.mxu0 0.0
        %2671 = vmatprep.subr.mxu0 0.0
        %2672 = vmatpush1.msra.mxu0 0.0
        %2673 = vmatprep.subr.mxu0 0.0
        %2674 = vmatpush1.msra.mxu0 0.0
        %2675 = vmatprep.subr.mxu0 0.0
        %2676 = vmatpush1.msra.mxu0 0.0
        %2677 = vmatprep.subr.mxu0 0.0
        %2678 = vmatpush1.msra.mxu0 0.0
        %2679 = vmatprep.subr.mxu0 0.0
        %2680 = vmatpush1.msra.mxu0 0.0
        %2681 = vmatprep.subr.mxu0 0.0
        %2682 = vmatpush1.msra.mxu0 0.0
        %2683 = vmatprep.mubr.f32.mxu0 0.0
        %2684 = vmatmul.mubr.f32.gmra.mrb[0].mxu0 %v2617
        %v2685 = vpop.f32.mrb[0].mxu0
        %v2686 = vadd.f32 %v1291, %v2685
        %v2687 = vpop.f32.mrb[0].mxu0
        %2688 = vdwg.mxu0
        %v2690 = vsel %vm1102, %v2448, 0
        %2692 = vmatprep.subr.mxu0 0.0
        %2693 = vmatpush1.msra.mxu0 %v1068
        %2694 = vmatprep.subr.mxu0 0.0
        %2695 = vmatpush1.msra.mxu0 %v1069
        %2696 = vmatprep.subr.mxu0 0.0
        %2697 = vmatpush1.msra.mxu0 %v1070
        %2698 = vmatprep.subr.mxu0 0.0
        %2699 = vmatpush1.msra.mxu0 %v1071
        %2700 = vmatprep.subr.mxu0 0.0
        %2701 = vmatpush1.msra.mxu0 %v1373
        %2702 = vmatprep.subr.mxu0 0.0
        %2703 = vmatpush1.msra.mxu0 0.0
        %2704 = vmatprep.subr.mxu0 0.0
        %2705 = vmatpush1.msra.mxu0 0.0
        %2706 = vmatprep.subr.mxu0 0.0
        %2707 = vmatpush1.msra.mxu0 0.0
        %2708 = vmatprep.subr.mxu0 0.0
        %2709 = vmatpush1.msra.mxu0 0.0
        %2710 = vmatprep.subr.mxu0 0.0
        %2711 = vmatpush1.msra.mxu0 0.0
        %2712 = vmatprep.subr.mxu0 0.0
        %2713 = vmatpush1.msra.mxu0 0.0
        %2714 = vmatprep.subr.mxu0 0.0
        %2715 = vmatpush1.msra.mxu0 0.0
        %2716 = vmatprep.subr.mxu0 0.0
        %2717 = vmatpush1.msra.mxu0 0.0
        %2718 = vmatprep.subr.mxu0 0.0
        %2719 = vmatpush1.msra.mxu0 0.0
        %2720 = vmatprep.subr.mxu0 0.0
        %2721 = vmatpush1.msra.mxu0 0.0
        %2722 = vmatprep.subr.mxu0 0.0
        %2723 = vmatpush1.msra.mxu0 0.0
        %2724 = vmatprep.subr.mxu0 0.0
        %2725 = vmatpush1.msra.mxu0 0.0
        %2726 = vmatprep.subr.mxu0 0.0
        %2727 = vmatpush1.msra.mxu0 0.0
        %2728 = vmatprep.subr.mxu0 0.0
        %2729 = vmatpush1.msra.mxu0 0.0
        %2730 = vmatprep.subr.mxu0 0.0
        %2731 = vmatpush1.msra.mxu0 0.0
        %2732 = vmatprep.subr.mxu0 0.0
        %2733 = vmatpush1.msra.mxu0 0.0
        %2734 = vmatprep.subr.mxu0 0.0
        %2735 = vmatpush1.msra.mxu0 0.0
        %2736 = vmatprep.subr.mxu0 0.0
        %2737 = vmatpush1.msra.mxu0 0.0
        %2738 = vmatprep.subr.mxu0 0.0
        %2739 = vmatpush1.msra.mxu0 0.0
        %2740 = vmatprep.subr.mxu0 0.0
        %2741 = vmatpush1.msra.mxu0 0.0
        %2742 = vmatprep.subr.mxu0 0.0
        %2743 = vmatpush1.msra.mxu0 0.0
        %2744 = vmatprep.subr.mxu0 0.0
        %2745 = vmatpush1.msra.mxu0 0.0
        %2746 = vmatprep.subr.mxu0 0.0
        %2747 = vmatpush1.msra.mxu0 0.0
        %2748 = vmatprep.subr.mxu0 0.0
        %2749 = vmatpush1.msra.mxu0 0.0
        %2750 = vmatprep.subr.mxu0 0.0
        %2751 = vmatpush1.msra.mxu0 0.0
        %2752 = vmatprep.subr.mxu0 0.0
        %2753 = vmatpush1.msra.mxu0 0.0
        %2754 = vmatprep.subr.mxu0 0.0
        %2755 = vmatpush1.msra.mxu0 0.0
        %2756 = vmatprep.mubr.f32.mxu0 0.0
        %2757 = vmatmul.mubr.f32.gmra.mrb[0].mxu0 %v2690
        %v2758 = vpop.f32.mrb[0].mxu0
        %v2759 = vadd.f32 0.0, %v2758
        %v2760 = vpop.f32.mrb[0].mxu0
        %2761 = vdwg.mxu0
        %v2763 = vsel %vm1102, %v2531, 0
        %2765 = vmatprep.subr.mxu0 0.0
        %2766 = vmatpush1.msra.mxu0 %v1063
        %2767 = vmatprep.subr.mxu0 0.0
        %2768 = vmatpush1.msra.mxu0 %v1064
        %2769 = vmatprep.subr.mxu0 0.0
        %2770 = vmatpush1.msra.mxu0 %v1065
        %2771 = vmatprep.subr.mxu0 0.0
        %2772 = vmatpush1.msra.mxu0 %v1066
        %2773 = vmatprep.subr.mxu0 0.0
        %2774 = vmatpush1.msra.mxu0 %v1449
        %2775 = vmatprep.subr.mxu0 0.0
        %2776 = vmatpush1.msra.mxu0 0.0
        %2777 = vmatprep.subr.mxu0 0.0
        %2778 = vmatpush1.msra.mxu0 0.0
        %2779 = vmatprep.subr.mxu0 0.0
        %2780 = vmatpush1.msra.mxu0 0.0
        %2781 = vmatprep.subr.mxu0 0.0
        %2782 = vmatpush1.msra.mxu0 0.0
        %2783 = vmatprep.subr.mxu0 0.0
        %2784 = vmatpush1.msra.mxu0 0.0
        %2785 = vmatprep.subr.mxu0 0.0
        %2786 = vmatpush1.msra.mxu0 0.0
        %2787 = vmatprep.subr.mxu0 0.0
        %2788 = vmatpush1.msra.mxu0 0.0
        %2789 = vmatprep.subr.mxu0 0.0
        %2790 = vmatpush1.msra.mxu0 0.0
        %2791 = vmatprep.subr.mxu0 0.0
        %2792 = vmatpush1.msra.mxu0 0.0
        %2793 = vmatprep.subr.mxu0 0.0
        %2794 = vmatpush1.msra.mxu0 0.0
        %2795 = vmatprep.subr.mxu0 0.0
        %2796 = vmatpush1.msra.mxu0 0.0
        %2797 = vmatprep.subr.mxu0 0.0
        %2798 = vmatpush1.msra.mxu0 0.0
        %2799 = vmatprep.subr.mxu0 0.0
        %2800 = vmatpush1.msra.mxu0 0.0
        %2801 = vmatprep.subr.mxu0 0.0
        %2802 = vmatpush1.msra.mxu0 0.0
        %2803 = vmatprep.subr.mxu0 0.0
        %2804 = vmatpush1.msra.mxu0 0.0
        %2805 = vmatprep.subr.mxu0 0.0
        %2806 = vmatpush1.msra.mxu0 0.0
        %2807 = vmatprep.subr.mxu0 0.0
        %2808 = vmatpush1.msra.mxu0 0.0
        %2809 = vmatprep.subr.mxu0 0.0
        %2810 = vmatpush1.msra.mxu0 0.0
        %2811 = vmatprep.subr.mxu0 0.0
        %2812 = vmatpush1.msra.mxu0 0.0
        %2813 = vmatprep.subr.mxu0 0.0
        %2814 = vmatpush1.msra.mxu0 0.0
        %2815 = vmatprep.subr.mxu0 0.0
        %2816 = vmatpush1.msra.mxu0 0.0
        %2817 = vmatprep.subr.mxu0 0.0
        %2818 = vmatpush1.msra.mxu0 0.0
        %2819 = vmatprep.subr.mxu0 0.0
        %2820 = vmatpush1.msra.mxu0 0.0
        %2821 = vmatprep.subr.mxu0 0.0
        %2822 = vmatpush1.msra.mxu0 0.0
        %2823 = vmatprep.subr.mxu0 0.0
        %2824 = vmatpush1.msra.mxu0 0.0
        %2825 = vmatprep.subr.mxu0 0.0
        %2826 = vmatpush1.msra.mxu0 0.0
        %2827 = vmatprep.subr.mxu0 0.0
        %2828 = vmatpush1.msra.mxu0 0.0
        %2829 = vmatprep.mubr.f32.mxu0 0.0
        %2830 = vmatmul.mubr.f32.gmra.mrb[0].mxu0 %v2763
        %v2831 = vpop.f32.mrb[0].mxu0
        %v2832 = vadd.f32 %v2759, %v2831
        %v2833 = vpop.f32.mrb[0].mxu0
        %2834 = vdwg.mxu0
        %v2835 = vadd.f32 %v2832, %v1525
        %v2836 = vxor.u32 %v2835, 2147483648
        %v2837 = vmul.f32 %v2836, 1.442695
        %v2838 = vpow.pop %v2837
        %v2839 = vadd.f32 %v2838, 1.0
        %v2840 = vrcp.pop %v2839
        %v2841 = vmul.f32 1.0, %v2840
        %v2842 = vmul.f32 %v2841, %v2686
        %v2843 = vsub.f32 1.0, %v2841
        %v2844 = vmul.f32 %v2843, %v2609
        %v2845 = vadd.f32 %v2842, %v2844
        %v2846 = vmul.f32 %v2613, %v2845
        %v2847 = vadd.f32 %v2612, %v2846
        %2848 = vmatprep.subr.mxu0 0.0
        %2849 = vmatpush1.msra.mxu0 %v1079
        %2850 = vmatprep.subr.mxu0 0.0
        %2851 = vmatpush1.msra.mxu0 %v1080
        %2852 = vmatprep.subr.mxu0 0.0
        %2853 = vmatpush1.msra.mxu0 %v1081
        %2854 = vmatprep.subr.mxu0 0.0
        %2855 = vmatpush1.msra.mxu0 %v1082
        %2856 = vmatprep.subr.mxu0 0.0
        %2857 = vmatpush1.msra.mxu0 %v1541
        %2858 = vmatprep.subr.mxu0 0.0
        %2859 = vmatpush1.msra.mxu0 0.0
        %2860 = vmatprep.subr.mxu0 0.0
        %2861 = vmatpush1.msra.mxu0 0.0
        %2862 = vmatprep.subr.mxu0 0.0
        %2863 = vmatpush1.msra.mxu0 0.0
        %2864 = vmatprep.subr.mxu0 0.0
        %2865 = vmatpush1.msra.mxu0 0.0
        %2866 = vmatprep.subr.mxu0 0.0
        %2867 = vmatpush1.msra.mxu0 0.0
        %2868 = vmatprep.subr.mxu0 0.0
        %2869 = vmatpush1.msra.mxu0 0.0
        %2870 = vmatprep.subr.mxu0 0.0
        %2871 = vmatpush1.msra.mxu0 0.0
        %2872 = vmatprep.subr.mxu0 0.0
        %2873 = vmatpush1.msra.mxu0 0.0
        %2874 = vmatprep.subr.mxu0 0.0
        %2875 = vmatpush1.msra.mxu0 0.0
        %2876 = vmatprep.subr.mxu0 0.0
        %2877 = vmatpush1.msra.mxu0 0.0
        %2878 = vmatprep.subr.mxu0 0.0
        %2879 = vmatpush1.msra.mxu0 0.0
        %2880 = vmatprep.subr.mxu0 0.0
        %2881 = vmatpush1.msra.mxu0 0.0
        %2882 = vmatprep.subr.mxu0 0.0
        %2883 = vmatpush1.msra.mxu0 0.0
        %2884 = vmatprep.subr.mxu0 0.0
        %2885 = vmatpush1.msra.mxu0 0.0
        %2886 = vmatprep.subr.mxu0 0.0
        %2887 = vmatpush1.msra.mxu0 0.0
        %2888 = vmatprep.subr.mxu0 0.0
        %2889 = vmatpush1.msra.mxu0 0.0
        %2890 = vmatprep.subr.mxu0 0.0
        %2891 = vmatpush1.msra.mxu0 0.0
        %2892 = vmatprep.subr.mxu0 0.0
        %2893 = vmatpush1.msra.mxu0 0.0
        %2894 = vmatprep.subr.mxu0 0.0
        %2895 = vmatpush1.msra.mxu0 0.0
        %2896 = vmatprep.subr.mxu0 0.0
        %2897 = vmatpush1.msra.mxu0 0.0
        %2898 = vmatprep.subr.mxu0 0.0
        %2899 = vmatpush1.msra.mxu0 0.0
        %2900 = vmatprep.subr.mxu0 0.0
        %2901 = vmatpush1.msra.mxu0 0.0
        %2902 = vmatprep.subr.mxu0 0.0
        %2903 = vmatpush1.msra.mxu0 0.0
        %2904 = vmatprep.subr.mxu0 0.0
        %2905 = vmatpush1.msra.mxu0 0.0
        %2906 = vmatprep.subr.mxu0 0.0
        %2907 = vmatpush1.msra.mxu0 0.0
        %2908 = vmatprep.subr.mxu0 0.0
        %2909 = vmatpush1.msra.mxu0 0.0
        %2910 = vmatprep.subr.mxu0 0.0
        %2911 = vmatpush1.msra.mxu0 0.0
        %2912 = vmatprep.mubr.f32.mxu0 0.0
        %2913 = vmatmul.mubr.f32.gmra.mrb[0].mxu0 %v2690
        %v2914 = vpop.f32.mrb[0].mxu0
        %v2915 = vadd.f32 0.0, %v2914
        %v2916 = vpop.f32.mrb[0].mxu0
        %2917 = vdwg.mxu0
        %v2919 = vsel %vm1102, %v2847, 0
        %2921 = vmatprep.subr.mxu0 0.0
        %2922 = vmatpush1.msra.mxu0 %v1074
        %2923 = vmatprep.subr.mxu0 0.0
        %2924 = vmatpush1.msra.mxu0 %v1075
        %2925 = vmatprep.subr.mxu0 0.0
        %2926 = vmatpush1.msra.mxu0 %v1076
        %2927 = vmatprep.subr.mxu0 0.0
        %2928 = vmatpush1.msra.mxu0 %v1077
        %2929 = vmatprep.subr.mxu0 0.0
        %2930 = vmatpush1.msra.mxu0 %v1617
        %2931 = vmatprep.subr.mxu0 0.0
        %2932 = vmatpush1.msra.mxu0 0.0
        %2933 = vmatprep.subr.mxu0 0.0
        %2934 = vmatpush1.msra.mxu0 0.0
        %2935 = vmatprep.subr.mxu0 0.0
        %2936 = vmatpush1.msra.mxu0 0.0
        %2937 = vmatprep.subr.mxu0 0.0
        %2938 = vmatpush1.msra.mxu0 0.0
        %2939 = vmatprep.subr.mxu0 0.0
        %2940 = vmatpush1.msra.mxu0 0.0
        %2941 = vmatprep.subr.mxu0 0.0
        %2942 = vmatpush1.msra.mxu0 0.0
        %2943 = vmatprep.subr.mxu0 0.0
        %2944 = vmatpush1.msra.mxu0 0.0
        %2945 = vmatprep.subr.mxu0 0.0
        %2946 = vmatpush1.msra.mxu0 0.0
        %2947 = vmatprep.subr.mxu0 0.0
        %2948 = vmatpush1.msra.mxu0 0.0
        %2949 = vmatprep.subr.mxu0 0.0
        %2950 = vmatpush1.msra.mxu0 0.0
        %2951 = vmatprep.subr.mxu0 0.0
        %2952 = vmatpush1.msra.mxu0 0.0
        %2953 = vmatprep.subr.mxu0 0.0
        %2954 = vmatpush1.msra.mxu0 0.0
        %2955 = vmatprep.subr.mxu0 0.0
        %2956 = vmatpush1.msra.mxu0 0.0
        %2957 = vmatprep.subr.mxu0 0.0
        %2958 = vmatpush1.msra.mxu0 0.0
        %2959 = vmatprep.subr.mxu0 0.0
        %2960 = vmatpush1.msra.mxu0 0.0
        %2961 = vmatprep.subr.mxu0 0.0
        %2962 = vmatpush1.msra.mxu0 0.0
        %2963 = vmatprep.subr.mxu0 0.0
        %2964 = vmatpush1.msra.mxu0 0.0
        %2965 = vmatprep.subr.mxu0 0.0
        %2966 = vmatpush1.msra.mxu0 0.0
        %2967 = vmatprep.subr.mxu0 0.0
        %2968 = vmatpush1.msra.mxu0 0.0
        %2969 = vmatprep.subr.mxu0 0.0
        %2970 = vmatpush1.msra.mxu0 0.0
        %2971 = vmatprep.subr.mxu0 0.0
        %2972 = vmatpush1.msra.mxu0 0.0
        %2973 = vmatprep.subr.mxu0 0.0
        %2974 = vmatpush1.msra.mxu0 0.0
        %2975 = vmatprep.subr.mxu0 0.0
        %2976 = vmatpush1.msra.mxu0 0.0
        %2977 = vmatprep.subr.mxu0 0.0
        %2978 = vmatpush1.msra.mxu0 0.0
        %2979 = vmatprep.subr.mxu0 0.0
        %2980 = vmatpush1.msra.mxu0 0.0
        %2981 = vmatprep.subr.mxu0 0.0
        %2982 = vmatpush1.msra.mxu0 0.0
        %2983 = vmatprep.subr.mxu0 0.0
        %2984 = vmatpush1.msra.mxu0 0.0
        %2985 = vmatprep.mubr.f32.mxu0 0.0
        %2986 = vmatmul.mubr.f32.gmra.mrb[0].mxu0 %v2919
        %v2987 = vpop.f32.mrb[0].mxu0
        %v2988 = vadd.f32 %v2915, %v2987
        %v2989 = vpop.f32.mrb[0].mxu0
        %2990 = vdwg.mxu0
        %2991 = vmatprep.subr.mxu0 0.0
        %2992 = vmatpush1.msra.mxu0 %v1084
        %2993 = vmatprep.subr.mxu0 0.0
        %2994 = vmatpush1.msra.mxu0 %v1085
        %2995 = vmatprep.subr.mxu0 0.0
        %2996 = vmatpush1.msra.mxu0 %v1086
        %2997 = vmatprep.subr.mxu0 0.0
        %2998 = vmatpush1.msra.mxu0 %v1087
        %2999 = vmatprep.subr.mxu0 0.0
        %3000 = vmatpush1.msra.mxu0 0.0
        %3001 = vmatprep.subr.mxu0 0.0
        %3002 = vmatpush1.msra.mxu0 0.0
        %3003 = vmatprep.subr.mxu0 0.0
        %3004 = vmatpush1.msra.mxu0 0.0
        %3005 = vmatprep.subr.mxu0 0.0
        %3006 = vmatpush1.msra.mxu0 0.0
        %3007 = vmatprep.subr.mxu0 0.0
        %3008 = vmatpush1.msra.mxu0 0.0
        %3009 = vmatprep.subr.mxu0 0.0
        %3010 = vmatpush1.msra.mxu0 0.0
        %3011 = vmatprep.subr.mxu0 0.0
        %3012 = vmatpush1.msra.mxu0 0.0
        %3013 = vmatprep.subr.mxu0 0.0
        %3014 = vmatpush1.msra.mxu0 0.0
        %3015 = vmatprep.subr.mxu0 0.0
        %3016 = vmatpush1.msra.mxu0 0.0
        %3017 = vmatprep.subr.mxu0 0.0
        %3018 = vmatpush1.msra.mxu0 0.0
        %3019 = vmatprep.subr.mxu0 0.0
        %3020 = vmatpush1.msra.mxu0 0.0
        %3021 = vmatprep.subr.mxu0 0.0
        %3022 = vmatpush1.msra.mxu0 0.0
        %3023 = vmatprep.subr.mxu0 0.0
        %3024 = vmatpush1.msra.mxu0 0.0
        %3025 = vmatprep.subr.mxu0 0.0
        %3026 = vmatpush1.msra.mxu0 0.0
        %3027 = vmatprep.subr.mxu0 0.0
        %3028 = vmatpush1.msra.mxu0 0.0
        %3029 = vmatprep.subr.mxu0 0.0
        %3030 = vmatpush1.msra.mxu0 0.0
        %3031 = vmatprep.subr.mxu0 0.0
        %3032 = vmatpush1.msra.mxu0 0.0
        %3033 = vmatprep.subr.mxu0 0.0
        %3034 = vmatpush1.msra.mxu0 0.0
        %3035 = vmatprep.subr.mxu0 0.0
        %3036 = vmatpush1.msra.mxu0 0.0
        %3037 = vmatprep.subr.mxu0 0.0
        %3038 = vmatpush1.msra.mxu0 0.0
        %3039 = vmatprep.subr.mxu0 0.0
        %3040 = vmatpush1.msra.mxu0 0.0
        %3041 = vmatprep.subr.mxu0 0.0
        %3042 = vmatpush1.msra.mxu0 0.0
        %3043 = vmatprep.subr.mxu0 0.0
        %3044 = vmatpush1.msra.mxu0 0.0
        %3045 = vmatprep.subr.mxu0 0.0
        %3046 = vmatpush1.msra.mxu0 0.0
        %3047 = vmatprep.subr.mxu0 0.0
        %3048 = vmatpush1.msra.mxu0 0.0
        %3049 = vmatprep.subr.mxu0 0.0
        %3050 = vmatpush1.msra.mxu0 0.0
        %3051 = vmatprep.subr.mxu0 0.0
        %3052 = vmatpush1.msra.mxu0 0.0
        %3053 = vmatprep.subr.mxu0 0.0
        %3054 = vmatpush1.msra.mxu0 0.0
        %3055 = vmatprep.mubr.f32.mxu0 0.0
        %3056 = vmatmul.mubr.f32.gmra.mrb[0].mxu0 %v2540
        %v3057 = vpop.f32.mrb[0].mxu0
        %v3058 = vadd.f32 0.0, %v3057
        %v3059 = vpop.f32.mrb[0].mxu0
        %3060 = vdwg.mxu0
        %v3061 = vadd.f32 %v2988, %v3058
        %v3062 = vadd.f32 %v3061, %v1764
        %v3063 = vxor.u32 %v3062, 2147483648
        %v3064 = vmul.f32 %v3063, 1.442695
        %v3065 = vpow.pop %v3064
        %v3066 = vadd.f32 %v3065, 1.0
        %v3067 = vrcp.pop %v3066
        %v3068 = vmul.f32 1.0, %v3067
        %v3069 = vtanh.pop %v3062
        %v3070 = vmul.f32 %v3068, %v2432
        %3072 = vrot.lane.b32.xlu0 %v3069, 64
        %v3073 = vpop.permute.xlu0 %3072
        %v3075 = vmul.f32 %v3068, %v3073
        %3077 = vrot.lane.b32.xlu0 %v3075, 32
        %v3078 = vpop.permute.xlu0 %3077
        %v3080 = vadd.f32 %v3070, %v3078
        %v3081 = vtanh.pop %v3080
        %3083 = vrot.lane.b32.xlu0 %v3081, 64
        %v3084 = vpop.permute.xlu0 %3083
        %v3086 = vmul.f32 %v3068, %v3084
        %s3087 = scalar_lea.vmem %s1039, %s2444
        %3088 = vst.msk [vmem:[%s3087] sm:$0xff] %vm1102, %v2847
        %v3089 = vmul.f32 %v2613, %v2442
        %v3090 = vadd.f32 %v3089, 1.0
        %s3091 = scalar_select %p1089, 3, 4
        %s3092 = smul.u32 %s3091, 8
        %s3093 = scalar_lea.vmem %s0, %s3092
        %v3094 = vld [vmem:[%s3093] sm:$0xff]
        %s3095 = scalar_lea.vmem %s1, %s3092
        %v3096 = vld [vmem:[%s3095] sm:$0xff]
        %v3098 = vsel %vm1102, %v3090, 0
        %3100 = vmatprep.subr.mxu0 0.0
        %3101 = vmatpush1.msra.mxu0 %v1044
        %3102 = vmatprep.subr.mxu0 0.0
        %3103 = vmatpush1.msra.mxu0 %v1045
        %3104 = vmatprep.subr.mxu0 0.0
        %3105 = vmatpush1.msra.mxu0 %v1046
        %3106 = vmatprep.subr.mxu0 0.0
        %3107 = vmatpush1.msra.mxu0 %v1047
        %3108 = vmatprep.subr.mxu0 0.0
        %3109 = vmatpush1.msra.mxu0 %v1108
        %3110 = vmatprep.subr.mxu0 0.0
        %3111 = vmatpush1.msra.mxu0 0.0
        %3112 = vmatprep.subr.mxu0 0.0
        %3113 = vmatpush1.msra.mxu0 0.0
        %3114 = vmatprep.subr.mxu0 0.0
        %3115 = vmatpush1.msra.mxu0 0.0
        %3116 = vmatprep.subr.mxu0 0.0
        %3117 = vmatpush1.msra.mxu0 0.0
        %3118 = vmatprep.subr.mxu0 0.0
        %3119 = vmatpush1.msra.mxu0 0.0
        %3120 = vmatprep.subr.mxu0 0.0
        %3121 = vmatpush1.msra.mxu0 0.0
        %3122 = vmatprep.subr.mxu0 0.0
        %3123 = vmatpush1.msra.mxu0 0.0
        %3124 = vmatprep.subr.mxu0 0.0
        %3125 = vmatpush1.msra.mxu0 0.0
        %3126 = vmatprep.subr.mxu0 0.0
        %3127 = vmatpush1.msra.mxu0 0.0
        %3128 = vmatprep.subr.mxu0 0.0
        %3129 = vmatpush1.msra.mxu0 0.0
        %3130 = vmatprep.subr.mxu0 0.0
        %3131 = vmatpush1.msra.mxu0 0.0
        %3132 = vmatprep.subr.mxu0 0.0
        %3133 = vmatpush1.msra.mxu0 0.0
        %3134 = vmatprep.subr.mxu0 0.0
        %3135 = vmatpush1.msra.mxu0 0.0
        %3136 = vmatprep.subr.mxu0 0.0
        %3137 = vmatpush1.msra.mxu0 0.0
        %3138 = vmatprep.subr.mxu0 0.0
        %3139 = vmatpush1.msra.mxu0 0.0
        %3140 = vmatprep.subr.mxu0 0.0
        %3141 = vmatpush1.msra.mxu0 0.0
        %3142 = vmatprep.subr.mxu0 0.0
        %3143 = vmatpush1.msra.mxu0 0.0
        %3144 = vmatprep.subr.mxu0 0.0
        %3145 = vmatpush1.msra.mxu0 0.0
        %3146 = vmatprep.subr.mxu0 0.0
        %3147 = vmatpush1.msra.mxu0 0.0
        %3148 = vmatprep.subr.mxu0 0.0
        %3149 = vmatpush1.msra.mxu0 0.0
        %3150 = vmatprep.subr.mxu0 0.0
        %3151 = vmatpush1.msra.mxu0 0.0
        %3152 = vmatprep.subr.mxu0 0.0
        %3153 = vmatpush1.msra.mxu0 0.0
        %3154 = vmatprep.subr.mxu0 0.0
        %3155 = vmatpush1.msra.mxu0 0.0
        %3156 = vmatprep.subr.mxu0 0.0
        %3157 = vmatpush1.msra.mxu0 0.0
        %3158 = vmatprep.subr.mxu0 0.0
        %3159 = vmatpush1.msra.mxu0 0.0
        %3160 = vmatprep.subr.mxu0 0.0
        %3161 = vmatpush1.msra.mxu0 0.0
        %3162 = vmatprep.subr.mxu0 0.0
        %3163 = vmatpush1.msra.mxu0 0.0
        %3164 = vmatprep.mubr.f32.mxu0 0.0
        %3165 = vmatmul.mubr.f32.gmra.mrb[0].mxu0 %v3098
        %v3166 = vpop.f32.mrb[0].mxu0
        %v3167 = vadd.f32 %v1100, %v3166
        %v3168 = vpop.f32.mrb[0].mxu0
        %3169 = vdwg.mxu0
        %v3170 = vmax.f32 %v3167, 0.0
        %v3171 = vsub.f32 0.0, %v3170
        %v3172 = vmul.f32 %v3171, 1.442695
        %v3173 = vpow.pop %v3172
        %v3174 = vmul.f32 %v3090, %v1188
        %v3175 = vadd.f32 %v3174, %v1195
        %v3176 = vmax.f32 %v3175, 0.0
        %v3177 = vsub.f32 0.0, %v3176
        %v3178 = vmul.f32 %v3177, 1.442695
        %v3179 = vpow.pop %v3178
        %3181 = vrot.lane.b32.xlu0 %v3173, 96
        %v3182 = vpop.permute.xlu0 %3181
        %v3184 = vmul.f32 %v3086, %v3182
        %3186 = vrot.lane.b32.xlu0 %v3184, 32
        %v3187 = vpop.permute.xlu0 %3186
        %v3188 = vsel %vm1209, %v3187, 0
        %3190 = vmatprep.subr.mxu0 0.0
        %3191 = vmatpush1.msra.mxu0 %v1052
        %3192 = vmatprep.subr.mxu0 0.0
        %3193 = vmatpush1.msra.mxu0 %v1053
        %3194 = vmatprep.subr.mxu0 0.0
        %3195 = vmatpush1.msra.mxu0 %v1054
        %3196 = vmatprep.subr.mxu0 0.0
        %3197 = vmatpush1.msra.mxu0 %v1055
        %3198 = vmatprep.subr.mxu0 0.0
        %3199 = vmatpush1.msra.mxu0 0.0
        %3200 = vmatprep.subr.mxu0 0.0
        %3201 = vmatpush1.msra.mxu0 0.0
        %3202 = vmatprep.subr.mxu0 0.0
        %3203 = vmatpush1.msra.mxu0 0.0
        %3204 = vmatprep.subr.mxu0 0.0
        %3205 = vmatpush1.msra.mxu0 0.0
        %3206 = vmatprep.subr.mxu0 0.0
        %3207 = vmatpush1.msra.mxu0 0.0
        %3208 = vmatprep.subr.mxu0 0.0
        %3209 = vmatpush1.msra.mxu0 0.0
        %3210 = vmatprep.subr.mxu0 0.0
        %3211 = vmatpush1.msra.mxu0 0.0
        %3212 = vmatprep.subr.mxu0 0.0
        %3213 = vmatpush1.msra.mxu0 0.0
        %3214 = vmatprep.subr.mxu0 0.0
        %3215 = vmatpush1.msra.mxu0 0.0
        %3216 = vmatprep.subr.mxu0 0.0
        %3217 = vmatpush1.msra.mxu0 0.0
        %3218 = vmatprep.subr.mxu0 0.0
        %3219 = vmatpush1.msra.mxu0 0.0
        %3220 = vmatprep.subr.mxu0 0.0
        %3221 = vmatpush1.msra.mxu0 0.0
        %3222 = vmatprep.subr.mxu0 0.0
        %3223 = vmatpush1.msra.mxu0 0.0
        %3224 = vmatprep.subr.mxu0 0.0
        %3225 = vmatpush1.msra.mxu0 0.0
        %3226 = vmatprep.subr.mxu0 0.0
        %3227 = vmatpush1.msra.mxu0 0.0
        %3228 = vmatprep.subr.mxu0 0.0
        %3229 = vmatpush1.msra.mxu0 0.0
        %3230 = vmatprep.subr.mxu0 0.0
        %3231 = vmatpush1.msra.mxu0 0.0
        %3232 = vmatprep.subr.mxu0 0.0
        %3233 = vmatpush1.msra.mxu0 0.0
        %3234 = vmatprep.subr.mxu0 0.0
        %3235 = vmatpush1.msra.mxu0 0.0
        %3236 = vmatprep.subr.mxu0 0.0
        %3237 = vmatpush1.msra.mxu0 0.0
        %3238 = vmatprep.subr.mxu0 0.0
        %3239 = vmatpush1.msra.mxu0 0.0
        %3240 = vmatprep.subr.mxu0 0.0
        %3241 = vmatpush1.msra.mxu0 0.0
        %3242 = vmatprep.subr.mxu0 0.0
        %3243 = vmatpush1.msra.mxu0 0.0
        %3244 = vmatprep.subr.mxu0 0.0
        %3245 = vmatpush1.msra.mxu0 0.0
        %3246 = vmatprep.subr.mxu0 0.0
        %3247 = vmatpush1.msra.mxu0 0.0
        %3248 = vmatprep.subr.mxu0 0.0
        %3249 = vmatpush1.msra.mxu0 0.0
        %3250 = vmatprep.subr.mxu0 0.0
        %3251 = vmatpush1.msra.mxu0 0.0
        %3252 = vmatprep.subr.mxu0 0.0
        %3253 = vmatpush1.msra.mxu0 0.0
        %3254 = vmatprep.mubr.f32.mxu0 0.0
        %3255 = vmatmul.mubr.f32.gmra.mrb[0].mxu0 %v3188
        %v3256 = vpop.f32.mrb[0].mxu0
        %v3257 = vadd.f32 %v1207, %v3256
        %v3258 = vpop.f32.mrb[0].mxu0
        %3259 = vdwg.mxu0
        %v3260 = vmul.f32 %v3096, %v3094
        %v3261 = vsub.f32 1.0, %v3096
        %v3262 = vmul.f32 %v3261, %v3257
        %v3263 = vadd.f32 %v3260, %v3262
        %v3265 = vsel %vm1102, %v3263, 0
        %3267 = vmatprep.subr.mxu0 0.0
        %3268 = vmatpush1.msra.mxu0 %v1057
        %3269 = vmatprep.subr.mxu0 0.0
        %3270 = vmatpush1.msra.mxu0 %v1058
        %3271 = vmatprep.subr.mxu0 0.0
        %3272 = vmatpush1.msra.mxu0 %v1059
        %3273 = vmatprep.subr.mxu0 0.0
        %3274 = vmatpush1.msra.mxu0 %v1060
        %3275 = vmatprep.subr.mxu0 0.0
        %3276 = vmatpush1.msra.mxu0 %v1297
        %3277 = vmatprep.subr.mxu0 0.0
        %3278 = vmatpush1.msra.mxu0 0.0
        %3279 = vmatprep.subr.mxu0 0.0
        %3280 = vmatpush1.msra.mxu0 0.0
        %3281 = vmatprep.subr.mxu0 0.0
        %3282 = vmatpush1.msra.mxu0 0.0
        %3283 = vmatprep.subr.mxu0 0.0
        %3284 = vmatpush1.msra.mxu0 0.0
        %3285 = vmatprep.subr.mxu0 0.0
        %3286 = vmatpush1.msra.mxu0 0.0
        %3287 = vmatprep.subr.mxu0 0.0
        %3288 = vmatpush1.msra.mxu0 0.0
        %3289 = vmatprep.subr.mxu0 0.0
        %3290 = vmatpush1.msra.mxu0 0.0
        %3291 = vmatprep.subr.mxu0 0.0
        %3292 = vmatpush1.msra.mxu0 0.0
        %3293 = vmatprep.subr.mxu0 0.0
        %3294 = vmatpush1.msra.mxu0 0.0
        %3295 = vmatprep.subr.mxu0 0.0
        %3296 = vmatpush1.msra.mxu0 0.0
        %3297 = vmatprep.subr.mxu0 0.0
        %3298 = vmatpush1.msra.mxu0 0.0
        %3299 = vmatprep.subr.mxu0 0.0
        %3300 = vmatpush1.msra.mxu0 0.0
        %3301 = vmatprep.subr.mxu0 0.0
        %3302 = vmatpush1.msra.mxu0 0.0
        %3303 = vmatprep.subr.mxu0 0.0
        %3304 = vmatpush1.msra.mxu0 0.0
        %3305 = vmatprep.subr.mxu0 0.0
        %3306 = vmatpush1.msra.mxu0 0.0
        %3307 = vmatprep.subr.mxu0 0.0
        %3308 = vmatpush1.msra.mxu0 0.0
        %3309 = vmatprep.subr.mxu0 0.0
        %3310 = vmatpush1.msra.mxu0 0.0
        %3311 = vmatprep.subr.mxu0 0.0
        %3312 = vmatpush1.msra.mxu0 0.0
        %3313 = vmatprep.subr.mxu0 0.0
        %3314 = vmatpush1.msra.mxu0 0.0
        %3315 = vmatprep.subr.mxu0 0.0
        %3316 = vmatpush1.msra.mxu0 0.0
        %3317 = vmatprep.subr.mxu0 0.0
        %3318 = vmatpush1.msra.mxu0 0.0
        %3319 = vmatprep.subr.mxu0 0.0
        %3320 = vmatpush1.msra.mxu0 0.0
        %3321 = vmatprep.subr.mxu0 0.0
        %3322 = vmatpush1.msra.mxu0 0.0
        %3323 = vmatprep.subr.mxu0 0.0
        %3324 = vmatpush1.msra.mxu0 0.0
        %3325 = vmatprep.subr.mxu0 0.0
        %3326 = vmatpush1.msra.mxu0 0.0
        %3327 = vmatprep.subr.mxu0 0.0
        %3328 = vmatpush1.msra.mxu0 0.0
        %3329 = vmatprep.subr.mxu0 0.0
        %3330 = vmatpush1.msra.mxu0 0.0
        %3331 = vmatprep.mubr.f32.mxu0 0.0
        %3332 = vmatmul.mubr.f32.gmra.mrb[0].mxu0 %v3265
        %v3333 = vpop.f32.mrb[0].mxu0
        %v3334 = vadd.f32 %v1291, %v3333
        %v3335 = vpop.f32.mrb[0].mxu0
        %3336 = vdwg.mxu0
        %v3338 = vsel %vm1102, %v3096, 0
        %3340 = vmatprep.subr.mxu0 0.0
        %3341 = vmatpush1.msra.mxu0 %v1068
        %3342 = vmatprep.subr.mxu0 0.0
        %3343 = vmatpush1.msra.mxu0 %v1069
        %3344 = vmatprep.subr.mxu0 0.0
        %3345 = vmatpush1.msra.mxu0 %v1070
        %3346 = vmatprep.subr.mxu0 0.0
        %3347 = vmatpush1.msra.mxu0 %v1071
        %3348 = vmatprep.subr.mxu0 0.0
        %3349 = vmatpush1.msra.mxu0 %v1373
        %3350 = vmatprep.subr.mxu0 0.0
        %3351 = vmatpush1.msra.mxu0 0.0
        %3352 = vmatprep.subr.mxu0 0.0
        %3353 = vmatpush1.msra.mxu0 0.0
        %3354 = vmatprep.subr.mxu0 0.0
        %3355 = vmatpush1.msra.mxu0 0.0
        %3356 = vmatprep.subr.mxu0 0.0
        %3357 = vmatpush1.msra.mxu0 0.0
        %3358 = vmatprep.subr.mxu0 0.0
        %3359 = vmatpush1.msra.mxu0 0.0
        %3360 = vmatprep.subr.mxu0 0.0
        %3361 = vmatpush1.msra.mxu0 0.0
        %3362 = vmatprep.subr.mxu0 0.0
        %3363 = vmatpush1.msra.mxu0 0.0
        %3364 = vmatprep.subr.mxu0 0.0
        %3365 = vmatpush1.msra.mxu0 0.0
        %3366 = vmatprep.subr.mxu0 0.0
        %3367 = vmatpush1.msra.mxu0 0.0
        %3368 = vmatprep.subr.mxu0 0.0
        %3369 = vmatpush1.msra.mxu0 0.0
        %3370 = vmatprep.subr.mxu0 0.0
        %3371 = vmatpush1.msra.mxu0 0.0
        %3372 = vmatprep.subr.mxu0 0.0
        %3373 = vmatpush1.msra.mxu0 0.0
        %3374 = vmatprep.subr.mxu0 0.0
        %3375 = vmatpush1.msra.mxu0 0.0
        %3376 = vmatprep.subr.mxu0 0.0
        %3377 = vmatpush1.msra.mxu0 0.0
        %3378 = vmatprep.subr.mxu0 0.0
        %3379 = vmatpush1.msra.mxu0 0.0
        %3380 = vmatprep.subr.mxu0 0.0
        %3381 = vmatpush1.msra.mxu0 0.0
        %3382 = vmatprep.subr.mxu0 0.0
        %3383 = vmatpush1.msra.mxu0 0.0
        %3384 = vmatprep.subr.mxu0 0.0
        %3385 = vmatpush1.msra.mxu0 0.0
        %3386 = vmatprep.subr.mxu0 0.0
        %3387 = vmatpush1.msra.mxu0 0.0
        %3388 = vmatprep.subr.mxu0 0.0
        %3389 = vmatpush1.msra.mxu0 0.0
        %3390 = vmatprep.subr.mxu0 0.0
        %3391 = vmatpush1.msra.mxu0 0.0
        %3392 = vmatprep.subr.mxu0 0.0
        %3393 = vmatpush1.msra.mxu0 0.0
        %3394 = vmatprep.subr.mxu0 0.0
        %3395 = vmatpush1.msra.mxu0 0.0
        %3396 = vmatprep.subr.mxu0 0.0
        %3397 = vmatpush1.msra.mxu0 0.0
        %3398 = vmatprep.subr.mxu0 0.0
        %3399 = vmatpush1.msra.mxu0 0.0
        %3400 = vmatprep.subr.mxu0 0.0
        %3401 = vmatpush1.msra.mxu0 0.0
        %3402 = vmatprep.subr.mxu0 0.0
        %3403 = vmatpush1.msra.mxu0 0.0
        %3404 = vmatprep.mubr.f32.mxu0 0.0
        %3405 = vmatmul.mubr.f32.gmra.mrb[0].mxu0 %v3338
        %v3406 = vpop.f32.mrb[0].mxu0
        %v3407 = vadd.f32 0.0, %v3406
        %v3408 = vpop.f32.mrb[0].mxu0
        %3409 = vdwg.mxu0
        %v3411 = vsel %vm1102, %v3179, 0
        %3413 = vmatprep.subr.mxu0 0.0
        %3414 = vmatpush1.msra.mxu0 %v1063
        %3415 = vmatprep.subr.mxu0 0.0
        %3416 = vmatpush1.msra.mxu0 %v1064
        %3417 = vmatprep.subr.mxu0 0.0
        %3418 = vmatpush1.msra.mxu0 %v1065
        %3419 = vmatprep.subr.mxu0 0.0
        %3420 = vmatpush1.msra.mxu0 %v1066
        %3421 = vmatprep.subr.mxu0 0.0
        %3422 = vmatpush1.msra.mxu0 %v1449
        %3423 = vmatprep.subr.mxu0 0.0
        %3424 = vmatpush1.msra.mxu0 0.0
        %3425 = vmatprep.subr.mxu0 0.0
        %3426 = vmatpush1.msra.mxu0 0.0
        %3427 = vmatprep.subr.mxu0 0.0
        %3428 = vmatpush1.msra.mxu0 0.0
        %3429 = vmatprep.subr.mxu0 0.0
        %3430 = vmatpush1.msra.mxu0 0.0
        %3431 = vmatprep.subr.mxu0 0.0
        %3432 = vmatpush1.msra.mxu0 0.0
        %3433 = vmatprep.subr.mxu0 0.0
        %3434 = vmatpush1.msra.mxu0 0.0
        %3435 = vmatprep.subr.mxu0 0.0
        %3436 = vmatpush1.msra.mxu0 0.0
        %3437 = vmatprep.subr.mxu0 0.0
        %3438 = vmatpush1.msra.mxu0 0.0
        %3439 = vmatprep.subr.mxu0 0.0
        %3440 = vmatpush1.msra.mxu0 0.0
        %3441 = vmatprep.subr.mxu0 0.0
        %3442 = vmatpush1.msra.mxu0 0.0
        %3443 = vmatprep.subr.mxu0 0.0
        %3444 = vmatpush1.msra.mxu0 0.0
        %3445 = vmatprep.subr.mxu0 0.0
        %3446 = vmatpush1.msra.mxu0 0.0
        %3447 = vmatprep.subr.mxu0 0.0
        %3448 = vmatpush1.msra.mxu0 0.0
        %3449 = vmatprep.subr.mxu0 0.0
        %3450 = vmatpush1.msra.mxu0 0.0
        %3451 = vmatprep.subr.mxu0 0.0
        %3452 = vmatpush1.msra.mxu0 0.0
        %3453 = vmatprep.subr.mxu0 0.0
        %3454 = vmatpush1.msra.mxu0 0.0
        %3455 = vmatprep.subr.mxu0 0.0
        %3456 = vmatpush1.msra.mxu0 0.0
        %3457 = vmatprep.subr.mxu0 0.0
        %3458 = vmatpush1.msra.mxu0 0.0
        %3459 = vmatprep.subr.mxu0 0.0
        %3460 = vmatpush1.msra.mxu0 0.0
        %3461 = vmatprep.subr.mxu0 0.0
        %3462 = vmatpush1.msra.mxu0 0.0
        %3463 = vmatprep.subr.mxu0 0.0
        %3464 = vmatpush1.msra.mxu0 0.0
        %3465 = vmatprep.subr.mxu0 0.0
        %3466 = vmatpush1.msra.mxu0 0.0
        %3467 = vmatprep.subr.mxu0 0.0
        %3468 = vmatpush1.msra.mxu0 0.0
        %3469 = vmatprep.subr.mxu0 0.0
        %3470 = vmatpush1.msra.mxu0 0.0
        %3471 = vmatprep.subr.mxu0 0.0
        %3472 = vmatpush1.msra.mxu0 0.0
        %3473 = vmatprep.subr.mxu0 0.0
        %3474 = vmatpush1.msra.mxu0 0.0
        %3475 = vmatprep.subr.mxu0 0.0
        %3476 = vmatpush1.msra.mxu0 0.0
        %3477 = vmatprep.mubr.f32.mxu0 0.0
        %3478 = vmatmul.mubr.f32.gmra.mrb[0].mxu0 %v3411
        %v3479 = vpop.f32.mrb[0].mxu0
        %v3480 = vadd.f32 %v3407, %v3479
        %v3481 = vpop.f32.mrb[0].mxu0
        %3482 = vdwg.mxu0
        %v3483 = vadd.f32 %v3480, %v1525
        %v3484 = vxor.u32 %v3483, 2147483648
        %v3485 = vmul.f32 %v3484, 1.442695
        %v3486 = vpow.pop %v3485
        %v3487 = vadd.f32 %v3486, 1.0
        %v3488 = vrcp.pop %v3487
        %v3489 = vmul.f32 1.0, %v3488
        %v3490 = vmul.f32 %v3489, %v3334
        %v3491 = vsub.f32 1.0, %v3489
        %v3492 = vmul.f32 %v3491, %v3257
        %v3493 = vadd.f32 %v3490, %v3492
        %v3494 = vmul.f32 %v3261, %v3493
        %v3495 = vadd.f32 %v3260, %v3494
        %3496 = vmatprep.subr.mxu0 0.0
        %3497 = vmatpush1.msra.mxu0 %v1079
        %3498 = vmatprep.subr.mxu0 0.0
        %3499 = vmatpush1.msra.mxu0 %v1080
        %3500 = vmatprep.subr.mxu0 0.0
        %3501 = vmatpush1.msra.mxu0 %v1081
        %3502 = vmatprep.subr.mxu0 0.0
        %3503 = vmatpush1.msra.mxu0 %v1082
        %3504 = vmatprep.subr.mxu0 0.0
        %3505 = vmatpush1.msra.mxu0 %v1541
        %3506 = vmatprep.subr.mxu0 0.0
        %3507 = vmatpush1.msra.mxu0 0.0
        %3508 = vmatprep.subr.mxu0 0.0
        %3509 = vmatpush1.msra.mxu0 0.0
        %3510 = vmatprep.subr.mxu0 0.0
        %3511 = vmatpush1.msra.mxu0 0.0
        %3512 = vmatprep.subr.mxu0 0.0
        %3513 = vmatpush1.msra.mxu0 0.0
        %3514 = vmatprep.subr.mxu0 0.0
        %3515 = vmatpush1.msra.mxu0 0.0
        %3516 = vmatprep.subr.mxu0 0.0
        %3517 = vmatpush1.msra.mxu0 0.0
        %3518 = vmatprep.subr.mxu0 0.0
        %3519 = vmatpush1.msra.mxu0 0.0
        %3520 = vmatprep.subr.mxu0 0.0
        %3521 = vmatpush1.msra.mxu0 0.0
        %3522 = vmatprep.subr.mxu0 0.0
        %3523 = vmatpush1.msra.mxu0 0.0
        %3524 = vmatprep.subr.mxu0 0.0
        %3525 = vmatpush1.msra.mxu0 0.0
        %3526 = vmatprep.subr.mxu0 0.0
        %3527 = vmatpush1.msra.mxu0 0.0
        %3528 = vmatprep.subr.mxu0 0.0
        %3529 = vmatpush1.msra.mxu0 0.0
        %3530 = vmatprep.subr.mxu0 0.0
        %3531 = vmatpush1.msra.mxu0 0.0
        %3532 = vmatprep.subr.mxu0 0.0
        %3533 = vmatpush1.msra.mxu0 0.0
        %3534 = vmatprep.subr.mxu0 0.0
        %3535 = vmatpush1.msra.mxu0 0.0
        %3536 = vmatprep.subr.mxu0 0.0
        %3537 = vmatpush1.msra.mxu0 0.0
        %3538 = vmatprep.subr.mxu0 0.0
        %3539 = vmatpush1.msra.mxu0 0.0
        %3540 = vmatprep.subr.mxu0 0.0
        %3541 = vmatpush1.msra.mxu0 0.0
        %3542 = vmatprep.subr.mxu0 0.0
        %3543 = vmatpush1.msra.mxu0 0.0
        %3544 = vmatprep.subr.mxu0 0.0
        %3545 = vmatpush1.msra.mxu0 0.0
        %3546 = vmatprep.subr.mxu0 0.0
        %3547 = vmatpush1.msra.mxu0 0.0
        %3548 = vmatprep.subr.mxu0 0.0
        %3549 = vmatpush1.msra.mxu0 0.0
        %3550 = vmatprep.subr.mxu0 0.0
        %3551 = vmatpush1.msra.mxu0 0.0
        %3552 = vmatprep.subr.mxu0 0.0
        %3553 = vmatpush1.msra.mxu0 0.0
        %3554 = vmatprep.subr.mxu0 0.0
        %3555 = vmatpush1.msra.mxu0 0.0
        %3556 = vmatprep.subr.mxu0 0.0
        %3557 = vmatpush1.msra.mxu0 0.0
        %3558 = vmatprep.subr.mxu0 0.0
        %3559 = vmatpush1.msra.mxu0 0.0
        %3560 = vmatprep.mubr.f32.mxu0 0.0
        %3561 = vmatmul.mubr.f32.gmra.mrb[0].mxu0 %v3338
        %v3562 = vpop.f32.mrb[0].mxu0
        %v3563 = vadd.f32 0.0, %v3562
        %v3564 = vpop.f32.mrb[0].mxu0
        %3565 = vdwg.mxu0
        %v3567 = vsel %vm1102, %v3495, 0
        %3569 = vmatprep.subr.mxu0 0.0
        %3570 = vmatpush1.msra.mxu0 %v1074
        %3571 = vmatprep.subr.mxu0 0.0
        %3572 = vmatpush1.msra.mxu0 %v1075
        %3573 = vmatprep.subr.mxu0 0.0
        %3574 = vmatpush1.msra.mxu0 %v1076
        %3575 = vmatprep.subr.mxu0 0.0
        %3576 = vmatpush1.msra.mxu0 %v1077
        %3577 = vmatprep.subr.mxu0 0.0
        %3578 = vmatpush1.msra.mxu0 %v1617
        %3579 = vmatprep.subr.mxu0 0.0
        %3580 = vmatpush1.msra.mxu0 0.0
        %3581 = vmatprep.subr.mxu0 0.0
        %3582 = vmatpush1.msra.mxu0 0.0
        %3583 = vmatprep.subr.mxu0 0.0
        %3584 = vmatpush1.msra.mxu0 0.0
        %3585 = vmatprep.subr.mxu0 0.0
        %3586 = vmatpush1.msra.mxu0 0.0
        %3587 = vmatprep.subr.mxu0 0.0
        %3588 = vmatpush1.msra.mxu0 0.0
        %3589 = vmatprep.subr.mxu0 0.0
        %3590 = vmatpush1.msra.mxu0 0.0
        %3591 = vmatprep.subr.mxu0 0.0
        %3592 = vmatpush1.msra.mxu0 0.0
        %3593 = vmatprep.subr.mxu0 0.0
        %3594 = vmatpush1.msra.mxu0 0.0
        %3595 = vmatprep.subr.mxu0 0.0
        %3596 = vmatpush1.msra.mxu0 0.0
        %3597 = vmatprep.subr.mxu0 0.0
        %3598 = vmatpush1.msra.mxu0 0.0
        %3599 = vmatprep.subr.mxu0 0.0
        %3600 = vmatpush1.msra.mxu0 0.0
        %3601 = vmatprep.subr.mxu0 0.0
        %3602 = vmatpush1.msra.mxu0 0.0
        %3603 = vmatprep.subr.mxu0 0.0
        %3604 = vmatpush1.msra.mxu0 0.0
        %3605 = vmatprep.subr.mxu0 0.0
        %3606 = vmatpush1.msra.mxu0 0.0
        %3607 = vmatprep.subr.mxu0 0.0
        %3608 = vmatpush1.msra.mxu0 0.0
        %3609 = vmatprep.subr.mxu0 0.0
        %3610 = vmatpush1.msra.mxu0 0.0
        %3611 = vmatprep.subr.mxu0 0.0
        %3612 = vmatpush1.msra.mxu0 0.0
        %3613 = vmatprep.subr.mxu0 0.0
        %3614 = vmatpush1.msra.mxu0 0.0
        %3615 = vmatprep.subr.mxu0 0.0
        %3616 = vmatpush1.msra.mxu0 0.0
        %3617 = vmatprep.subr.mxu0 0.0
        %3618 = vmatpush1.msra.mxu0 0.0
        %3619 = vmatprep.subr.mxu0 0.0
        %3620 = vmatpush1.msra.mxu0 0.0
        %3621 = vmatprep.subr.mxu0 0.0
        %3622 = vmatpush1.msra.mxu0 0.0
        %3623 = vmatprep.subr.mxu0 0.0
        %3624 = vmatpush1.msra.mxu0 0.0
        %3625 = vmatprep.subr.mxu0 0.0
        %3626 = vmatpush1.msra.mxu0 0.0
        %3627 = vmatprep.subr.mxu0 0.0
        %3628 = vmatpush1.msra.mxu0 0.0
        %3629 = vmatprep.subr.mxu0 0.0
        %3630 = vmatpush1.msra.mxu0 0.0
        %3631 = vmatprep.subr.mxu0 0.0
        %3632 = vmatpush1.msra.mxu0 0.0
        %3633 = vmatprep.mubr.f32.mxu0 0.0
        %3634 = vmatmul.mubr.f32.gmra.mrb[0].mxu0 %v3567
        %v3635 = vpop.f32.mrb[0].mxu0
        %v3636 = vadd.f32 %v3563, %v3635
        %v3637 = vpop.f32.mrb[0].mxu0
        %3638 = vdwg.mxu0
        %3639 = vmatprep.subr.mxu0 0.0
        %3640 = vmatpush1.msra.mxu0 %v1084
        %3641 = vmatprep.subr.mxu0 0.0
        %3642 = vmatpush1.msra.mxu0 %v1085
        %3643 = vmatprep.subr.mxu0 0.0
        %3644 = vmatpush1.msra.mxu0 %v1086
        %3645 = vmatprep.subr.mxu0 0.0
        %3646 = vmatpush1.msra.mxu0 %v1087
        %3647 = vmatprep.subr.mxu0 0.0
        %3648 = vmatpush1.msra.mxu0 0.0
        %3649 = vmatprep.subr.mxu0 0.0
        %3650 = vmatpush1.msra.mxu0 0.0
        %3651 = vmatprep.subr.mxu0 0.0
        %3652 = vmatpush1.msra.mxu0 0.0
        %3653 = vmatprep.subr.mxu0 0.0
        %3654 = vmatpush1.msra.mxu0 0.0
        %3655 = vmatprep.subr.mxu0 0.0
        %3656 = vmatpush1.msra.mxu0 0.0
        %3657 = vmatprep.subr.mxu0 0.0
        %3658 = vmatpush1.msra.mxu0 0.0
        %3659 = vmatprep.subr.mxu0 0.0
        %3660 = vmatpush1.msra.mxu0 0.0
        %3661 = vmatprep.subr.mxu0 0.0
        %3662 = vmatpush1.msra.mxu0 0.0
        %3663 = vmatprep.subr.mxu0 0.0
        %3664 = vmatpush1.msra.mxu0 0.0
        %3665 = vmatprep.subr.mxu0 0.0
        %3666 = vmatpush1.msra.mxu0 0.0
        %3667 = vmatprep.subr.mxu0 0.0
        %3668 = vmatpush1.msra.mxu0 0.0
        %3669 = vmatprep.subr.mxu0 0.0
        %3670 = vmatpush1.msra.mxu0 0.0
        %3671 = vmatprep.subr.mxu0 0.0
        %3672 = vmatpush1.msra.mxu0 0.0
        %3673 = vmatprep.subr.mxu0 0.0
        %3674 = vmatpush1.msra.mxu0 0.0
        %3675 = vmatprep.subr.mxu0 0.0
        %3676 = vmatpush1.msra.mxu0 0.0
        %3677 = vmatprep.subr.mxu0 0.0
        %3678 = vmatpush1.msra.mxu0 0.0
        %3679 = vmatprep.subr.mxu0 0.0
        %3680 = vmatpush1.msra.mxu0 0.0
        %3681 = vmatprep.subr.mxu0 0.0
        %3682 = vmatpush1.msra.mxu0 0.0
        %3683 = vmatprep.subr.mxu0 0.0
        %3684 = vmatpush1.msra.mxu0 0.0
        %3685 = vmatprep.subr.mxu0 0.0
        %3686 = vmatpush1.msra.mxu0 0.0
        %3687 = vmatprep.subr.mxu0 0.0
        %3688 = vmatpush1.msra.mxu0 0.0
        %3689 = vmatprep.subr.mxu0 0.0
        %3690 = vmatpush1.msra.mxu0 0.0
        %3691 = vmatprep.subr.mxu0 0.0
        %3692 = vmatpush1.msra.mxu0 0.0
        %3693 = vmatprep.subr.mxu0 0.0
        %3694 = vmatpush1.msra.mxu0 0.0
        %3695 = vmatprep.subr.mxu0 0.0
        %3696 = vmatpush1.msra.mxu0 0.0
        %3697 = vmatprep.subr.mxu0 0.0
        %3698 = vmatpush1.msra.mxu0 0.0
        %3699 = vmatprep.subr.mxu0 0.0
        %3700 = vmatpush1.msra.mxu0 0.0
        %3701 = vmatprep.subr.mxu0 0.0
        %3702 = vmatpush1.msra.mxu0 0.0
        %3703 = vmatprep.mubr.f32.mxu0 0.0
        %3704 = vmatmul.mubr.f32.gmra.mrb[0].mxu0 %v3188
        %v3705 = vpop.f32.mrb[0].mxu0
        %v3706 = vadd.f32 0.0, %v3705
        %v3707 = vpop.f32.mrb[0].mxu0
        %3708 = vdwg.mxu0
        %v3709 = vadd.f32 %v3636, %v3706
        %v3710 = vadd.f32 %v3709, %v1764
        %v3711 = vxor.u32 %v3710, 2147483648
        %v3712 = vmul.f32 %v3711, 1.442695
        %v3713 = vpow.pop %v3712
        %v3714 = vadd.f32 %v3713, 1.0
        %v3715 = vrcp.pop %v3714
        %v3716 = vmul.f32 1.0, %v3715
        %v3717 = vtanh.pop %v3710
        %v3718 = vmul.f32 %v3716, %v3080
        %3720 = vrot.lane.b32.xlu0 %v3717, 64
        %v3721 = vpop.permute.xlu0 %3720
        %v3723 = vmul.f32 %v3716, %v3721
        %3725 = vrot.lane.b32.xlu0 %v3723, 32
        %v3726 = vpop.permute.xlu0 %3725
        %v3728 = vadd.f32 %v3718, %v3726
        %v3729 = vtanh.pop %v3728
        %3731 = vrot.lane.b32.xlu0 %v3729, 64
        %v3732 = vpop.permute.xlu0 %3731
        %v3734 = vmul.f32 %v3716, %v3732
        %s3735 = scalar_lea.vmem %s1039, %s3092
        %3736 = vst.msk [vmem:[%s3735] sm:$0xff] %vm1102, %v3495
        %v3737 = vmul.f32 %v3261, %v3090
        %v3738 = vadd.f32 %v3737, 1.0
        %s3739 = scalar_select %p1089, 4, 3
        %s3740 = smul.u32 %s3739, 8
        %s3741 = scalar_lea.vmem %s0, %s3740
        %v3742 = vld [vmem:[%s3741] sm:$0xff]
        %s3743 = scalar_lea.vmem %s1, %s3740
        %v3744 = vld [vmem:[%s3743] sm:$0xff]
        %v3746 = vsel %vm1102, %v3738, 0
        %3748 = vmatprep.subr.mxu0 0.0
        %3749 = vmatpush1.msra.mxu0 %v1044
        %3750 = vmatprep.subr.mxu0 0.0
        %3751 = vmatpush1.msra.mxu0 %v1045
        %3752 = vmatprep.subr.mxu0 0.0
        %3753 = vmatpush1.msra.mxu0 %v1046
        %3754 = vmatprep.subr.mxu0 0.0
        %3755 = vmatpush1.msra.mxu0 %v1047
        %3756 = vmatprep.subr.mxu0 0.0
        %3757 = vmatpush1.msra.mxu0 %v1108
        %3758 = vmatprep.subr.mxu0 0.0
        %3759 = vmatpush1.msra.mxu0 0.0
        %3760 = vmatprep.subr.mxu0 0.0
        %3761 = vmatpush1.msra.mxu0 0.0
        %3762 = vmatprep.subr.mxu0 0.0
        %3763 = vmatpush1.msra.mxu0 0.0
        %3764 = vmatprep.subr.mxu0 0.0
        %3765 = vmatpush1.msra.mxu0 0.0
        %3766 = vmatprep.subr.mxu0 0.0
        %3767 = vmatpush1.msra.mxu0 0.0
        %3768 = vmatprep.subr.mxu0 0.0
        %3769 = vmatpush1.msra.mxu0 0.0
        %3770 = vmatprep.subr.mxu0 0.0
        %3771 = vmatpush1.msra.mxu0 0.0
        %3772 = vmatprep.subr.mxu0 0.0
        %3773 = vmatpush1.msra.mxu0 0.0
        %3774 = vmatprep.subr.mxu0 0.0
        %3775 = vmatpush1.msra.mxu0 0.0
        %3776 = vmatprep.subr.mxu0 0.0
        %3777 = vmatpush1.msra.mxu0 0.0
        %3778 = vmatprep.subr.mxu0 0.0
        %3779 = vmatpush1.msra.mxu0 0.0
        %3780 = vmatprep.subr.mxu0 0.0
        %3781 = vmatpush1.msra.mxu0 0.0
        %3782 = vmatprep.subr.mxu0 0.0
        %3783 = vmatpush1.msra.mxu0 0.0
        %3784 = vmatprep.subr.mxu0 0.0
        %3785 = vmatpush1.msra.mxu0 0.0
        %3786 = vmatprep.subr.mxu0 0.0
        %3787 = vmatpush1.msra.mxu0 0.0
        %3788 = vmatprep.subr.mxu0 0.0
        %3789 = vmatpush1.msra.mxu0 0.0
        %3790 = vmatprep.subr.mxu0 0.0
        %3791 = vmatpush1.msra.mxu0 0.0
        %3792 = vmatprep.subr.mxu0 0.0
        %3793 = vmatpush1.msra.mxu0 0.0
        %3794 = vmatprep.subr.mxu0 0.0
        %3795 = vmatpush1.msra.mxu0 0.0
        %3796 = vmatprep.subr.mxu0 0.0
        %3797 = vmatpush1.msra.mxu0 0.0
        %3798 = vmatprep.subr.mxu0 0.0
        %3799 = vmatpush1.msra.mxu0 0.0
        %3800 = vmatprep.subr.mxu0 0.0
        %3801 = vmatpush1.msra.mxu0 0.0
        %3802 = vmatprep.subr.mxu0 0.0
        %3803 = vmatpush1.msra.mxu0 0.0
        %3804 = vmatprep.subr.mxu0 0.0
        %3805 = vmatpush1.msra.mxu0 0.0
        %3806 = vmatprep.subr.mxu0 0.0
        %3807 = vmatpush1.msra.mxu0 0.0
        %3808 = vmatprep.subr.mxu0 0.0
        %3809 = vmatpush1.msra.mxu0 0.0
        %3810 = vmatprep.subr.mxu0 0.0
        %3811 = vmatpush1.msra.mxu0 0.0
        %3812 = vmatprep.mubr.f32.mxu0 0.0
        %3813 = vmatmul.mubr.f32.gmra.mrb[0].mxu0 %v3746
        %v3814 = vpop.f32.mrb[0].mxu0
        %v3815 = vadd.f32 %v1100, %v3814
        %v3816 = vpop.f32.mrb[0].mxu0
        %3817 = vdwg.mxu0
        %v3818 = vmax.f32 %v3815, 0.0
        %v3819 = vsub.f32 0.0, %v3818
        %v3820 = vmul.f32 %v3819, 1.442695
        %v3821 = vpow.pop %v3820
        %v3822 = vmul.f32 %v3738, %v1188
        %v3823 = vadd.f32 %v3822, %v1195
        %v3824 = vmax.f32 %v3823, 0.0
        %v3825 = vsub.f32 0.0, %v3824
        %v3826 = vmul.f32 %v3825, 1.442695
        %v3827 = vpow.pop %v3826
        %3829 = vrot.lane.b32.xlu0 %v3821, 96
        %v3830 = vpop.permute.xlu0 %3829
        %v3832 = vmul.f32 %v3734, %v3830
        %3834 = vrot.lane.b32.xlu0 %v3832, 32
        %v3835 = vpop.permute.xlu0 %3834
        %v3836 = vsel %vm1209, %v3835, 0
        %3838 = vmatprep.subr.mxu0 0.0
        %3839 = vmatpush1.msra.mxu0 %v1052
        %3840 = vmatprep.subr.mxu0 0.0
        %3841 = vmatpush1.msra.mxu0 %v1053
        %3842 = vmatprep.subr.mxu0 0.0
        %3843 = vmatpush1.msra.mxu0 %v1054
        %3844 = vmatprep.subr.mxu0 0.0
        %3845 = vmatpush1.msra.mxu0 %v1055
        %3846 = vmatprep.subr.mxu0 0.0
        %3847 = vmatpush1.msra.mxu0 0.0
        %3848 = vmatprep.subr.mxu0 0.0
        %3849 = vmatpush1.msra.mxu0 0.0
        %3850 = vmatprep.subr.mxu0 0.0
        %3851 = vmatpush1.msra.mxu0 0.0
        %3852 = vmatprep.subr.mxu0 0.0
        %3853 = vmatpush1.msra.mxu0 0.0
        %3854 = vmatprep.subr.mxu0 0.0
        %3855 = vmatpush1.msra.mxu0 0.0
        %3856 = vmatprep.subr.mxu0 0.0
        %3857 = vmatpush1.msra.mxu0 0.0
        %3858 = vmatprep.subr.mxu0 0.0
        %3859 = vmatpush1.msra.mxu0 0.0
        %3860 = vmatprep.subr.mxu0 0.0
        %3861 = vmatpush1.msra.mxu0 0.0
        %3862 = vmatprep.subr.mxu0 0.0
        %3863 = vmatpush1.msra.mxu0 0.0
        %3864 = vmatprep.subr.mxu0 0.0
        %3865 = vmatpush1.msra.mxu0 0.0
        %3866 = vmatprep.subr.mxu0 0.0
        %3867 = vmatpush1.msra.mxu0 0.0
        %3868 = vmatprep.subr.mxu0 0.0
        %3869 = vmatpush1.msra.mxu0 0.0
        %3870 = vmatprep.subr.mxu0 0.0
        %3871 = vmatpush1.msra.mxu0 0.0
        %3872 = vmatprep.subr.mxu0 0.0
        %3873 = vmatpush1.msra.mxu0 0.0
        %3874 = vmatprep.subr.mxu0 0.0
        %3875 = vmatpush1.msra.mxu0 0.0
        %3876 = vmatprep.subr.mxu0 0.0
        %3877 = vmatpush1.msra.mxu0 0.0
        %3878 = vmatprep.subr.mxu0 0.0
        %3879 = vmatpush1.msra.mxu0 0.0
        %3880 = vmatprep.subr.mxu0 0.0
        %3881 = vmatpush1.msra.mxu0 0.0
        %3882 = vmatprep.subr.mxu0 0.0
        %3883 = vmatpush1.msra.mxu0 0.0
        %3884 = vmatprep.subr.mxu0 0.0
        %3885 = vmatpush1.msra.mxu0 0.0
        %3886 = vmatprep.subr.mxu0 0.0
        %3887 = vmatpush1.msra.mxu0 0.0
        %3888 = vmatprep.subr.mxu0 0.0
        %3889 = vmatpush1.msra.mxu0 0.0
        %3890 = vmatprep.subr.mxu0 0.0
        %3891 = vmatpush1.msra.mxu0 0.0
        %3892 = vmatprep.subr.mxu0 0.0
        %3893 = vmatpush1.msra.mxu0 0.0
        %3894 = vmatprep.subr.mxu0 0.0
        %3895 = vmatpush1.msra.mxu0 0.0
        %3896 = vmatprep.subr.mxu0 0.0
        %3897 = vmatpush1.msra.mxu0 0.0
        %3898 = vmatprep.subr.mxu0 0.0
        %3899 = vmatpush1.msra.mxu0 0.0
        %3900 = vmatprep.subr.mxu0 0.0
        %3901 = vmatpush1.msra.mxu0 0.0
        %3902 = vmatprep.mubr.f32.mxu0 0.0
        %3903 = vmatmul.mubr.f32.gmra.mrb[0].mxu0 %v3836
        %v3904 = vpop.f32.mrb[0].mxu0
        %v3905 = vadd.f32 %v1207, %v3904
        %v3906 = vpop.f32.mrb[0].mxu0
        %3907 = vdwg.mxu0
        %v3908 = vmul.f32 %v3744, %v3742
        %v3909 = vsub.f32 1.0, %v3744
        %v3910 = vmul.f32 %v3909, %v3905
        %v3911 = vadd.f32 %v3908, %v3910
        %v3913 = vsel %vm1102, %v3911, 0
        %3915 = vmatprep.subr.mxu0 0.0
        %3916 = vmatpush1.msra.mxu0 %v1057
        %3917 = vmatprep.subr.mxu0 0.0
        %3918 = vmatpush1.msra.mxu0 %v1058
        %3919 = vmatprep.subr.mxu0 0.0
        %3920 = vmatpush1.msra.mxu0 %v1059
        %3921 = vmatprep.subr.mxu0 0.0
        %3922 = vmatpush1.msra.mxu0 %v1060
        %3923 = vmatprep.subr.mxu0 0.0
        %3924 = vmatpush1.msra.mxu0 %v1297
        %3925 = vmatprep.subr.mxu0 0.0
        %3926 = vmatpush1.msra.mxu0 0.0
        %3927 = vmatprep.subr.mxu0 0.0
        %3928 = vmatpush1.msra.mxu0 0.0
        %3929 = vmatprep.subr.mxu0 0.0
        %3930 = vmatpush1.msra.mxu0 0.0
        %3931 = vmatprep.subr.mxu0 0.0
        %3932 = vmatpush1.msra.mxu0 0.0
        %3933 = vmatprep.subr.mxu0 0.0
        %3934 = vmatpush1.msra.mxu0 0.0
        %3935 = vmatprep.subr.mxu0 0.0
        %3936 = vmatpush1.msra.mxu0 0.0
        %3937 = vmatprep.subr.mxu0 0.0
        %3938 = vmatpush1.msra.mxu0 0.0
        %3939 = vmatprep.subr.mxu0 0.0
        %3940 = vmatpush1.msra.mxu0 0.0
        %3941 = vmatprep.subr.mxu0 0.0
        %3942 = vmatpush1.msra.mxu0 0.0
        %3943 = vmatprep.subr.mxu0 0.0
        %3944 = vmatpush1.msra.mxu0 0.0
        %3945 = vmatprep.subr.mxu0 0.0
        %3946 = vmatpush1.msra.mxu0 0.0
        %3947 = vmatprep.subr.mxu0 0.0
        %3948 = vmatpush1.msra.mxu0 0.0
        %3949 = vmatprep.subr.mxu0 0.0
        %3950 = vmatpush1.msra.mxu0 0.0
        %3951 = vmatprep.subr.mxu0 0.0
        %3952 = vmatpush1.msra.mxu0 0.0
        %3953 = vmatprep.subr.mxu0 0.0
        %3954 = vmatpush1.msra.mxu0 0.0
        %3955 = vmatprep.subr.mxu0 0.0
        %3956 = vmatpush1.msra.mxu0 0.0
        %3957 = vmatprep.subr.mxu0 0.0
        %3958 = vmatpush1.msra.mxu0 0.0
        %3959 = vmatprep.subr.mxu0 0.0
        %3960 = vmatpush1.msra.mxu0 0.0
        %3961 = vmatprep.subr.mxu0 0.0
        %3962 = vmatpush1.msra.mxu0 0.0
        %3963 = vmatprep.subr.mxu0 0.0
        %3964 = vmatpush1.msra.mxu0 0.0
        %3965 = vmatprep.subr.mxu0 0.0
        %3966 = vmatpush1.msra.mxu0 0.0
        %3967 = vmatprep.subr.mxu0 0.0
        %3968 = vmatpush1.msra.mxu0 0.0
        %3969 = vmatprep.subr.mxu0 0.0
        %3970 = vmatpush1.msra.mxu0 0.0
        %3971 = vmatprep.subr.mxu0 0.0
        %3972 = vmatpush1.msra.mxu0 0.0
        %3973 = vmatprep.subr.mxu0 0.0
        %3974 = vmatpush1.msra.mxu0 0.0
        %3975 = vmatprep.subr.mxu0 0.0
        %3976 = vmatpush1.msra.mxu0 0.0
        %3977 = vmatprep.subr.mxu0 0.0
        %3978 = vmatpush1.msra.mxu0 0.0
        %3979 = vmatprep.mubr.f32.mxu0 0.0
        %3980 = vmatmul.mubr.f32.gmra.mrb[0].mxu0 %v3913
        %v3981 = vpop.f32.mrb[0].mxu0
        %v3982 = vadd.f32 %v1291, %v3981
        %v3983 = vpop.f32.mrb[0].mxu0
        %3984 = vdwg.mxu0
        %v3986 = vsel %vm1102, %v3744, 0
        %3988 = vmatprep.subr.mxu0 0.0
        %3989 = vmatpush1.msra.mxu0 %v1068
        %3990 = vmatprep.subr.mxu0 0.0
        %3991 = vmatpush1.msra.mxu0 %v1069
        %3992 = vmatprep.subr.mxu0 0.0
        %3993 = vmatpush1.msra.mxu0 %v1070
        %3994 = vmatprep.subr.mxu0 0.0
        %3995 = vmatpush1.msra.mxu0 %v1071
        %3996 = vmatprep.subr.mxu0 0.0
        %3997 = vmatpush1.msra.mxu0 %v1373
        %3998 = vmatprep.subr.mxu0 0.0
        %3999 = vmatpush1.msra.mxu0 0.0
        %4000 = vmatprep.subr.mxu0 0.0
        %4001 = vmatpush1.msra.mxu0 0.0
        %4002 = vmatprep.subr.mxu0 0.0
        %4003 = vmatpush1.msra.mxu0 0.0
        %4004 = vmatprep.subr.mxu0 0.0
        %4005 = vmatpush1.msra.mxu0 0.0
        %4006 = vmatprep.subr.mxu0 0.0
        %4007 = vmatpush1.msra.mxu0 0.0
        %4008 = vmatprep.subr.mxu0 0.0
        %4009 = vmatpush1.msra.mxu0 0.0
        %4010 = vmatprep.subr.mxu0 0.0
        %4011 = vmatpush1.msra.mxu0 0.0
        %4012 = vmatprep.subr.mxu0 0.0
        %4013 = vmatpush1.msra.mxu0 0.0
        %4014 = vmatprep.subr.mxu0 0.0
        %4015 = vmatpush1.msra.mxu0 0.0
        %4016 = vmatprep.subr.mxu0 0.0
        %4017 = vmatpush1.msra.mxu0 0.0
        %4018 = vmatprep.subr.mxu0 0.0
        %4019 = vmatpush1.msra.mxu0 0.0
        %4020 = vmatprep.subr.mxu0 0.0
        %4021 = vmatpush1.msra.mxu0 0.0
        %4022 = vmatprep.subr.mxu0 0.0
        %4023 = vmatpush1.msra.mxu0 0.0
        %4024 = vmatprep.subr.mxu0 0.0
        %4025 = vmatpush1.msra.mxu0 0.0
        %4026 = vmatprep.subr.mxu0 0.0
        %4027 = vmatpush1.msra.mxu0 0.0
        %4028 = vmatprep.subr.mxu0 0.0
        %4029 = vmatpush1.msra.mxu0 0.0
        %4030 = vmatprep.subr.mxu0 0.0
        %4031 = vmatpush1.msra.mxu0 0.0
        %4032 = vmatprep.subr.mxu0 0.0
        %4033 = vmatpush1.msra.mxu0 0.0
        %4034 = vmatprep.subr.mxu0 0.0
        %4035 = vmatpush1.msra.mxu0 0.0
        %4036 = vmatprep.subr.mxu0 0.0
        %4037 = vmatpush1.msra.mxu0 0.0
        %4038 = vmatprep.subr.mxu0 0.0
        %4039 = vmatpush1.msra.mxu0 0.0
        %4040 = vmatprep.subr.mxu0 0.0
        %4041 = vmatpush1.msra.mxu0 0.0
        %4042 = vmatprep.subr.mxu0 0.0
        %4043 = vmatpush1.msra.mxu0 0.0
        %4044 = vmatprep.subr.mxu0 0.0
        %4045 = vmatpush1.msra.mxu0 0.0
        %4046 = vmatprep.subr.mxu0 0.0
        %4047 = vmatpush1.msra.mxu0 0.0
        %4048 = vmatprep.subr.mxu0 0.0
        %4049 = vmatpush1.msra.mxu0 0.0
        %4050 = vmatprep.subr.mxu0 0.0
        %4051 = vmatpush1.msra.mxu0 0.0
        %4052 = vmatprep.mubr.f32.mxu0 0.0
        %4053 = vmatmul.mubr.f32.gmra.mrb[0].mxu0 %v3986
        %v4054 = vpop.f32.mrb[0].mxu0
        %v4055 = vadd.f32 0.0, %v4054
        %v4056 = vpop.f32.mrb[0].mxu0
        %4057 = vdwg.mxu0
        %v4059 = vsel %vm1102, %v3827, 0
        %4061 = vmatprep.subr.mxu0 0.0
        %4062 = vmatpush1.msra.mxu0 %v1063
        %4063 = vmatprep.subr.mxu0 0.0
        %4064 = vmatpush1.msra.mxu0 %v1064
        %4065 = vmatprep.subr.mxu0 0.0
        %4066 = vmatpush1.msra.mxu0 %v1065
        %4067 = vmatprep.subr.mxu0 0.0
        %4068 = vmatpush1.msra.mxu0 %v1066
        %4069 = vmatprep.subr.mxu0 0.0
        %4070 = vmatpush1.msra.mxu0 %v1449
        %4071 = vmatprep.subr.mxu0 0.0
        %4072 = vmatpush1.msra.mxu0 0.0
        %4073 = vmatprep.subr.mxu0 0.0
        %4074 = vmatpush1.msra.mxu0 0.0
        %4075 = vmatprep.subr.mxu0 0.0
        %4076 = vmatpush1.msra.mxu0 0.0
        %4077 = vmatprep.subr.mxu0 0.0
        %4078 = vmatpush1.msra.mxu0 0.0
        %4079 = vmatprep.subr.mxu0 0.0
        %4080 = vmatpush1.msra.mxu0 0.0
        %4081 = vmatprep.subr.mxu0 0.0
        %4082 = vmatpush1.msra.mxu0 0.0
        %4083 = vmatprep.subr.mxu0 0.0
        %4084 = vmatpush1.msra.mxu0 0.0
        %4085 = vmatprep.subr.mxu0 0.0
        %4086 = vmatpush1.msra.mxu0 0.0
        %4087 = vmatprep.subr.mxu0 0.0
        %4088 = vmatpush1.msra.mxu0 0.0
        %4089 = vmatprep.subr.mxu0 0.0
        %4090 = vmatpush1.msra.mxu0 0.0
        %4091 = vmatprep.subr.mxu0 0.0
        %4092 = vmatpush1.msra.mxu0 0.0
        %4093 = vmatprep.subr.mxu0 0.0
        %4094 = vmatpush1.msra.mxu0 0.0
        %4095 = vmatprep.subr.mxu0 0.0
        %4096 = vmatpush1.msra.mxu0 0.0
        %4097 = vmatprep.subr.mxu0 0.0
        %4098 = vmatpush1.msra.mxu0 0.0
        %4099 = vmatprep.subr.mxu0 0.0
        %4100 = vmatpush1.msra.mxu0 0.0
        %4101 = vmatprep.subr.mxu0 0.0
        %4102 = vmatpush1.msra.mxu0 0.0
        %4103 = vmatprep.subr.mxu0 0.0
        %4104 = vmatpush1.msra.mxu0 0.0
        %4105 = vmatprep.subr.mxu0 0.0
        %4106 = vmatpush1.msra.mxu0 0.0
        %4107 = vmatprep.subr.mxu0 0.0
        %4108 = vmatpush1.msra.mxu0 0.0
        %4109 = vmatprep.subr.mxu0 0.0
        %4110 = vmatpush1.msra.mxu0 0.0
        %4111 = vmatprep.subr.mxu0 0.0
        %4112 = vmatpush1.msra.mxu0 0.0
        %4113 = vmatprep.subr.mxu0 0.0
        %4114 = vmatpush1.msra.mxu0 0.0
        %4115 = vmatprep.subr.mxu0 0.0
        %4116 = vmatpush1.msra.mxu0 0.0
        %4117 = vmatprep.subr.mxu0 0.0
        %4118 = vmatpush1.msra.mxu0 0.0
        %4119 = vmatprep.subr.mxu0 0.0
        %4120 = vmatpush1.msra.mxu0 0.0
        %4121 = vmatprep.subr.mxu0 0.0
        %4122 = vmatpush1.msra.mxu0 0.0
        %4123 = vmatprep.subr.mxu0 0.0
        %4124 = vmatpush1.msra.mxu0 0.0
        %4125 = vmatprep.mubr.f32.mxu0 0.0
        %4126 = vmatmul.mubr.f32.gmra.mrb[0].mxu0 %v4059
        %v4127 = vpop.f32.mrb[0].mxu0
        %v4128 = vadd.f32 %v4055, %v4127
        %v4129 = vpop.f32.mrb[0].mxu0
        %4130 = vdwg.mxu0
        %v4131 = vadd.f32 %v4128, %v1525
        %v4132 = vxor.u32 %v4131, 2147483648
        %v4133 = vmul.f32 %v4132, 1.442695
        %v4134 = vpow.pop %v4133
        %v4135 = vadd.f32 %v4134, 1.0
        %v4136 = vrcp.pop %v4135
        %v4137 = vmul.f32 1.0, %v4136
        %v4138 = vmul.f32 %v4137, %v3982
        %v4139 = vsub.f32 1.0, %v4137
        %v4140 = vmul.f32 %v4139, %v3905
        %v4141 = vadd.f32 %v4138, %v4140
        %v4142 = vmul.f32 %v3909, %v4141
        %v4143 = vadd.f32 %v3908, %v4142
        %4144 = vmatprep.subr.mxu0 0.0
        %4145 = vmatpush1.msra.mxu0 %v1079
        %4146 = vmatprep.subr.mxu0 0.0
        %4147 = vmatpush1.msra.mxu0 %v1080
        %4148 = vmatprep.subr.mxu0 0.0
        %4149 = vmatpush1.msra.mxu0 %v1081
        %4150 = vmatprep.subr.mxu0 0.0
        %4151 = vmatpush1.msra.mxu0 %v1082
        %4152 = vmatprep.subr.mxu0 0.0
        %4153 = vmatpush1.msra.mxu0 %v1541
        %4154 = vmatprep.subr.mxu0 0.0
        %4155 = vmatpush1.msra.mxu0 0.0
        %4156 = vmatprep.subr.mxu0 0.0
        %4157 = vmatpush1.msra.mxu0 0.0
        %4158 = vmatprep.subr.mxu0 0.0
        %4159 = vmatpush1.msra.mxu0 0.0
        %4160 = vmatprep.subr.mxu0 0.0
        %4161 = vmatpush1.msra.mxu0 0.0
        %4162 = vmatprep.subr.mxu0 0.0
        %4163 = vmatpush1.msra.mxu0 0.0
        %4164 = vmatprep.subr.mxu0 0.0
        %4165 = vmatpush1.msra.mxu0 0.0
        %4166 = vmatprep.subr.mxu0 0.0
        %4167 = vmatpush1.msra.mxu0 0.0
        %4168 = vmatprep.subr.mxu0 0.0
        %4169 = vmatpush1.msra.mxu0 0.0
        %4170 = vmatprep.subr.mxu0 0.0
        %4171 = vmatpush1.msra.mxu0 0.0
        %4172 = vmatprep.subr.mxu0 0.0
        %4173 = vmatpush1.msra.mxu0 0.0
        %4174 = vmatprep.subr.mxu0 0.0
        %4175 = vmatpush1.msra.mxu0 0.0
        %4176 = vmatprep.subr.mxu0 0.0
        %4177 = vmatpush1.msra.mxu0 0.0
        %4178 = vmatprep.subr.mxu0 0.0
        %4179 = vmatpush1.msra.mxu0 0.0
        %4180 = vmatprep.subr.mxu0 0.0
        %4181 = vmatpush1.msra.mxu0 0.0
        %4182 = vmatprep.subr.mxu0 0.0
        %4183 = vmatpush1.msra.mxu0 0.0
        %4184 = vmatprep.subr.mxu0 0.0
        %4185 = vmatpush1.msra.mxu0 0.0
        %4186 = vmatprep.subr.mxu0 0.0
        %4187 = vmatpush1.msra.mxu0 0.0
        %4188 = vmatprep.subr.mxu0 0.0
        %4189 = vmatpush1.msra.mxu0 0.0
        %4190 = vmatprep.subr.mxu0 0.0
        %4191 = vmatpush1.msra.mxu0 0.0
        %4192 = vmatprep.subr.mxu0 0.0
        %4193 = vmatpush1.msra.mxu0 0.0
        %4194 = vmatprep.subr.mxu0 0.0
        %4195 = vmatpush1.msra.mxu0 0.0
        %4196 = vmatprep.subr.mxu0 0.0
        %4197 = vmatpush1.msra.mxu0 0.0
        %4198 = vmatprep.subr.mxu0 0.0
        %4199 = vmatpush1.msra.mxu0 0.0
        %4200 = vmatprep.subr.mxu0 0.0
        %4201 = vmatpush1.msra.mxu0 0.0
        %4202 = vmatprep.subr.mxu0 0.0
        %4203 = vmatpush1.msra.mxu0 0.0
        %4204 = vmatprep.subr.mxu0 0.0
        %4205 = vmatpush1.msra.mxu0 0.0
        %4206 = vmatprep.subr.mxu0 0.0
        %4207 = vmatpush1.msra.mxu0 0.0
        %4208 = vmatprep.mubr.f32.mxu0 0.0
        %4209 = vmatmul.mubr.f32.gmra.mrb[0].mxu0 %v3986
        %v4210 = vpop.f32.mrb[0].mxu0
        %v4211 = vadd.f32 0.0, %v4210
        %v4212 = vpop.f32.mrb[0].mxu0
        %4213 = vdwg.mxu0
        %v4215 = vsel %vm1102, %v4143, 0
        %4217 = vmatprep.subr.mxu0 0.0
        %4218 = vmatpush1.msra.mxu0 %v1074
        %4219 = vmatprep.subr.mxu0 0.0
        %4220 = vmatpush1.msra.mxu0 %v1075
        %4221 = vmatprep.subr.mxu0 0.0
        %4222 = vmatpush1.msra.mxu0 %v1076
        %4223 = vmatprep.subr.mxu0 0.0
        %4224 = vmatpush1.msra.mxu0 %v1077
        %4225 = vmatprep.subr.mxu0 0.0
        %4226 = vmatpush1.msra.mxu0 %v1617
        %4227 = vmatprep.subr.mxu0 0.0
        %4228 = vmatpush1.msra.mxu0 0.0
        %4229 = vmatprep.subr.mxu0 0.0
        %4230 = vmatpush1.msra.mxu0 0.0
        %4231 = vmatprep.subr.mxu0 0.0
        %4232 = vmatpush1.msra.mxu0 0.0
        %4233 = vmatprep.subr.mxu0 0.0
        %4234 = vmatpush1.msra.mxu0 0.0
        %4235 = vmatprep.subr.mxu0 0.0
        %4236 = vmatpush1.msra.mxu0 0.0
        %4237 = vmatprep.subr.mxu0 0.0
        %4238 = vmatpush1.msra.mxu0 0.0
        %4239 = vmatprep.subr.mxu0 0.0
        %4240 = vmatpush1.msra.mxu0 0.0
        %4241 = vmatprep.subr.mxu0 0.0
        %4242 = vmatpush1.msra.mxu0 0.0
        %4243 = vmatprep.subr.mxu0 0.0
        %4244 = vmatpush1.msra.mxu0 0.0
        %4245 = vmatprep.subr.mxu0 0.0
        %4246 = vmatpush1.msra.mxu0 0.0
        %4247 = vmatprep.subr.mxu0 0.0
        %4248 = vmatpush1.msra.mxu0 0.0
        %4249 = vmatprep.subr.mxu0 0.0
        %4250 = vmatpush1.msra.mxu0 0.0
        %4251 = vmatprep.subr.mxu0 0.0
        %4252 = vmatpush1.msra.mxu0 0.0
        %4253 = vmatprep.subr.mxu0 0.0
        %4254 = vmatpush1.msra.mxu0 0.0
        %4255 = vmatprep.subr.mxu0 0.0
        %4256 = vmatpush1.msra.mxu0 0.0
        %4257 = vmatprep.subr.mxu0 0.0
        %4258 = vmatpush1.msra.mxu0 0.0
        %4259 = vmatprep.subr.mxu0 0.0
        %4260 = vmatpush1.msra.mxu0 0.0
        %4261 = vmatprep.subr.mxu0 0.0
        %4262 = vmatpush1.msra.mxu0 0.0
        %4263 = vmatprep.subr.mxu0 0.0
        %4264 = vmatpush1.msra.mxu0 0.0
        %4265 = vmatprep.subr.mxu0 0.0
        %4266 = vmatpush1.msra.mxu0 0.0
        %4267 = vmatprep.subr.mxu0 0.0
        %4268 = vmatpush1.msra.mxu0 0.0
        %4269 = vmatprep.subr.mxu0 0.0
        %4270 = vmatpush1.msra.mxu0 0.0
        %4271 = vmatprep.subr.mxu0 0.0
        %4272 = vmatpush1.msra.mxu0 0.0
        %4273 = vmatprep.subr.mxu0 0.0
        %4274 = vmatpush1.msra.mxu0 0.0
        %4275 = vmatprep.subr.mxu0 0.0
        %4276 = vmatpush1.msra.mxu0 0.0
        %4277 = vmatprep.subr.mxu0 0.0
        %4278 = vmatpush1.msra.mxu0 0.0
        %4279 = vmatprep.subr.mxu0 0.0
        %4280 = vmatpush1.msra.mxu0 0.0
        %4281 = vmatprep.mubr.f32.mxu0 0.0
        %4282 = vmatmul.mubr.f32.gmra.mrb[0].mxu0 %v4215
        %v4283 = vpop.f32.mrb[0].mxu0
        %v4284 = vadd.f32 %v4211, %v4283
        %v4285 = vpop.f32.mrb[0].mxu0
        %4286 = vdwg.mxu0
        %4287 = vmatprep.subr.mxu0 0.0
        %4288 = vmatpush1.msra.mxu0 %v1084
        %4289 = vmatprep.subr.mxu0 0.0
        %4290 = vmatpush1.msra.mxu0 %v1085
        %4291 = vmatprep.subr.mxu0 0.0
        %4292 = vmatpush1.msra.mxu0 %v1086
        %4293 = vmatprep.subr.mxu0 0.0
        %4294 = vmatpush1.msra.mxu0 %v1087
        %4295 = vmatprep.subr.mxu0 0.0
        %4296 = vmatpush1.msra.mxu0 0.0
        %4297 = vmatprep.subr.mxu0 0.0
        %4298 = vmatpush1.msra.mxu0 0.0
        %4299 = vmatprep.subr.mxu0 0.0
        %4300 = vmatpush1.msra.mxu0 0.0
        %4301 = vmatprep.subr.mxu0 0.0
        %4302 = vmatpush1.msra.mxu0 0.0
        %4303 = vmatprep.subr.mxu0 0.0
        %4304 = vmatpush1.msra.mxu0 0.0
        %4305 = vmatprep.subr.mxu0 0.0
        %4306 = vmatpush1.msra.mxu0 0.0
        %4307 = vmatprep.subr.mxu0 0.0
        %4308 = vmatpush1.msra.mxu0 0.0
        %4309 = vmatprep.subr.mxu0 0.0
        %4310 = vmatpush1.msra.mxu0 0.0
        %4311 = vmatprep.subr.mxu0 0.0
        %4312 = vmatpush1.msra.mxu0 0.0
        %4313 = vmatprep.subr.mxu0 0.0
        %4314 = vmatpush1.msra.mxu0 0.0
        %4315 = vmatprep.subr.mxu0 0.0
        %4316 = vmatpush1.msra.mxu0 0.0
        %4317 = vmatprep.subr.mxu0 0.0
        %4318 = vmatpush1.msra.mxu0 0.0
        %4319 = vmatprep.subr.mxu0 0.0
        %4320 = vmatpush1.msra.mxu0 0.0
        %4321 = vmatprep.subr.mxu0 0.0
        %4322 = vmatpush1.msra.mxu0 0.0
        %4323 = vmatprep.subr.mxu0 0.0
        %4324 = vmatpush1.msra.mxu0 0.0
        %4325 = vmatprep.subr.mxu0 0.0
        %4326 = vmatpush1.msra.mxu0 0.0
        %4327 = vmatprep.subr.mxu0 0.0
        %4328 = vmatpush1.msra.mxu0 0.0
        %4329 = vmatprep.subr.mxu0 0.0
        %4330 = vmatpush1.msra.mxu0 0.0
        %4331 = vmatprep.subr.mxu0 0.0
        %4332 = vmatpush1.msra.mxu0 0.0
        %4333 = vmatprep.subr.mxu0 0.0
        %4334 = vmatpush1.msra.mxu0 0.0
        %4335 = vmatprep.subr.mxu0 0.0
        %4336 = vmatpush1.msra.mxu0 0.0
        %4337 = vmatprep.subr.mxu0 0.0
        %4338 = vmatpush1.msra.mxu0 0.0
        %4339 = vmatprep.subr.mxu0 0.0
        %4340 = vmatpush1.msra.mxu0 0.0
        %4341 = vmatprep.subr.mxu0 0.0
        %4342 = vmatpush1.msra.mxu0 0.0
        %4343 = vmatprep.subr.mxu0 0.0
        %4344 = vmatpush1.msra.mxu0 0.0
        %4345 = vmatprep.subr.mxu0 0.0
        %4346 = vmatpush1.msra.mxu0 0.0
        %4347 = vmatprep.subr.mxu0 0.0
        %4348 = vmatpush1.msra.mxu0 0.0
        %4349 = vmatprep.subr.mxu0 0.0
        %4350 = vmatpush1.msra.mxu0 0.0
        %4351 = vmatprep.mubr.f32.mxu0 0.0
        %4352 = vmatmul.mubr.f32.gmra.mrb[0].mxu0 %v3836
        %v4353 = vpop.f32.mrb[0].mxu0
        %v4354 = vadd.f32 0.0, %v4353
        %v4355 = vpop.f32.mrb[0].mxu0
        %4356 = vdwg.mxu0
        %v4357 = vadd.f32 %v4284, %v4354
        %v4358 = vadd.f32 %v4357, %v1764
        %v4359 = vxor.u32 %v4358, 2147483648
        %v4360 = vmul.f32 %v4359, 1.442695
        %v4361 = vpow.pop %v4360
        %v4362 = vadd.f32 %v4361, 1.0
        %v4363 = vrcp.pop %v4362
        %v4364 = vmul.f32 1.0, %v4363
        %v4365 = vtanh.pop %v4358
        %v4366 = vmul.f32 %v4364, %v3728
        %4368 = vrot.lane.b32.xlu0 %v4365, 64
        %v4369 = vpop.permute.xlu0 %4368
        %v4371 = vmul.f32 %v4364, %v4369
        %4373 = vrot.lane.b32.xlu0 %v4371, 32
        %v4374 = vpop.permute.xlu0 %4373
        %v4376 = vadd.f32 %v4366, %v4374
        %v4377 = vtanh.pop %v4376
        %4379 = vrot.lane.b32.xlu0 %v4377, 64
        %v4380 = vpop.permute.xlu0 %4379
        %v4382 = vmul.f32 %v4364, %v4380
        %s4383 = scalar_lea.vmem %s1039, %s3740
        %4384 = vst.msk [vmem:[%s4383] sm:$0xff] %vm1102, %v4143
        %v4385 = vmul.f32 %v3909, %v3738
        %v4386 = vadd.f32 %v4385, 1.0
        %s4387 = scalar_select %p1089, 5, 2
        %s4388 = smul.u32 %s4387, 8
        %s4389 = scalar_lea.vmem %s0, %s4388
        %v4390 = vld [vmem:[%s4389] sm:$0xff]
        %s4391 = scalar_lea.vmem %s1, %s4388
        %v4392 = vld [vmem:[%s4391] sm:$0xff]
        %v4394 = vsel %vm1102, %v4386, 0
        %4396 = vmatprep.subr.mxu0 0.0
        %4397 = vmatpush1.msra.mxu0 %v1044
        %4398 = vmatprep.subr.mxu0 0.0
        %4399 = vmatpush1.msra.mxu0 %v1045
        %4400 = vmatprep.subr.mxu0 0.0
        %4401 = vmatpush1.msra.mxu0 %v1046
        %4402 = vmatprep.subr.mxu0 0.0
        %4403 = vmatpush1.msra.mxu0 %v1047
        %4404 = vmatprep.subr.mxu0 0.0
        %4405 = vmatpush1.msra.mxu0 %v1108
        %4406 = vmatprep.subr.mxu0 0.0
        %4407 = vmatpush1.msra.mxu0 0.0
        %4408 = vmatprep.subr.mxu0 0.0
        %4409 = vmatpush1.msra.mxu0 0.0
        %4410 = vmatprep.subr.mxu0 0.0
        %4411 = vmatpush1.msra.mxu0 0.0
        %4412 = vmatprep.subr.mxu0 0.0
        %4413 = vmatpush1.msra.mxu0 0.0
        %4414 = vmatprep.subr.mxu0 0.0
        %4415 = vmatpush1.msra.mxu0 0.0
        %4416 = vmatprep.subr.mxu0 0.0
        %4417 = vmatpush1.msra.mxu0 0.0
        %4418 = vmatprep.subr.mxu0 0.0
        %4419 = vmatpush1.msra.mxu0 0.0
        %4420 = vmatprep.subr.mxu0 0.0
        %4421 = vmatpush1.msra.mxu0 0.0
        %4422 = vmatprep.subr.mxu0 0.0
        %4423 = vmatpush1.msra.mxu0 0.0
        %4424 = vmatprep.subr.mxu0 0.0
        %4425 = vmatpush1.msra.mxu0 0.0
        %4426 = vmatprep.subr.mxu0 0.0
        %4427 = vmatpush1.msra.mxu0 0.0
        %4428 = vmatprep.subr.mxu0 0.0
        %4429 = vmatpush1.msra.mxu0 0.0
        %4430 = vmatprep.subr.mxu0 0.0
        %4431 = vmatpush1.msra.mxu0 0.0
        %4432 = vmatprep.subr.mxu0 0.0
        %4433 = vmatpush1.msra.mxu0 0.0
        %4434 = vmatprep.subr.mxu0 0.0
        %4435 = vmatpush1.msra.mxu0 0.0
        %4436 = vmatprep.subr.mxu0 0.0
        %4437 = vmatpush1.msra.mxu0 0.0
        %4438 = vmatprep.subr.mxu0 0.0
        %4439 = vmatpush1.msra.mxu0 0.0
        %4440 = vmatprep.subr.mxu0 0.0
        %4441 = vmatpush1.msra.mxu0 0.0
        %4442 = vmatprep.subr.mxu0 0.0
        %4443 = vmatpush1.msra.mxu0 0.0
        %4444 = vmatprep.subr.mxu0 0.0
        %4445 = vmatpush1.msra.mxu0 0.0
        %4446 = vmatprep.subr.mxu0 0.0
        %4447 = vmatpush1.msra.mxu0 0.0
        %4448 = vmatprep.subr.mxu0 0.0
        %4449 = vmatpush1.msra.mxu0 0.0
        %4450 = vmatprep.subr.mxu0 0.0
        %4451 = vmatpush1.msra.mxu0 0.0
        %4452 = vmatprep.subr.mxu0 0.0
        %4453 = vmatpush1.msra.mxu0 0.0
        %4454 = vmatprep.subr.mxu0 0.0
        %4455 = vmatpush1.msra.mxu0 0.0
        %4456 = vmatprep.subr.mxu0 0.0
        %4457 = vmatpush1.msra.mxu0 0.0
        %4458 = vmatprep.subr.mxu0 0.0
        %4459 = vmatpush1.msra.mxu0 0.0
        %4460 = vmatprep.mubr.f32.mxu0 0.0
        %4461 = vmatmul.mubr.f32.gmra.mrb[0].mxu0 %v4394
        %v4462 = vpop.f32.mrb[0].mxu0
        %v4463 = vadd.f32 %v1100, %v4462
        %v4464 = vpop.f32.mrb[0].mxu0
        %4465 = vdwg.mxu0
        %v4466 = vmax.f32 %v4463, 0.0
        %v4467 = vsub.f32 0.0, %v4466
        %v4468 = vmul.f32 %v4467, 1.442695
        %v4469 = vpow.pop %v4468
        %v4470 = vmul.f32 %v4386, %v1188
        %v4471 = vadd.f32 %v4470, %v1195
        %v4472 = vmax.f32 %v4471, 0.0
        %v4473 = vsub.f32 0.0, %v4472
        %v4474 = vmul.f32 %v4473, 1.442695
        %v4475 = vpow.pop %v4474
        %4477 = vrot.lane.b32.xlu0 %v4469, 96
        %v4478 = vpop.permute.xlu0 %4477
        %v4480 = vmul.f32 %v4382, %v4478
        %4482 = vrot.lane.b32.xlu0 %v4480, 32
        %v4483 = vpop.permute.xlu0 %4482
        %v4484 = vsel %vm1209, %v4483, 0
        %4486 = vmatprep.subr.mxu0 0.0
        %4487 = vmatpush1.msra.mxu0 %v1052
        %4488 = vmatprep.subr.mxu0 0.0
        %4489 = vmatpush1.msra.mxu0 %v1053
        %4490 = vmatprep.subr.mxu0 0.0
        %4491 = vmatpush1.msra.mxu0 %v1054
        %4492 = vmatprep.subr.mxu0 0.0
        %4493 = vmatpush1.msra.mxu0 %v1055
        %4494 = vmatprep.subr.mxu0 0.0
        %4495 = vmatpush1.msra.mxu0 0.0
        %4496 = vmatprep.subr.mxu0 0.0
        %4497 = vmatpush1.msra.mxu0 0.0
        %4498 = vmatprep.subr.mxu0 0.0
        %4499 = vmatpush1.msra.mxu0 0.0
        %4500 = vmatprep.subr.mxu0 0.0
        %4501 = vmatpush1.msra.mxu0 0.0
        %4502 = vmatprep.subr.mxu0 0.0
        %4503 = vmatpush1.msra.mxu0 0.0
        %4504 = vmatprep.subr.mxu0 0.0
        %4505 = vmatpush1.msra.mxu0 0.0
        %4506 = vmatprep.subr.mxu0 0.0
        %4507 = vmatpush1.msra.mxu0 0.0
        %4508 = vmatprep.subr.mxu0 0.0
        %4509 = vmatpush1.msra.mxu0 0.0
        %4510 = vmatprep.subr.mxu0 0.0
        %4511 = vmatpush1.msra.mxu0 0.0
        %4512 = vmatprep.subr.mxu0 0.0
        %4513 = vmatpush1.msra.mxu0 0.0
        %4514 = vmatprep.subr.mxu0 0.0
        %4515 = vmatpush1.msra.mxu0 0.0
        %4516 = vmatprep.subr.mxu0 0.0
        %4517 = vmatpush1.msra.mxu0 0.0
        %4518 = vmatprep.subr.mxu0 0.0
        %4519 = vmatpush1.msra.mxu0 0.0
        %4520 = vmatprep.subr.mxu0 0.0
        %4521 = vmatpush1.msra.mxu0 0.0
        %4522 = vmatprep.subr.mxu0 0.0
        %4523 = vmatpush1.msra.mxu0 0.0
        %4524 = vmatprep.subr.mxu0 0.0
        %4525 = vmatpush1.msra.mxu0 0.0
        %4526 = vmatprep.subr.mxu0 0.0
        %4527 = vmatpush1.msra.mxu0 0.0
        %4528 = vmatprep.subr.mxu0 0.0
        %4529 = vmatpush1.msra.mxu0 0.0
        %4530 = vmatprep.subr.mxu0 0.0
        %4531 = vmatpush1.msra.mxu0 0.0
        %4532 = vmatprep.subr.mxu0 0.0
        %4533 = vmatpush1.msra.mxu0 0.0
        %4534 = vmatprep.subr.mxu0 0.0
        %4535 = vmatpush1.msra.mxu0 0.0
        %4536 = vmatprep.subr.mxu0 0.0
        %4537 = vmatpush1.msra.mxu0 0.0
        %4538 = vmatprep.subr.mxu0 0.0
        %4539 = vmatpush1.msra.mxu0 0.0
        %4540 = vmatprep.subr.mxu0 0.0
        %4541 = vmatpush1.msra.mxu0 0.0
        %4542 = vmatprep.subr.mxu0 0.0
        %4543 = vmatpush1.msra.mxu0 0.0
        %4544 = vmatprep.subr.mxu0 0.0
        %4545 = vmatpush1.msra.mxu0 0.0
        %4546 = vmatprep.subr.mxu0 0.0
        %4547 = vmatpush1.msra.mxu0 0.0
        %4548 = vmatprep.subr.mxu0 0.0
        %4549 = vmatpush1.msra.mxu0 0.0
        %4550 = vmatprep.mubr.f32.mxu0 0.0
        %4551 = vmatmul.mubr.f32.gmra.mrb[0].mxu0 %v4484
        %v4552 = vpop.f32.mrb[0].mxu0
        %v4553 = vadd.f32 %v1207, %v4552
        %v4554 = vpop.f32.mrb[0].mxu0
        %4555 = vdwg.mxu0
        %v4556 = vmul.f32 %v4392, %v4390
        %v4557 = vsub.f32 1.0, %v4392
        %v4558 = vmul.f32 %v4557, %v4553
        %v4559 = vadd.f32 %v4556, %v4558
        %v4561 = vsel %vm1102, %v4559, 0
        %4563 = vmatprep.subr.mxu0 0.0
        %4564 = vmatpush1.msra.mxu0 %v1057
        %4565 = vmatprep.subr.mxu0 0.0
        %4566 = vmatpush1.msra.mxu0 %v1058
        %4567 = vmatprep.subr.mxu0 0.0
        %4568 = vmatpush1.msra.mxu0 %v1059
        %4569 = vmatprep.subr.mxu0 0.0
        %4570 = vmatpush1.msra.mxu0 %v1060
        %4571 = vmatprep.subr.mxu0 0.0
        %4572 = vmatpush1.msra.mxu0 %v1297
        %4573 = vmatprep.subr.mxu0 0.0
        %4574 = vmatpush1.msra.mxu0 0.0
        %4575 = vmatprep.subr.mxu0 0.0
        %4576 = vmatpush1.msra.mxu0 0.0
        %4577 = vmatprep.subr.mxu0 0.0
        %4578 = vmatpush1.msra.mxu0 0.0
        %4579 = vmatprep.subr.mxu0 0.0
        %4580 = vmatpush1.msra.mxu0 0.0
        %4581 = vmatprep.subr.mxu0 0.0
        %4582 = vmatpush1.msra.mxu0 0.0
        %4583 = vmatprep.subr.mxu0 0.0
        %4584 = vmatpush1.msra.mxu0 0.0
        %4585 = vmatprep.subr.mxu0 0.0
        %4586 = vmatpush1.msra.mxu0 0.0
        %4587 = vmatprep.subr.mxu0 0.0
        %4588 = vmatpush1.msra.mxu0 0.0
        %4589 = vmatprep.subr.mxu0 0.0
        %4590 = vmatpush1.msra.mxu0 0.0
        %4591 = vmatprep.subr.mxu0 0.0
        %4592 = vmatpush1.msra.mxu0 0.0
        %4593 = vmatprep.subr.mxu0 0.0
        %4594 = vmatpush1.msra.mxu0 0.0
        %4595 = vmatprep.subr.mxu0 0.0
        %4596 = vmatpush1.msra.mxu0 0.0
        %4597 = vmatprep.subr.mxu0 0.0
        %4598 = vmatpush1.msra.mxu0 0.0
        %4599 = vmatprep.subr.mxu0 0.0
        %4600 = vmatpush1.msra.mxu0 0.0
        %4601 = vmatprep.subr.mxu0 0.0
        %4602 = vmatpush1.msra.mxu0 0.0
        %4603 = vmatprep.subr.mxu0 0.0
        %4604 = vmatpush1.msra.mxu0 0.0
        %4605 = vmatprep.subr.mxu0 0.0
        %4606 = vmatpush1.msra.mxu0 0.0
        %4607 = vmatprep.subr.mxu0 0.0
        %4608 = vmatpush1.msra.mxu0 0.0
        %4609 = vmatprep.subr.mxu0 0.0
        %4610 = vmatpush1.msra.mxu0 0.0
        %4611 = vmatprep.subr.mxu0 0.0
        %4612 = vmatpush1.msra.mxu0 0.0
        %4613 = vmatprep.subr.mxu0 0.0
        %4614 = vmatpush1.msra.mxu0 0.0
        %4615 = vmatprep.subr.mxu0 0.0
        %4616 = vmatpush1.msra.mxu0 0.0
        %4617 = vmatprep.subr.mxu0 0.0
        %4618 = vmatpush1.msra.mxu0 0.0
        %4619 = vmatprep.subr.mxu0 0.0
        %4620 = vmatpush1.msra.mxu0 0.0
        %4621 = vmatprep.subr.mxu0 0.0
        %4622 = vmatpush1.msra.mxu0 0.0
        %4623 = vmatprep.subr.mxu0 0.0
        %4624 = vmatpush1.msra.mxu0 0.0
        %4625 = vmatprep.subr.mxu0 0.0
        %4626 = vmatpush1.msra.mxu0 0.0
        %4627 = vmatprep.mubr.f32.mxu0 0.0
        %4628 = vmatmul.mubr.f32.gmra.mrb[0].mxu0 %v4561
        %v4629 = vpop.f32.mrb[0].mxu0
        %v4630 = vadd.f32 %v1291, %v4629
        %v4631 = vpop.f32.mrb[0].mxu0
        %4632 = vdwg.mxu0
        %v4634 = vsel %vm1102, %v4392, 0
        %4636 = vmatprep.subr.mxu0 0.0
        %4637 = vmatpush1.msra.mxu0 %v1068
        %4638 = vmatprep.subr.mxu0 0.0
        %4639 = vmatpush1.msra.mxu0 %v1069
        %4640 = vmatprep.subr.mxu0 0.0
        %4641 = vmatpush1.msra.mxu0 %v1070
        %4642 = vmatprep.subr.mxu0 0.0
        %4643 = vmatpush1.msra.mxu0 %v1071
        %4644 = vmatprep.subr.mxu0 0.0
        %4645 = vmatpush1.msra.mxu0 %v1373
        %4646 = vmatprep.subr.mxu0 0.0
        %4647 = vmatpush1.msra.mxu0 0.0
        %4648 = vmatprep.subr.mxu0 0.0
        %4649 = vmatpush1.msra.mxu0 0.0
        %4650 = vmatprep.subr.mxu0 0.0
        %4651 = vmatpush1.msra.mxu0 0.0
        %4652 = vmatprep.subr.mxu0 0.0
        %4653 = vmatpush1.msra.mxu0 0.0
        %4654 = vmatprep.subr.mxu0 0.0
        %4655 = vmatpush1.msra.mxu0 0.0
        %4656 = vmatprep.subr.mxu0 0.0
        %4657 = vmatpush1.msra.mxu0 0.0
        %4658 = vmatprep.subr.mxu0 0.0
        %4659 = vmatpush1.msra.mxu0 0.0
        %4660 = vmatprep.subr.mxu0 0.0
        %4661 = vmatpush1.msra.mxu0 0.0
        %4662 = vmatprep.subr.mxu0 0.0
        %4663 = vmatpush1.msra.mxu0 0.0
        %4664 = vmatprep.subr.mxu0 0.0
        %4665 = vmatpush1.msra.mxu0 0.0
        %4666 = vmatprep.subr.mxu0 0.0
        %4667 = vmatpush1.msra.mxu0 0.0
        %4668 = vmatprep.subr.mxu0 0.0
        %4669 = vmatpush1.msra.mxu0 0.0
        %4670 = vmatprep.subr.mxu0 0.0
        %4671 = vmatpush1.msra.mxu0 0.0
        %4672 = vmatprep.subr.mxu0 0.0
        %4673 = vmatpush1.msra.mxu0 0.0
        %4674 = vmatprep.subr.mxu0 0.0
        %4675 = vmatpush1.msra.mxu0 0.0
        %4676 = vmatprep.subr.mxu0 0.0
        %4677 = vmatpush1.msra.mxu0 0.0
        %4678 = vmatprep.subr.mxu0 0.0
        %4679 = vmatpush1.msra.mxu0 0.0
        %4680 = vmatprep.subr.mxu0 0.0
        %4681 = vmatpush1.msra.mxu0 0.0
        %4682 = vmatprep.subr.mxu0 0.0
        %4683 = vmatpush1.msra.mxu0 0.0
        %4684 = vmatprep.subr.mxu0 0.0
        %4685 = vmatpush1.msra.mxu0 0.0
        %4686 = vmatprep.subr.mxu0 0.0
        %4687 = vmatpush1.msra.mxu0 0.0
        %4688 = vmatprep.subr.mxu0 0.0
        %4689 = vmatpush1.msra.mxu0 0.0
        %4690 = vmatprep.subr.mxu0 0.0
        %4691 = vmatpush1.msra.mxu0 0.0
        %4692 = vmatprep.subr.mxu0 0.0
        %4693 = vmatpush1.msra.mxu0 0.0
        %4694 = vmatprep.subr.mxu0 0.0
        %4695 = vmatpush1.msra.mxu0 0.0
        %4696 = vmatprep.subr.mxu0 0.0
        %4697 = vmatpush1.msra.mxu0 0.0
        %4698 = vmatprep.subr.mxu0 0.0
        %4699 = vmatpush1.msra.mxu0 0.0
        %4700 = vmatprep.mubr.f32.mxu0 0.0
        %4701 = vmatmul.mubr.f32.gmra.mrb[0].mxu0 %v4634
        %v4702 = vpop.f32.mrb[0].mxu0
        %v4703 = vadd.f32 0.0, %v4702
        %v4704 = vpop.f32.mrb[0].mxu0
        %4705 = vdwg.mxu0
        %v4707 = vsel %vm1102, %v4475, 0
        %4709 = vmatprep.subr.mxu0 0.0
        %4710 = vmatpush1.msra.mxu0 %v1063
        %4711 = vmatprep.subr.mxu0 0.0
        %4712 = vmatpush1.msra.mxu0 %v1064
        %4713 = vmatprep.subr.mxu0 0.0
        %4714 = vmatpush1.msra.mxu0 %v1065
        %4715 = vmatprep.subr.mxu0 0.0
        %4716 = vmatpush1.msra.mxu0 %v1066
        %4717 = vmatprep.subr.mxu0 0.0
        %4718 = vmatpush1.msra.mxu0 %v1449
        %4719 = vmatprep.subr.mxu0 0.0
        %4720 = vmatpush1.msra.mxu0 0.0
        %4721 = vmatprep.subr.mxu0 0.0
        %4722 = vmatpush1.msra.mxu0 0.0
        %4723 = vmatprep.subr.mxu0 0.0
        %4724 = vmatpush1.msra.mxu0 0.0
        %4725 = vmatprep.subr.mxu0 0.0
        %4726 = vmatpush1.msra.mxu0 0.0
        %4727 = vmatprep.subr.mxu0 0.0
        %4728 = vmatpush1.msra.mxu0 0.0
        %4729 = vmatprep.subr.mxu0 0.0
        %4730 = vmatpush1.msra.mxu0 0.0
        %4731 = vmatprep.subr.mxu0 0.0
        %4732 = vmatpush1.msra.mxu0 0.0
        %4733 = vmatprep.subr.mxu0 0.0
        %4734 = vmatpush1.msra.mxu0 0.0
        %4735 = vmatprep.subr.mxu0 0.0
        %4736 = vmatpush1.msra.mxu0 0.0
        %4737 = vmatprep.subr.mxu0 0.0
        %4738 = vmatpush1.msra.mxu0 0.0
        %4739 = vmatprep.subr.mxu0 0.0
        %4740 = vmatpush1.msra.mxu0 0.0
        %4741 = vmatprep.subr.mxu0 0.0
        %4742 = vmatpush1.msra.mxu0 0.0
        %4743 = vmatprep.subr.mxu0 0.0
        %4744 = vmatpush1.msra.mxu0 0.0
        %4745 = vmatprep.subr.mxu0 0.0
        %4746 = vmatpush1.msra.mxu0 0.0
        %4747 = vmatprep.subr.mxu0 0.0
        %4748 = vmatpush1.msra.mxu0 0.0
        %4749 = vmatprep.subr.mxu0 0.0
        %4750 = vmatpush1.msra.mxu0 0.0
        %4751 = vmatprep.subr.mxu0 0.0
        %4752 = vmatpush1.msra.mxu0 0.0
        %4753 = vmatprep.subr.mxu0 0.0
        %4754 = vmatpush1.msra.mxu0 0.0
        %4755 = vmatprep.subr.mxu0 0.0
        %4756 = vmatpush1.msra.mxu0 0.0
        %4757 = vmatprep.subr.mxu0 0.0
        %4758 = vmatpush1.msra.mxu0 0.0
        %4759 = vmatprep.subr.mxu0 0.0
        %4760 = vmatpush1.msra.mxu0 0.0
        %4761 = vmatprep.subr.mxu0 0.0
        %4762 = vmatpush1.msra.mxu0 0.0
        %4763 = vmatprep.subr.mxu0 0.0
        %4764 = vmatpush1.msra.mxu0 0.0
        %4765 = vmatprep.subr.mxu0 0.0
        %4766 = vmatpush1.msra.mxu0 0.0
        %4767 = vmatprep.subr.mxu0 0.0
        %4768 = vmatpush1.msra.mxu0 0.0
        %4769 = vmatprep.subr.mxu0 0.0
        %4770 = vmatpush1.msra.mxu0 0.0
        %4771 = vmatprep.subr.mxu0 0.0
        %4772 = vmatpush1.msra.mxu0 0.0
        %4773 = vmatprep.mubr.f32.mxu0 0.0
        %4774 = vmatmul.mubr.f32.gmra.mrb[0].mxu0 %v4707
        %v4775 = vpop.f32.mrb[0].mxu0
        %v4776 = vadd.f32 %v4703, %v4775
        %v4777 = vpop.f32.mrb[0].mxu0
        %4778 = vdwg.mxu0
        %v4779 = vadd.f32 %v4776, %v1525
        %v4780 = vxor.u32 %v4779, 2147483648
        %v4781 = vmul.f32 %v4780, 1.442695
        %v4782 = vpow.pop %v4781
        %v4783 = vadd.f32 %v4782, 1.0
        %v4784 = vrcp.pop %v4783
        %v4785 = vmul.f32 1.0, %v4784
        %v4786 = vmul.f32 %v4785, %v4630
        %v4787 = vsub.f32 1.0, %v4785
        %v4788 = vmul.f32 %v4787, %v4553
        %v4789 = vadd.f32 %v4786, %v4788
        %v4790 = vmul.f32 %v4557, %v4789
        %v4791 = vadd.f32 %v4556, %v4790
        %4792 = vmatprep.subr.mxu0 0.0
        %4793 = vmatpush1.msra.mxu0 %v1079
        %4794 = vmatprep.subr.mxu0 0.0
        %4795 = vmatpush1.msra.mxu0 %v1080
        %4796 = vmatprep.subr.mxu0 0.0
        %4797 = vmatpush1.msra.mxu0 %v1081
        %4798 = vmatprep.subr.mxu0 0.0
        %4799 = vmatpush1.msra.mxu0 %v1082
        %4800 = vmatprep.subr.mxu0 0.0
        %4801 = vmatpush1.msra.mxu0 %v1541
        %4802 = vmatprep.subr.mxu0 0.0
        %4803 = vmatpush1.msra.mxu0 0.0
        %4804 = vmatprep.subr.mxu0 0.0
        %4805 = vmatpush1.msra.mxu0 0.0
        %4806 = vmatprep.subr.mxu0 0.0
        %4807 = vmatpush1.msra.mxu0 0.0
        %4808 = vmatprep.subr.mxu0 0.0
        %4809 = vmatpush1.msra.mxu0 0.0
        %4810 = vmatprep.subr.mxu0 0.0
        %4811 = vmatpush1.msra.mxu0 0.0
        %4812 = vmatprep.subr.mxu0 0.0
        %4813 = vmatpush1.msra.mxu0 0.0
        %4814 = vmatprep.subr.mxu0 0.0
        %4815 = vmatpush1.msra.mxu0 0.0
        %4816 = vmatprep.subr.mxu0 0.0
        %4817 = vmatpush1.msra.mxu0 0.0
        %4818 = vmatprep.subr.mxu0 0.0
        %4819 = vmatpush1.msra.mxu0 0.0
        %4820 = vmatprep.subr.mxu0 0.0
        %4821 = vmatpush1.msra.mxu0 0.0
        %4822 = vmatprep.subr.mxu0 0.0
        %4823 = vmatpush1.msra.mxu0 0.0
        %4824 = vmatprep.subr.mxu0 0.0
        %4825 = vmatpush1.msra.mxu0 0.0
        %4826 = vmatprep.subr.mxu0 0.0
        %4827 = vmatpush1.msra.mxu0 0.0
        %4828 = vmatprep.subr.mxu0 0.0
        %4829 = vmatpush1.msra.mxu0 0.0
        %4830 = vmatprep.subr.mxu0 0.0
        %4831 = vmatpush1.msra.mxu0 0.0
        %4832 = vmatprep.subr.mxu0 0.0
        %4833 = vmatpush1.msra.mxu0 0.0
        %4834 = vmatprep.subr.mxu0 0.0
        %4835 = vmatpush1.msra.mxu0 0.0
        %4836 = vmatprep.subr.mxu0 0.0
        %4837 = vmatpush1.msra.mxu0 0.0
        %4838 = vmatprep.subr.mxu0 0.0
        %4839 = vmatpush1.msra.mxu0 0.0
        %4840 = vmatprep.subr.mxu0 0.0
        %4841 = vmatpush1.msra.mxu0 0.0
        %4842 = vmatprep.subr.mxu0 0.0
        %4843 = vmatpush1.msra.mxu0 0.0
        %4844 = vmatprep.subr.mxu0 0.0
        %4845 = vmatpush1.msra.mxu0 0.0
        %4846 = vmatprep.subr.mxu0 0.0
        %4847 = vmatpush1.msra.mxu0 0.0
        %4848 = vmatprep.subr.mxu0 0.0
        %4849 = vmatpush1.msra.mxu0 0.0
        %4850 = vmatprep.subr.mxu0 0.0
        %4851 = vmatpush1.msra.mxu0 0.0
        %4852 = vmatprep.subr.mxu0 0.0
        %4853 = vmatpush1.msra.mxu0 0.0
        %4854 = vmatprep.subr.mxu0 0.0
        %4855 = vmatpush1.msra.mxu0 0.0
        %4856 = vmatprep.mubr.f32.mxu0 0.0
        %4857 = vmatmul.mubr.f32.gmra.mrb[0].mxu0 %v4634
        %v4858 = vpop.f32.mrb[0].mxu0
        %v4859 = vadd.f32 0.0, %v4858
        %v4860 = vpop.f32.mrb[0].mxu0
        %4861 = vdwg.mxu0
        %v4863 = vsel %vm1102, %v4791, 0
        %4865 = vmatprep.subr.mxu0 0.0
        %4866 = vmatpush1.msra.mxu0 %v1074
        %4867 = vmatprep.subr.mxu0 0.0
        %4868 = vmatpush1.msra.mxu0 %v1075
        %4869 = vmatprep.subr.mxu0 0.0
        %4870 = vmatpush1.msra.mxu0 %v1076
        %4871 = vmatprep.subr.mxu0 0.0
        %4872 = vmatpush1.msra.mxu0 %v1077
        %4873 = vmatprep.subr.mxu0 0.0
        %4874 = vmatpush1.msra.mxu0 %v1617
        %4875 = vmatprep.subr.mxu0 0.0
        %4876 = vmatpush1.msra.mxu0 0.0
        %4877 = vmatprep.subr.mxu0 0.0
        %4878 = vmatpush1.msra.mxu0 0.0
        %4879 = vmatprep.subr.mxu0 0.0
        %4880 = vmatpush1.msra.mxu0 0.0
        %4881 = vmatprep.subr.mxu0 0.0
        %4882 = vmatpush1.msra.mxu0 0.0
        %4883 = vmatprep.subr.mxu0 0.0
        %4884 = vmatpush1.msra.mxu0 0.0
        %4885 = vmatprep.subr.mxu0 0.0
        %4886 = vmatpush1.msra.mxu0 0.0
        %4887 = vmatprep.subr.mxu0 0.0
        %4888 = vmatpush1.msra.mxu0 0.0
        %4889 = vmatprep.subr.mxu0 0.0
        %4890 = vmatpush1.msra.mxu0 0.0
        %4891 = vmatprep.subr.mxu0 0.0
        %4892 = vmatpush1.msra.mxu0 0.0
        %4893 = vmatprep.subr.mxu0 0.0
        %4894 = vmatpush1.msra.mxu0 0.0
        %4895 = vmatprep.subr.mxu0 0.0
        %4896 = vmatpush1.msra.mxu0 0.0
        %4897 = vmatprep.subr.mxu0 0.0
        %4898 = vmatpush1.msra.mxu0 0.0
        %4899 = vmatprep.subr.mxu0 0.0
        %4900 = vmatpush1.msra.mxu0 0.0
        %4901 = vmatprep.subr.mxu0 0.0
        %4902 = vmatpush1.msra.mxu0 0.0
        %4903 = vmatprep.subr.mxu0 0.0
        %4904 = vmatpush1.msra.mxu0 0.0
        %4905 = vmatprep.subr.mxu0 0.0
        %4906 = vmatpush1.msra.mxu0 0.0
        %4907 = vmatprep.subr.mxu0 0.0
        %4908 = vmatpush1.msra.mxu0 0.0
        %4909 = vmatprep.subr.mxu0 0.0
        %4910 = vmatpush1.msra.mxu0 0.0
        %4911 = vmatprep.subr.mxu0 0.0
        %4912 = vmatpush1.msra.mxu0 0.0
        %4913 = vmatprep.subr.mxu0 0.0
        %4914 = vmatpush1.msra.mxu0 0.0
        %4915 = vmatprep.subr.mxu0 0.0
        %4916 = vmatpush1.msra.mxu0 0.0
        %4917 = vmatprep.subr.mxu0 0.0
        %4918 = vmatpush1.msra.mxu0 0.0
        %4919 = vmatprep.subr.mxu0 0.0
        %4920 = vmatpush1.msra.mxu0 0.0
        %4921 = vmatprep.subr.mxu0 0.0
        %4922 = vmatpush1.msra.mxu0 0.0
        %4923 = vmatprep.subr.mxu0 0.0
        %4924 = vmatpush1.msra.mxu0 0.0
        %4925 = vmatprep.subr.mxu0 0.0
        %4926 = vmatpush1.msra.mxu0 0.0
        %4927 = vmatprep.subr.mxu0 0.0
        %4928 = vmatpush1.msra.mxu0 0.0
        %4929 = vmatprep.mubr.f32.mxu0 0.0
        %4930 = vmatmul.mubr.f32.gmra.mrb[0].mxu0 %v4863
        %v4931 = vpop.f32.mrb[0].mxu0
        %v4932 = vadd.f32 %v4859, %v4931
        %v4933 = vpop.f32.mrb[0].mxu0
        %4934 = vdwg.mxu0
        %4935 = vmatprep.subr.mxu0 0.0
        %4936 = vmatpush1.msra.mxu0 %v1084
        %4937 = vmatprep.subr.mxu0 0.0
        %4938 = vmatpush1.msra.mxu0 %v1085
        %4939 = vmatprep.subr.mxu0 0.0
        %4940 = vmatpush1.msra.mxu0 %v1086
        %4941 = vmatprep.subr.mxu0 0.0
        %4942 = vmatpush1.msra.mxu0 %v1087
        %4943 = vmatprep.subr.mxu0 0.0
        %4944 = vmatpush1.msra.mxu0 0.0
        %4945 = vmatprep.subr.mxu0 0.0
        %4946 = vmatpush1.msra.mxu0 0.0
        %4947 = vmatprep.subr.mxu0 0.0
        %4948 = vmatpush1.msra.mxu0 0.0
        %4949 = vmatprep.subr.mxu0 0.0
        %4950 = vmatpush1.msra.mxu0 0.0
        %4951 = vmatprep.subr.mxu0 0.0
        %4952 = vmatpush1.msra.mxu0 0.0
        %4953 = vmatprep.subr.mxu0 0.0
        %4954 = vmatpush1.msra.mxu0 0.0
        %4955 = vmatprep.subr.mxu0 0.0
        %4956 = vmatpush1.msra.mxu0 0.0
        %4957 = vmatprep.subr.mxu0 0.0
        %4958 = vmatpush1.msra.mxu0 0.0
        %4959 = vmatprep.subr.mxu0 0.0
        %4960 = vmatpush1.msra.mxu0 0.0
        %4961 = vmatprep.subr.mxu0 0.0
        %4962 = vmatpush1.msra.mxu0 0.0
        %4963 = vmatprep.subr.mxu0 0.0
        %4964 = vmatpush1.msra.mxu0 0.0
        %4965 = vmatprep.subr.mxu0 0.0
        %4966 = vmatpush1.msra.mxu0 0.0
        %4967 = vmatprep.subr.mxu0 0.0
        %4968 = vmatpush1.msra.mxu0 0.0
        %4969 = vmatprep.subr.mxu0 0.0
        %4970 = vmatpush1.msra.mxu0 0.0
        %4971 = vmatprep.subr.mxu0 0.0
        %4972 = vmatpush1.msra.mxu0 0.0
        %4973 = vmatprep.subr.mxu0 0.0
        %4974 = vmatpush1.msra.mxu0 0.0
        %4975 = vmatprep.subr.mxu0 0.0
        %4976 = vmatpush1.msra.mxu0 0.0
        %4977 = vmatprep.subr.mxu0 0.0
        %4978 = vmatpush1.msra.mxu0 0.0
        %4979 = vmatprep.subr.mxu0 0.0
        %4980 = vmatpush1.msra.mxu0 0.0
        %4981 = vmatprep.subr.mxu0 0.0
        %4982 = vmatpush1.msra.mxu0 0.0
        %4983 = vmatprep.subr.mxu0 0.0
        %4984 = vmatpush1.msra.mxu0 0.0
        %4985 = vmatprep.subr.mxu0 0.0
        %4986 = vmatpush1.msra.mxu0 0.0
        %4987 = vmatprep.subr.mxu0 0.0
        %4988 = vmatpush1.msra.mxu0 0.0
        %4989 = vmatprep.subr.mxu0 0.0
        %4990 = vmatpush1.msra.mxu0 0.0
        %4991 = vmatprep.subr.mxu0 0.0
        %4992 = vmatpush1.msra.mxu0 0.0
        %4993 = vmatprep.subr.mxu0 0.0
        %4994 = vmatpush1.msra.mxu0 0.0
        %4995 = vmatprep.subr.mxu0 0.0
        %4996 = vmatpush1.msra.mxu0 0.0
        %4997 = vmatprep.subr.mxu0 0.0
        %4998 = vmatpush1.msra.mxu0 0.0
        %4999 = vmatprep.mubr.f32.mxu0 0.0
        %5000 = vmatmul.mubr.f32.gmra.mrb[0].mxu0 %v4484
        %v5001 = vpop.f32.mrb[0].mxu0
        %v5002 = vadd.f32 0.0, %v5001
        %v5003 = vpop.f32.mrb[0].mxu0
        %5004 = vdwg.mxu0
        %v5005 = vadd.f32 %v4932, %v5002
        %v5006 = vadd.f32 %v5005, %v1764
        %v5007 = vxor.u32 %v5006, 2147483648
        %v5008 = vmul.f32 %v5007, 1.442695
        %v5009 = vpow.pop %v5008
        %v5010 = vadd.f32 %v5009, 1.0
        %v5011 = vrcp.pop %v5010
        %v5012 = vmul.f32 1.0, %v5011
        %v5013 = vtanh.pop %v5006
        %v5014 = vmul.f32 %v5012, %v4376
        %5016 = vrot.lane.b32.xlu0 %v5013, 64
        %v5017 = vpop.permute.xlu0 %5016
        %v5019 = vmul.f32 %v5012, %v5017
        %5021 = vrot.lane.b32.xlu0 %v5019, 32
        %v5022 = vpop.permute.xlu0 %5021
        %v5024 = vadd.f32 %v5014, %v5022
        %v5025 = vtanh.pop %v5024
        %5027 = vrot.lane.b32.xlu0 %v5025, 64
        %v5028 = vpop.permute.xlu0 %5027
        %v5030 = vmul.f32 %v5012, %v5028
        %s5031 = scalar_lea.vmem %s1039, %s4388
        %5032 = vst.msk [vmem:[%s5031] sm:$0xff] %vm1102, %v4791
        %v5033 = vmul.f32 %v4557, %v4386
        %v5034 = vadd.f32 %v5033, 1.0
        %s5035 = scalar_select %p1089, 6, 1
        %s5036 = smul.u32 %s5035, 8
        %s5037 = scalar_lea.vmem %s0, %s5036
        %v5038 = vld [vmem:[%s5037] sm:$0xff]
        %s5039 = scalar_lea.vmem %s1, %s5036
        %v5040 = vld [vmem:[%s5039] sm:$0xff]
        %v5042 = vsel %vm1102, %v5034, 0
        %5044 = vmatprep.subr.mxu0 0.0
        %5045 = vmatpush1.msra.mxu0 %v1044
        %5046 = vmatprep.subr.mxu0 0.0
        %5047 = vmatpush1.msra.mxu0 %v1045
        %5048 = vmatprep.subr.mxu0 0.0
        %5049 = vmatpush1.msra.mxu0 %v1046
        %5050 = vmatprep.subr.mxu0 0.0
        %5051 = vmatpush1.msra.mxu0 %v1047
        %5052 = vmatprep.subr.mxu0 0.0
        %5053 = vmatpush1.msra.mxu0 %v1108
        %5054 = vmatprep.subr.mxu0 0.0
        %5055 = vmatpush1.msra.mxu0 0.0
        %5056 = vmatprep.subr.mxu0 0.0
        %5057 = vmatpush1.msra.mxu0 0.0
        %5058 = vmatprep.subr.mxu0 0.0
        %5059 = vmatpush1.msra.mxu0 0.0
        %5060 = vmatprep.subr.mxu0 0.0
        %5061 = vmatpush1.msra.mxu0 0.0
        %5062 = vmatprep.subr.mxu0 0.0
        %5063 = vmatpush1.msra.mxu0 0.0
        %5064 = vmatprep.subr.mxu0 0.0
        %5065 = vmatpush1.msra.mxu0 0.0
        %5066 = vmatprep.subr.mxu0 0.0
        %5067 = vmatpush1.msra.mxu0 0.0
        %5068 = vmatprep.subr.mxu0 0.0
        %5069 = vmatpush1.msra.mxu0 0.0
        %5070 = vmatprep.subr.mxu0 0.0
        %5071 = vmatpush1.msra.mxu0 0.0
        %5072 = vmatprep.subr.mxu0 0.0
        %5073 = vmatpush1.msra.mxu0 0.0
        %5074 = vmatprep.subr.mxu0 0.0
        %5075 = vmatpush1.msra.mxu0 0.0
        %5076 = vmatprep.subr.mxu0 0.0
        %5077 = vmatpush1.msra.mxu0 0.0
        %5078 = vmatprep.subr.mxu0 0.0
        %5079 = vmatpush1.msra.mxu0 0.0
        %5080 = vmatprep.subr.mxu0 0.0
        %5081 = vmatpush1.msra.mxu0 0.0
        %5082 = vmatprep.subr.mxu0 0.0
        %5083 = vmatpush1.msra.mxu0 0.0
        %5084 = vmatprep.subr.mxu0 0.0
        %5085 = vmatpush1.msra.mxu0 0.0
        %5086 = vmatprep.subr.mxu0 0.0
        %5087 = vmatpush1.msra.mxu0 0.0
        %5088 = vmatprep.subr.mxu0 0.0
        %5089 = vmatpush1.msra.mxu0 0.0
        %5090 = vmatprep.subr.mxu0 0.0
        %5091 = vmatpush1.msra.mxu0 0.0
        %5092 = vmatprep.subr.mxu0 0.0
        %5093 = vmatpush1.msra.mxu0 0.0
        %5094 = vmatprep.subr.mxu0 0.0
        %5095 = vmatpush1.msra.mxu0 0.0
        %5096 = vmatprep.subr.mxu0 0.0
        %5097 = vmatpush1.msra.mxu0 0.0
        %5098 = vmatprep.subr.mxu0 0.0
        %5099 = vmatpush1.msra.mxu0 0.0
        %5100 = vmatprep.subr.mxu0 0.0
        %5101 = vmatpush1.msra.mxu0 0.0
        %5102 = vmatprep.subr.mxu0 0.0
        %5103 = vmatpush1.msra.mxu0 0.0
        %5104 = vmatprep.subr.mxu0 0.0
        %5105 = vmatpush1.msra.mxu0 0.0
        %5106 = vmatprep.subr.mxu0 0.0
        %5107 = vmatpush1.msra.mxu0 0.0
        %5108 = vmatprep.mubr.f32.mxu0 0.0
        %5109 = vmatmul.mubr.f32.gmra.mrb[0].mxu0 %v5042
        %v5110 = vpop.f32.mrb[0].mxu0
        %v5111 = vadd.f32 %v1100, %v5110
        %v5112 = vpop.f32.mrb[0].mxu0
        %5113 = vdwg.mxu0
        %v5114 = vmax.f32 %v5111, 0.0
        %v5115 = vsub.f32 0.0, %v5114
        %v5116 = vmul.f32 %v5115, 1.442695
        %v5117 = vpow.pop %v5116
        %v5118 = vmul.f32 %v5034, %v1188
        %v5119 = vadd.f32 %v5118, %v1195
        %v5120 = vmax.f32 %v5119, 0.0
        %v5121 = vsub.f32 0.0, %v5120
        %v5122 = vmul.f32 %v5121, 1.442695
        %v5123 = vpow.pop %v5122
        %5125 = vrot.lane.b32.xlu0 %v5117, 96
        %v5126 = vpop.permute.xlu0 %5125
        %v5128 = vmul.f32 %v5030, %v5126
        %5130 = vrot.lane.b32.xlu0 %v5128, 32
        %v5131 = vpop.permute.xlu0 %5130
        %v5132 = vsel %vm1209, %v5131, 0
        %5134 = vmatprep.subr.mxu0 0.0
        %5135 = vmatpush1.msra.mxu0 %v1052
        %5136 = vmatprep.subr.mxu0 0.0
        %5137 = vmatpush1.msra.mxu0 %v1053
        %5138 = vmatprep.subr.mxu0 0.0
        %5139 = vmatpush1.msra.mxu0 %v1054
        %5140 = vmatprep.subr.mxu0 0.0
        %5141 = vmatpush1.msra.mxu0 %v1055
        %5142 = vmatprep.subr.mxu0 0.0
        %5143 = vmatpush1.msra.mxu0 0.0
        %5144 = vmatprep.subr.mxu0 0.0
        %5145 = vmatpush1.msra.mxu0 0.0
        %5146 = vmatprep.subr.mxu0 0.0
        %5147 = vmatpush1.msra.mxu0 0.0
        %5148 = vmatprep.subr.mxu0 0.0
        %5149 = vmatpush1.msra.mxu0 0.0
        %5150 = vmatprep.subr.mxu0 0.0
        %5151 = vmatpush1.msra.mxu0 0.0
        %5152 = vmatprep.subr.mxu0 0.0
        %5153 = vmatpush1.msra.mxu0 0.0
        %5154 = vmatprep.subr.mxu0 0.0
        %5155 = vmatpush1.msra.mxu0 0.0
        %5156 = vmatprep.subr.mxu0 0.0
        %5157 = vmatpush1.msra.mxu0 0.0
        %5158 = vmatprep.subr.mxu0 0.0
        %5159 = vmatpush1.msra.mxu0 0.0
        %5160 = vmatprep.subr.mxu0 0.0
        %5161 = vmatpush1.msra.mxu0 0.0
        %5162 = vmatprep.subr.mxu0 0.0
        %5163 = vmatpush1.msra.mxu0 0.0
        %5164 = vmatprep.subr.mxu0 0.0
        %5165 = vmatpush1.msra.mxu0 0.0
        %5166 = vmatprep.subr.mxu0 0.0
        %5167 = vmatpush1.msra.mxu0 0.0
        %5168 = vmatprep.subr.mxu0 0.0
        %5169 = vmatpush1.msra.mxu0 0.0
        %5170 = vmatprep.subr.mxu0 0.0
        %5171 = vmatpush1.msra.mxu0 0.0
        %5172 = vmatprep.subr.mxu0 0.0
        %5173 = vmatpush1.msra.mxu0 0.0
        %5174 = vmatprep.subr.mxu0 0.0
        %5175 = vmatpush1.msra.mxu0 0.0
        %5176 = vmatprep.subr.mxu0 0.0
        %5177 = vmatpush1.msra.mxu0 0.0
        %5178 = vmatprep.subr.mxu0 0.0
        %5179 = vmatpush1.msra.mxu0 0.0
        %5180 = vmatprep.subr.mxu0 0.0
        %5181 = vmatpush1.msra.mxu0 0.0
        %5182 = vmatprep.subr.mxu0 0.0
        %5183 = vmatpush1.msra.mxu0 0.0
        %5184 = vmatprep.subr.mxu0 0.0
        %5185 = vmatpush1.msra.mxu0 0.0
        %5186 = vmatprep.subr.mxu0 0.0
        %5187 = vmatpush1.msra.mxu0 0.0
        %5188 = vmatprep.subr.mxu0 0.0
        %5189 = vmatpush1.msra.mxu0 0.0
        %5190 = vmatprep.subr.mxu0 0.0
        %5191 = vmatpush1.msra.mxu0 0.0
        %5192 = vmatprep.subr.mxu0 0.0
        %5193 = vmatpush1.msra.mxu0 0.0
        %5194 = vmatprep.subr.mxu0 0.0
        %5195 = vmatpush1.msra.mxu0 0.0
        %5196 = vmatprep.subr.mxu0 0.0
        %5197 = vmatpush1.msra.mxu0 0.0
        %5198 = vmatprep.mubr.f32.mxu0 0.0
        %5199 = vmatmul.mubr.f32.gmra.mrb[0].mxu0 %v5132
        %v5200 = vpop.f32.mrb[0].mxu0
        %v5201 = vadd.f32 %v1207, %v5200
        %v5202 = vpop.f32.mrb[0].mxu0
        %5203 = vdwg.mxu0
        %v5204 = vmul.f32 %v5040, %v5038
        %v5205 = vsub.f32 1.0, %v5040
        %v5206 = vmul.f32 %v5205, %v5201
        %v5207 = vadd.f32 %v5204, %v5206
        %v5209 = vsel %vm1102, %v5207, 0
        %5211 = vmatprep.subr.mxu0 0.0
        %5212 = vmatpush1.msra.mxu0 %v1057
        %5213 = vmatprep.subr.mxu0 0.0
        %5214 = vmatpush1.msra.mxu0 %v1058
        %5215 = vmatprep.subr.mxu0 0.0
        %5216 = vmatpush1.msra.mxu0 %v1059
        %5217 = vmatprep.subr.mxu0 0.0
        %5218 = vmatpush1.msra.mxu0 %v1060
        %5219 = vmatprep.subr.mxu0 0.0
        %5220 = vmatpush1.msra.mxu0 %v1297
        %5221 = vmatprep.subr.mxu0 0.0
        %5222 = vmatpush1.msra.mxu0 0.0
        %5223 = vmatprep.subr.mxu0 0.0
        %5224 = vmatpush1.msra.mxu0 0.0
        %5225 = vmatprep.subr.mxu0 0.0
        %5226 = vmatpush1.msra.mxu0 0.0
        %5227 = vmatprep.subr.mxu0 0.0
        %5228 = vmatpush1.msra.mxu0 0.0
        %5229 = vmatprep.subr.mxu0 0.0
        %5230 = vmatpush1.msra.mxu0 0.0
        %5231 = vmatprep.subr.mxu0 0.0
        %5232 = vmatpush1.msra.mxu0 0.0
        %5233 = vmatprep.subr.mxu0 0.0
        %5234 = vmatpush1.msra.mxu0 0.0
        %5235 = vmatprep.subr.mxu0 0.0
        %5236 = vmatpush1.msra.mxu0 0.0
        %5237 = vmatprep.subr.mxu0 0.0
        %5238 = vmatpush1.msra.mxu0 0.0
        %5239 = vmatprep.subr.mxu0 0.0
        %5240 = vmatpush1.msra.mxu0 0.0
        %5241 = vmatprep.subr.mxu0 0.0
        %5242 = vmatpush1.msra.mxu0 0.0
        %5243 = vmatprep.subr.mxu0 0.0
        %5244 = vmatpush1.msra.mxu0 0.0
        %5245 = vmatprep.subr.mxu0 0.0
        %5246 = vmatpush1.msra.mxu0 0.0
        %5247 = vmatprep.subr.mxu0 0.0
        %5248 = vmatpush1.msra.mxu0 0.0
        %5249 = vmatprep.subr.mxu0 0.0
        %5250 = vmatpush1.msra.mxu0 0.0
        %5251 = vmatprep.subr.mxu0 0.0
        %5252 = vmatpush1.msra.mxu0 0.0
        %5253 = vmatprep.subr.mxu0 0.0
        %5254 = vmatpush1.msra.mxu0 0.0
        %5255 = vmatprep.subr.mxu0 0.0
        %5256 = vmatpush1.msra.mxu0 0.0
        %5257 = vmatprep.subr.mxu0 0.0
        %5258 = vmatpush1.msra.mxu0 0.0
        %5259 = vmatprep.subr.mxu0 0.0
        %5260 = vmatpush1.msra.mxu0 0.0
        %5261 = vmatprep.subr.mxu0 0.0
        %5262 = vmatpush1.msra.mxu0 0.0
        %5263 = vmatprep.subr.mxu0 0.0
        %5264 = vmatpush1.msra.mxu0 0.0
        %5265 = vmatprep.subr.mxu0 0.0
        %5266 = vmatpush1.msra.mxu0 0.0
        %5267 = vmatprep.subr.mxu0 0.0
        %5268 = vmatpush1.msra.mxu0 0.0
        %5269 = vmatprep.subr.mxu0 0.0
        %5270 = vmatpush1.msra.mxu0 0.0
        %5271 = vmatprep.subr.mxu0 0.0
        %5272 = vmatpush1.msra.mxu0 0.0
        %5273 = vmatprep.subr.mxu0 0.0
        %5274 = vmatpush1.msra.mxu0 0.0
        %5275 = vmatprep.mubr.f32.mxu0 0.0
        %5276 = vmatmul.mubr.f32.gmra.mrb[0].mxu0 %v5209
        %v5277 = vpop.f32.mrb[0].mxu0
        %v5278 = vadd.f32 %v1291, %v5277
        %v5279 = vpop.f32.mrb[0].mxu0
        %5280 = vdwg.mxu0
        %v5282 = vsel %vm1102, %v5040, 0
        %5284 = vmatprep.subr.mxu0 0.0
        %5285 = vmatpush1.msra.mxu0 %v1068
        %5286 = vmatprep.subr.mxu0 0.0
        %5287 = vmatpush1.msra.mxu0 %v1069
        %5288 = vmatprep.subr.mxu0 0.0
        %5289 = vmatpush1.msra.mxu0 %v1070
        %5290 = vmatprep.subr.mxu0 0.0
        %5291 = vmatpush1.msra.mxu0 %v1071
        %5292 = vmatprep.subr.mxu0 0.0
        %5293 = vmatpush1.msra.mxu0 %v1373
        %5294 = vmatprep.subr.mxu0 0.0
        %5295 = vmatpush1.msra.mxu0 0.0
        %5296 = vmatprep.subr.mxu0 0.0
        %5297 = vmatpush1.msra.mxu0 0.0
        %5298 = vmatprep.subr.mxu0 0.0
        %5299 = vmatpush1.msra.mxu0 0.0
        %5300 = vmatprep.subr.mxu0 0.0
        %5301 = vmatpush1.msra.mxu0 0.0
        %5302 = vmatprep.subr.mxu0 0.0
        %5303 = vmatpush1.msra.mxu0 0.0
        %5304 = vmatprep.subr.mxu0 0.0
        %5305 = vmatpush1.msra.mxu0 0.0
        %5306 = vmatprep.subr.mxu0 0.0
        %5307 = vmatpush1.msra.mxu0 0.0
        %5308 = vmatprep.subr.mxu0 0.0
        %5309 = vmatpush1.msra.mxu0 0.0
        %5310 = vmatprep.subr.mxu0 0.0
        %5311 = vmatpush1.msra.mxu0 0.0
        %5312 = vmatprep.subr.mxu0 0.0
        %5313 = vmatpush1.msra.mxu0 0.0
        %5314 = vmatprep.subr.mxu0 0.0
        %5315 = vmatpush1.msra.mxu0 0.0
        %5316 = vmatprep.subr.mxu0 0.0
        %5317 = vmatpush1.msra.mxu0 0.0
        %5318 = vmatprep.subr.mxu0 0.0
        %5319 = vmatpush1.msra.mxu0 0.0
        %5320 = vmatprep.subr.mxu0 0.0
        %5321 = vmatpush1.msra.mxu0 0.0
        %5322 = vmatprep.subr.mxu0 0.0
        %5323 = vmatpush1.msra.mxu0 0.0
        %5324 = vmatprep.subr.mxu0 0.0
        %5325 = vmatpush1.msra.mxu0 0.0
        %5326 = vmatprep.subr.mxu0 0.0
        %5327 = vmatpush1.msra.mxu0 0.0
        %5328 = vmatprep.subr.mxu0 0.0
        %5329 = vmatpush1.msra.mxu0 0.0
        %5330 = vmatprep.subr.mxu0 0.0
        %5331 = vmatpush1.msra.mxu0 0.0
        %5332 = vmatprep.subr.mxu0 0.0
        %5333 = vmatpush1.msra.mxu0 0.0
        %5334 = vmatprep.subr.mxu0 0.0
        %5335 = vmatpush1.msra.mxu0 0.0
        %5336 = vmatprep.subr.mxu0 0.0
        %5337 = vmatpush1.msra.mxu0 0.0
        %5338 = vmatprep.subr.mxu0 0.0
        %5339 = vmatpush1.msra.mxu0 0.0
        %5340 = vmatprep.subr.mxu0 0.0
        %5341 = vmatpush1.msra.mxu0 0.0
        %5342 = vmatprep.subr.mxu0 0.0
        %5343 = vmatpush1.msra.mxu0 0.0
        %5344 = vmatprep.subr.mxu0 0.0
        %5345 = vmatpush1.msra.mxu0 0.0
        %5346 = vmatprep.subr.mxu0 0.0
        %5347 = vmatpush1.msra.mxu0 0.0
        %5348 = vmatprep.mubr.f32.mxu0 0.0
        %5349 = vmatmul.mubr.f32.gmra.mrb[0].mxu0 %v5282
        %v5350 = vpop.f32.mrb[0].mxu0
        %v5351 = vadd.f32 0.0, %v5350
        %v5352 = vpop.f32.mrb[0].mxu0
        %5353 = vdwg.mxu0
        %v5355 = vsel %vm1102, %v5123, 0
        %5357 = vmatprep.subr.mxu0 0.0
        %5358 = vmatpush1.msra.mxu0 %v1063
        %5359 = vmatprep.subr.mxu0 0.0
        %5360 = vmatpush1.msra.mxu0 %v1064
        %5361 = vmatprep.subr.mxu0 0.0
        %5362 = vmatpush1.msra.mxu0 %v1065
        %5363 = vmatprep.subr.mxu0 0.0
        %5364 = vmatpush1.msra.mxu0 %v1066
        %5365 = vmatprep.subr.mxu0 0.0
        %5366 = vmatpush1.msra.mxu0 %v1449
        %5367 = vmatprep.subr.mxu0 0.0
        %5368 = vmatpush1.msra.mxu0 0.0
        %5369 = vmatprep.subr.mxu0 0.0
        %5370 = vmatpush1.msra.mxu0 0.0
        %5371 = vmatprep.subr.mxu0 0.0
        %5372 = vmatpush1.msra.mxu0 0.0
        %5373 = vmatprep.subr.mxu0 0.0
        %5374 = vmatpush1.msra.mxu0 0.0
        %5375 = vmatprep.subr.mxu0 0.0
        %5376 = vmatpush1.msra.mxu0 0.0
        %5377 = vmatprep.subr.mxu0 0.0
        %5378 = vmatpush1.msra.mxu0 0.0
        %5379 = vmatprep.subr.mxu0 0.0
        %5380 = vmatpush1.msra.mxu0 0.0
        %5381 = vmatprep.subr.mxu0 0.0
        %5382 = vmatpush1.msra.mxu0 0.0
        %5383 = vmatprep.subr.mxu0 0.0
        %5384 = vmatpush1.msra.mxu0 0.0
        %5385 = vmatprep.subr.mxu0 0.0
        %5386 = vmatpush1.msra.mxu0 0.0
        %5387 = vmatprep.subr.mxu0 0.0
        %5388 = vmatpush1.msra.mxu0 0.0
        %5389 = vmatprep.subr.mxu0 0.0
        %5390 = vmatpush1.msra.mxu0 0.0
        %5391 = vmatprep.subr.mxu0 0.0
        %5392 = vmatpush1.msra.mxu0 0.0
        %5393 = vmatprep.subr.mxu0 0.0
        %5394 = vmatpush1.msra.mxu0 0.0
        %5395 = vmatprep.subr.mxu0 0.0
        %5396 = vmatpush1.msra.mxu0 0.0
        %5397 = vmatprep.subr.mxu0 0.0
        %5398 = vmatpush1.msra.mxu0 0.0
        %5399 = vmatprep.subr.mxu0 0.0
        %5400 = vmatpush1.msra.mxu0 0.0
        %5401 = vmatprep.subr.mxu0 0.0
        %5402 = vmatpush1.msra.mxu0 0.0
        %5403 = vmatprep.subr.mxu0 0.0
        %5404 = vmatpush1.msra.mxu0 0.0
        %5405 = vmatprep.subr.mxu0 0.0
        %5406 = vmatpush1.msra.mxu0 0.0
        %5407 = vmatprep.subr.mxu0 0.0
        %5408 = vmatpush1.msra.mxu0 0.0
        %5409 = vmatprep.subr.mxu0 0.0
        %5410 = vmatpush1.msra.mxu0 0.0
        %5411 = vmatprep.subr.mxu0 0.0
        %5412 = vmatpush1.msra.mxu0 0.0
        %5413 = vmatprep.subr.mxu0 0.0
        %5414 = vmatpush1.msra.mxu0 0.0
        %5415 = vmatprep.subr.mxu0 0.0
        %5416 = vmatpush1.msra.mxu0 0.0
        %5417 = vmatprep.subr.mxu0 0.0
        %5418 = vmatpush1.msra.mxu0 0.0
        %5419 = vmatprep.subr.mxu0 0.0
        %5420 = vmatpush1.msra.mxu0 0.0
        %5421 = vmatprep.mubr.f32.mxu0 0.0
        %5422 = vmatmul.mubr.f32.gmra.mrb[0].mxu0 %v5355
        %v5423 = vpop.f32.mrb[0].mxu0
        %v5424 = vadd.f32 %v5351, %v5423
        %v5425 = vpop.f32.mrb[0].mxu0
        %5426 = vdwg.mxu0
        %v5427 = vadd.f32 %v5424, %v1525
        %v5428 = vxor.u32 %v5427, 2147483648
        %v5429 = vmul.f32 %v5428, 1.442695
        %v5430 = vpow.pop %v5429
        %v5431 = vadd.f32 %v5430, 1.0
        %v5432 = vrcp.pop %v5431
        %v5433 = vmul.f32 1.0, %v5432
        %v5434 = vmul.f32 %v5433, %v5278
        %v5435 = vsub.f32 1.0, %v5433
        %v5436 = vmul.f32 %v5435, %v5201
        %v5437 = vadd.f32 %v5434, %v5436
        %v5438 = vmul.f32 %v5205, %v5437
        %v5439 = vadd.f32 %v5204, %v5438
        %5440 = vmatprep.subr.mxu0 0.0
        %5441 = vmatpush1.msra.mxu0 %v1079
        %5442 = vmatprep.subr.mxu0 0.0
        %5443 = vmatpush1.msra.mxu0 %v1080
        %5444 = vmatprep.subr.mxu0 0.0
        %5445 = vmatpush1.msra.mxu0 %v1081
        %5446 = vmatprep.subr.mxu0 0.0
        %5447 = vmatpush1.msra.mxu0 %v1082
        %5448 = vmatprep.subr.mxu0 0.0
        %5449 = vmatpush1.msra.mxu0 %v1541
        %5450 = vmatprep.subr.mxu0 0.0
        %5451 = vmatpush1.msra.mxu0 0.0
        %5452 = vmatprep.subr.mxu0 0.0
        %5453 = vmatpush1.msra.mxu0 0.0
        %5454 = vmatprep.subr.mxu0 0.0
        %5455 = vmatpush1.msra.mxu0 0.0
        %5456 = vmatprep.subr.mxu0 0.0
        %5457 = vmatpush1.msra.mxu0 0.0
        %5458 = vmatprep.subr.mxu0 0.0
        %5459 = vmatpush1.msra.mxu0 0.0
        %5460 = vmatprep.subr.mxu0 0.0
        %5461 = vmatpush1.msra.mxu0 0.0
        %5462 = vmatprep.subr.mxu0 0.0
        %5463 = vmatpush1.msra.mxu0 0.0
        %5464 = vmatprep.subr.mxu0 0.0
        %5465 = vmatpush1.msra.mxu0 0.0
        %5466 = vmatprep.subr.mxu0 0.0
        %5467 = vmatpush1.msra.mxu0 0.0
        %5468 = vmatprep.subr.mxu0 0.0
        %5469 = vmatpush1.msra.mxu0 0.0
        %5470 = vmatprep.subr.mxu0 0.0
        %5471 = vmatpush1.msra.mxu0 0.0
        %5472 = vmatprep.subr.mxu0 0.0
        %5473 = vmatpush1.msra.mxu0 0.0
        %5474 = vmatprep.subr.mxu0 0.0
        %5475 = vmatpush1.msra.mxu0 0.0
        %5476 = vmatprep.subr.mxu0 0.0
        %5477 = vmatpush1.msra.mxu0 0.0
        %5478 = vmatprep.subr.mxu0 0.0
        %5479 = vmatpush1.msra.mxu0 0.0
        %5480 = vmatprep.subr.mxu0 0.0
        %5481 = vmatpush1.msra.mxu0 0.0
        %5482 = vmatprep.subr.mxu0 0.0
        %5483 = vmatpush1.msra.mxu0 0.0
        %5484 = vmatprep.subr.mxu0 0.0
        %5485 = vmatpush1.msra.mxu0 0.0
        %5486 = vmatprep.subr.mxu0 0.0
        %5487 = vmatpush1.msra.mxu0 0.0
        %5488 = vmatprep.subr.mxu0 0.0
        %5489 = vmatpush1.msra.mxu0 0.0
        %5490 = vmatprep.subr.mxu0 0.0
        %5491 = vmatpush1.msra.mxu0 0.0
        %5492 = vmatprep.subr.mxu0 0.0
        %5493 = vmatpush1.msra.mxu0 0.0
        %5494 = vmatprep.subr.mxu0 0.0
        %5495 = vmatpush1.msra.mxu0 0.0
        %5496 = vmatprep.subr.mxu0 0.0
        %5497 = vmatpush1.msra.mxu0 0.0
        %5498 = vmatprep.subr.mxu0 0.0
        %5499 = vmatpush1.msra.mxu0 0.0
        %5500 = vmatprep.subr.mxu0 0.0
        %5501 = vmatpush1.msra.mxu0 0.0
        %5502 = vmatprep.subr.mxu0 0.0
        %5503 = vmatpush1.msra.mxu0 0.0
        %5504 = vmatprep.mubr.f32.mxu0 0.0
        %5505 = vmatmul.mubr.f32.gmra.mrb[0].mxu0 %v5282
        %v5506 = vpop.f32.mrb[0].mxu0
        %v5507 = vadd.f32 0.0, %v5506
        %v5508 = vpop.f32.mrb[0].mxu0
        %5509 = vdwg.mxu0
        %v5511 = vsel %vm1102, %v5439, 0
        %5513 = vmatprep.subr.mxu0 0.0
        %5514 = vmatpush1.msra.mxu0 %v1074
        %5515 = vmatprep.subr.mxu0 0.0
        %5516 = vmatpush1.msra.mxu0 %v1075
        %5517 = vmatprep.subr.mxu0 0.0
        %5518 = vmatpush1.msra.mxu0 %v1076
        %5519 = vmatprep.subr.mxu0 0.0
        %5520 = vmatpush1.msra.mxu0 %v1077
        %5521 = vmatprep.subr.mxu0 0.0
        %5522 = vmatpush1.msra.mxu0 %v1617
        %5523 = vmatprep.subr.mxu0 0.0
        %5524 = vmatpush1.msra.mxu0 0.0
        %5525 = vmatprep.subr.mxu0 0.0
        %5526 = vmatpush1.msra.mxu0 0.0
        %5527 = vmatprep.subr.mxu0 0.0
        %5528 = vmatpush1.msra.mxu0 0.0
        %5529 = vmatprep.subr.mxu0 0.0
        %5530 = vmatpush1.msra.mxu0 0.0
        %5531 = vmatprep.subr.mxu0 0.0
        %5532 = vmatpush1.msra.mxu0 0.0
        %5533 = vmatprep.subr.mxu0 0.0
        %5534 = vmatpush1.msra.mxu0 0.0
        %5535 = vmatprep.subr.mxu0 0.0
        %5536 = vmatpush1.msra.mxu0 0.0
        %5537 = vmatprep.subr.mxu0 0.0
        %5538 = vmatpush1.msra.mxu0 0.0
        %5539 = vmatprep.subr.mxu0 0.0
        %5540 = vmatpush1.msra.mxu0 0.0
        %5541 = vmatprep.subr.mxu0 0.0
        %5542 = vmatpush1.msra.mxu0 0.0
        %5543 = vmatprep.subr.mxu0 0.0
        %5544 = vmatpush1.msra.mxu0 0.0
        %5545 = vmatprep.subr.mxu0 0.0
        %5546 = vmatpush1.msra.mxu0 0.0
        %5547 = vmatprep.subr.mxu0 0.0
        %5548 = vmatpush1.msra.mxu0 0.0
        %5549 = vmatprep.subr.mxu0 0.0
        %5550 = vmatpush1.msra.mxu0 0.0
        %5551 = vmatprep.subr.mxu0 0.0
        %5552 = vmatpush1.msra.mxu0 0.0
        %5553 = vmatprep.subr.mxu0 0.0
        %5554 = vmatpush1.msra.mxu0 0.0
        %5555 = vmatprep.subr.mxu0 0.0
        %5556 = vmatpush1.msra.mxu0 0.0
        %5557 = vmatprep.subr.mxu0 0.0
        %5558 = vmatpush1.msra.mxu0 0.0
        %5559 = vmatprep.subr.mxu0 0.0
        %5560 = vmatpush1.msra.mxu0 0.0
        %5561 = vmatprep.subr.mxu0 0.0
        %5562 = vmatpush1.msra.mxu0 0.0
        %5563 = vmatprep.subr.mxu0 0.0
        %5564 = vmatpush1.msra.mxu0 0.0
        %5565 = vmatprep.subr.mxu0 0.0
        %5566 = vmatpush1.msra.mxu0 0.0
        %5567 = vmatprep.subr.mxu0 0.0
        %5568 = vmatpush1.msra.mxu0 0.0
        %5569 = vmatprep.subr.mxu0 0.0
        %5570 = vmatpush1.msra.mxu0 0.0
        %5571 = vmatprep.subr.mxu0 0.0
        %5572 = vmatpush1.msra.mxu0 0.0
        %5573 = vmatprep.subr.mxu0 0.0
        %5574 = vmatpush1.msra.mxu0 0.0
        %5575 = vmatprep.subr.mxu0 0.0
        %5576 = vmatpush1.msra.mxu0 0.0
        %5577 = vmatprep.mubr.f32.mxu0 0.0
        %5578 = vmatmul.mubr.f32.gmra.mrb[0].mxu0 %v5511
        %v5579 = vpop.f32.mrb[0].mxu0
        %v5580 = vadd.f32 %v5507, %v5579
        %v5581 = vpop.f32.mrb[0].mxu0
        %5582 = vdwg.mxu0
        %5583 = vmatprep.subr.mxu0 0.0
        %5584 = vmatpush1.msra.mxu0 %v1084
        %5585 = vmatprep.subr.mxu0 0.0
        %5586 = vmatpush1.msra.mxu0 %v1085
        %5587 = vmatprep.subr.mxu0 0.0
        %5588 = vmatpush1.msra.mxu0 %v1086
        %5589 = vmatprep.subr.mxu0 0.0
        %5590 = vmatpush1.msra.mxu0 %v1087
        %5591 = vmatprep.subr.mxu0 0.0
        %5592 = vmatpush1.msra.mxu0 0.0
        %5593 = vmatprep.subr.mxu0 0.0
        %5594 = vmatpush1.msra.mxu0 0.0
        %5595 = vmatprep.subr.mxu0 0.0
        %5596 = vmatpush1.msra.mxu0 0.0
        %5597 = vmatprep.subr.mxu0 0.0
        %5598 = vmatpush1.msra.mxu0 0.0
        %5599 = vmatprep.subr.mxu0 0.0
        %5600 = vmatpush1.msra.mxu0 0.0
        %5601 = vmatprep.subr.mxu0 0.0
        %5602 = vmatpush1.msra.mxu0 0.0
        %5603 = vmatprep.subr.mxu0 0.0
        %5604 = vmatpush1.msra.mxu0 0.0
        %5605 = vmatprep.subr.mxu0 0.0
        %5606 = vmatpush1.msra.mxu0 0.0
        %5607 = vmatprep.subr.mxu0 0.0
        %5608 = vmatpush1.msra.mxu0 0.0
        %5609 = vmatprep.subr.mxu0 0.0
        %5610 = vmatpush1.msra.mxu0 0.0
        %5611 = vmatprep.subr.mxu0 0.0
        %5612 = vmatpush1.msra.mxu0 0.0
        %5613 = vmatprep.subr.mxu0 0.0
        %5614 = vmatpush1.msra.mxu0 0.0
        %5615 = vmatprep.subr.mxu0 0.0
        %5616 = vmatpush1.msra.mxu0 0.0
        %5617 = vmatprep.subr.mxu0 0.0
        %5618 = vmatpush1.msra.mxu0 0.0
        %5619 = vmatprep.subr.mxu0 0.0
        %5620 = vmatpush1.msra.mxu0 0.0
        %5621 = vmatprep.subr.mxu0 0.0
        %5622 = vmatpush1.msra.mxu0 0.0
        %5623 = vmatprep.subr.mxu0 0.0
        %5624 = vmatpush1.msra.mxu0 0.0
        %5625 = vmatprep.subr.mxu0 0.0
        %5626 = vmatpush1.msra.mxu0 0.0
        %5627 = vmatprep.subr.mxu0 0.0
        %5628 = vmatpush1.msra.mxu0 0.0
        %5629 = vmatprep.subr.mxu0 0.0
        %5630 = vmatpush1.msra.mxu0 0.0
        %5631 = vmatprep.subr.mxu0 0.0
        %5632 = vmatpush1.msra.mxu0 0.0
        %5633 = vmatprep.subr.mxu0 0.0
        %5634 = vmatpush1.msra.mxu0 0.0
        %5635 = vmatprep.subr.mxu0 0.0
        %5636 = vmatpush1.msra.mxu0 0.0
        %5637 = vmatprep.subr.mxu0 0.0
        %5638 = vmatpush1.msra.mxu0 0.0
        %5639 = vmatprep.subr.mxu0 0.0
        %5640 = vmatpush1.msra.mxu0 0.0
        %5641 = vmatprep.subr.mxu0 0.0
        %5642 = vmatpush1.msra.mxu0 0.0
        %5643 = vmatprep.subr.mxu0 0.0
        %5644 = vmatpush1.msra.mxu0 0.0
        %5645 = vmatprep.subr.mxu0 0.0
        %5646 = vmatpush1.msra.mxu0 0.0
        %5647 = vmatprep.mubr.f32.mxu0 0.0
        %5648 = vmatmul.mubr.f32.gmra.mrb[0].mxu0 %v5132
        %v5649 = vpop.f32.mrb[0].mxu0
        %v5650 = vadd.f32 0.0, %v5649
        %v5651 = vpop.f32.mrb[0].mxu0
        %5652 = vdwg.mxu0
        %v5653 = vadd.f32 %v5580, %v5650
        %v5654 = vadd.f32 %v5653, %v1764
        %v5655 = vxor.u32 %v5654, 2147483648
        %v5656 = vmul.f32 %v5655, 1.442695
        %v5657 = vpow.pop %v5656
        %v5658 = vadd.f32 %v5657, 1.0
        %v5659 = vrcp.pop %v5658
        %v5660 = vmul.f32 1.0, %v5659
        %v5661 = vtanh.pop %v5654
        %v5662 = vmul.f32 %v5660, %v5024
        %5664 = vrot.lane.b32.xlu0 %v5661, 64
        %v5665 = vpop.permute.xlu0 %5664
        %v5667 = vmul.f32 %v5660, %v5665
        %5669 = vrot.lane.b32.xlu0 %v5667, 32
        %v5670 = vpop.permute.xlu0 %5669
        %v5672 = vadd.f32 %v5662, %v5670
        %v5673 = vtanh.pop %v5672
        %5675 = vrot.lane.b32.xlu0 %v5673, 64
        %v5676 = vpop.permute.xlu0 %5675
        %v5678 = vmul.f32 %v5660, %v5676
        %s5679 = scalar_lea.vmem %s1039, %s5036
        %5680 = vst.msk [vmem:[%s5679] sm:$0xff] %vm1102, %v5439
        %v5681 = vmul.f32 %v5205, %v5034
        %v5682 = vadd.f32 %v5681, 1.0
        %s5683 = scalar_select %p1089, 7, 0
        %s5684 = smul.u32 %s5683, 8
        %s5685 = scalar_lea.vmem %s0, %s5684
        %v5686 = vld [vmem:[%s5685] sm:$0xff]
        %s5687 = scalar_lea.vmem %s1, %s5684
        %v5688 = vld [vmem:[%s5687] sm:$0xff]
        %v5690 = vsel %vm1102, %v5682, 0
        %5692 = vmatprep.subr.mxu0 0.0
        %5693 = vmatpush1.msra.mxu0 %v1044
        %5694 = vmatprep.subr.mxu0 0.0
        %5695 = vmatpush1.msra.mxu0 %v1045
        %5696 = vmatprep.subr.mxu0 0.0
        %5697 = vmatpush1.msra.mxu0 %v1046
        %5698 = vmatprep.subr.mxu0 0.0
        %5699 = vmatpush1.msra.mxu0 %v1047
        %5700 = vmatprep.subr.mxu0 0.0
        %5701 = vmatpush1.msra.mxu0 %v1108
        %5702 = vmatprep.subr.mxu0 0.0
        %5703 = vmatpush1.msra.mxu0 0.0
        %5704 = vmatprep.subr.mxu0 0.0
        %5705 = vmatpush1.msra.mxu0 0.0
        %5706 = vmatprep.subr.mxu0 0.0
        %5707 = vmatpush1.msra.mxu0 0.0
        %5708 = vmatprep.subr.mxu0 0.0
        %5709 = vmatpush1.msra.mxu0 0.0
        %5710 = vmatprep.subr.mxu0 0.0
        %5711 = vmatpush1.msra.mxu0 0.0
        %5712 = vmatprep.subr.mxu0 0.0
        %5713 = vmatpush1.msra.mxu0 0.0
        %5714 = vmatprep.subr.mxu0 0.0
        %5715 = vmatpush1.msra.mxu0 0.0
        %5716 = vmatprep.subr.mxu0 0.0
        %5717 = vmatpush1.msra.mxu0 0.0
        %5718 = vmatprep.subr.mxu0 0.0
        %5719 = vmatpush1.msra.mxu0 0.0
        %5720 = vmatprep.subr.mxu0 0.0
        %5721 = vmatpush1.msra.mxu0 0.0
        %5722 = vmatprep.subr.mxu0 0.0
        %5723 = vmatpush1.msra.mxu0 0.0
        %5724 = vmatprep.subr.mxu0 0.0
        %5725 = vmatpush1.msra.mxu0 0.0
        %5726 = vmatprep.subr.mxu0 0.0
        %5727 = vmatpush1.msra.mxu0 0.0
        %5728 = vmatprep.subr.mxu0 0.0
        %5729 = vmatpush1.msra.mxu0 0.0
        %5730 = vmatprep.subr.mxu0 0.0
        %5731 = vmatpush1.msra.mxu0 0.0
        %5732 = vmatprep.subr.mxu0 0.0
        %5733 = vmatpush1.msra.mxu0 0.0
        %5734 = vmatprep.subr.mxu0 0.0
        %5735 = vmatpush1.msra.mxu0 0.0
        %5736 = vmatprep.subr.mxu0 0.0
        %5737 = vmatpush1.msra.mxu0 0.0
        %5738 = vmatprep.subr.mxu0 0.0
        %5739 = vmatpush1.msra.mxu0 0.0
        %5740 = vmatprep.subr.mxu0 0.0
        %5741 = vmatpush1.msra.mxu0 0.0
        %5742 = vmatprep.subr.mxu0 0.0
        %5743 = vmatpush1.msra.mxu0 0.0
        %5744 = vmatprep.subr.mxu0 0.0
        %5745 = vmatpush1.msra.mxu0 0.0
        %5746 = vmatprep.subr.mxu0 0.0
        %5747 = vmatpush1.msra.mxu0 0.0
        %5748 = vmatprep.subr.mxu0 0.0
        %5749 = vmatpush1.msra.mxu0 0.0
        %5750 = vmatprep.subr.mxu0 0.0
        %5751 = vmatpush1.msra.mxu0 0.0
        %5752 = vmatprep.subr.mxu0 0.0
        %5753 = vmatpush1.msra.mxu0 0.0
        %5754 = vmatprep.subr.mxu0 0.0
        %5755 = vmatpush1.msra.mxu0 0.0
        %5756 = vmatprep.mubr.f32.mxu0 0.0
        %5757 = vmatmul.mubr.f32.gmra.mrb[0].mxu0 %v5690
        %v5758 = vpop.f32.mrb[0].mxu0
        %v5759 = vadd.f32 %v1100, %v5758
        %v5760 = vpop.f32.mrb[0].mxu0
        %5761 = vdwg.mxu0
        %v5762 = vmax.f32 %v5759, 0.0
        %v5763 = vsub.f32 0.0, %v5762
        %v5764 = vmul.f32 %v5763, 1.442695
        %v5765 = vpow.pop %v5764
        %v5766 = vmul.f32 %v5682, %v1188
        %v5767 = vadd.f32 %v5766, %v1195
        %v5768 = vmax.f32 %v5767, 0.0
        %v5769 = vsub.f32 0.0, %v5768
        %v5770 = vmul.f32 %v5769, 1.442695
        %v5771 = vpow.pop %v5770
        %5773 = vrot.lane.b32.xlu0 %v5765, 96
        %v5774 = vpop.permute.xlu0 %5773
        %v5776 = vmul.f32 %v5678, %v5774
        %5778 = vrot.lane.b32.xlu0 %v5776, 32
        %v5779 = vpop.permute.xlu0 %5778
        %v5780 = vsel %vm1209, %v5779, 0
        %5782 = vmatprep.subr.mxu0 0.0
        %5783 = vmatpush1.msra.mxu0 %v1052
        %5784 = vmatprep.subr.mxu0 0.0
        %5785 = vmatpush1.msra.mxu0 %v1053
        %5786 = vmatprep.subr.mxu0 0.0
        %5787 = vmatpush1.msra.mxu0 %v1054
        %5788 = vmatprep.subr.mxu0 0.0
        %5789 = vmatpush1.msra.mxu0 %v1055
        %5790 = vmatprep.subr.mxu0 0.0
        %5791 = vmatpush1.msra.mxu0 0.0
        %5792 = vmatprep.subr.mxu0 0.0
        %5793 = vmatpush1.msra.mxu0 0.0
        %5794 = vmatprep.subr.mxu0 0.0
        %5795 = vmatpush1.msra.mxu0 0.0
        %5796 = vmatprep.subr.mxu0 0.0
        %5797 = vmatpush1.msra.mxu0 0.0
        %5798 = vmatprep.subr.mxu0 0.0
        %5799 = vmatpush1.msra.mxu0 0.0
        %5800 = vmatprep.subr.mxu0 0.0
        %5801 = vmatpush1.msra.mxu0 0.0
        %5802 = vmatprep.subr.mxu0 0.0
        %5803 = vmatpush1.msra.mxu0 0.0
        %5804 = vmatprep.subr.mxu0 0.0
        %5805 = vmatpush1.msra.mxu0 0.0
        %5806 = vmatprep.subr.mxu0 0.0
        %5807 = vmatpush1.msra.mxu0 0.0
        %5808 = vmatprep.subr.mxu0 0.0
        %5809 = vmatpush1.msra.mxu0 0.0
        %5810 = vmatprep.subr.mxu0 0.0
        %5811 = vmatpush1.msra.mxu0 0.0
        %5812 = vmatprep.subr.mxu0 0.0
        %5813 = vmatpush1.msra.mxu0 0.0
        %5814 = vmatprep.subr.mxu0 0.0
        %5815 = vmatpush1.msra.mxu0 0.0
        %5816 = vmatprep.subr.mxu0 0.0
        %5817 = vmatpush1.msra.mxu0 0.0
        %5818 = vmatprep.subr.mxu0 0.0
        %5819 = vmatpush1.msra.mxu0 0.0
        %5820 = vmatprep.subr.mxu0 0.0
        %5821 = vmatpush1.msra.mxu0 0.0
        %5822 = vmatprep.subr.mxu0 0.0
        %5823 = vmatpush1.msra.mxu0 0.0
        %5824 = vmatprep.subr.mxu0 0.0
        %5825 = vmatpush1.msra.mxu0 0.0
        %5826 = vmatprep.subr.mxu0 0.0
        %5827 = vmatpush1.msra.mxu0 0.0
        %5828 = vmatprep.subr.mxu0 0.0
        %5829 = vmatpush1.msra.mxu0 0.0
        %5830 = vmatprep.subr.mxu0 0.0
        %5831 = vmatpush1.msra.mxu0 0.0
        %5832 = vmatprep.subr.mxu0 0.0
        %5833 = vmatpush1.msra.mxu0 0.0
        %5834 = vmatprep.subr.mxu0 0.0
        %5835 = vmatpush1.msra.mxu0 0.0
        %5836 = vmatprep.subr.mxu0 0.0
        %5837 = vmatpush1.msra.mxu0 0.0
        %5838 = vmatprep.subr.mxu0 0.0
        %5839 = vmatpush1.msra.mxu0 0.0
        %5840 = vmatprep.subr.mxu0 0.0
        %5841 = vmatpush1.msra.mxu0 0.0
        %5842 = vmatprep.subr.mxu0 0.0
        %5843 = vmatpush1.msra.mxu0 0.0
        %5844 = vmatprep.subr.mxu0 0.0
        %5845 = vmatpush1.msra.mxu0 0.0
        %5846 = vmatprep.mubr.f32.mxu0 0.0
        %5847 = vmatmul.mubr.f32.gmra.mrb[0].mxu0 %v5780
        %v5848 = vpop.f32.mrb[0].mxu0
        %v5849 = vadd.f32 %v1207, %v5848
        %v5850 = vpop.f32.mrb[0].mxu0
        %5851 = vdwg.mxu0
        %v5852 = vmul.f32 %v5688, %v5686
        %v5853 = vsub.f32 1.0, %v5688
        %v5854 = vmul.f32 %v5853, %v5849
        %v5855 = vadd.f32 %v5852, %v5854
        %v5857 = vsel %vm1102, %v5855, 0
        %5859 = vmatprep.subr.mxu0 0.0
        %5860 = vmatpush1.msra.mxu0 %v1057
        %5861 = vmatprep.subr.mxu0 0.0
        %5862 = vmatpush1.msra.mxu0 %v1058
        %5863 = vmatprep.subr.mxu0 0.0
        %5864 = vmatpush1.msra.mxu0 %v1059
        %5865 = vmatprep.subr.mxu0 0.0
        %5866 = vmatpush1.msra.mxu0 %v1060
        %5867 = vmatprep.subr.mxu0 0.0
        %5868 = vmatpush1.msra.mxu0 %v1297
        %5869 = vmatprep.subr.mxu0 0.0
        %5870 = vmatpush1.msra.mxu0 0.0
        %5871 = vmatprep.subr.mxu0 0.0
        %5872 = vmatpush1.msra.mxu0 0.0
        %5873 = vmatprep.subr.mxu0 0.0
        %5874 = vmatpush1.msra.mxu0 0.0
        %5875 = vmatprep.subr.mxu0 0.0
        %5876 = vmatpush1.msra.mxu0 0.0
        %5877 = vmatprep.subr.mxu0 0.0
        %5878 = vmatpush1.msra.mxu0 0.0
        %5879 = vmatprep.subr.mxu0 0.0
        %5880 = vmatpush1.msra.mxu0 0.0
        %5881 = vmatprep.subr.mxu0 0.0
        %5882 = vmatpush1.msra.mxu0 0.0
        %5883 = vmatprep.subr.mxu0 0.0
        %5884 = vmatpush1.msra.mxu0 0.0
        %5885 = vmatprep.subr.mxu0 0.0
        %5886 = vmatpush1.msra.mxu0 0.0
        %5887 = vmatprep.subr.mxu0 0.0
        %5888 = vmatpush1.msra.mxu0 0.0
        %5889 = vmatprep.subr.mxu0 0.0
        %5890 = vmatpush1.msra.mxu0 0.0
        %5891 = vmatprep.subr.mxu0 0.0
        %5892 = vmatpush1.msra.mxu0 0.0
        %5893 = vmatprep.subr.mxu0 0.0
        %5894 = vmatpush1.msra.mxu0 0.0
        %5895 = vmatprep.subr.mxu0 0.0
        %5896 = vmatpush1.msra.mxu0 0.0
        %5897 = vmatprep.subr.mxu0 0.0
        %5898 = vmatpush1.msra.mxu0 0.0
        %5899 = vmatprep.subr.mxu0 0.0
        %5900 = vmatpush1.msra.mxu0 0.0
        %5901 = vmatprep.subr.mxu0 0.0
        %5902 = vmatpush1.msra.mxu0 0.0
        %5903 = vmatprep.subr.mxu0 0.0
        %5904 = vmatpush1.msra.mxu0 0.0
        %5905 = vmatprep.subr.mxu0 0.0
        %5906 = vmatpush1.msra.mxu0 0.0
        %5907 = vmatprep.subr.mxu0 0.0
        %5908 = vmatpush1.msra.mxu0 0.0
        %5909 = vmatprep.subr.mxu0 0.0
        %5910 = vmatpush1.msra.mxu0 0.0
        %5911 = vmatprep.subr.mxu0 0.0
        %5912 = vmatpush1.msra.mxu0 0.0
        %5913 = vmatprep.subr.mxu0 0.0
        %5914 = vmatpush1.msra.mxu0 0.0
        %5915 = vmatprep.subr.mxu0 0.0
        %5916 = vmatpush1.msra.mxu0 0.0
        %5917 = vmatprep.subr.mxu0 0.0
        %5918 = vmatpush1.msra.mxu0 0.0
        %5919 = vmatprep.subr.mxu0 0.0
        %5920 = vmatpush1.msra.mxu0 0.0
        %5921 = vmatprep.subr.mxu0 0.0
        %5922 = vmatpush1.msra.mxu0 0.0
        %5923 = vmatprep.mubr.f32.mxu0 0.0
        %5924 = vmatmul.mubr.f32.gmra.mrb[0].mxu0 %v5857
        %v5925 = vpop.f32.mrb[0].mxu0
        %v5926 = vadd.f32 %v1291, %v5925
        %v5927 = vpop.f32.mrb[0].mxu0
        %5928 = vdwg.mxu0
        %v5930 = vsel %vm1102, %v5688, 0
        %5932 = vmatprep.subr.mxu0 0.0
        %5933 = vmatpush1.msra.mxu0 %v1068
        %5934 = vmatprep.subr.mxu0 0.0
        %5935 = vmatpush1.msra.mxu0 %v1069
        %5936 = vmatprep.subr.mxu0 0.0
        %5937 = vmatpush1.msra.mxu0 %v1070
        %5938 = vmatprep.subr.mxu0 0.0
        %5939 = vmatpush1.msra.mxu0 %v1071
        %5940 = vmatprep.subr.mxu0 0.0
        %5941 = vmatpush1.msra.mxu0 %v1373
        %5942 = vmatprep.subr.mxu0 0.0
        %5943 = vmatpush1.msra.mxu0 0.0
        %5944 = vmatprep.subr.mxu0 0.0
        %5945 = vmatpush1.msra.mxu0 0.0
        %5946 = vmatprep.subr.mxu0 0.0
        %5947 = vmatpush1.msra.mxu0 0.0
        %5948 = vmatprep.subr.mxu0 0.0
        %5949 = vmatpush1.msra.mxu0 0.0
        %5950 = vmatprep.subr.mxu0 0.0
        %5951 = vmatpush1.msra.mxu0 0.0
        %5952 = vmatprep.subr.mxu0 0.0
        %5953 = vmatpush1.msra.mxu0 0.0
        %5954 = vmatprep.subr.mxu0 0.0
        %5955 = vmatpush1.msra.mxu0 0.0
        %5956 = vmatprep.subr.mxu0 0.0
        %5957 = vmatpush1.msra.mxu0 0.0
        %5958 = vmatprep.subr.mxu0 0.0
        %5959 = vmatpush1.msra.mxu0 0.0
        %5960 = vmatprep.subr.mxu0 0.0
        %5961 = vmatpush1.msra.mxu0 0.0
        %5962 = vmatprep.subr.mxu0 0.0
        %5963 = vmatpush1.msra.mxu0 0.0
        %5964 = vmatprep.subr.mxu0 0.0
        %5965 = vmatpush1.msra.mxu0 0.0
        %5966 = vmatprep.subr.mxu0 0.0
        %5967 = vmatpush1.msra.mxu0 0.0
        %5968 = vmatprep.subr.mxu0 0.0
        %5969 = vmatpush1.msra.mxu0 0.0
        %5970 = vmatprep.subr.mxu0 0.0
        %5971 = vmatpush1.msra.mxu0 0.0
        %5972 = vmatprep.subr.mxu0 0.0
        %5973 = vmatpush1.msra.mxu0 0.0
        %5974 = vmatprep.subr.mxu0 0.0
        %5975 = vmatpush1.msra.mxu0 0.0
        %5976 = vmatprep.subr.mxu0 0.0
        %5977 = vmatpush1.msra.mxu0 0.0
        %5978 = vmatprep.subr.mxu0 0.0
        %5979 = vmatpush1.msra.mxu0 0.0
        %5980 = vmatprep.subr.mxu0 0.0
        %5981 = vmatpush1.msra.mxu0 0.0
        %5982 = vmatprep.subr.mxu0 0.0
        %5983 = vmatpush1.msra.mxu0 0.0
        %5984 = vmatprep.subr.mxu0 0.0
        %5985 = vmatpush1.msra.mxu0 0.0
        %5986 = vmatprep.subr.mxu0 0.0
        %5987 = vmatpush1.msra.mxu0 0.0
        %5988 = vmatprep.subr.mxu0 0.0
        %5989 = vmatpush1.msra.mxu0 0.0
        %5990 = vmatprep.subr.mxu0 0.0
        %5991 = vmatpush1.msra.mxu0 0.0
        %5992 = vmatprep.subr.mxu0 0.0
        %5993 = vmatpush1.msra.mxu0 0.0
        %5994 = vmatprep.subr.mxu0 0.0
        %5995 = vmatpush1.msra.mxu0 0.0
        %5996 = vmatprep.mubr.f32.mxu0 0.0
        %5997 = vmatmul.mubr.f32.gmra.mrb[0].mxu0 %v5930
        %v5998 = vpop.f32.mrb[0].mxu0
        %v5999 = vadd.f32 0.0, %v5998
        %v6000 = vpop.f32.mrb[0].mxu0
        %6001 = vdwg.mxu0
        %v6003 = vsel %vm1102, %v5771, 0
        %6005 = vmatprep.subr.mxu0 0.0
        %6006 = vmatpush1.msra.mxu0 %v1063
        %6007 = vmatprep.subr.mxu0 0.0
        %6008 = vmatpush1.msra.mxu0 %v1064
        %6009 = vmatprep.subr.mxu0 0.0
        %6010 = vmatpush1.msra.mxu0 %v1065
        %6011 = vmatprep.subr.mxu0 0.0
        %6012 = vmatpush1.msra.mxu0 %v1066
        %6013 = vmatprep.subr.mxu0 0.0
        %6014 = vmatpush1.msra.mxu0 %v1449
        %6015 = vmatprep.subr.mxu0 0.0
        %6016 = vmatpush1.msra.mxu0 0.0
        %6017 = vmatprep.subr.mxu0 0.0
        %6018 = vmatpush1.msra.mxu0 0.0
        %6019 = vmatprep.subr.mxu0 0.0
        %6020 = vmatpush1.msra.mxu0 0.0
        %6021 = vmatprep.subr.mxu0 0.0
        %6022 = vmatpush1.msra.mxu0 0.0
        %6023 = vmatprep.subr.mxu0 0.0
        %6024 = vmatpush1.msra.mxu0 0.0
        %6025 = vmatprep.subr.mxu0 0.0
        %6026 = vmatpush1.msra.mxu0 0.0
        %6027 = vmatprep.subr.mxu0 0.0
        %6028 = vmatpush1.msra.mxu0 0.0
        %6029 = vmatprep.subr.mxu0 0.0
        %6030 = vmatpush1.msra.mxu0 0.0
        %6031 = vmatprep.subr.mxu0 0.0
        %6032 = vmatpush1.msra.mxu0 0.0
        %6033 = vmatprep.subr.mxu0 0.0
        %6034 = vmatpush1.msra.mxu0 0.0
        %6035 = vmatprep.subr.mxu0 0.0
        %6036 = vmatpush1.msra.mxu0 0.0
        %6037 = vmatprep.subr.mxu0 0.0
        %6038 = vmatpush1.msra.mxu0 0.0
        %6039 = vmatprep.subr.mxu0 0.0
        %6040 = vmatpush1.msra.mxu0 0.0
        %6041 = vmatprep.subr.mxu0 0.0
        %6042 = vmatpush1.msra.mxu0 0.0
        %6043 = vmatprep.subr.mxu0 0.0
        %6044 = vmatpush1.msra.mxu0 0.0
        %6045 = vmatprep.subr.mxu0 0.0
        %6046 = vmatpush1.msra.mxu0 0.0
        %6047 = vmatprep.subr.mxu0 0.0
        %6048 = vmatpush1.msra.mxu0 0.0
        %6049 = vmatprep.subr.mxu0 0.0
        %6050 = vmatpush1.msra.mxu0 0.0
        %6051 = vmatprep.subr.mxu0 0.0
        %6052 = vmatpush1.msra.mxu0 0.0
        %6053 = vmatprep.subr.mxu0 0.0
        %6054 = vmatpush1.msra.mxu0 0.0
        %6055 = vmatprep.subr.mxu0 0.0
        %6056 = vmatpush1.msra.mxu0 0.0
        %6057 = vmatprep.subr.mxu0 0.0
        %6058 = vmatpush1.msra.mxu0 0.0
        %6059 = vmatprep.subr.mxu0 0.0
        %6060 = vmatpush1.msra.mxu0 0.0
        %6061 = vmatprep.subr.mxu0 0.0
        %6062 = vmatpush1.msra.mxu0 0.0
        %6063 = vmatprep.subr.mxu0 0.0
        %6064 = vmatpush1.msra.mxu0 0.0
        %6065 = vmatprep.subr.mxu0 0.0
        %6066 = vmatpush1.msra.mxu0 0.0
        %6067 = vmatprep.subr.mxu0 0.0
        %6068 = vmatpush1.msra.mxu0 0.0
        %6069 = vmatprep.mubr.f32.mxu0 0.0
        %6070 = vmatmul.mubr.f32.gmra.mrb[0].mxu0 %v6003
        %v6071 = vpop.f32.mrb[0].mxu0
        %v6072 = vadd.f32 %v5999, %v6071
        %v6073 = vpop.f32.mrb[0].mxu0
        %6074 = vdwg.mxu0
        %v6075 = vadd.f32 %v6072, %v1525
        %v6076 = vxor.u32 %v6075, 2147483648
        %v6077 = vmul.f32 %v6076, 1.442695
        %v6078 = vpow.pop %v6077
        %v6079 = vadd.f32 %v6078, 1.0
        %v6080 = vrcp.pop %v6079
        %v6081 = vmul.f32 1.0, %v6080
        %v6082 = vmul.f32 %v6081, %v5926
        %v6083 = vsub.f32 1.0, %v6081
        %v6084 = vmul.f32 %v6083, %v5849
        %v6085 = vadd.f32 %v6082, %v6084
        %v6086 = vmul.f32 %v5853, %v6085
        %v6087 = vadd.f32 %v5852, %v6086
        %6088 = vmatprep.subr.mxu0 0.0
        %6089 = vmatpush1.msra.mxu0 %v1079
        %6090 = vmatprep.subr.mxu0 0.0
        %6091 = vmatpush1.msra.mxu0 %v1080
        %6092 = vmatprep.subr.mxu0 0.0
        %6093 = vmatpush1.msra.mxu0 %v1081
        %6094 = vmatprep.subr.mxu0 0.0
        %6095 = vmatpush1.msra.mxu0 %v1082
        %6096 = vmatprep.subr.mxu0 0.0
        %6097 = vmatpush1.msra.mxu0 %v1541
        %6098 = vmatprep.subr.mxu0 0.0
        %6099 = vmatpush1.msra.mxu0 0.0
        %6100 = vmatprep.subr.mxu0 0.0
        %6101 = vmatpush1.msra.mxu0 0.0
        %6102 = vmatprep.subr.mxu0 0.0
        %6103 = vmatpush1.msra.mxu0 0.0
        %6104 = vmatprep.subr.mxu0 0.0
        %6105 = vmatpush1.msra.mxu0 0.0
        %6106 = vmatprep.subr.mxu0 0.0
        %6107 = vmatpush1.msra.mxu0 0.0
        %6108 = vmatprep.subr.mxu0 0.0
        %6109 = vmatpush1.msra.mxu0 0.0
        %6110 = vmatprep.subr.mxu0 0.0
        %6111 = vmatpush1.msra.mxu0 0.0
        %6112 = vmatprep.subr.mxu0 0.0
        %6113 = vmatpush1.msra.mxu0 0.0
        %6114 = vmatprep.subr.mxu0 0.0
        %6115 = vmatpush1.msra.mxu0 0.0
        %6116 = vmatprep.subr.mxu0 0.0
        %6117 = vmatpush1.msra.mxu0 0.0
        %6118 = vmatprep.subr.mxu0 0.0
        %6119 = vmatpush1.msra.mxu0 0.0
        %6120 = vmatprep.subr.mxu0 0.0
        %6121 = vmatpush1.msra.mxu0 0.0
        %6122 = vmatprep.subr.mxu0 0.0
        %6123 = vmatpush1.msra.mxu0 0.0
        %6124 = vmatprep.subr.mxu0 0.0
        %6125 = vmatpush1.msra.mxu0 0.0
        %6126 = vmatprep.subr.mxu0 0.0
        %6127 = vmatpush1.msra.mxu0 0.0
        %6128 = vmatprep.subr.mxu0 0.0
        %6129 = vmatpush1.msra.mxu0 0.0
        %6130 = vmatprep.subr.mxu0 0.0
        %6131 = vmatpush1.msra.mxu0 0.0
        %6132 = vmatprep.subr.mxu0 0.0
        %6133 = vmatpush1.msra.mxu0 0.0
        %6134 = vmatprep.subr.mxu0 0.0
        %6135 = vmatpush1.msra.mxu0 0.0
        %6136 = vmatprep.subr.mxu0 0.0
        %6137 = vmatpush1.msra.mxu0 0.0
        %6138 = vmatprep.subr.mxu0 0.0
        %6139 = vmatpush1.msra.mxu0 0.0
        %6140 = vmatprep.subr.mxu0 0.0
        %6141 = vmatpush1.msra.mxu0 0.0
        %6142 = vmatprep.subr.mxu0 0.0
        %6143 = vmatpush1.msra.mxu0 0.0
        %6144 = vmatprep.subr.mxu0 0.0
        %6145 = vmatpush1.msra.mxu0 0.0
        %6146 = vmatprep.subr.mxu0 0.0
        %6147 = vmatpush1.msra.mxu0 0.0
        %6148 = vmatprep.subr.mxu0 0.0
        %6149 = vmatpush1.msra.mxu0 0.0
        %6150 = vmatprep.subr.mxu0 0.0
        %6151 = vmatpush1.msra.mxu0 0.0
        %6152 = vmatprep.mubr.f32.mxu0 0.0
        %6153 = vmatmul.mubr.f32.gmra.mrb[0].mxu0 %v5930
        %v6154 = vpop.f32.mrb[0].mxu0
        %v6155 = vadd.f32 0.0, %v6154
        %v6156 = vpop.f32.mrb[0].mxu0
        %6157 = vdwg.mxu0
        %v6159 = vsel %vm1102, %v6087, 0
        %6161 = vmatprep.subr.mxu0 0.0
        %6162 = vmatpush1.msra.mxu0 %v1074
        %6163 = vmatprep.subr.mxu0 0.0
        %6164 = vmatpush1.msra.mxu0 %v1075
        %6165 = vmatprep.subr.mxu0 0.0
        %6166 = vmatpush1.msra.mxu0 %v1076
        %6167 = vmatprep.subr.mxu0 0.0
        %6168 = vmatpush1.msra.mxu0 %v1077
        %6169 = vmatprep.subr.mxu0 0.0
        %6170 = vmatpush1.msra.mxu0 %v1617
        %6171 = vmatprep.subr.mxu0 0.0
        %6172 = vmatpush1.msra.mxu0 0.0
        %6173 = vmatprep.subr.mxu0 0.0
        %6174 = vmatpush1.msra.mxu0 0.0
        %6175 = vmatprep.subr.mxu0 0.0
        %6176 = vmatpush1.msra.mxu0 0.0
        %6177 = vmatprep.subr.mxu0 0.0
        %6178 = vmatpush1.msra.mxu0 0.0
        %6179 = vmatprep.subr.mxu0 0.0
        %6180 = vmatpush1.msra.mxu0 0.0
        %6181 = vmatprep.subr.mxu0 0.0
        %6182 = vmatpush1.msra.mxu0 0.0
        %6183 = vmatprep.subr.mxu0 0.0
        %6184 = vmatpush1.msra.mxu0 0.0
        %6185 = vmatprep.subr.mxu0 0.0
        %6186 = vmatpush1.msra.mxu0 0.0
        %6187 = vmatprep.subr.mxu0 0.0
        %6188 = vmatpush1.msra.mxu0 0.0
        %6189 = vmatprep.subr.mxu0 0.0
        %6190 = vmatpush1.msra.mxu0 0.0
        %6191 = vmatprep.subr.mxu0 0.0
        %6192 = vmatpush1.msra.mxu0 0.0
        %6193 = vmatprep.subr.mxu0 0.0
        %6194 = vmatpush1.msra.mxu0 0.0
        %6195 = vmatprep.subr.mxu0 0.0
        %6196 = vmatpush1.msra.mxu0 0.0
        %6197 = vmatprep.subr.mxu0 0.0
        %6198 = vmatpush1.msra.mxu0 0.0
        %6199 = vmatprep.subr.mxu0 0.0
        %6200 = vmatpush1.msra.mxu0 0.0
        %6201 = vmatprep.subr.mxu0 0.0
        %6202 = vmatpush1.msra.mxu0 0.0
        %6203 = vmatprep.subr.mxu0 0.0
        %6204 = vmatpush1.msra.mxu0 0.0
        %6205 = vmatprep.subr.mxu0 0.0
        %6206 = vmatpush1.msra.mxu0 0.0
        %6207 = vmatprep.subr.mxu0 0.0
        %6208 = vmatpush1.msra.mxu0 0.0
        %6209 = vmatprep.subr.mxu0 0.0
        %6210 = vmatpush1.msra.mxu0 0.0
        %6211 = vmatprep.subr.mxu0 0.0
        %6212 = vmatpush1.msra.mxu0 0.0
        %6213 = vmatprep.subr.mxu0 0.0
        %6214 = vmatpush1.msra.mxu0 0.0
        %6215 = vmatprep.subr.mxu0 0.0
        %6216 = vmatpush1.msra.mxu0 0.0
        %6217 = vmatprep.subr.mxu0 0.0
        %6218 = vmatpush1.msra.mxu0 0.0
        %6219 = vmatprep.subr.mxu0 0.0
        %6220 = vmatpush1.msra.mxu0 0.0
        %6221 = vmatprep.subr.mxu0 0.0
        %6222 = vmatpush1.msra.mxu0 0.0
        %6223 = vmatprep.subr.mxu0 0.0
        %6224 = vmatpush1.msra.mxu0 0.0
        %6225 = vmatprep.mubr.f32.mxu0 0.0
        %6226 = vmatmul.mubr.f32.gmra.mrb[0].mxu0 %v6159
        %v6227 = vpop.f32.mrb[0].mxu0
        %v6228 = vadd.f32 %v6155, %v6227
        %v6229 = vpop.f32.mrb[0].mxu0
        %6230 = vdwg.mxu0
        %6231 = vmatprep.subr.mxu0 0.0
        %6232 = vmatpush1.msra.mxu0 %v1084
        %6233 = vmatprep.subr.mxu0 0.0
        %6234 = vmatpush1.msra.mxu0 %v1085
        %6235 = vmatprep.subr.mxu0 0.0
        %6236 = vmatpush1.msra.mxu0 %v1086
        %6237 = vmatprep.subr.mxu0 0.0
        %6238 = vmatpush1.msra.mxu0 %v1087
        %6239 = vmatprep.subr.mxu0 0.0
        %6240 = vmatpush1.msra.mxu0 0.0
        %6241 = vmatprep.subr.mxu0 0.0
        %6242 = vmatpush1.msra.mxu0 0.0
        %6243 = vmatprep.subr.mxu0 0.0
        %6244 = vmatpush1.msra.mxu0 0.0
        %6245 = vmatprep.subr.mxu0 0.0
        %6246 = vmatpush1.msra.mxu0 0.0
        %6247 = vmatprep.subr.mxu0 0.0
        %6248 = vmatpush1.msra.mxu0 0.0
        %6249 = vmatprep.subr.mxu0 0.0
        %6250 = vmatpush1.msra.mxu0 0.0
        %6251 = vmatprep.subr.mxu0 0.0
        %6252 = vmatpush1.msra.mxu0 0.0
        %6253 = vmatprep.subr.mxu0 0.0
        %6254 = vmatpush1.msra.mxu0 0.0
        %6255 = vmatprep.subr.mxu0 0.0
        %6256 = vmatpush1.msra.mxu0 0.0
        %6257 = vmatprep.subr.mxu0 0.0
        %6258 = vmatpush1.msra.mxu0 0.0
        %6259 = vmatprep.subr.mxu0 0.0
        %6260 = vmatpush1.msra.mxu0 0.0
        %6261 = vmatprep.subr.mxu0 0.0
        %6262 = vmatpush1.msra.mxu0 0.0
        %6263 = vmatprep.subr.mxu0 0.0
        %6264 = vmatpush1.msra.mxu0 0.0
        %6265 = vmatprep.subr.mxu0 0.0
        %6266 = vmatpush1.msra.mxu0 0.0
        %6267 = vmatprep.subr.mxu0 0.0
        %6268 = vmatpush1.msra.mxu0 0.0
        %6269 = vmatprep.subr.mxu0 0.0
        %6270 = vmatpush1.msra.mxu0 0.0
        %6271 = vmatprep.subr.mxu0 0.0
        %6272 = vmatpush1.msra.mxu0 0.0
        %6273 = vmatprep.subr.mxu0 0.0
        %6274 = vmatpush1.msra.mxu0 0.0
        %6275 = vmatprep.subr.mxu0 0.0
        %6276 = vmatpush1.msra.mxu0 0.0
        %6277 = vmatprep.subr.mxu0 0.0
        %6278 = vmatpush1.msra.mxu0 0.0
        %6279 = vmatprep.subr.mxu0 0.0
        %6280 = vmatpush1.msra.mxu0 0.0
        %6281 = vmatprep.subr.mxu0 0.0
        %6282 = vmatpush1.msra.mxu0 0.0
        %6283 = vmatprep.subr.mxu0 0.0
        %6284 = vmatpush1.msra.mxu0 0.0
        %6285 = vmatprep.subr.mxu0 0.0
        %6286 = vmatpush1.msra.mxu0 0.0
        %6287 = vmatprep.subr.mxu0 0.0
        %6288 = vmatpush1.msra.mxu0 0.0
        %6289 = vmatprep.subr.mxu0 0.0
        %6290 = vmatpush1.msra.mxu0 0.0
        %6291 = vmatprep.subr.mxu0 0.0
        %6292 = vmatpush1.msra.mxu0 0.0
        %6293 = vmatprep.subr.mxu0 0.0
        %6294 = vmatpush1.msra.mxu0 0.0
        %6295 = vmatprep.mubr.f32.mxu0 0.0
        %6296 = vmatmul.mubr.f32.gmra.mrb[0].mxu0 %v5780
        %v6297 = vpop.f32.mrb[0].mxu0
        %v6298 = vadd.f32 0.0, %v6297
        %v6299 = vpop.f32.mrb[0].mxu0
        %6300 = vdwg.mxu0
        %v6301 = vadd.f32 %v6228, %v6298
        %v6302 = vadd.f32 %v6301, %v1764
        %v6303 = vxor.u32 %v6302, 2147483648
        %v6304 = vmul.f32 %v6303, 1.442695
        %v6305 = vpow.pop %v6304
        %v6306 = vadd.f32 %v6305, 1.0
        %v6307 = vrcp.pop %v6306
        %v6308 = vmul.f32 1.0, %v6307
        %v6309 = vtanh.pop %v6302
        %v6310 = vmul.f32 %v6308, %v5672
        %6312 = vrot.lane.b32.xlu0 %v6309, 64
        %v6313 = vpop.permute.xlu0 %6312
        %v6315 = vmul.f32 %v6308, %v6313
        %6317 = vrot.lane.b32.xlu0 %v6315, 32
        %v6318 = vpop.permute.xlu0 %6317
        %v6320 = vadd.f32 %v6310, %v6318
        %v6321 = vtanh.pop %v6320
        %6323 = vrot.lane.b32.xlu0 %v6321, 64
        %v6324 = vpop.permute.xlu0 %6323
        %v6326 = vmul.f32 %v6308, %v6324
        %s6327 = scalar_lea.vmem %s1039, %s5684
        %6328 = vst.msk [vmem:[%s6327] sm:$0xff] %vm1102, %v6087
        %v6329 = vld [vmem:[%s1031] sm:$0xff]
        %v6330 = vld [vmem:[%s1031 + $0x8] sm:$0xff]
        %v6331 = vld [vmem:[%s1031 + $0x10] sm:$0xff]
        %v6332 = vld [vmem:[%s1031 + $0x18] sm:$0xff]
        %v6333 = vld [vmem:[%s1034] sm:$0x1]
        %v6335 = vlaneseq
        %v6336 = vshrl.u32 %v6335, 7
        %v6337 = vsub.s32 0, %v6336
        %v6338 = vrot.slane %v6333, %v6337
        %6341 = vrot.lane.b32.xlu0 %v6326, 32
        %v6342 = vpop.permute.xlu0 %6341
        %v6343 = vsel %vm1209, %v6342, 0
        %6345 = vmatprep.subr.mxu0 0.0
        %6346 = vmatpush1.msra.mxu0 %v6329
        %6347 = vmatprep.subr.mxu0 0.0
        %6348 = vmatpush1.msra.mxu0 %v6330
        %6349 = vmatprep.subr.mxu0 0.0
        %6350 = vmatpush1.msra.mxu0 %v6331
        %6351 = vmatprep.subr.mxu0 0.0
        %6352 = vmatpush1.msra.mxu0 %v6332
        %6353 = vmatprep.subr.mxu0 0.0
        %6354 = vmatpush1.msra.mxu0 0.0
        %6355 = vmatprep.subr.mxu0 0.0
        %6356 = vmatpush1.msra.mxu0 0.0
        %6357 = vmatprep.subr.mxu0 0.0
        %6358 = vmatpush1.msra.mxu0 0.0
        %6359 = vmatprep.subr.mxu0 0.0
        %6360 = vmatpush1.msra.mxu0 0.0
        %6361 = vmatprep.subr.mxu0 0.0
        %6362 = vmatpush1.msra.mxu0 0.0
        %6363 = vmatprep.subr.mxu0 0.0
        %6364 = vmatpush1.msra.mxu0 0.0
        %6365 = vmatprep.subr.mxu0 0.0
        %6366 = vmatpush1.msra.mxu0 0.0
        %6367 = vmatprep.subr.mxu0 0.0
        %6368 = vmatpush1.msra.mxu0 0.0
        %6369 = vmatprep.subr.mxu0 0.0
        %6370 = vmatpush1.msra.mxu0 0.0
        %6371 = vmatprep.subr.mxu0 0.0
        %6372 = vmatpush1.msra.mxu0 0.0
        %6373 = vmatprep.subr.mxu0 0.0
        %6374 = vmatpush1.msra.mxu0 0.0
        %6375 = vmatprep.subr.mxu0 0.0
        %6376 = vmatpush1.msra.mxu0 0.0
        %6377 = vmatprep.subr.mxu0 0.0
        %6378 = vmatpush1.msra.mxu0 0.0
        %6379 = vmatprep.subr.mxu0 0.0
        %6380 = vmatpush1.msra.mxu0 0.0
        %6381 = vmatprep.subr.mxu0 0.0
        %6382 = vmatpush1.msra.mxu0 0.0
        %6383 = vmatprep.subr.mxu0 0.0
        %6384 = vmatpush1.msra.mxu0 0.0
        %6385 = vmatprep.subr.mxu0 0.0
        %6386 = vmatpush1.msra.mxu0 0.0
        %6387 = vmatprep.subr.mxu0 0.0
        %6388 = vmatpush1.msra.mxu0 0.0
        %6389 = vmatprep.subr.mxu0 0.0
        %6390 = vmatpush1.msra.mxu0 0.0
        %6391 = vmatprep.subr.mxu0 0.0
        %6392 = vmatpush1.msra.mxu0 0.0
        %6393 = vmatprep.subr.mxu0 0.0
        %6394 = vmatpush1.msra.mxu0 0.0
        %6395 = vmatprep.subr.mxu0 0.0
        %6396 = vmatpush1.msra.mxu0 0.0
        %6397 = vmatprep.subr.mxu0 0.0
        %6398 = vmatpush1.msra.mxu0 0.0
        %6399 = vmatprep.subr.mxu0 0.0
        %6400 = vmatpush1.msra.mxu0 0.0
        %6401 = vmatprep.subr.mxu0 0.0
        %6402 = vmatpush1.msra.mxu0 0.0
        %6403 = vmatprep.subr.mxu0 0.0
        %6404 = vmatpush1.msra.mxu0 0.0
        %6405 = vmatprep.subr.mxu0 0.0
        %6406 = vmatpush1.msra.mxu0 0.0
        %6407 = vmatprep.subr.mxu0 0.0
        %6408 = vmatpush1.msra.mxu0 0.0
        %6409 = vmatprep.mubr.f32.mxu0 0.0
        %6410 = vmatmul.mubr.f32.gmra.mrb[0].mxu0 %v6343
        %v6411 = vpop.f32.mrb[0].mxu0
        %v6412 = vadd.f32 %v6338, %v6411
        %v6413 = vpop.f32.mrb[0].mxu0
        %6414 = vdwg.mxu0
        %vm6415 = vcmask 15360
        %6416 = vst.msk [vmem:[%s1043] sm:$0xff] %vm6415, %v6412
        %p6417 = scmp.lt.s32.totalorder %s44, 1
        %s6418 = scalar_select %p6417, %s44, 1
        %s6419 = smul.addr %s6418, 8
        %s6420 = smul.addr %s6419, 8
        %s6421 = scalar_lea.vmem %s19, %s6420
        %p6422 = scmp.lt.s32.totalorder %s44, 1
        %s6423 = scalar_select %p6422, %s44, 1
        %s6424 = smul.addr %s6423, 8
        %s6425 = scalar_lea.vmem %s20, %s6424
        // Predicated region
        $region125: #{a_call__.1} parent=95 // pred_check
          %p6426 = pneg %p546
        $region126: #{a_call__.1} parent=95 // pred_check_branch
          %6428 = sbr.rel (%p6426) target = $region128
        $region127: #{a_call__.1} parent=95 // pred_region
          _
        $region128: #{a_call__.1} parent=95 // pred_fallthru
          _
        // Predicated region
        $region129: #{a_call__.1} parent=95 // pred_check
          %p6429 = pneg %p572
        $region130: #{a_call__.1} parent=95 // pred_check_branch
          %6431 = sbr.rel (%p6429) target = $region132
        $region131: #{a_call__.1} parent=95 // pred_region
          _
        $region132: #{a_call__.1} parent=95 // pred_fallthru
          _
      $region96: #{a_call__.1} parent=5 // pred_fallthru
        _
      %p6432 = scmp.le.s32.totalorder 2, %s39
      // Predicated region
      $region133: #{a_call__.1} parent=5 // pred_check
        %p6433 = pneg %p6432
      $region134: #{a_call__.1} parent=5 // pred_check_branch
        %6435 = sbr.rel (%p6433) target = $region136
      $region135: #{a_call__.1} parent=5 // pred_region
        %s6436 = ssub.s32 %s39, 2
        // Predicated region
        $region137: #{a_call__.1} parent=135 // pred_check
          %p6437 = pneg %p552
        $region138: #{a_call__.1} parent=135 // pred_check_branch
          %6439 = sbr.rel (%p6437) target = $region140
        $region139: #{a_call__.1} parent=135 // pred_region
          %p6440 = scmp.lt.s32.totalorder %s45, 1
          %s6441 = scalar_select %p6440, %s45, 1
          %s6442 = smul.addr %s6441, 8
          %s6443 = smul.addr %s6442, 8
          %s6444 = scalar_lea.vmem %s19, %s6443
        $region140: #{a_call__.1} parent=135 // pred_fallthru
          _
        // Predicated region
        $region141: #{a_call__.1} parent=135 // pred_check
          %p6445 = pneg %p578
        $region142: #{a_call__.1} parent=135 // pred_check_branch
          %6447 = sbr.rel (%p6445) target = $region144
        $region143: #{a_call__.1} parent=135 // pred_region
          %p6448 = scmp.lt.s32.totalorder %s45, 1
          %s6449 = scalar_select %p6448, %s45, 1
          %s6450 = smul.addr %s6449, 8
          %s6451 = scalar_lea.vmem %s20, %s6450
        $region144: #{a_call__.1} parent=135 // pred_fallthru
          _
      $region136: #{a_call__.1} parent=5 // pred_fallthru
        _
    $region6: #{a_call__.1} parent=1 // loop_footer
      %s43 = sadd.s32 1, %s39
    $region7: #{a_call__.1} parent=1 // loop_footer_branch
      %38 = sbr.rel target = $region3
    $region8: #{a_call__.1} parent=1 // loop_exit
      _
    %6452 = vsyncpa [#allocation3], 1
    %s6453 = scalar_lea.sflag [#allocation3], 1
    %6454 = vsyncpa %s6453, 1
    %6455 = vsyncpa [#allocation5], 1
    %s6456 = scalar_lea.sflag [#allocation5], 1
    %6457 = vsyncpa %s6456, 1
    %6458 = vsyncpa [#allocation8], 1
    %s6459 = scalar_lea.sflag [#allocation8], 1
    %6460 = vsyncpa %s6459, 1
    %6461 = vsyncpa [#allocation11], 1
    %s6462 = scalar_lea.sflag [#allocation11], 1
    %6463 = vsyncpa %s6462, 1

</llo_original>
